<compile_context>
chip_gen: v5e
topology: v5e:2x2
jax: 0.10.0
libtpu: 0.0.40
codegen_flags: <defaults>
</compile_context>

<pallas_src>
import functools

import jax
import jax.numpy as jnp
from jax.experimental import pallas as pl
from jax.experimental.pallas import tpu as pltpu

_BN_EPS = 1e-5
_K = 5
CONV_DIM = [1, 32, 64]
DENSE_DIM = [1024, 512]
N_CLASSES = 10


def _vmem_specs(n):
    return [pl.BlockSpec(memory_space=pltpu.MemorySpace.VMEM) for _ in range(n)]


# ---------------------------- fused Pallas kernels ----------------------------

def _conv_bn_relu_pool_kernel(p00, p01, p10, p11, w_ref, wscale_ref, b_ref,
                              g_ref, beta_ref, oscale_ref, o_ref, *, eps):
    """im2col conv (4 pool parities) -> +bias -> BatchNorm2d(batch stats, biased var)
    -> ReLU -> MaxPool2d(2,2) -> per-output-channel scale, fully VMEM resident.

    p{ph}{pw}: (rows, Kfeat) patches of the conv output positions with parity (ph, pw);
      together they cover every pre-pool position, so the BN stats below are exact.
    wscale_ref: (Kfeat, 1) folds a per-input-channel activation modulation into the
      weights (conv is linear).  oscale_ref: (1, Cout) post-pool channel modulation.
    Pass all-ones scales when no modulation applies (multiplying by 1.0 is exact)."""
    w = w_ref[...] * wscale_ref[...]
    b = b_ref[...]
    ys = [jnp.dot(p[...], w, preferred_element_type=jnp.float32) + b
          for p in (p00, p01, p10, p11)]
    n_total = 4.0 * ys[0].shape[0]                      # = B * OH * OW (pre-pool)
    mean = (ys[0].sum(axis=0, keepdims=True) + ys[1].sum(axis=0, keepdims=True)
            + ys[2].sum(axis=0, keepdims=True) + ys[3].sum(axis=0, keepdims=True)) / n_total
    var = (jnp.square(ys[0] - mean).sum(axis=0, keepdims=True)
           + jnp.square(ys[1] - mean).sum(axis=0, keepdims=True)
           + jnp.square(ys[2] - mean).sum(axis=0, keepdims=True)
           + jnp.square(ys[3] - mean).sum(axis=0, keepdims=True)) / n_total
    scale = jax.lax.rsqrt(var + eps) * g_ref[...]
    shift = beta_ref[...]
    zs = [jnp.maximum((y - mean) * scale + shift, 0.0) for y in ys]
    pooled = jnp.maximum(jnp.maximum(zs[0], zs[1]), jnp.maximum(zs[2], zs[3]))
    o_ref[...] = (pooled * oscale_ref[...]).astype(o_ref.dtype)


def conv_bn_relu_pool(parities, w, wscale, b, gamma, beta, oscale):
    rows = parities[0].shape[0]
    cout = w.shape[1]
    return pl.pallas_call(
        functools.partial(_conv_bn_relu_pool_kernel, eps=_BN_EPS),
        out_shape=jax.ShapeDtypeStruct((rows, cout), jnp.float32),
        in_specs=_vmem_specs(10),
        out_specs=pl.BlockSpec(memory_space=pltpu.MemorySpace.VMEM),
    )(*parities, w, wscale, b, gamma, beta, oscale)


def _fm_tail_kernel(h_ref, w1, b1, w2, b2, w3, b3, w4, b4, sig_ref):
    """fc1 -> ReLU -> fc2 -> ReLU -> mean(dim=0) -> fc3 -> ReLU -> fc4 -> sigmoid."""
    h = h_ref[...]
    h1 = jnp.maximum(jnp.dot(h, w1[...], preferred_element_type=jnp.float32) + b1[...], 0.0)
    h2 = jnp.maximum(jnp.dot(h1, w2[...], preferred_element_type=jnp.float32) + b2[...], 0.0)
    m = jnp.mean(h2, axis=0, keepdims=True)
    h3 = jnp.maximum(jnp.dot(m, w3[...], preferred_element_type=jnp.float32) + b3[...], 0.0)
    z = jnp.dot(h3, w4[...], preferred_element_type=jnp.float32) + b4[...]
    sig_ref[...] = jax.nn.sigmoid(z)                    # consumers only ever use sigmoid(z)


def fm_tail(h, fm):
    out_dim = fm["fc4_w"].shape[1]
    return pl.pallas_call(
        _fm_tail_kernel,
        out_shape=jax.ShapeDtypeStruct((1, out_dim), jnp.float32),
        in_specs=_vmem_specs(9),
        out_specs=pl.BlockSpec(memory_space=pltpu.MemorySpace.VMEM),
    )(h, fm["fc1_w"], fm["fc1_b"], fm["fc2_w"], fm["fc2_b"],
      fm["fc3_w"], fm["fc3_b"], fm["fc4_w"], fm["fc4_b"])


def _dense_tail_kernel(h_ref, sz0_ref, dw_ref, db_ref, dg_ref, dbeta_ref,
                       sz1_ref, lw_ref, lb_ref, o_ref, *, eps):
    """modulate(z0) -> Linear -> BatchNorm1d(batch stats) -> ReLU -> modulate(z1) -> Linear."""
    h = h_ref[...] * sz0_ref[...]
    a = jnp.dot(h, dw_ref[...], preferred_element_type=jnp.float32) + db_ref[...]
    mean = jnp.mean(a, axis=0, keepdims=True)
    var = jnp.mean(jnp.square(a - mean), axis=0, keepdims=True)
    a = (a - mean) * (jax.lax.rsqrt(var + eps) * dg_ref[...]) + dbeta_ref[...]
    a = jnp.maximum(a, 0.0) * sz1_ref[...]
    o_ref[...] = (jnp.dot(a, lw_ref[...], preferred_element_type=jnp.float32)
                  + lb_ref[...]).astype(o_ref.dtype)


def dense_tail(h, sig_z0, sig_z1, p):
    n_out = p["lin_w"].shape[1]
    return pl.pallas_call(
        functools.partial(_dense_tail_kernel, eps=_BN_EPS),
        out_shape=jax.ShapeDtypeStruct((h.shape[0], n_out), jnp.float32),
        in_specs=_vmem_specs(9),
        out_specs=pl.BlockSpec(memory_space=pltpu.MemorySpace.VMEM),
    )(h, sig_z0, p["d1_w"], p["d1_b"], p["d1_gamma"], p["d1_beta"],
      sig_z1, p["lin_w"], p["lin_b"])


# ---------------------------- XLA glue (im2col / reshapes) ----------------------------

def _im2col_pool_parities(x_nhwc, k=_K):
    """Patch matrices for the four 2x2 max-pool parities of a valid k x k conv.
    Feature order: input-channel-major, then (kh, kw) -- identical to flattening a
    PyTorch (Cout, Cin, KH, KW) weight with .reshape(Cout, -1)."""
    B, H, W, Cin = x_nhwc.shape
    OH, OW = H - k + 1, W - k + 1
    PH, PW = OH // 2, OW // 2
    cols = [x_nhwc[:, kh:kh + OH, kw:kw + OW, :] for kh in range(k) for kw in range(k)]
    pt = jnp.stack(cols, axis=-1)                       # (B, OH, OW, Cin, k*k)
    pt = pt.reshape(B, OH, OW, Cin * k * k)
    return [pt[:, ph::2, pw::2, :].reshape(B * PH * PW, Cin * k * k)
            for ph in range(2) for pw in range(2)]


def conv_block(x_nhwc, p, wscale=None, oscale=None):
    """Conv2d(k=5, valid) -> BN2d -> ReLU -> MaxPool2d(2,2) [-> channel modulations]."""
    B, H, W, _ = x_nhwc.shape
    parities = _im2col_pool_parities(x_nhwc)
    kfeat, cout = p["w"].shape
    if wscale is None:
        wscale = jnp.ones((kfeat, 1), jnp.float32)
    if oscale is None:
        oscale = jnp.ones((1, cout), jnp.float32)
    pooled = conv_bn_relu_pool(parities, p["w"], wscale, p["b"], p["gamma"], p["beta"], oscale)
    PH, PW = (H - _K + 1) // 2, (W - _K + 1) // 2
    return pooled.reshape(B, PH, PW, cout)


def flatten_nhwc(y):
    return y.reshape(y.shape[0], -1)


# ---------------------------- model ----------------------------

def simple_cnn_with_te_apply(x_nchw, p):
    """SimpleCNNModuleWithTE.forward, modulation='c1'."""
    B = x_nchw.shape[0]
    # NCHW -> NHWC is a pure reshape because Cin == 1 (no runtime transpose).
    x = x_nchw.reshape(B, x_nchw.shape[2], x_nchw.shape[3], 1)

    # conv block 1: fm branch + main branch share one im2col and one fused kernel.
    y1 = conv_block(x, p["conv1_dual"])                          # (B, 12, 12, 64)
    fm1, main1 = y1[..., :CONV_DIM[1]], y1[..., CONV_DIM[1]:]

    # federated-modulator branch
    fm2 = conv_block(fm1, p["fm_conv2"])                         # (B, 4, 4, 64)
    sig = fm_tail(flatten_nhwc(fm2), p["fm"])                    # (1, 1632) = sigmoid(fc4)
    c1, c2, d0 = CONV_DIM[1], CONV_DIM[2], DENSE_DIM[0]
    sig_r1 = sig[:, :c1]                                         # (1, 32)
    sig_r2 = sig[:, c1:c1 + c2]                                  # (1, 64)
    sig_z0 = sig[:, c1 + c2:c1 + c2 + d0]                        # (1, 1024) (NHWC order)
    sig_z1 = sig[:, c1 + c2 + d0:]                               # (1, 512)

    # main branch conv block 2: modulate(pool1, r1) folded into the conv weights,
    # modulate(pool2, r2) fused as the post-pool output scale.
    wscale = jnp.repeat(sig_r1, _K * _K, axis=1).reshape(c1 * _K * _K, 1)
    main2 = conv_block(main1, p["main_conv2"], wscale=wscale, oscale=sig_r2)  # (B,4,4,64)

    # dense tail (flatten order handled by the d1_w / fc4 z0-column permutation).
    h = flatten_nhwc(main2)                                      # (B, 1024)
    return dense_tail(h, sig_z0, sig_z1, p)                      # (B, 10)


# ---------------------------- parameters (torch layout) + one-time prep ----------------------------

def init_params_torch_layout(key):
    """Deterministic random parameters in native PyTorch layouts."""
    keys = iter(jax.random.split(key, 40))

    def conv_block_params(cin, cout):
        return {"w": 0.05 * jax.random.normal(next(keys), (cout, cin, _K, _K), jnp.float32),
                "b": 0.05 * jax.random.normal(next(keys), (cout,), jnp.float32),
                "gamma": jnp.ones((cout,), jnp.float32),
                "beta": jnp.zeros((cout,), jnp.float32)}

    def linear_params(din, dout):
        return {"w": 0.05 * jax.random.normal(next(keys), (dout, din), jnp.float32),
                "b": 0.05 * jax.random.normal(next(keys), (dout,), jnp.float32)}

    out_dim = CONV_DIM[1] + CONV_DIM[2] + DENSE_DIM[0] + DENSE_DIM[1]      # 1632
    return {
        "fm_cnn1": conv_block_params(1, CONV_DIM[1]),
        "fm_cnn2": conv_block_params(CONV_DIM[1], CONV_DIM[2]),
        "fm_fc1": linear_params(DENSE_DIM[0], 100),
        "fm_fc2": linear_params(100, 200),
        "fm_fc3": linear_params(200, 200),
        "fm_fc4": linear_params(200, out_dim),
        "cnn1": conv_block_params(CONV_DIM[0], CONV_DIM[1]),
        "cnn2": conv_block_params(CONV_DIM[1], CONV_DIM[2]),
        "d1": linear_params(DENSE_DIM[0], DENSE_DIM[1]),
        "d1_gamma": jnp.ones((DENSE_DIM[1],), jnp.float32),
        "d1_beta": jnp.zeros((DENSE_DIM[1],), jnp.float32),
        "lin": linear_params(DENSE_DIM[1], N_CLASSES),
    }


def _chw_to_hwc_perm(c, h, w):
    # perm[f_hwc] = f_chw: reorders Linear-weight rows from torch's CHW flatten order to
    # our NHWC flatten order (one-time host-side prep; removes runtime transposes).
    return jnp.transpose(jnp.arange(c * h * w).reshape(c, h, w), (1, 2, 0)).reshape(-1)


def prepare_params(raw):
    def lin(p):            # torch (dout, din) -> (din, dout); bias -> (1, dout)
        return jnp.transpose(p["w"]), p["b"].reshape(1, -1)

    def conv(p):           # torch (Cout, Cin, K, K) -> (Cin*K*K, Cout); vectors -> rows
        cout = p["w"].shape[0]
        return {"w": jnp.transpose(p["w"].reshape(cout, -1)),
                "b": p["b"].reshape(1, -1),
                "gamma": p["gamma"].reshape(1, -1),
                "beta": p["beta"].reshape(1, -1)}

    perm = _chw_to_hwc_perm(CONV_DIM[2], 4, 4)          # flatten of a (64, 4, 4) map

    # fm conv1 and main conv1 run on the same input: concatenate along Cout so one
    # fused kernel (shared im2col) computes both branches.
    fm1, m1 = conv(raw["fm_cnn1"]), conv(raw["cnn1"])
    conv1_dual = {k: jnp.concatenate([fm1[k], m1[k]], axis=1) for k in fm1}

    fm = {}
    fm["fc1_w"], fm["fc1_b"] = lin(raw["fm_fc1"])
    fm["fc1_w"] = fm["fc1_w"][perm, :]                  # accept NHWC flatten order
    fm["fc2_w"], fm["fc2_b"] = lin(raw["fm_fc2"])
    fm["fc3_w"], fm["fc3_b"] = lin(raw["fm_fc3"])
    fc4_w, fc4_b = lin(raw["fm_fc4"])
    # z0 multiplies the flattened main activations: permute those fc4 columns to NHWC
    # order so no runtime gather of sigmoid(z0) is needed.
    z0_lo = CONV_DIM[1] + CONV_DIM[2]
    z0_hi = z0_lo + DENSE_DIM[0]
    col_perm = jnp.concatenate([jnp.arange(z0_lo), z0_lo + perm,
                                jnp.arange(z0_hi, fc4_w.shape[1])])
    fm["fc4_w"] = fc4_w[:, col_perm]
    fm["fc4_b"] = fc4_b[:, col_perm]

    d1_w, d1_b = lin(raw["d1"])
    lin_w, lin_b = lin(raw["lin"])
    return {
        "conv1_dual": conv1_dual,
        "fm_conv2": conv(raw["fm_cnn2"]),
        "main_conv2": conv(raw["cnn2"]),
        "fm": fm,
        "d1_w": d1_w[perm, :], "d1_b": d1_b,
        "d1_gamma": raw["d1_gamma"].reshape(1, -1),
        "d1_beta": raw["d1_beta"].reshape(1, -1),
        "lin_w": lin_w, "lin_b": lin_b,
    }


if __name__ == "__main__":
    key = jax.random.PRNGKey(0)
    pkey, xkey = jax.random.split(key)
    params = prepare_params(init_params_torch_layout(pkey))
    # 28x28 is required so that flatten yields 64*4*4 = 1024 = dense_dim[0].
    x = jax.random.normal(xkey, (2, 1, 28, 28), jnp.float32)

    fwd = jax.jit(simple_cnn_with_te_apply)
    out = fwd(x, params)
    jax.block_until_ready(out)
    assert out.shape == (2, N_CLASSES)
    assert bool(jnp.all(jnp.isfinite(out)))
    print("KERNEL_OK")
</pallas_src>

<mosaic_0001>
module attributes {stable_mosaic.version = 11 : i64} {
  func.func @_conv_bn_relu_pool_kernel(%arg0: memref<288x25xf32, #tpu.memory_space<vmem>>, %arg1: memref<288x25xf32, #tpu.memory_space<vmem>>, %arg2: memref<288x25xf32, #tpu.memory_space<vmem>>, %arg3: memref<288x25xf32, #tpu.memory_space<vmem>>, %arg4: memref<25x64xf32, #tpu.memory_space<vmem>>, %arg5: memref<25x1xf32, #tpu.memory_space<vmem>>, %arg6: memref<1x64xf32, #tpu.memory_space<vmem>>, %arg7: memref<1x64xf32, #tpu.memory_space<vmem>>, %arg8: memref<1x64xf32, #tpu.memory_space<vmem>>, %arg9: memref<1x64xf32, #tpu.memory_space<vmem>>, %arg10: memref<288x64xf32, #tpu.memory_space<vmem>>) attributes {dimension_semantics = [], scalar_prefetch = 0 : i64, scratch_operands = 0 : i64, tpu.core_type = #tpu.core_type<tc>} {
    %c0 = arith.constant 0 : index
    %c0_0 = arith.constant 0 : index
    %0 = vector.load %arg4[%c0, %c0_0] : memref<25x64xf32, #tpu.memory_space<vmem>>, vector<25x64xf32>
    %c0_1 = arith.constant 0 : index
    %c0_2 = arith.constant 0 : index
    %1 = vector.load %arg5[%c0_1, %c0_2] : memref<25x1xf32, #tpu.memory_space<vmem>>, vector<25x1xf32>
    %2 = vector.broadcast %1 : vector<25x1xf32> to vector<25x64xf32>
    %3 = arith.mulf %0, %2 : vector<25x64xf32>
    %c0_3 = arith.constant 0 : index
    %c0_4 = arith.constant 0 : index
    %4 = vector.load %arg6[%c0_3, %c0_4] : memref<1x64xf32, #tpu.memory_space<vmem>>, vector<1x64xf32>
    %c0_5 = arith.constant 0 : index
    %c0_6 = arith.constant 0 : index
    %5 = vector.load %arg0[%c0_5, %c0_6] : memref<288x25xf32, #tpu.memory_space<vmem>>, vector<288x25xf32>
    %cst = arith.constant dense<0.000000e+00> : vector<288x64xf32>
    %6 = tpu.matmul %5, %3, %cst {dimension_numbers = #tpu.dot_dimension_numbers<[1], [0], [0], [1], [0, 0, 1, 1], [], []>} : vector<288x25xf32>, vector<25x64xf32>, vector<288x64xf32> -> vector<288x64xf32>
    %7 = vector.broadcast %4 : vector<1x64xf32> to vector<288x64xf32>
    %8 = arith.addf %6, %7 : vector<288x64xf32>
    %c0_7 = arith.constant 0 : index
    %c0_8 = arith.constant 0 : index
    %9 = vector.load %arg1[%c0_7, %c0_8] : memref<288x25xf32, #tpu.memory_space<vmem>>, vector<288x25xf32>
    %cst_9 = arith.constant dense<0.000000e+00> : vector<288x64xf32>
    %10 = tpu.matmul %9, %3, %cst_9 {dimension_numbers = #tpu.dot_dimension_numbers<[1], [0], [0], [1], [0, 0, 1, 1], [], []>} : vector<288x25xf32>, vector<25x64xf32>, vector<288x64xf32> -> vector<288x64xf32>
    %11 = vector.broadcast %4 : vector<1x64xf32> to vector<288x64xf32>
    %12 = arith.addf %10, %11 : vector<288x64xf32>
    %c0_10 = arith.constant 0 : index
    %c0_11 = arith.constant 0 : index
    %13 = vector.load %arg2[%c0_10, %c0_11] : memref<288x25xf32, #tpu.memory_space<vmem>>, vector<288x25xf32>
    %cst_12 = arith.constant dense<0.000000e+00> : vector<288x64xf32>
    %14 = tpu.matmul %13, %3, %cst_12 {dimension_numbers = #tpu.dot_dimension_numbers<[1], [0], [0], [1], [0, 0, 1, 1], [], []>} : vector<288x25xf32>, vector<25x64xf32>, vector<288x64xf32> -> vector<288x64xf32>
    %15 = vector.broadcast %4 : vector<1x64xf32> to vector<288x64xf32>
    %16 = arith.addf %14, %15 : vector<288x64xf32>
    %c0_13 = arith.constant 0 : index
    %c0_14 = arith.constant 0 : index
    %17 = vector.load %arg3[%c0_13, %c0_14] : memref<288x25xf32, #tpu.memory_space<vmem>>, vector<288x25xf32>
    %cst_15 = arith.constant dense<0.000000e+00> : vector<288x64xf32>
    %18 = tpu.matmul %17, %3, %cst_15 {dimension_numbers = #tpu.dot_dimension_numbers<[1], [0], [0], [1], [0, 0, 1, 1], [], []>} : vector<288x25xf32>, vector<25x64xf32>, vector<288x64xf32> -> vector<288x64xf32>
    %19 = vector.broadcast %4 : vector<1x64xf32> to vector<288x64xf32>
    %20 = arith.addf %18, %19 : vector<288x64xf32>
    %cst_16 = arith.constant dense<0.000000e+00> : vector<64xf32>
    %21 = vector.multi_reduction <add>, %8, %cst_16 [0] : vector<288x64xf32> to vector<64xf32>
    %22 = vector.shape_cast %21 : vector<64xf32> to vector<1x64xf32>
    %cst_17 = arith.constant dense<0.000000e+00> : vector<64xf32>
    %23 = vector.multi_reduction <add>, %12, %cst_17 [0] : vector<288x64xf32> to vector<64xf32>
    %24 = vector.shape_cast %23 : vector<64xf32> to vector<1x64xf32>
    %25 = arith.addf %22, %24 : vector<1x64xf32>
    %cst_18 = arith.constant dense<0.000000e+00> : vector<64xf32>
    %26 = vector.multi_reduction <add>, %16, %cst_18 [0] : vector<288x64xf32> to vector<64xf32>
    %27 = vector.shape_cast %26 : vector<64xf32> to vector<1x64xf32>
    %28 = arith.addf %25, %27 : vector<1x64xf32>
    %cst_19 = arith.constant dense<0.000000e+00> : vector<64xf32>
    %29 = vector.multi_reduction <add>, %20, %cst_19 [0] : vector<288x64xf32> to vector<64xf32>
    %30 = vector.shape_cast %29 : vector<64xf32> to vector<1x64xf32>
    %31 = arith.addf %28, %30 : vector<1x64xf32>
    %cst_20 = arith.constant 1.152000e+03 : f32
    %32 = vector.broadcast %cst_20 : f32 to vector<1x64xf32>
    %33 = arith.divf %31, %32 : vector<1x64xf32>
    %34 = vector.broadcast %33 : vector<1x64xf32> to vector<288x64xf32>
    %35 = arith.subf %8, %34 : vector<288x64xf32>
    %36 = arith.mulf %35, %35 : vector<288x64xf32>
    %cst_21 = arith.constant dense<0.000000e+00> : vector<64xf32>
    %37 = vector.multi_reduction <add>, %36, %cst_21 [0] : vector<288x64xf32> to vector<64xf32>
    %38 = vector.shape_cast %37 : vector<64xf32> to vector<1x64xf32>
    %39 = vector.broadcast %33 : vector<1x64xf32> to vector<288x64xf32>
    %40 = arith.subf %12, %39 : vector<288x64xf32>
    %41 = arith.mulf %40, %40 : vector<288x64xf32>
    %cst_22 = arith.constant dense<0.000000e+00> : vector<64xf32>
    %42 = vector.multi_reduction <add>, %41, %cst_22 [0] : vector<288x64xf32> to vector<64xf32>
    %43 = vector.shape_cast %42 : vector<64xf32> to vector<1x64xf32>
    %44 = arith.addf %38, %43 : vector<1x64xf32>
    %45 = vector.broadcast %33 : vector<1x64xf32> to vector<288x64xf32>
    %46 = arith.subf %16, %45 : vector<288x64xf32>
    %47 = arith.mulf %46, %46 : vector<288x64xf32>
    %cst_23 = arith.constant dense<0.000000e+00> : vector<64xf32>
    %48 = vector.multi_reduction <add>, %47, %cst_23 [0] : vector<288x64xf32> to vector<64xf32>
    %49 = vector.shape_cast %48 : vector<64xf32> to vector<1x64xf32>
    %50 = arith.addf %44, %49 : vector<1x64xf32>
    %51 = vector.broadcast %33 : vector<1x64xf32> to vector<288x64xf32>
    %52 = arith.subf %20, %51 : vector<288x64xf32>
    %53 = arith.mulf %52, %52 : vector<288x64xf32>
    %cst_24 = arith.constant dense<0.000000e+00> : vector<64xf32>
    %54 = vector.multi_reduction <add>, %53, %cst_24 [0] : vector<288x64xf32> to vector<64xf32>
    %55 = vector.shape_cast %54 : vector<64xf32> to vector<1x64xf32>
    %56 = arith.addf %50, %55 : vector<1x64xf32>
    %cst_25 = arith.constant 1.152000e+03 : f32
    %57 = vector.broadcast %cst_25 : f32 to vector<1x64xf32>
    %58 = arith.divf %56, %57 : vector<1x64xf32>
    %cst_26 = arith.constant 9.99999974E-6 : f32
    %59 = vector.broadcast %cst_26 : f32 to vector<1x64xf32>
    %60 = arith.addf %58, %59 : vector<1x64xf32>
    %61 = math.rsqrt %60 : vector<1x64xf32>
    %c0_27 = arith.constant 0 : index
    %c0_28 = arith.constant 0 : index
    %62 = vector.load %arg7[%c0_27, %c0_28] : memref<1x64xf32, #tpu.memory_space<vmem>>, vector<1x64xf32>
    %63 = arith.mulf %61, %62 : vector<1x64xf32>
    %c0_29 = arith.constant 0 : index
    %c0_30 = arith.constant 0 : index
    %64 = vector.load %arg8[%c0_29, %c0_30] : memref<1x64xf32, #tpu.memory_space<vmem>>, vector<1x64xf32>
    %65 = vector.broadcast %33 : vector<1x64xf32> to vector<288x64xf32>
    %66 = arith.subf %8, %65 : vector<288x64xf32>
    %67 = vector.broadcast %63 : vector<1x64xf32> to vector<288x64xf32>
    %68 = arith.mulf %66, %67 : vector<288x64xf32>
    %69 = vector.broadcast %64 : vector<1x64xf32> to vector<288x64xf32>
    %70 = arith.addf %68, %69 : vector<288x64xf32>
    %cst_31 = arith.constant 0.000000e+00 : f32
    %71 = vector.broadcast %cst_31 : f32 to vector<288x64xf32>
    %72 = arith.maximumf %70, %71 : vector<288x64xf32>
    %73 = vector.broadcast %33 : vector<1x64xf32> to vector<288x64xf32>
    %74 = arith.subf %12, %73 : vector<288x64xf32>
    %75 = vector.broadcast %63 : vector<1x64xf32> to vector<288x64xf32>
    %76 = arith.mulf %74, %75 : vector<288x64xf32>
    %77 = vector.broadcast %64 : vector<1x64xf32> to vector<288x64xf32>
    %78 = arith.addf %76, %77 : vector<288x64xf32>
    %cst_32 = arith.constant 0.000000e+00 : f32
    %79 = vector.broadcast %cst_32 : f32 to vector<288x64xf32>
    %80 = arith.maximumf %78, %79 : vector<288x64xf32>
    %81 = vector.broadcast %33 : vector<1x64xf32> to vector<288x64xf32>
    %82 = arith.subf %16, %81 : vector<288x64xf32>
    %83 = vector.broadcast %63 : vector<1x64xf32> to vector<288x64xf32>
    %84 = arith.mulf %82, %83 : vector<288x64xf32>
    %85 = vector.broadcast %64 : vector<1x64xf32> to vector<288x64xf32>
    %86 = arith.addf %84, %85 : vector<288x64xf32>
    %cst_33 = arith.constant 0.000000e+00 : f32
    %87 = vector.broadcast %cst_33 : f32 to vector<288x64xf32>
    %88 = arith.maximumf %86, %87 : vector<288x64xf32>
    %89 = vector.broadcast %33 : vector<1x64xf32> to vector<288x64xf32>
    %90 = arith.subf %20, %89 : vector<288x64xf32>
    %91 = vector.broadcast %63 : vector<1x64xf32> to vector<288x64xf32>
    %92 = arith.mulf %90, %91 : vector<288x64xf32>
    %93 = vector.broadcast %64 : vector<1x64xf32> to vector<288x64xf32>
    %94 = arith.addf %92, %93 : vector<288x64xf32>
    %cst_34 = arith.constant 0.000000e+00 : f32
    %95 = vector.broadcast %cst_34 : f32 to vector<288x64xf32>
    %96 = arith.maximumf %94, %95 : vector<288x64xf32>
    %97 = arith.maximumf %72, %80 : vector<288x64xf32>
    %98 = arith.maximumf %88, %96 : vector<288x64xf32>
    %99 = arith.maximumf %97, %98 : vector<288x64xf32>
    %c0_35 = arith.constant 0 : index
    %c0_36 = arith.constant 0 : index
    %100 = vector.load %arg9[%c0_35, %c0_36] : memref<1x64xf32, #tpu.memory_space<vmem>>, vector<1x64xf32>
    %101 = vector.broadcast %100 : vector<1x64xf32> to vector<288x64xf32>
    %102 = arith.mulf %99, %101 : vector<288x64xf32>
    %c0_37 = arith.constant 0 : index
    %c0_38 = arith.constant 0 : index
    %103 = vector.load %arg10[%c0_37, %c0_38] : memref<288x64xf32, #tpu.memory_space<vmem>>, vector<288x64xf32>
    tpu.vector_store %arg10[%c0_37, %c0_38], %102 {strides = array<i32>} : memref<288x64xf32, #tpu.memory_space<vmem>>, vector<288x64xf32>,
    return
  }
}

module attributes {stable_mosaic.version = 11 : i64} {
  func.func @_conv_bn_relu_pool_kernel(%arg0: memref<32x800xf32, #tpu.memory_space<vmem>>, %arg1: memref<32x800xf32, #tpu.memory_space<vmem>>, %arg2: memref<32x800xf32, #tpu.memory_space<vmem>>, %arg3: memref<32x800xf32, #tpu.memory_space<vmem>>, %arg4: memref<800x64xf32, #tpu.memory_space<vmem>>, %arg5: memref<800x1xf32, #tpu.memory_space<vmem>>, %arg6: memref<1x64xf32, #tpu.memory_space<vmem>>, %arg7: memref<1x64xf32, #tpu.memory_space<vmem>>, %arg8: memref<1x64xf32, #tpu.memory_space<vmem>>, %arg9: memref<1x64xf32, #tpu.memory_space<vmem>>, %arg10: memref<32x64xf32, #tpu.memory_space<vmem>>) attributes {dimension_semantics = [], scalar_prefetch = 0 : i64, scratch_operands = 0 : i64, tpu.core_type = #tpu.core_type<tc>} {
    %c0 = arith.constant 0 : index
    %c0_0 = arith.constant 0 : index
    %0 = vector.load %arg4[%c0, %c0_0] : memref<800x64xf32, #tpu.memory_space<vmem>>, vector<800x64xf32>
    %c0_1 = arith.constant 0 : index
    %c0_2 = arith.constant 0 : index
    %1 = vector.load %arg5[%c0_1, %c0_2] : memref<800x1xf32, #tpu.memory_space<vmem>>, vector<800x1xf32>
    %2 = vector.broadcast %1 : vector<800x1xf32> to vector<800x64xf32>
    %3 = arith.mulf %0, %2 : vector<800x64xf32>
    %c0_3 = arith.constant 0 : index
    %c0_4 = arith.constant 0 : index
    %4 = vector.load %arg6[%c0_3, %c0_4] : memref<1x64xf32, #tpu.memory_space<vmem>>, vector<1x64xf32>
    %c0_5 = arith.constant 0 : index
    %c0_6 = arith.constant 0 : index
    %5 = vector.load %arg0[%c0_5, %c0_6] : memref<32x800xf32, #tpu.memory_space<vmem>>, vector<32x800xf32>
    %cst = arith.constant dense<0.000000e+00> : vector<32x64xf32>
    %6 = tpu.matmul %5, %3, %cst {dimension_numbers = #tpu.dot_dimension_numbers<[1], [0], [0], [1], [0, 0, 1, 1], [], []>} : vector<32x800xf32>, vector<800x64xf32>, vector<32x64xf32> -> vector<32x64xf32>
    %7 = vector.broadcast %4 : vector<1x64xf32> to vector<32x64xf32>
    %8 = arith.addf %6, %7 : vector<32x64xf32>
    %c0_7 = arith.constant 0 : index
    %c0_8 = arith.constant 0 : index
    %9 = vector.load %arg1[%c0_7, %c0_8] : memref<32x800xf32, #tpu.memory_space<vmem>>, vector<32x800xf32>
    %cst_9 = arith.constant dense<0.000000e+00> : vector<32x64xf32>
    %10 = tpu.matmul %9, %3, %cst_9 {dimension_numbers = #tpu.dot_dimension_numbers<[1], [0], [0], [1], [0, 0, 1, 1], [], []>} : vector<32x800xf32>, vector<800x64xf32>, vector<32x64xf32> -> vector<32x64xf32>
    %11 = vector.broadcast %4 : vector<1x64xf32> to vector<32x64xf32>
    %12 = arith.addf %10, %11 : vector<32x64xf32>
    %c0_10 = arith.constant 0 : index
    %c0_11 = arith.constant 0 : index
    %13 = vector.load %arg2[%c0_10, %c0_11] : memref<32x800xf32, #tpu.memory_space<vmem>>, vector<32x800xf32>
    %cst_12 = arith.constant dense<0.000000e+00> : vector<32x64xf32>
    %14 = tpu.matmul %13, %3, %cst_12 {dimension_numbers = #tpu.dot_dimension_numbers<[1], [0], [0], [1], [0, 0, 1, 1], [], []>} : vector<32x800xf32>, vector<800x64xf32>, vector<32x64xf32> -> vector<32x64xf32>
    %15 = vector.broadcast %4 : vector<1x64xf32> to vector<32x64xf32>
    %16 = arith.addf %14, %15 : vector<32x64xf32>
    %c0_13 = arith.constant 0 : index
    %c0_14 = arith.constant 0 : index
    %17 = vector.load %arg3[%c0_13, %c0_14] : memref<32x800xf32, #tpu.memory_space<vmem>>, vector<32x800xf32>
    %cst_15 = arith.constant dense<0.000000e+00> : vector<32x64xf32>
    %18 = tpu.matmul %17, %3, %cst_15 {dimension_numbers = #tpu.dot_dimension_numbers<[1], [0], [0], [1], [0, 0, 1, 1], [], []>} : vector<32x800xf32>, vector<800x64xf32>, vector<32x64xf32> -> vector<32x64xf32>
    %19 = vector.broadcast %4 : vector<1x64xf32> to vector<32x64xf32>
    %20 = arith.addf %18, %19 : vector<32x64xf32>
    %cst_16 = arith.constant dense<0.000000e+00> : vector<64xf32>
    %21 = vector.multi_reduction <add>, %8, %cst_16 [0] : vector<32x64xf32> to vector<64xf32>
    %22 = vector.shape_cast %21 : vector<64xf32> to vector<1x64xf32>
    %cst_17 = arith.constant dense<0.000000e+00> : vector<64xf32>
    %23 = vector.multi_reduction <add>, %12, %cst_17 [0] : vector<32x64xf32> to vector<64xf32>
    %24 = vector.shape_cast %23 : vector<64xf32> to vector<1x64xf32>
    %25 = arith.addf %22, %24 : vector<1x64xf32>
    %cst_18 = arith.constant dense<0.000000e+00> : vector<64xf32>
    %26 = vector.multi_reduction <add>, %16, %cst_18 [0] : vector<32x64xf32> to vector<64xf32>
    %27 = vector.shape_cast %26 : vector<64xf32> to vector<1x64xf32>
    %28 = arith.addf %25, %27 : vector<1x64xf32>
    %cst_19 = arith.constant dense<0.000000e+00> : vector<64xf32>
    %29 = vector.multi_reduction <add>, %20, %cst_19 [0] : vector<32x64xf32> to vector<64xf32>
    %30 = vector.shape_cast %29 : vector<64xf32> to vector<1x64xf32>
    %31 = arith.addf %28, %30 : vector<1x64xf32>
    %cst_20 = arith.constant 1.280000e+02 : f32
    %32 = vector.broadcast %cst_20 : f32 to vector<1x64xf32>
    %33 = arith.divf %31, %32 : vector<1x64xf32>
    %34 = vector.broadcast %33 : vector<1x64xf32> to vector<32x64xf32>
    %35 = arith.subf %8, %34 : vector<32x64xf32>
    %36 = arith.mulf %35, %35 : vector<32x64xf32>
    %cst_21 = arith.constant dense<0.000000e+00> : vector<64xf32>
    %37 = vector.multi_reduction <add>, %36, %cst_21 [0] : vector<32x64xf32> to vector<64xf32>
    %38 = vector.shape_cast %37 : vector<64xf32> to vector<1x64xf32>
    %39 = vector.broadcast %33 : vector<1x64xf32> to vector<32x64xf32>
    %40 = arith.subf %12, %39 : vector<32x64xf32>
    %41 = arith.mulf %40, %40 : vector<32x64xf32>
    %cst_22 = arith.constant dense<0.000000e+00> : vector<64xf32>
    %42 = vector.multi_reduction <add>, %41, %cst_22 [0] : vector<32x64xf32> to vector<64xf32>
    %43 = vector.shape_cast %42 : vector<64xf32> to vector<1x64xf32>
    %44 = arith.addf %38, %43 : vector<1x64xf32>
    %45 = vector.broadcast %33 : vector<1x64xf32> to vector<32x64xf32>
    %46 = arith.subf %16, %45 : vector<32x64xf32>
    %47 = arith.mulf %46, %46 : vector<32x64xf32>
    %cst_23 = arith.constant dense<0.000000e+00> : vector<64xf32>
    %48 = vector.multi_reduction <add>, %47, %cst_23 [0] : vector<32x64xf32> to vector<64xf32>
    %49 = vector.shape_cast %48 : vector<64xf32> to vector<1x64xf32>
    %50 = arith.addf %44, %49 : vector<1x64xf32>
    %51 = vector.broadcast %33 : vector<1x64xf32> to vector<32x64xf32>
    %52 = arith.subf %20, %51 : vector<32x64xf32>
    %53 = arith.mulf %52, %52 : vector<32x64xf32>
    %cst_24 = arith.constant dense<0.000000e+00> : vector<64xf32>
    %54 = vector.multi_reduction <add>, %53, %cst_24 [0] : vector<32x64xf32> to vector<64xf32>
    %55 = vector.shape_cast %54 : vector<64xf32> to vector<1x64xf32>
    %56 = arith.addf %50, %55 : vector<1x64xf32>
    %cst_25 = arith.constant 1.280000e+02 : f32
    %57 = vector.broadcast %cst_25 : f32 to vector<1x64xf32>
    %58 = arith.divf %56, %57 : vector<1x64xf32>
    %cst_26 = arith.constant 9.99999974E-6 : f32
    %59 = vector.broadcast %cst_26 : f32 to vector<1x64xf32>
    %60 = arith.addf %58, %59 : vector<1x64xf32>
    %61 = math.rsqrt %60 : vector<1x64xf32>
    %c0_27 = arith.constant 0 : index
    %c0_28 = arith.constant 0 : index
    %62 = vector.load %arg7[%c0_27, %c0_28] : memref<1x64xf32, #tpu.memory_space<vmem>>, vector<1x64xf32>
    %63 = arith.mulf %61, %62 : vector<1x64xf32>
    %c0_29 = arith.constant 0 : index
    %c0_30 = arith.constant 0 : index
    %64 = vector.load %arg8[%c0_29, %c0_30] : memref<1x64xf32, #tpu.memory_space<vmem>>, vector<1x64xf32>
    %65 = vector.broadcast %33 : vector<1x64xf32> to vector<32x64xf32>
    %66 = arith.subf %8, %65 : vector<32x64xf32>
    %67 = vector.broadcast %63 : vector<1x64xf32> to vector<32x64xf32>
    %68 = arith.mulf %66, %67 : vector<32x64xf32>
    %69 = vector.broadcast %64 : vector<1x64xf32> to vector<32x64xf32>
    %70 = arith.addf %68, %69 : vector<32x64xf32>
    %cst_31 = arith.constant 0.000000e+00 : f32
    %71 = vector.broadcast %cst_31 : f32 to vector<32x64xf32>
    %72 = arith.maximumf %70, %71 : vector<32x64xf32>
    %73 = vector.broadcast %33 : vector<1x64xf32> to vector<32x64xf32>
    %74 = arith.subf %12, %73 : vector<32x64xf32>
    %75 = vector.broadcast %63 : vector<1x64xf32> to vector<32x64xf32>
    %76 = arith.mulf %74, %75 : vector<32x64xf32>
    %77 = vector.broadcast %64 : vector<1x64xf32> to vector<32x64xf32>
    %78 = arith.addf %76, %77 : vector<32x64xf32>
    %cst_32 = arith.constant 0.000000e+00 : f32
    %79 = vector.broadcast %cst_32 : f32 to vector<32x64xf32>
    %80 = arith.maximumf %78, %79 : vector<32x64xf32>
    %81 = vector.broadcast %33 : vector<1x64xf32> to vector<32x64xf32>
    %82 = arith.subf %16, %81 : vector<32x64xf32>
    %83 = vector.broadcast %63 : vector<1x64xf32> to vector<32x64xf32>
    %84 = arith.mulf %82, %83 : vector<32x64xf32>
    %85 = vector.broadcast %64 : vector<1x64xf32> to vector<32x64xf32>
    %86 = arith.addf %84, %85 : vector<32x64xf32>
    %cst_33 = arith.constant 0.000000e+00 : f32
    %87 = vector.broadcast %cst_33 : f32 to vector<32x64xf32>
    %88 = arith.maximumf %86, %87 : vector<32x64xf32>
    %89 = vector.broadcast %33 : vector<1x64xf32> to vector<32x64xf32>
    %90 = arith.subf %20, %89 : vector<32x64xf32>
    %91 = vector.broadcast %63 : vector<1x64xf32> to vector<32x64xf32>
    %92 = arith.mulf %90, %91 : vector<32x64xf32>
    %93 = vector.broadcast %64 : vector<1x64xf32> to vector<32x64xf32>
    %94 = arith.addf %92, %93 : vector<32x64xf32>
    %cst_34 = arith.constant 0.000000e+00 : f32
    %95 = vector.broadcast %cst_34 : f32 to vector<32x64xf32>
    %96 = arith.maximumf %94, %95 : vector<32x64xf32>
    %97 = arith.maximumf %72, %80 : vector<32x64xf32>
    %98 = arith.maximumf %88, %96 : vector<32x64xf32>
    %99 = arith.maximumf %97, %98 : vector<32x64xf32>
    %c0_35 = arith.constant 0 : index
    %c0_36 = arith.constant 0 : index
    %100 = vector.load %arg9[%c0_35, %c0_36] : memref<1x64xf32, #tpu.memory_space<vmem>>, vector<1x64xf32>
    %101 = vector.broadcast %100 : vector<1x64xf32> to vector<32x64xf32>
    %102 = arith.mulf %99, %101 : vector<32x64xf32>
    %c0_37 = arith.constant 0 : index
    %c0_38 = arith.constant 0 : index
    %103 = vector.load %arg10[%c0_37, %c0_38] : memref<32x64xf32, #tpu.memory_space<vmem>>, vector<32x64xf32>
    tpu.vector_store %arg10[%c0_37, %c0_38], %102 {strides = array<i32>} : memref<32x64xf32, #tpu.memory_space<vmem>>, vector<32x64xf32>,
    return
  }
}

module attributes {stable_mosaic.version = 11 : i64} {
  func.func @_fm_tail_kernel(%arg0: memref<2x1024xf32, #tpu.memory_space<vmem>>, %arg1: memref<1024x100xf32, #tpu.memory_space<vmem>>, %arg2: memref<1x100xf32, #tpu.memory_space<vmem>>, %arg3: memref<100x200xf32, #tpu.memory_space<vmem>>, %arg4: memref<1x200xf32, #tpu.memory_space<vmem>>, %arg5: memref<200x200xf32, #tpu.memory_space<vmem>>, %arg6: memref<1x200xf32, #tpu.memory_space<vmem>>, %arg7: memref<200x1632xf32, #tpu.memory_space<vmem>>, %arg8: memref<1x1632xf32, #tpu.memory_space<vmem>>, %arg9: memref<1x1632xf32, #tpu.memory_space<vmem>>) attributes {dimension_semantics = [], scalar_prefetch = 0 : i64, scratch_operands = 0 : i64, tpu.core_type = #tpu.core_type<tc>} {
    %c0 = arith.constant 0 : index
    %c0_0 = arith.constant 0 : index
    %0 = vector.load %arg0[%c0, %c0_0] : memref<2x1024xf32, #tpu.memory_space<vmem>>, vector<2x1024xf32>
    %c0_1 = arith.constant 0 : index
    %c0_2 = arith.constant 0 : index
    %1 = vector.load %arg1[%c0_1, %c0_2] : memref<1024x100xf32, #tpu.memory_space<vmem>>, vector<1024x100xf32>
    %cst = arith.constant dense<0.000000e+00> : vector<2x100xf32>
    %2 = tpu.matmul %0, %1, %cst {dimension_numbers = #tpu.dot_dimension_numbers<[1], [0], [0], [1], [0, 0, 1, 1], [], []>} : vector<2x1024xf32>, vector<1024x100xf32>, vector<2x100xf32> -> vector<2x100xf32>
    %c0_3 = arith.constant 0 : index
    %c0_4 = arith.constant 0 : index
    %3 = vector.load %arg2[%c0_3, %c0_4] : memref<1x100xf32, #tpu.memory_space<vmem>>, vector<1x100xf32>
    %4 = vector.broadcast %3 : vector<1x100xf32> to vector<2x100xf32>
    %5 = arith.addf %2, %4 : vector<2x100xf32>
    %cst_5 = arith.constant 0.000000e+00 : f32
    %6 = vector.broadcast %cst_5 : f32 to vector<2x100xf32>
    %7 = arith.maximumf %5, %6 : vector<2x100xf32>
    %c0_6 = arith.constant 0 : index
    %c0_7 = arith.constant 0 : index
    %8 = vector.load %arg3[%c0_6, %c0_7] : memref<100x200xf32, #tpu.memory_space<vmem>>, vector<100x200xf32>
    %cst_8 = arith.constant dense<0.000000e+00> : vector<2x200xf32>
    %9 = tpu.matmul %7, %8, %cst_8 {dimension_numbers = #tpu.dot_dimension_numbers<[1], [0], [0], [1], [0, 0, 1, 1], [], []>} : vector<2x100xf32>, vector<100x200xf32>, vector<2x200xf32> -> vector<2x200xf32>
    %c0_9 = arith.constant 0 : index
    %c0_10 = arith.constant 0 : index
    %10 = vector.load %arg4[%c0_9, %c0_10] : memref<1x200xf32, #tpu.memory_space<vmem>>, vector<1x200xf32>
    %11 = vector.broadcast %10 : vector<1x200xf32> to vector<2x200xf32>
    %12 = arith.addf %9, %11 : vector<2x200xf32>
    %cst_11 = arith.constant 0.000000e+00 : f32
    %13 = vector.broadcast %cst_11 : f32 to vector<2x200xf32>
    %14 = arith.maximumf %12, %13 : vector<2x200xf32>
    %cst_12 = arith.constant dense<0.000000e+00> : vector<200xf32>
    %15 = vector.multi_reduction <add>, %14, %cst_12 [0] : vector<2x200xf32> to vector<200xf32>
    %16 = vector.shape_cast %15 : vector<200xf32> to vector<1x200xf32>
    %cst_13 = arith.constant 2.000000e+00 : f32
    %17 = vector.broadcast %cst_13 : f32 to vector<1x200xf32>
    %18 = arith.divf %16, %17 : vector<1x200xf32>
    %c0_14 = arith.constant 0 : index
    %c0_15 = arith.constant 0 : index
    %19 = vector.load %arg5[%c0_14, %c0_15] : memref<200x200xf32, #tpu.memory_space<vmem>>, vector<200x200xf32>
    %cst_16 = arith.constant dense<0.000000e+00> : vector<1x200xf32>
    %20 = tpu.matmul %18, %19, %cst_16 {dimension_numbers = #tpu.dot_dimension_numbers<[1], [0], [0], [1], [0, 0, 1, 1], [], []>} : vector<1x200xf32>, vector<200x200xf32>, vector<1x200xf32> -> vector<1x200xf32>
    %c0_17 = arith.constant 0 : index
    %c0_18 = arith.constant 0 : index
    %21 = vector.load %arg6[%c0_17, %c0_18] : memref<1x200xf32, #tpu.memory_space<vmem>>, vector<1x200xf32>
    %22 = arith.addf %20, %21 : vector<1x200xf32>
    %cst_19 = arith.constant 0.000000e+00 : f32
    %23 = vector.broadcast %cst_19 : f32 to vector<1x200xf32>
    %24 = arith.maximumf %22, %23 : vector<1x200xf32>
    %c0_20 = arith.constant 0 : index
    %c0_21 = arith.constant 0 : index
    %25 = vector.load %arg7[%c0_20, %c0_21] : memref<200x1632xf32, #tpu.memory_space<vmem>>, vector<200x1632xf32>
    %cst_22 = arith.constant dense<0.000000e+00> : vector<1x1632xf32>
    %26 = tpu.matmul %24, %25, %cst_22 {dimension_numbers = #tpu.dot_dimension_numbers<[1], [0], [0], [1], [0, 0, 1, 1], [], []>} : vector<1x200xf32>, vector<200x1632xf32>, vector<1x1632xf32> -> vector<1x1632xf32>
    %c0_23 = arith.constant 0 : index
    %c0_24 = arith.constant 0 : index
    %27 = vector.load %arg8[%c0_23, %c0_24] : memref<1x1632xf32, #tpu.memory_space<vmem>>, vector<1x1632xf32>
    %28 = arith.addf %26, %27 : vector<1x1632xf32>
    %29 = arith.negf %28 : vector<1x1632xf32>
    %30 = math.exp %29 : vector<1x1632xf32>
    %cst_25 = arith.constant 1.000000e+00 : f32
    %31 = vector.broadcast %cst_25 : f32 to vector<1x1632xf32>
    %32 = arith.addf %31, %30 : vector<1x1632xf32>
    %33 = arith.divf %31, %32 : vector<1x1632xf32>
    %c0_26 = arith.constant 0 : index
    %c0_27 = arith.constant 0 : index
    %34 = vector.load %arg9[%c0_26, %c0_27] : memref<1x1632xf32, #tpu.memory_space<vmem>>, vector<1x1632xf32>
    tpu.vector_store %arg9[%c0_26, %c0_27], %33 {strides = array<i32>} : memref<1x1632xf32, #tpu.memory_space<vmem>>, vector<1x1632xf32>,
    return
  }
}

module attributes {stable_mosaic.version = 11 : i64} {
  func.func @_dense_tail_kernel(%arg0: memref<2x1024xf32, #tpu.memory_space<vmem>>, %arg1: memref<1x1024xf32, #tpu.memory_space<vmem>>, %arg2: memref<1024x512xf32, #tpu.memory_space<vmem>>, %arg3: memref<1x512xf32, #tpu.memory_space<vmem>>, %arg4: memref<1x512xf32, #tpu.memory_space<vmem>>, %arg5: memref<1x512xf32, #tpu.memory_space<vmem>>, %arg6: memref<1x512xf32, #tpu.memory_space<vmem>>, %arg7: memref<512x10xf32, #tpu.memory_space<vmem>>, %arg8: memref<1x10xf32, #tpu.memory_space<vmem>>, %arg9: memref<2x10xf32, #tpu.memory_space<vmem>>) attributes {dimension_semantics = [], scalar_prefetch = 0 : i64, scratch_operands = 0 : i64, tpu.core_type = #tpu.core_type<tc>} {
    %c0 = arith.constant 0 : index
    %c0_0 = arith.constant 0 : index
    %0 = vector.load %arg0[%c0, %c0_0] : memref<2x1024xf32, #tpu.memory_space<vmem>>, vector<2x1024xf32>
    %c0_1 = arith.constant 0 : index
    %c0_2 = arith.constant 0 : index
    %1 = vector.load %arg1[%c0_1, %c0_2] : memref<1x1024xf32, #tpu.memory_space<vmem>>, vector<1x1024xf32>
    %2 = vector.broadcast %1 : vector<1x1024xf32> to vector<2x1024xf32>
    %3 = arith.mulf %0, %2 : vector<2x1024xf32>
    %c0_3 = arith.constant 0 : index
    %c0_4 = arith.constant 0 : index
    %4 = vector.load %arg2[%c0_3, %c0_4] : memref<1024x512xf32, #tpu.memory_space<vmem>>, vector<1024x512xf32>
    %cst = arith.constant dense<0.000000e+00> : vector<2x512xf32>
    %5 = tpu.matmul %3, %4, %cst {dimension_numbers = #tpu.dot_dimension_numbers<[1], [0], [0], [1], [0, 0, 1, 1], [], []>} : vector<2x1024xf32>, vector<1024x512xf32>, vector<2x512xf32> -> vector<2x512xf32>
    %c0_5 = arith.constant 0 : index
    %c0_6 = arith.constant 0 : index
    %6 = vector.load %arg3[%c0_5, %c0_6] : memref<1x512xf32, #tpu.memory_space<vmem>>, vector<1x512xf32>
    %7 = vector.broadcast %6 : vector<1x512xf32> to vector<2x512xf32>
    %8 = arith.addf %5, %7 : vector<2x512xf32>
    %cst_7 = arith.constant dense<0.000000e+00> : vector<512xf32>
    %9 = vector.multi_reduction <add>, %8, %cst_7 [0] : vector<2x512xf32> to vector<512xf32>
    %10 = vector.shape_cast %9 : vector<512xf32> to vector<1x512xf32>
    %cst_8 = arith.constant 2.000000e+00 : f32
    %11 = vector.broadcast %cst_8 : f32 to vector<1x512xf32>
    %12 = arith.divf %10, %11 : vector<1x512xf32>
    %13 = vector.broadcast %12 : vector<1x512xf32> to vector<2x512xf32>
    %14 = arith.subf %8, %13 : vector<2x512xf32>
    %15 = arith.mulf %14, %14 : vector<2x512xf32>
    %cst_9 = arith.constant dense<0.000000e+00> : vector<512xf32>
    %16 = vector.multi_reduction <add>, %15, %cst_9 [0] : vector<2x512xf32> to vector<512xf32>
    %17 = vector.shape_cast %16 : vector<512xf32> to vector<1x512xf32>
    %cst_10 = arith.constant 2.000000e+00 : f32
    %18 = vector.broadcast %cst_10 : f32 to vector<1x512xf32>
    %19 = arith.divf %17, %18 : vector<1x512xf32>
    %20 = vector.broadcast %12 : vector<1x512xf32> to vector<2x512xf32>
    %21 = arith.subf %8, %20 : vector<2x512xf32>
    %cst_11 = arith.constant 9.99999974E-6 : f32
    %22 = vector.broadcast %cst_11 : f32 to vector<1x512xf32>
    %23 = arith.addf %19, %22 : vector<1x512xf32>
    %24 = math.rsqrt %23 : vector<1x512xf32>
    %c0_12 = arith.constant 0 : index
    %c0_13 = arith.constant 0 : index
    %25 = vector.load %arg4[%c0_12, %c0_13] : memref<1x512xf32, #tpu.memory_space<vmem>>, vector<1x512xf32>
    %26 = arith.mulf %24, %25 : vector<1x512xf32>
    %27 = vector.broadcast %26 : vector<1x512xf32> to vector<2x512xf32>
    %28 = arith.mulf %21, %27 : vector<2x512xf32>
    %c0_14 = arith.constant 0 : index
    %c0_15 = arith.constant 0 : index
    %29 = vector.load %arg5[%c0_14, %c0_15] : memref<1x512xf32, #tpu.memory_space<vmem>>, vector<1x512xf32>
    %30 = vector.broadcast %29 : vector<1x512xf32> to vector<2x512xf32>
    %31 = arith.addf %28, %30 : vector<2x512xf32>
    %cst_16 = arith.constant 0.000000e+00 : f32
    %32 = vector.broadcast %cst_16 : f32 to vector<2x512xf32>
    %33 = arith.maximumf %31, %32 : vector<2x512xf32>
    %c0_17 = arith.constant 0 : index
    %c0_18 = arith.constant 0 : index
    %34 = vector.load %arg6[%c0_17, %c0_18] : memref<1x512xf32, #tpu.memory_space<vmem>>, vector<1x512xf32>
    %35 = vector.broadcast %34 : vector<1x512xf32> to vector<2x512xf32>
    %36 = arith.mulf %33, %35 : vector<2x512xf32>
    %c0_19 = arith.constant 0 : index
    %c0_20 = arith.constant 0 : index
    %37 = vector.load %arg7[%c0_19, %c0_20] : memref<512x10xf32, #tpu.memory_space<vmem>>, vector<512x10xf32>
    %cst_21 = arith.constant dense<0.000000e+00> : vector<2x10xf32>
    %38 = tpu.matmul %36, %37, %cst_21 {dimension_numbers = #tpu.dot_dimension_numbers<[1], [0], [0], [1], [0, 0, 1, 1], [], []>} : vector<2x512xf32>, vector<512x10xf32>, vector<2x10xf32> -> vector<2x10xf32>
    %c0_22 = arith.constant 0 : index
    %c0_23 = arith.constant 0 : index
    %39 = vector.load %arg8[%c0_22, %c0_23] : memref<1x10xf32, #tpu.memory_space<vmem>>, vector<1x10xf32>
    %40 = vector.broadcast %39 : vector<1x10xf32> to vector<2x10xf32>
    %41 = arith.addf %38, %40 : vector<2x10xf32>
    %c0_24 = arith.constant 0 : index
    %c0_25 = arith.constant 0 : index
    %42 = vector.load %arg9[%c0_24, %c0_25] : memref<2x10xf32, #tpu.memory_space<vmem>>, vector<2x10xf32>
    tpu.vector_store %arg9[%c0_24, %c0_25], %41 {strides = array<i32>} : memref<2x10xf32, #tpu.memory_space<vmem>>, vector<2x10xf32>,
    return
  }
}

</mosaic_0001>

<llo_original>
// kernel: simple_cnn_with_te_apply.5
$region0: #{simple_cnn_with_te_apply.5}
  #allocation0 [shape = 'u32[]', space=smem, size = 0x4, offset = 0x4, fixed_abs, tag = 'smem constant byte address 0x4 - core index']
  #allocation1 [shape = 'u32[72,128]{1,0:T(1,128)}', space=vmem, size = 0x9000, scoped, tag = 'internal scratch']
  %s0 = inlined_call_operand.vmem [shape: f32[288,25], index: 0, kind: input, shape index: {}]
  %s1 = inlined_call_operand.vmem [shape: f32[288,25], index: 1, kind: input, shape index: {}]
  %s2 = inlined_call_operand.vmem [shape: f32[288,25], index: 2, kind: input, shape index: {}]
  %s3 = inlined_call_operand.vmem [shape: f32[288,25], index: 3, kind: input, shape index: {}]
  %s4 = inlined_call_operand.vmem [shape: f32[25,64], index: 4, kind: input, shape index: {}]
  %s5 = inlined_call_operand.vmem [shape: f32[25,1], index: 5, kind: input, shape index: {}]
  %s6 = inlined_call_operand.vmem [shape: f32[1,64], index: 6, kind: input, shape index: {}]
  %s7 = inlined_call_operand.vmem [shape: f32[1,64], index: 7, kind: input, shape index: {}]
  %s8 = inlined_call_operand.vmem [shape: f32[1,64], index: 8, kind: input, shape index: {}]
  %s9 = inlined_call_operand.vmem [shape: f32[1,64], index: 9, kind: input, shape index: {}]
  %s10 = inlined_call_operand.vmem [shape: f32[288,64], index: 10, kind: output, shape index: {}]
  %s11 = sld [smem:[#allocation0]]
  $region50: #{simple_cnn_with_te_apply.5} parent=0
    _
  %s13 = ssub.s32 1, %s11
  %s14 = scalar_select 0, %s13, %s11
  // Predicated region
  $region2: #{simple_cnn_with_te_apply.5} parent=0 // pred_check
    _
  $region3: #{simple_cnn_with_te_apply.5} parent=0 // pred_check_branch
    %16 = sbr.rel (0) target = $region5
  $region4: #{simple_cnn_with_te_apply.5} parent=0 // pred_region
    _
  $region5: #{simple_cnn_with_te_apply.5} parent=0 // pred_fallthru
    _
  // Predicated region
  $region6: #{simple_cnn_with_te_apply.5} parent=0 // pred_check
    _
  $region7: #{simple_cnn_with_te_apply.5} parent=0 // pred_check_branch
    %18 = sbr.rel (0) target = $region9
  $region8: #{simple_cnn_with_te_apply.5} parent=0 // pred_region
    _
  $region9: #{simple_cnn_with_te_apply.5} parent=0 // pred_fallthru
    _
  // Predicated region
  $region10: #{simple_cnn_with_te_apply.5} parent=0 // pred_check
    _
  $region11: #{simple_cnn_with_te_apply.5} parent=0 // pred_check_branch
    %20 = sbr.rel (0) target = $region13
  $region12: #{simple_cnn_with_te_apply.5} parent=0 // pred_region
    _
  $region13: #{simple_cnn_with_te_apply.5} parent=0 // pred_fallthru
    _
  // Predicated region
  $region14: #{simple_cnn_with_te_apply.5} parent=0 // pred_check
    _
  $region15: #{simple_cnn_with_te_apply.5} parent=0 // pred_check_branch
    %22 = sbr.rel (0) target = $region17
  $region16: #{simple_cnn_with_te_apply.5} parent=0 // pred_region
    _
  $region17: #{simple_cnn_with_te_apply.5} parent=0 // pred_fallthru
    _
  // Predicated region
  $region18: #{simple_cnn_with_te_apply.5} parent=0 // pred_check
    _
  $region19: #{simple_cnn_with_te_apply.5} parent=0 // pred_check_branch
    %24 = sbr.rel (0) target = $region21
  $region20: #{simple_cnn_with_te_apply.5} parent=0 // pred_region
    _
  $region21: #{simple_cnn_with_te_apply.5} parent=0 // pred_fallthru
    _
  // Predicated region
  $region22: #{simple_cnn_with_te_apply.5} parent=0 // pred_check
    _
  $region23: #{simple_cnn_with_te_apply.5} parent=0 // pred_check_branch
    %26 = sbr.rel (0) target = $region25
  $region24: #{simple_cnn_with_te_apply.5} parent=0 // pred_region
    _
  $region25: #{simple_cnn_with_te_apply.5} parent=0 // pred_fallthru
    _
  // Predicated region
  $region26: #{simple_cnn_with_te_apply.5} parent=0 // pred_check
    _
  $region27: #{simple_cnn_with_te_apply.5} parent=0 // pred_check_branch
    %28 = sbr.rel (0) target = $region29
  $region28: #{simple_cnn_with_te_apply.5} parent=0 // pred_region
    _
  $region29: #{simple_cnn_with_te_apply.5} parent=0 // pred_fallthru
    _
  // Predicated region
  $region30: #{simple_cnn_with_te_apply.5} parent=0 // pred_check
    _
  $region31: #{simple_cnn_with_te_apply.5} parent=0 // pred_check_branch
    %30 = sbr.rel (0) target = $region33
  $region32: #{simple_cnn_with_te_apply.5} parent=0 // pred_region
    _
  $region33: #{simple_cnn_with_te_apply.5} parent=0 // pred_fallthru
    _
  // Predicated region
  $region34: #{simple_cnn_with_te_apply.5} parent=0 // pred_check
    _
  $region35: #{simple_cnn_with_te_apply.5} parent=0 // pred_check_branch
    %32 = sbr.rel (0) target = $region37
  $region36: #{simple_cnn_with_te_apply.5} parent=0 // pred_region
    _
  $region37: #{simple_cnn_with_te_apply.5} parent=0 // pred_fallthru
    _
  // Predicated region
  $region38: #{simple_cnn_with_te_apply.5} parent=0 // pred_check
    _
  $region39: #{simple_cnn_with_te_apply.5} parent=0 // pred_check_branch
    %34 = sbr.rel (0) target = $region41
  $region40: #{simple_cnn_with_te_apply.5} parent=0 // pred_region
    _
  $region41: #{simple_cnn_with_te_apply.5} parent=0 // pred_fallthru
    _
  %v35 = vld [vmem:[%s4] sm:$0xff]
  %v36 = vld [vmem:[%s4 + $0x8] sm:$0xff]
  %v37 = vld [vmem:[%s4 + $0x10] sm:$0xff]
  %v38 = vld [vmem:[%s4 + $0x18] sm:$0x1]
  %v39 = vld [vmem:[%s5] sm:$0xff]
  %v40 = vld [vmem:[%s5 + $0x8] sm:$0xff]
  %v41 = vld [vmem:[%s5 + $0x10] sm:$0xff]
  %v42 = vld [vmem:[%s5 + $0x18] sm:$0x1]
  %44 = vset.pattern.permute.xlu0 0
  %45 = vperm.xlu0 %44, %v39
  %v46 = vpop.permute.xlu0 %45
  %49 = vset.pattern.permute.xlu0 0
  %50 = vperm.xlu0 %49, %v40
  %v51 = vpop.permute.xlu0 %50
  %54 = vset.pattern.permute.xlu0 0
  %55 = vperm.xlu0 %54, %v41
  %v56 = vpop.permute.xlu0 %55
  %59 = vset.pattern.permute.xlu0 0
  %60 = vperm.xlu0 %59, %v42
  %v61 = vpop.permute.xlu0 %60
  %v63 = vmul.f32 %v35, %v46
  %v64 = vmul.f32 %v36, %v51
  %v65 = vmul.f32 %v37, %v56
  %v66 = vmul.f32 %v38, %v61
  %v67 = vld [vmem:[%s6] sm:$0x1]
  %v68 = vld [vmem:[%s0] sm:$0xff]
  %v69 = vld [vmem:[%s0 + $0x8] sm:$0xff]
  %v70 = vld [vmem:[%s0 + $0x10] sm:$0xff]
  %v71 = vld [vmem:[%s0 + $0x18] sm:$0xff]
  %v72 = vld [vmem:[%s0 + $0x20] sm:$0xff]
  %v73 = vld [vmem:[%s0 + $0x28] sm:$0xff]
  %v74 = vld [vmem:[%s0 + $0x30] sm:$0xff]
  %v75 = vld [vmem:[%s0 + $0x38] sm:$0xff]
  %v76 = vld [vmem:[%s0 + $0x40] sm:$0xff]
  %v77 = vld [vmem:[%s0 + $0x48] sm:$0xff]
  %v78 = vld [vmem:[%s0 + $0x50] sm:$0xff]
  %v79 = vld [vmem:[%s0 + $0x58] sm:$0xff]
  %v80 = vld [vmem:[%s0 + $0x60] sm:$0xff]
  %v81 = vld [vmem:[%s0 + $0x68] sm:$0xff]
  %v82 = vld [vmem:[%s0 + $0x70] sm:$0xff]
  %v83 = vld [vmem:[%s0 + $0x78] sm:$0xff]
  %v84 = vld [vmem:[%s0 + $0x80] sm:$0xff]
  %v85 = vld [vmem:[%s0 + $0x88] sm:$0xff]
  %v86 = vld [vmem:[%s0 + $0x90] sm:$0xff]
  %v87 = vld [vmem:[%s0 + $0x98] sm:$0xff]
  %v88 = vld [vmem:[%s0 + $0xa0] sm:$0xff]
  %v89 = vld [vmem:[%s0 + $0xa8] sm:$0xff]
  %v90 = vld [vmem:[%s0 + $0xb0] sm:$0xff]
  %v91 = vld [vmem:[%s0 + $0xb8] sm:$0xff]
  %v92 = vld [vmem:[%s0 + $0xc0] sm:$0xff]
  %v93 = vld [vmem:[%s0 + $0xc8] sm:$0xff]
  %v94 = vld [vmem:[%s0 + $0xd0] sm:$0xff]
  %v95 = vld [vmem:[%s0 + $0xd8] sm:$0xff]
  %v96 = vld [vmem:[%s0 + $0xe0] sm:$0xff]
  %v97 = vld [vmem:[%s0 + $0xe8] sm:$0xff]
  %v98 = vld [vmem:[%s0 + $0xf0] sm:$0xff]
  %v99 = vld [vmem:[%s0 + $0xf8] sm:$0xff]
  %v100 = vld [vmem:[%s0 + $0x100] sm:$0xff]
  %v101 = vld [vmem:[%s0 + $0x108] sm:$0xff]
  %v102 = vld [vmem:[%s0 + $0x110] sm:$0xff]
  %v103 = vld [vmem:[%s0 + $0x118] sm:$0xff]
  %v105 = vperm.slane %v67, 0
  %vm107 = vcmask 203776
  %v109 = vsel %vm107, %v68, 0
  %v112 = vsel %vm107, %v69, 0
  %v115 = vsel %vm107, %v70, 0
  %v118 = vsel %vm107, %v71, 0
  %v121 = vsel %vm107, %v72, 0
  %v124 = vsel %vm107, %v73, 0
  %v127 = vsel %vm107, %v74, 0
  %v130 = vsel %vm107, %v75, 0
  %v133 = vsel %vm107, %v76, 0
  %v136 = vsel %vm107, %v77, 0
  %v139 = vsel %vm107, %v78, 0
  %v142 = vsel %vm107, %v79, 0
  %v145 = vsel %vm107, %v80, 0
  %v148 = vsel %vm107, %v81, 0
  %v151 = vsel %vm107, %v82, 0
  %v154 = vsel %vm107, %v83, 0
  %v157 = vsel %vm107, %v84, 0
  %v160 = vsel %vm107, %v85, 0
  %v163 = vsel %vm107, %v86, 0
  %v166 = vsel %vm107, %v87, 0
  %v169 = vsel %vm107, %v88, 0
  %v172 = vsel %vm107, %v89, 0
  %v175 = vsel %vm107, %v90, 0
  %v178 = vsel %vm107, %v91, 0
  %v181 = vsel %vm107, %v92, 0
  %v184 = vsel %vm107, %v93, 0
  %v187 = vsel %vm107, %v94, 0
  %v190 = vsel %vm107, %v95, 0
  %v193 = vsel %vm107, %v96, 0
  %v196 = vsel %vm107, %v97, 0
  %v199 = vsel %vm107, %v98, 0
  %v202 = vsel %vm107, %v99, 0
  %v205 = vsel %vm107, %v100, 0
  %v208 = vsel %vm107, %v101, 0
  %v211 = vsel %vm107, %v102, 0
  %v214 = vsel %vm107, %v103, 0
  %vm216 = vcmask 1040384
  %v218 = vsel %vm216, %v66, 0
  %220 = vmatpush.msra.mxu0 0.0
  %221 = vmatpush.msra.mxu0 0.0
  %222 = vmatpush.msra.mxu0 0.0
  %223 = vmatpush.msra.mxu0 0.0
  %224 = vmatpush.msra.mxu0 0.0
  %225 = vmatpush.msra.mxu0 0.0
  %226 = vmatpush.msra.mxu0 0.0
  %227 = vmatpush.msra.mxu0 0.0
  %228 = vmatpush.msra.mxu0 0.0
  %229 = vmatpush.msra.mxu0 0.0
  %230 = vmatpush.msra.mxu0 0.0
  %231 = vmatpush.msra.mxu0 0.0
  %232 = vmatpush.msra.mxu0 %v218
  %233 = vmatpush.msra.mxu0 %v65
  %234 = vmatpush.msra.mxu0 %v64
  %235 = vmatpush.msra.mxu0 %v63
  %236 = vmatmul.f32.gmra.mxu0 %v109
  %v237 = vpop.f32.mrf.mxu0
  %v238 = vadd.f32 %v105, %v237
  %239 = vmatmul.f32.gmra.mxu0 %v112
  %v240 = vpop.f32.mrf.mxu0
  %v241 = vadd.f32 %v105, %v240
  %242 = vmatmul.f32.gmra.mxu0 %v115
  %v243 = vpop.f32.mrf.mxu0
  %v244 = vadd.f32 %v105, %v243
  %245 = vmatmul.f32.gmra.mxu0 %v118
  %v246 = vpop.f32.mrf.mxu0
  %v247 = vadd.f32 %v105, %v246
  %248 = vmatmul.f32.gmra.mxu0 %v121
  %v249 = vpop.f32.mrf.mxu0
  %v250 = vadd.f32 %v105, %v249
  %251 = vmatmul.f32.gmra.mxu0 %v124
  %v252 = vpop.f32.mrf.mxu0
  %v253 = vadd.f32 %v105, %v252
  %254 = vmatmul.f32.gmra.mxu0 %v127
  %v255 = vpop.f32.mrf.mxu0
  %v256 = vadd.f32 %v105, %v255
  %257 = vmatmul.f32.gmra.mxu0 %v130
  %v258 = vpop.f32.mrf.mxu0
  %v259 = vadd.f32 %v105, %v258
  %260 = vmatmul.f32.gmra.mxu0 %v133
  %v261 = vpop.f32.mrf.mxu0
  %v262 = vadd.f32 %v105, %v261
  %263 = vmatmul.f32.gmra.mxu0 %v136
  %v264 = vpop.f32.mrf.mxu0
  %v265 = vadd.f32 %v105, %v264
  %266 = vmatmul.f32.gmra.mxu0 %v139
  %v267 = vpop.f32.mrf.mxu0
  %v268 = vadd.f32 %v105, %v267
  %269 = vmatmul.f32.gmra.mxu0 %v142
  %v270 = vpop.f32.mrf.mxu0
  %v271 = vadd.f32 %v105, %v270
  %272 = vmatmul.f32.gmra.mxu0 %v145
  %v273 = vpop.f32.mrf.mxu0
  %v274 = vadd.f32 %v105, %v273
  %275 = vmatmul.f32.gmra.mxu0 %v148
  %v276 = vpop.f32.mrf.mxu0
  %v277 = vadd.f32 %v105, %v276
  %278 = vmatmul.f32.gmra.mxu0 %v151
  %v279 = vpop.f32.mrf.mxu0
  %v280 = vadd.f32 %v105, %v279
  %281 = vmatmul.f32.gmra.mxu0 %v154
  %v282 = vpop.f32.mrf.mxu0
  %v283 = vadd.f32 %v105, %v282
  %284 = vmatmul.f32.gmra.mxu0 %v157
  %v285 = vpop.f32.mrf.mxu0
  %v286 = vadd.f32 %v105, %v285
  %287 = vmatmul.f32.gmra.mxu0 %v160
  %v288 = vpop.f32.mrf.mxu0
  %v289 = vadd.f32 %v105, %v288
  %290 = vmatmul.f32.gmra.mxu0 %v163
  %v291 = vpop.f32.mrf.mxu0
  %v292 = vadd.f32 %v105, %v291
  %293 = vmatmul.f32.gmra.mxu0 %v166
  %v294 = vpop.f32.mrf.mxu0
  %v295 = vadd.f32 %v105, %v294
  %296 = vmatmul.f32.gmra.mxu0 %v169
  %v297 = vpop.f32.mrf.mxu0
  %v298 = vadd.f32 %v105, %v297
  %299 = vmatmul.f32.gmra.mxu0 %v172
  %v300 = vpop.f32.mrf.mxu0
  %v301 = vadd.f32 %v105, %v300
  %302 = vmatmul.f32.gmra.mxu0 %v175
  %v303 = vpop.f32.mrf.mxu0
  %v304 = vadd.f32 %v105, %v303
  %305 = vmatmul.f32.gmra.mxu0 %v178
  %v306 = vpop.f32.mrf.mxu0
  %v307 = vadd.f32 %v105, %v306
  %308 = vmatmul.f32.gmra.mxu0 %v181
  %v309 = vpop.f32.mrf.mxu0
  %v310 = vadd.f32 %v105, %v309
  %311 = vmatmul.f32.gmra.mxu0 %v184
  %v312 = vpop.f32.mrf.mxu0
  %v313 = vadd.f32 %v105, %v312
  %314 = vmatmul.f32.gmra.mxu0 %v187
  %v315 = vpop.f32.mrf.mxu0
  %v316 = vadd.f32 %v105, %v315
  %317 = vmatmul.f32.gmra.mxu0 %v190
  %v318 = vpop.f32.mrf.mxu0
  %v319 = vadd.f32 %v105, %v318
  %320 = vmatmul.f32.gmra.mxu0 %v193
  %v321 = vpop.f32.mrf.mxu0
  %v322 = vadd.f32 %v105, %v321
  %323 = vmatmul.f32.gmra.mxu0 %v196
  %v324 = vpop.f32.mrf.mxu0
  %v325 = vadd.f32 %v105, %v324
  %326 = vmatmul.f32.gmra.mxu0 %v199
  %v327 = vpop.f32.mrf.mxu0
  %v328 = vadd.f32 %v105, %v327
  %329 = vmatmul.f32.gmra.mxu0 %v202
  %v330 = vpop.f32.mrf.mxu0
  %v331 = vadd.f32 %v105, %v330
  %332 = vmatmul.f32.gmra.mxu0 %v205
  %v333 = vpop.f32.mrf.mxu0
  %v334 = vadd.f32 %v105, %v333
  %335 = vmatmul.f32.gmra.mxu0 %v208
  %v336 = vpop.f32.mrf.mxu0
  %v337 = vadd.f32 %v105, %v336
  %338 = vmatmul.f32.gmra.mxu0 %v211
  %v339 = vpop.f32.mrf.mxu0
  %v340 = vadd.f32 %v105, %v339
  %341 = vmatmul.f32.gmra.mxu0 %v214
  %v342 = vpop.f32.mrf.mxu0
  %v343 = vadd.f32 %v105, %v342
  %344 = vdwg.mxu0
  %v345 = vld [vmem:[%s1] sm:$0xff]
  %v346 = vld [vmem:[%s1 + $0x8] sm:$0xff]
  %v347 = vld [vmem:[%s1 + $0x10] sm:$0xff]
  %v348 = vld [vmem:[%s1 + $0x18] sm:$0xff]
  %v349 = vld [vmem:[%s1 + $0x20] sm:$0xff]
  %v350 = vld [vmem:[%s1 + $0x28] sm:$0xff]
  %v351 = vld [vmem:[%s1 + $0x30] sm:$0xff]
  %v352 = vld [vmem:[%s1 + $0x38] sm:$0xff]
  %v353 = vld [vmem:[%s1 + $0x40] sm:$0xff]
  %v354 = vld [vmem:[%s1 + $0x48] sm:$0xff]
  %v355 = vld [vmem:[%s1 + $0x50] sm:$0xff]
  %v356 = vld [vmem:[%s1 + $0x58] sm:$0xff]
  %v357 = vld [vmem:[%s1 + $0x60] sm:$0xff]
  %v358 = vld [vmem:[%s1 + $0x68] sm:$0xff]
  %v359 = vld [vmem:[%s1 + $0x70] sm:$0xff]
  %v360 = vld [vmem:[%s1 + $0x78] sm:$0xff]
  %v361 = vld [vmem:[%s1 + $0x80] sm:$0xff]
  %v362 = vld [vmem:[%s1 + $0x88] sm:$0xff]
  %v363 = vld [vmem:[%s1 + $0x90] sm:$0xff]
  %v364 = vld [vmem:[%s1 + $0x98] sm:$0xff]
  %v365 = vld [vmem:[%s1 + $0xa0] sm:$0xff]
  %v366 = vld [vmem:[%s1 + $0xa8] sm:$0xff]
  %v367 = vld [vmem:[%s1 + $0xb0] sm:$0xff]
  %v368 = vld [vmem:[%s1 + $0xb8] sm:$0xff]
  %v369 = vld [vmem:[%s1 + $0xc0] sm:$0xff]
  %v370 = vld [vmem:[%s1 + $0xc8] sm:$0xff]
  %v371 = vld [vmem:[%s1 + $0xd0] sm:$0xff]
  %v372 = vld [vmem:[%s1 + $0xd8] sm:$0xff]
  %v373 = vld [vmem:[%s1 + $0xe0] sm:$0xff]
  %v374 = vld [vmem:[%s1 + $0xe8] sm:$0xff]
  %v375 = vld [vmem:[%s1 + $0xf0] sm:$0xff]
  %v376 = vld [vmem:[%s1 + $0xf8] sm:$0xff]
  %v377 = vld [vmem:[%s1 + $0x100] sm:$0xff]
  %v378 = vld [vmem:[%s1 + $0x108] sm:$0xff]
  %v379 = vld [vmem:[%s1 + $0x110] sm:$0xff]
  %v380 = vld [vmem:[%s1 + $0x118] sm:$0xff]
  %v382 = vsel %vm107, %v345, 0
  %v385 = vsel %vm107, %v346, 0
  %v388 = vsel %vm107, %v347, 0
  %v391 = vsel %vm107, %v348, 0
  %v394 = vsel %vm107, %v349, 0
  %v397 = vsel %vm107, %v350, 0
  %v400 = vsel %vm107, %v351, 0
  %v403 = vsel %vm107, %v352, 0
  %v406 = vsel %vm107, %v353, 0
  %v409 = vsel %vm107, %v354, 0
  %v412 = vsel %vm107, %v355, 0
  %v415 = vsel %vm107, %v356, 0
  %v418 = vsel %vm107, %v357, 0
  %v421 = vsel %vm107, %v358, 0
  %v424 = vsel %vm107, %v359, 0
  %v427 = vsel %vm107, %v360, 0
  %v430 = vsel %vm107, %v361, 0
  %v433 = vsel %vm107, %v362, 0
  %v436 = vsel %vm107, %v363, 0
  %v439 = vsel %vm107, %v364, 0
  %v442 = vsel %vm107, %v365, 0
  %v445 = vsel %vm107, %v366, 0
  %v448 = vsel %vm107, %v367, 0
  %v451 = vsel %vm107, %v368, 0
  %v454 = vsel %vm107, %v369, 0
  %v457 = vsel %vm107, %v370, 0
  %v460 = vsel %vm107, %v371, 0
  %v463 = vsel %vm107, %v372, 0
  %v466 = vsel %vm107, %v373, 0
  %v469 = vsel %vm107, %v374, 0
  %v472 = vsel %vm107, %v375, 0
  %v475 = vsel %vm107, %v376, 0
  %v478 = vsel %vm107, %v377, 0
  %v481 = vsel %vm107, %v378, 0
  %v484 = vsel %vm107, %v379, 0
  %v487 = vsel %vm107, %v380, 0
  %489 = vmatpush.msra.mxu0 0.0
  %490 = vmatpush.msra.mxu0 0.0
  %491 = vmatpush.msra.mxu0 0.0
  %492 = vmatpush.msra.mxu0 0.0
  %493 = vmatpush.msra.mxu0 0.0
  %494 = vmatpush.msra.mxu0 0.0
  %495 = vmatpush.msra.mxu0 0.0
  %496 = vmatpush.msra.mxu0 0.0
  %497 = vmatpush.msra.mxu0 0.0
  %498 = vmatpush.msra.mxu0 0.0
  %499 = vmatpush.msra.mxu0 0.0
  %500 = vmatpush.msra.mxu0 0.0
  %501 = vmatpush.msra.mxu0 %v218
  %502 = vmatpush.msra.mxu0 %v65
  %503 = vmatpush.msra.mxu0 %v64
  %504 = vmatpush.msra.mxu0 %v63
  %505 = vmatmul.f32.gmra.mxu0 %v382
  %v506 = vpop.f32.mrf.mxu0
  %v507 = vadd.f32 %v105, %v506
  %508 = vmatmul.f32.gmra.mxu0 %v385
  %v509 = vpop.f32.mrf.mxu0
  %v510 = vadd.f32 %v105, %v509
  %511 = vmatmul.f32.gmra.mxu0 %v388
  %v512 = vpop.f32.mrf.mxu0
  %v513 = vadd.f32 %v105, %v512
  %514 = vmatmul.f32.gmra.mxu0 %v391
  %v515 = vpop.f32.mrf.mxu0
  %v516 = vadd.f32 %v105, %v515
  %517 = vmatmul.f32.gmra.mxu0 %v394
  %v518 = vpop.f32.mrf.mxu0
  %v519 = vadd.f32 %v105, %v518
  %520 = vmatmul.f32.gmra.mxu0 %v397
  %v521 = vpop.f32.mrf.mxu0
  %v522 = vadd.f32 %v105, %v521
  %523 = vmatmul.f32.gmra.mxu0 %v400
  %v524 = vpop.f32.mrf.mxu0
  %v525 = vadd.f32 %v105, %v524
  %526 = vmatmul.f32.gmra.mxu0 %v403
  %v527 = vpop.f32.mrf.mxu0
  %v528 = vadd.f32 %v105, %v527
  %529 = vmatmul.f32.gmra.mxu0 %v406
  %v530 = vpop.f32.mrf.mxu0
  %v531 = vadd.f32 %v105, %v530
  %532 = vmatmul.f32.gmra.mxu0 %v409
  %v533 = vpop.f32.mrf.mxu0
  %v534 = vadd.f32 %v105, %v533
  %535 = vmatmul.f32.gmra.mxu0 %v412
  %v536 = vpop.f32.mrf.mxu0
  %v537 = vadd.f32 %v105, %v536
  %538 = vmatmul.f32.gmra.mxu0 %v415
  %v539 = vpop.f32.mrf.mxu0
  %v540 = vadd.f32 %v105, %v539
  %541 = vmatmul.f32.gmra.mxu0 %v418
  %v542 = vpop.f32.mrf.mxu0
  %v543 = vadd.f32 %v105, %v542
  %544 = vmatmul.f32.gmra.mxu0 %v421
  %v545 = vpop.f32.mrf.mxu0
  %v546 = vadd.f32 %v105, %v545
  %547 = vmatmul.f32.gmra.mxu0 %v424
  %v548 = vpop.f32.mrf.mxu0
  %v549 = vadd.f32 %v105, %v548
  %550 = vmatmul.f32.gmra.mxu0 %v427
  %v551 = vpop.f32.mrf.mxu0
  %v552 = vadd.f32 %v105, %v551
  %553 = vmatmul.f32.gmra.mxu0 %v430
  %v554 = vpop.f32.mrf.mxu0
  %v555 = vadd.f32 %v105, %v554
  %556 = vmatmul.f32.gmra.mxu0 %v433
  %v557 = vpop.f32.mrf.mxu0
  %v558 = vadd.f32 %v105, %v557
  %559 = vmatmul.f32.gmra.mxu0 %v436
  %v560 = vpop.f32.mrf.mxu0
  %v561 = vadd.f32 %v105, %v560
  %562 = vmatmul.f32.gmra.mxu0 %v439
  %v563 = vpop.f32.mrf.mxu0
  %v564 = vadd.f32 %v105, %v563
  %565 = vmatmul.f32.gmra.mxu0 %v442
  %v566 = vpop.f32.mrf.mxu0
  %v567 = vadd.f32 %v105, %v566
  %568 = vmatmul.f32.gmra.mxu0 %v445
  %v569 = vpop.f32.mrf.mxu0
  %v570 = vadd.f32 %v105, %v569
  %571 = vmatmul.f32.gmra.mxu0 %v448
  %v572 = vpop.f32.mrf.mxu0
  %v573 = vadd.f32 %v105, %v572
  %574 = vmatmul.f32.gmra.mxu0 %v451
  %v575 = vpop.f32.mrf.mxu0
  %v576 = vadd.f32 %v105, %v575
  %577 = vmatmul.f32.gmra.mxu0 %v454
  %v578 = vpop.f32.mrf.mxu0
  %v579 = vadd.f32 %v105, %v578
  %580 = vmatmul.f32.gmra.mxu0 %v457
  %v581 = vpop.f32.mrf.mxu0
  %v582 = vadd.f32 %v105, %v581
  %583 = vmatmul.f32.gmra.mxu0 %v460
  %v584 = vpop.f32.mrf.mxu0
  %v585 = vadd.f32 %v105, %v584
  %586 = vmatmul.f32.gmra.mxu0 %v463
  %v587 = vpop.f32.mrf.mxu0
  %v588 = vadd.f32 %v105, %v587
  %589 = vmatmul.f32.gmra.mxu0 %v466
  %v590 = vpop.f32.mrf.mxu0
  %v591 = vadd.f32 %v105, %v590
  %592 = vmatmul.f32.gmra.mxu0 %v469
  %v593 = vpop.f32.mrf.mxu0
  %v594 = vadd.f32 %v105, %v593
  %595 = vmatmul.f32.gmra.mxu0 %v472
  %v596 = vpop.f32.mrf.mxu0
  %v597 = vadd.f32 %v105, %v596
  %598 = vmatmul.f32.gmra.mxu0 %v475
  %v599 = vpop.f32.mrf.mxu0
  %v600 = vadd.f32 %v105, %v599
  %601 = vmatmul.f32.gmra.mxu0 %v478
  %v602 = vpop.f32.mrf.mxu0
  %v603 = vadd.f32 %v105, %v602
  %604 = vmatmul.f32.gmra.mxu0 %v481
  %v605 = vpop.f32.mrf.mxu0
  %v606 = vadd.f32 %v105, %v605
  %607 = vmatmul.f32.gmra.mxu0 %v484
  %v608 = vpop.f32.mrf.mxu0
  %v609 = vadd.f32 %v105, %v608
  %610 = vmatmul.f32.gmra.mxu0 %v487
  %v611 = vpop.f32.mrf.mxu0
  %v612 = vadd.f32 %v105, %v611
  %613 = vdwg.mxu0
  %v614 = vld [vmem:[%s2] sm:$0xff]
  %v615 = vld [vmem:[%s2 + $0x8] sm:$0xff]
  %v616 = vld [vmem:[%s2 + $0x10] sm:$0xff]
  %v617 = vld [vmem:[%s2 + $0x18] sm:$0xff]
  %v618 = vld [vmem:[%s2 + $0x20] sm:$0xff]
  %v619 = vld [vmem:[%s2 + $0x28] sm:$0xff]
  %v620 = vld [vmem:[%s2 + $0x30] sm:$0xff]
  %v621 = vld [vmem:[%s2 + $0x38] sm:$0xff]
  %v622 = vld [vmem:[%s2 + $0x40] sm:$0xff]
  %v623 = vld [vmem:[%s2 + $0x48] sm:$0xff]
  %v624 = vld [vmem:[%s2 + $0x50] sm:$0xff]
  %v625 = vld [vmem:[%s2 + $0x58] sm:$0xff]
  %v626 = vld [vmem:[%s2 + $0x60] sm:$0xff]
  %v627 = vld [vmem:[%s2 + $0x68] sm:$0xff]
  %v628 = vld [vmem:[%s2 + $0x70] sm:$0xff]
  %v629 = vld [vmem:[%s2 + $0x78] sm:$0xff]
  %v630 = vld [vmem:[%s2 + $0x80] sm:$0xff]
  %v631 = vld [vmem:[%s2 + $0x88] sm:$0xff]
  %v632 = vld [vmem:[%s2 + $0x90] sm:$0xff]
  %v633 = vld [vmem:[%s2 + $0x98] sm:$0xff]
  %v634 = vld [vmem:[%s2 + $0xa0] sm:$0xff]
  %v635 = vld [vmem:[%s2 + $0xa8] sm:$0xff]
  %v636 = vld [vmem:[%s2 + $0xb0] sm:$0xff]
  %v637 = vld [vmem:[%s2 + $0xb8] sm:$0xff]
  %v638 = vld [vmem:[%s2 + $0xc0] sm:$0xff]
  %v639 = vld [vmem:[%s2 + $0xc8] sm:$0xff]
  %v640 = vld [vmem:[%s2 + $0xd0] sm:$0xff]
  %v641 = vld [vmem:[%s2 + $0xd8] sm:$0xff]
  %v642 = vld [vmem:[%s2 + $0xe0] sm:$0xff]
  %v643 = vld [vmem:[%s2 + $0xe8] sm:$0xff]
  %v644 = vld [vmem:[%s2 + $0xf0] sm:$0xff]
  %v645 = vld [vmem:[%s2 + $0xf8] sm:$0xff]
  %v646 = vld [vmem:[%s2 + $0x100] sm:$0xff]
  %v647 = vld [vmem:[%s2 + $0x108] sm:$0xff]
  %v648 = vld [vmem:[%s2 + $0x110] sm:$0xff]
  %v649 = vld [vmem:[%s2 + $0x118] sm:$0xff]
  %v651 = vsel %vm107, %v614, 0
  %v654 = vsel %vm107, %v615, 0
  %v657 = vsel %vm107, %v616, 0
  %v660 = vsel %vm107, %v617, 0
  %v663 = vsel %vm107, %v618, 0
  %v666 = vsel %vm107, %v619, 0
  %v669 = vsel %vm107, %v620, 0
  %v672 = vsel %vm107, %v621, 0
  %v675 = vsel %vm107, %v622, 0
  %v678 = vsel %vm107, %v623, 0
  %v681 = vsel %vm107, %v624, 0
  %v684 = vsel %vm107, %v625, 0
  %v687 = vsel %vm107, %v626, 0
  %v690 = vsel %vm107, %v627, 0
  %v693 = vsel %vm107, %v628, 0
  %v696 = vsel %vm107, %v629, 0
  %v699 = vsel %vm107, %v630, 0
  %v702 = vsel %vm107, %v631, 0
  %v705 = vsel %vm107, %v632, 0
  %v708 = vsel %vm107, %v633, 0
  %v711 = vsel %vm107, %v634, 0
  %v714 = vsel %vm107, %v635, 0
  %v717 = vsel %vm107, %v636, 0
  %v720 = vsel %vm107, %v637, 0
  %v723 = vsel %vm107, %v638, 0
  %v726 = vsel %vm107, %v639, 0
  %v729 = vsel %vm107, %v640, 0
  %v732 = vsel %vm107, %v641, 0
  %v735 = vsel %vm107, %v642, 0
  %v738 = vsel %vm107, %v643, 0
  %v741 = vsel %vm107, %v644, 0
  %v744 = vsel %vm107, %v645, 0
  %v747 = vsel %vm107, %v646, 0
  %v750 = vsel %vm107, %v647, 0
  %v753 = vsel %vm107, %v648, 0
  %v756 = vsel %vm107, %v649, 0
  %758 = vmatpush.msra.mxu0 0.0
  %759 = vmatpush.msra.mxu0 0.0
  %760 = vmatpush.msra.mxu0 0.0
  %761 = vmatpush.msra.mxu0 0.0
  %762 = vmatpush.msra.mxu0 0.0
  %763 = vmatpush.msra.mxu0 0.0
  %764 = vmatpush.msra.mxu0 0.0
  %765 = vmatpush.msra.mxu0 0.0
  %766 = vmatpush.msra.mxu0 0.0
  %767 = vmatpush.msra.mxu0 0.0
  %768 = vmatpush.msra.mxu0 0.0
  %769 = vmatpush.msra.mxu0 0.0
  %770 = vmatpush.msra.mxu0 %v218
  %771 = vmatpush.msra.mxu0 %v65
  %772 = vmatpush.msra.mxu0 %v64
  %773 = vmatpush.msra.mxu0 %v63
  %774 = vmatmul.f32.gmra.mxu0 %v651
  %v775 = vpop.f32.mrf.mxu0
  %v776 = vadd.f32 %v105, %v775
  %777 = vmatmul.f32.gmra.mxu0 %v654
  %v778 = vpop.f32.mrf.mxu0
  %v779 = vadd.f32 %v105, %v778
  %780 = vmatmul.f32.gmra.mxu0 %v657
  %v781 = vpop.f32.mrf.mxu0
  %v782 = vadd.f32 %v105, %v781
  %783 = vmatmul.f32.gmra.mxu0 %v660
  %v784 = vpop.f32.mrf.mxu0
  %v785 = vadd.f32 %v105, %v784
  %786 = vmatmul.f32.gmra.mxu0 %v663
  %v787 = vpop.f32.mrf.mxu0
  %v788 = vadd.f32 %v105, %v787
  %789 = vmatmul.f32.gmra.mxu0 %v666
  %v790 = vpop.f32.mrf.mxu0
  %v791 = vadd.f32 %v105, %v790
  %792 = vmatmul.f32.gmra.mxu0 %v669
  %v793 = vpop.f32.mrf.mxu0
  %v794 = vadd.f32 %v105, %v793
  %795 = vmatmul.f32.gmra.mxu0 %v672
  %v796 = vpop.f32.mrf.mxu0
  %v797 = vadd.f32 %v105, %v796
  %798 = vmatmul.f32.gmra.mxu0 %v675
  %v799 = vpop.f32.mrf.mxu0
  %v800 = vadd.f32 %v105, %v799
  %801 = vmatmul.f32.gmra.mxu0 %v678
  %v802 = vpop.f32.mrf.mxu0
  %v803 = vadd.f32 %v105, %v802
  %804 = vmatmul.f32.gmra.mxu0 %v681
  %v805 = vpop.f32.mrf.mxu0
  %v806 = vadd.f32 %v105, %v805
  %807 = vmatmul.f32.gmra.mxu0 %v684
  %v808 = vpop.f32.mrf.mxu0
  %v809 = vadd.f32 %v105, %v808
  %810 = vmatmul.f32.gmra.mxu0 %v687
  %v811 = vpop.f32.mrf.mxu0
  %v812 = vadd.f32 %v105, %v811
  %813 = vmatmul.f32.gmra.mxu0 %v690
  %v814 = vpop.f32.mrf.mxu0
  %v815 = vadd.f32 %v105, %v814
  %816 = vmatmul.f32.gmra.mxu0 %v693
  %v817 = vpop.f32.mrf.mxu0
  %v818 = vadd.f32 %v105, %v817
  %819 = vmatmul.f32.gmra.mxu0 %v696
  %v820 = vpop.f32.mrf.mxu0
  %v821 = vadd.f32 %v105, %v820
  %822 = vmatmul.f32.gmra.mxu0 %v699
  %v823 = vpop.f32.mrf.mxu0
  %v824 = vadd.f32 %v105, %v823
  %825 = vmatmul.f32.gmra.mxu0 %v702
  %v826 = vpop.f32.mrf.mxu0
  %v827 = vadd.f32 %v105, %v826
  %828 = vmatmul.f32.gmra.mxu0 %v705
  %v829 = vpop.f32.mrf.mxu0
  %v830 = vadd.f32 %v105, %v829
  %831 = vmatmul.f32.gmra.mxu0 %v708
  %v832 = vpop.f32.mrf.mxu0
  %v833 = vadd.f32 %v105, %v832
  %834 = vmatmul.f32.gmra.mxu0 %v711
  %v835 = vpop.f32.mrf.mxu0
  %v836 = vadd.f32 %v105, %v835
  %837 = vmatmul.f32.gmra.mxu0 %v714
  %v838 = vpop.f32.mrf.mxu0
  %v839 = vadd.f32 %v105, %v838
  %840 = vmatmul.f32.gmra.mxu0 %v717
  %v841 = vpop.f32.mrf.mxu0
  %v842 = vadd.f32 %v105, %v841
  %843 = vmatmul.f32.gmra.mxu0 %v720
  %v844 = vpop.f32.mrf.mxu0
  %v845 = vadd.f32 %v105, %v844
  %846 = vmatmul.f32.gmra.mxu0 %v723
  %v847 = vpop.f32.mrf.mxu0
  %v848 = vadd.f32 %v105, %v847
  %849 = vmatmul.f32.gmra.mxu0 %v726
  %v850 = vpop.f32.mrf.mxu0
  %v851 = vadd.f32 %v105, %v850
  %852 = vmatmul.f32.gmra.mxu0 %v729
  %v853 = vpop.f32.mrf.mxu0
  %v854 = vadd.f32 %v105, %v853
  %855 = vmatmul.f32.gmra.mxu0 %v732
  %v856 = vpop.f32.mrf.mxu0
  %v857 = vadd.f32 %v105, %v856
  %858 = vmatmul.f32.gmra.mxu0 %v735
  %v859 = vpop.f32.mrf.mxu0
  %v860 = vadd.f32 %v105, %v859
  %861 = vmatmul.f32.gmra.mxu0 %v738
  %v862 = vpop.f32.mrf.mxu0
  %v863 = vadd.f32 %v105, %v862
  %864 = vmatmul.f32.gmra.mxu0 %v741
  %v865 = vpop.f32.mrf.mxu0
  %v866 = vadd.f32 %v105, %v865
  %867 = vmatmul.f32.gmra.mxu0 %v744
  %v868 = vpop.f32.mrf.mxu0
  %v869 = vadd.f32 %v105, %v868
  %870 = vmatmul.f32.gmra.mxu0 %v747
  %v871 = vpop.f32.mrf.mxu0
  %v872 = vadd.f32 %v105, %v871
  %873 = vmatmul.f32.gmra.mxu0 %v750
  %v874 = vpop.f32.mrf.mxu0
  %v875 = vadd.f32 %v105, %v874
  %876 = vmatmul.f32.gmra.mxu0 %v753
  %v877 = vpop.f32.mrf.mxu0
  %v878 = vadd.f32 %v105, %v877
  %879 = vmatmul.f32.gmra.mxu0 %v756
  %v880 = vpop.f32.mrf.mxu0
  %v881 = vadd.f32 %v105, %v880
  %882 = vdwg.mxu0
  %v883 = vld [vmem:[%s3] sm:$0xff]
  %v884 = vld [vmem:[%s3 + $0x8] sm:$0xff]
  %v885 = vld [vmem:[%s3 + $0x10] sm:$0xff]
  %v886 = vld [vmem:[%s3 + $0x18] sm:$0xff]
  %v887 = vld [vmem:[%s3 + $0x20] sm:$0xff]
  %v888 = vld [vmem:[%s3 + $0x28] sm:$0xff]
  %v889 = vld [vmem:[%s3 + $0x30] sm:$0xff]
  %v890 = vld [vmem:[%s3 + $0x38] sm:$0xff]
  %v891 = vld [vmem:[%s3 + $0x40] sm:$0xff]
  %v892 = vld [vmem:[%s3 + $0x48] sm:$0xff]
  %v893 = vld [vmem:[%s3 + $0x50] sm:$0xff]
  %v894 = vld [vmem:[%s3 + $0x58] sm:$0xff]
  %v895 = vld [vmem:[%s3 + $0x60] sm:$0xff]
  %v896 = vld [vmem:[%s3 + $0x68] sm:$0xff]
  %v897 = vld [vmem:[%s3 + $0x70] sm:$0xff]
  %v898 = vld [vmem:[%s3 + $0x78] sm:$0xff]
  %v899 = vld [vmem:[%s3 + $0x80] sm:$0xff]
  %v900 = vld [vmem:[%s3 + $0x88] sm:$0xff]
  %v901 = vld [vmem:[%s3 + $0x90] sm:$0xff]
  %v902 = vld [vmem:[%s3 + $0x98] sm:$0xff]
  %v903 = vld [vmem:[%s3 + $0xa0] sm:$0xff]
  %v904 = vld [vmem:[%s3 + $0xa8] sm:$0xff]
  %v905 = vld [vmem:[%s3 + $0xb0] sm:$0xff]
  %v906 = vld [vmem:[%s3 + $0xb8] sm:$0xff]
  %v907 = vld [vmem:[%s3 + $0xc0] sm:$0xff]
  %v908 = vld [vmem:[%s3 + $0xc8] sm:$0xff]
  %v909 = vld [vmem:[%s3 + $0xd0] sm:$0xff]
  %v910 = vld [vmem:[%s3 + $0xd8] sm:$0xff]
  %v911 = vld [vmem:[%s3 + $0xe0] sm:$0xff]
  %v912 = vld [vmem:[%s3 + $0xe8] sm:$0xff]
  %v913 = vld [vmem:[%s3 + $0xf0] sm:$0xff]
  %v914 = vld [vmem:[%s3 + $0xf8] sm:$0xff]
  %v915 = vld [vmem:[%s3 + $0x100] sm:$0xff]
  %v916 = vld [vmem:[%s3 + $0x108] sm:$0xff]
  %v917 = vld [vmem:[%s3 + $0x110] sm:$0xff]
  %v918 = vld [vmem:[%s3 + $0x118] sm:$0xff]
  %v920 = vsel %vm107, %v883, 0
  %v923 = vsel %vm107, %v884, 0
  %v926 = vsel %vm107, %v885, 0
  %v929 = vsel %vm107, %v886, 0
  %v932 = vsel %vm107, %v887, 0
  %v935 = vsel %vm107, %v888, 0
  %v938 = vsel %vm107, %v889, 0
  %v941 = vsel %vm107, %v890, 0
  %v944 = vsel %vm107, %v891, 0
  %v947 = vsel %vm107, %v892, 0
  %v950 = vsel %vm107, %v893, 0
  %v953 = vsel %vm107, %v894, 0
  %v956 = vsel %vm107, %v895, 0
  %v959 = vsel %vm107, %v896, 0
  %v962 = vsel %vm107, %v897, 0
  %v965 = vsel %vm107, %v898, 0
  %v968 = vsel %vm107, %v899, 0
  %v971 = vsel %vm107, %v900, 0
  %v974 = vsel %vm107, %v901, 0
  %v977 = vsel %vm107, %v902, 0
  %v980 = vsel %vm107, %v903, 0
  %v983 = vsel %vm107, %v904, 0
  %v986 = vsel %vm107, %v905, 0
  %v989 = vsel %vm107, %v906, 0
  %v992 = vsel %vm107, %v907, 0
  %v995 = vsel %vm107, %v908, 0
  %v998 = vsel %vm107, %v909, 0
  %v1001 = vsel %vm107, %v910, 0
  %v1004 = vsel %vm107, %v911, 0
  %v1007 = vsel %vm107, %v912, 0
  %v1010 = vsel %vm107, %v913, 0
  %v1013 = vsel %vm107, %v914, 0
  %v1016 = vsel %vm107, %v915, 0
  %v1019 = vsel %vm107, %v916, 0
  %v1022 = vsel %vm107, %v917, 0
  %v1025 = vsel %vm107, %v918, 0
  %1027 = vmatpush.msra.mxu0 0.0
  %1028 = vmatpush.msra.mxu0 0.0
  %1029 = vmatpush.msra.mxu0 0.0
  %1030 = vmatpush.msra.mxu0 0.0
  %1031 = vmatpush.msra.mxu0 0.0
  %1032 = vmatpush.msra.mxu0 0.0
  %1033 = vmatpush.msra.mxu0 0.0
  %1034 = vmatpush.msra.mxu0 0.0
  %1035 = vmatpush.msra.mxu0 0.0
  %1036 = vmatpush.msra.mxu0 0.0
  %1037 = vmatpush.msra.mxu0 0.0
  %1038 = vmatpush.msra.mxu0 0.0
  %1039 = vmatpush.msra.mxu0 %v218
  %1040 = vmatpush.msra.mxu0 %v65
  %1041 = vmatpush.msra.mxu0 %v64
  %1042 = vmatpush.msra.mxu0 %v63
  %1043 = vmatmul.f32.gmra.mxu0 %v920
  %v1044 = vpop.f32.mrf.mxu0
  %v1045 = vadd.f32 %v105, %v1044
  %1046 = vmatmul.f32.gmra.mxu0 %v923
  %v1047 = vpop.f32.mrf.mxu0
  %v1048 = vadd.f32 %v105, %v1047
  %1049 = vmatmul.f32.gmra.mxu0 %v926
  %v1050 = vpop.f32.mrf.mxu0
  %v1051 = vadd.f32 %v105, %v1050
  %1052 = vmatmul.f32.gmra.mxu0 %v929
  %v1053 = vpop.f32.mrf.mxu0
  %v1054 = vadd.f32 %v105, %v1053
  %1055 = vmatmul.f32.gmra.mxu0 %v932
  %v1056 = vpop.f32.mrf.mxu0
  %v1057 = vadd.f32 %v105, %v1056
  %1058 = vmatmul.f32.gmra.mxu0 %v935
  %v1059 = vpop.f32.mrf.mxu0
  %v1060 = vadd.f32 %v105, %v1059
  %1061 = vmatmul.f32.gmra.mxu0 %v938
  %v1062 = vpop.f32.mrf.mxu0
  %v1063 = vadd.f32 %v105, %v1062
  %1064 = vmatmul.f32.gmra.mxu0 %v941
  %v1065 = vpop.f32.mrf.mxu0
  %v1066 = vadd.f32 %v105, %v1065
  %1067 = vmatmul.f32.gmra.mxu0 %v944
  %v1068 = vpop.f32.mrf.mxu0
  %v1069 = vadd.f32 %v105, %v1068
  %1070 = vmatmul.f32.gmra.mxu0 %v947
  %v1071 = vpop.f32.mrf.mxu0
  %v1072 = vadd.f32 %v105, %v1071
  %1073 = vmatmul.f32.gmra.mxu0 %v950
  %v1074 = vpop.f32.mrf.mxu0
  %v1075 = vadd.f32 %v105, %v1074
  %1076 = vmatmul.f32.gmra.mxu0 %v953
  %v1077 = vpop.f32.mrf.mxu0
  %v1078 = vadd.f32 %v105, %v1077
  %1079 = vmatmul.f32.gmra.mxu0 %v956
  %v1080 = vpop.f32.mrf.mxu0
  %v1081 = vadd.f32 %v105, %v1080
  %1082 = vmatmul.f32.gmra.mxu0 %v959
  %v1083 = vpop.f32.mrf.mxu0
  %v1084 = vadd.f32 %v105, %v1083
  %1085 = vmatmul.f32.gmra.mxu0 %v962
  %v1086 = vpop.f32.mrf.mxu0
  %v1087 = vadd.f32 %v105, %v1086
  %1088 = vmatmul.f32.gmra.mxu0 %v965
  %v1089 = vpop.f32.mrf.mxu0
  %v1090 = vadd.f32 %v105, %v1089
  %1091 = vmatmul.f32.gmra.mxu0 %v968
  %v1092 = vpop.f32.mrf.mxu0
  %v1093 = vadd.f32 %v105, %v1092
  %1094 = vmatmul.f32.gmra.mxu0 %v971
  %v1095 = vpop.f32.mrf.mxu0
  %v1096 = vadd.f32 %v105, %v1095
  %1097 = vmatmul.f32.gmra.mxu0 %v974
  %v1098 = vpop.f32.mrf.mxu0
  %v1099 = vadd.f32 %v105, %v1098
  %1100 = vmatmul.f32.gmra.mxu0 %v977
  %v1101 = vpop.f32.mrf.mxu0
  %v1102 = vadd.f32 %v105, %v1101
  %1103 = vmatmul.f32.gmra.mxu0 %v980
  %v1104 = vpop.f32.mrf.mxu0
  %v1105 = vadd.f32 %v105, %v1104
  %1106 = vmatmul.f32.gmra.mxu0 %v983
  %v1107 = vpop.f32.mrf.mxu0
  %v1108 = vadd.f32 %v105, %v1107
  %1109 = vmatmul.f32.gmra.mxu0 %v986
  %v1110 = vpop.f32.mrf.mxu0
  %v1111 = vadd.f32 %v105, %v1110
  %1112 = vmatmul.f32.gmra.mxu0 %v989
  %v1113 = vpop.f32.mrf.mxu0
  %v1114 = vadd.f32 %v105, %v1113
  %1115 = vmatmul.f32.gmra.mxu0 %v992
  %v1116 = vpop.f32.mrf.mxu0
  %v1117 = vadd.f32 %v105, %v1116
  %1118 = vmatmul.f32.gmra.mxu0 %v995
  %v1119 = vpop.f32.mrf.mxu0
  %v1120 = vadd.f32 %v105, %v1119
  %1121 = vmatmul.f32.gmra.mxu0 %v998
  %v1122 = vpop.f32.mrf.mxu0
  %v1123 = vadd.f32 %v105, %v1122
  %1124 = vmatmul.f32.gmra.mxu0 %v1001
  %v1125 = vpop.f32.mrf.mxu0
  %v1126 = vadd.f32 %v105, %v1125
  %1127 = vmatmul.f32.gmra.mxu0 %v1004
  %v1128 = vpop.f32.mrf.mxu0
  %v1129 = vadd.f32 %v105, %v1128
  %1130 = vmatmul.f32.gmra.mxu0 %v1007
  %v1131 = vpop.f32.mrf.mxu0
  %v1132 = vadd.f32 %v105, %v1131
  %1133 = vmatmul.f32.gmra.mxu0 %v1010
  %v1134 = vpop.f32.mrf.mxu0
  %v1135 = vadd.f32 %v105, %v1134
  %1136 = vmatmul.f32.gmra.mxu0 %v1013
  %v1137 = vpop.f32.mrf.mxu0
  %v1138 = vadd.f32 %v105, %v1137
  %1139 = vmatmul.f32.gmra.mxu0 %v1016
  %v1140 = vpop.f32.mrf.mxu0
  %v1141 = vadd.f32 %v105, %v1140
  %1142 = vmatmul.f32.gmra.mxu0 %v1019
  %v1143 = vpop.f32.mrf.mxu0
  %v1144 = vadd.f32 %v105, %v1143
  %1145 = vmatmul.f32.gmra.mxu0 %v1022
  %v1146 = vpop.f32.mrf.mxu0
  %v1147 = vadd.f32 %v105, %v1146
  %1148 = vmatmul.f32.gmra.mxu0 %v1025
  %v1149 = vpop.f32.mrf.mxu0
  %v1150 = vadd.f32 %v105, %v1149
  %1151 = vdwg.mxu0
  %vm1152 = vcmask 523264
  %v1153 = vsel %vm1152, %v238, 0.0
  %v1154 = vsel %vm1152, %v241, 0.0
  %v1155 = vadd.f32 %v1153, %v1154
  %v1156 = vsel %vm1152, %v244, 0.0
  %v1157 = vadd.f32 %v1155, %v1156
  %v1158 = vsel %vm1152, %v247, 0.0
  %v1159 = vadd.f32 %v1157, %v1158
  %v1160 = vsel %vm1152, %v250, 0.0
  %v1161 = vadd.f32 %v1159, %v1160
  %v1162 = vsel %vm1152, %v253, 0.0
  %v1163 = vadd.f32 %v1161, %v1162
  %v1164 = vsel %vm1152, %v256, 0.0
  %v1165 = vadd.f32 %v1163, %v1164
  %v1166 = vsel %vm1152, %v259, 0.0
  %v1167 = vadd.f32 %v1165, %v1166
  %v1168 = vsel %vm1152, %v262, 0.0
  %v1169 = vadd.f32 %v1167, %v1168
  %v1170 = vsel %vm1152, %v265, 0.0
  %v1171 = vadd.f32 %v1169, %v1170
  %v1172 = vsel %vm1152, %v268, 0.0
  %v1173 = vadd.f32 %v1171, %v1172
  %v1174 = vsel %vm1152, %v271, 0.0
  %v1175 = vadd.f32 %v1173, %v1174
  %v1176 = vsel %vm1152, %v274, 0.0
  %v1177 = vadd.f32 %v1175, %v1176
  %v1178 = vsel %vm1152, %v277, 0.0
  %v1179 = vadd.f32 %v1177, %v1178
  %v1180 = vsel %vm1152, %v280, 0.0
  %v1181 = vadd.f32 %v1179, %v1180
  %v1182 = vsel %vm1152, %v283, 0.0
  %v1183 = vadd.f32 %v1181, %v1182
  %v1184 = vsel %vm1152, %v286, 0.0
  %v1185 = vadd.f32 %v1183, %v1184
  %v1186 = vsel %vm1152, %v289, 0.0
  %v1187 = vadd.f32 %v1185, %v1186
  %v1188 = vsel %vm1152, %v292, 0.0
  %v1189 = vadd.f32 %v1187, %v1188
  %v1190 = vsel %vm1152, %v295, 0.0
  %v1191 = vadd.f32 %v1189, %v1190
  %v1192 = vsel %vm1152, %v298, 0.0
  %v1193 = vadd.f32 %v1191, %v1192
  %v1194 = vsel %vm1152, %v301, 0.0
  %v1195 = vadd.f32 %v1193, %v1194
  %v1196 = vsel %vm1152, %v304, 0.0
  %v1197 = vadd.f32 %v1195, %v1196
  %v1198 = vsel %vm1152, %v307, 0.0
  %v1199 = vadd.f32 %v1197, %v1198
  %v1200 = vsel %vm1152, %v310, 0.0
  %v1201 = vadd.f32 %v1199, %v1200
  %v1202 = vsel %vm1152, %v313, 0.0
  %v1203 = vadd.f32 %v1201, %v1202
  %v1204 = vsel %vm1152, %v316, 0.0
  %v1205 = vadd.f32 %v1203, %v1204
  %v1206 = vsel %vm1152, %v319, 0.0
  %v1207 = vadd.f32 %v1205, %v1206
  %v1208 = vsel %vm1152, %v322, 0.0
  %v1209 = vadd.f32 %v1207, %v1208
  %v1210 = vsel %vm1152, %v325, 0.0
  %v1211 = vadd.f32 %v1209, %v1210
  %v1212 = vsel %vm1152, %v328, 0.0
  %v1213 = vadd.f32 %v1211, %v1212
  %v1214 = vsel %vm1152, %v331, 0.0
  %v1215 = vadd.f32 %v1213, %v1214
  %v1216 = vsel %vm1152, %v334, 0.0
  %v1217 = vadd.f32 %v1215, %v1216
  %v1218 = vsel %vm1152, %v337, 0.0
  %v1219 = vadd.f32 %v1217, %v1218
  %v1220 = vsel %vm1152, %v340, 0.0
  %v1221 = vadd.f32 %v1219, %v1220
  %v1222 = vsel %vm1152, %v343, 0.0
  %v1223 = vadd.f32 %v1221, %v1222
  %v1224 = vrot.slane %v1223, 4
  %v1225 = vadd.f32 %v1223, %v1224
  %v1226 = vrot.slane %v1225, 2
  %v1227 = vadd.f32 %v1225, %v1226
  %v1228 = vrot.slane %v1227, 1
  %v1229 = vadd.f32 %v1227, %v1228
  %v1230 = vsel %vm1152, %v507, 0.0
  %v1231 = vsel %vm1152, %v510, 0.0
  %v1232 = vadd.f32 %v1230, %v1231
  %v1233 = vsel %vm1152, %v513, 0.0
  %v1234 = vadd.f32 %v1232, %v1233
  %v1235 = vsel %vm1152, %v516, 0.0
  %v1236 = vadd.f32 %v1234, %v1235
  %v1237 = vsel %vm1152, %v519, 0.0
  %v1238 = vadd.f32 %v1236, %v1237
  %v1239 = vsel %vm1152, %v522, 0.0
  %v1240 = vadd.f32 %v1238, %v1239
  %v1241 = vsel %vm1152, %v525, 0.0
  %v1242 = vadd.f32 %v1240, %v1241
  %v1243 = vsel %vm1152, %v528, 0.0
  %v1244 = vadd.f32 %v1242, %v1243
  %v1245 = vsel %vm1152, %v531, 0.0
  %v1246 = vadd.f32 %v1244, %v1245
  %v1247 = vsel %vm1152, %v534, 0.0
  %v1248 = vadd.f32 %v1246, %v1247
  %v1249 = vsel %vm1152, %v537, 0.0
  %v1250 = vadd.f32 %v1248, %v1249
  %v1251 = vsel %vm1152, %v540, 0.0
  %v1252 = vadd.f32 %v1250, %v1251
  %v1253 = vsel %vm1152, %v543, 0.0
  %v1254 = vadd.f32 %v1252, %v1253
  %v1255 = vsel %vm1152, %v546, 0.0
  %v1256 = vadd.f32 %v1254, %v1255
  %v1257 = vsel %vm1152, %v549, 0.0
  %v1258 = vadd.f32 %v1256, %v1257
  %v1259 = vsel %vm1152, %v552, 0.0
  %v1260 = vadd.f32 %v1258, %v1259
  %v1261 = vsel %vm1152, %v555, 0.0
  %v1262 = vadd.f32 %v1260, %v1261
  %v1263 = vsel %vm1152, %v558, 0.0
  %v1264 = vadd.f32 %v1262, %v1263
  %v1265 = vsel %vm1152, %v561, 0.0
  %v1266 = vadd.f32 %v1264, %v1265
  %v1267 = vsel %vm1152, %v564, 0.0
  %v1268 = vadd.f32 %v1266, %v1267
  %v1269 = vsel %vm1152, %v567, 0.0
  %v1270 = vadd.f32 %v1268, %v1269
  %v1271 = vsel %vm1152, %v570, 0.0
  %v1272 = vadd.f32 %v1270, %v1271
  %v1273 = vsel %vm1152, %v573, 0.0
  %v1274 = vadd.f32 %v1272, %v1273
  %v1275 = vsel %vm1152, %v576, 0.0
  %v1276 = vadd.f32 %v1274, %v1275
  %v1277 = vsel %vm1152, %v579, 0.0
  %v1278 = vadd.f32 %v1276, %v1277
  %v1279 = vsel %vm1152, %v582, 0.0
  %v1280 = vadd.f32 %v1278, %v1279
  %v1281 = vsel %vm1152, %v585, 0.0
  %v1282 = vadd.f32 %v1280, %v1281
  %v1283 = vsel %vm1152, %v588, 0.0
  %v1284 = vadd.f32 %v1282, %v1283
  %v1285 = vsel %vm1152, %v591, 0.0
  %v1286 = vadd.f32 %v1284, %v1285
  %v1287 = vsel %vm1152, %v594, 0.0
  %v1288 = vadd.f32 %v1286, %v1287
  %v1289 = vsel %vm1152, %v597, 0.0
  %v1290 = vadd.f32 %v1288, %v1289
  %v1291 = vsel %vm1152, %v600, 0.0
  %v1292 = vadd.f32 %v1290, %v1291
  %v1293 = vsel %vm1152, %v603, 0.0
  %v1294 = vadd.f32 %v1292, %v1293
  %v1295 = vsel %vm1152, %v606, 0.0
  %v1296 = vadd.f32 %v1294, %v1295
  %v1297 = vsel %vm1152, %v609, 0.0
  %v1298 = vadd.f32 %v1296, %v1297
  %v1299 = vsel %vm1152, %v612, 0.0
  %v1300 = vadd.f32 %v1298, %v1299
  %v1301 = vrot.slane %v1300, 4
  %v1302 = vadd.f32 %v1300, %v1301
  %v1303 = vrot.slane %v1302, 2
  %v1304 = vadd.f32 %v1302, %v1303
  %v1305 = vrot.slane %v1304, 1
  %v1306 = vadd.f32 %v1304, %v1305
  %v1307 = vadd.f32 %v1229, %v1306
  %v1308 = vsel %vm1152, %v776, 0.0
  %v1309 = vsel %vm1152, %v779, 0.0
  %v1310 = vadd.f32 %v1308, %v1309
  %v1311 = vsel %vm1152, %v782, 0.0
  %v1312 = vadd.f32 %v1310, %v1311
  %v1313 = vsel %vm1152, %v785, 0.0
  %v1314 = vadd.f32 %v1312, %v1313
  %v1315 = vsel %vm1152, %v788, 0.0
  %v1316 = vadd.f32 %v1314, %v1315
  %v1317 = vsel %vm1152, %v791, 0.0
  %v1318 = vadd.f32 %v1316, %v1317
  %v1319 = vsel %vm1152, %v794, 0.0
  %v1320 = vadd.f32 %v1318, %v1319
  %v1321 = vsel %vm1152, %v797, 0.0
  %v1322 = vadd.f32 %v1320, %v1321
  %v1323 = vsel %vm1152, %v800, 0.0
  %v1324 = vadd.f32 %v1322, %v1323
  %v1325 = vsel %vm1152, %v803, 0.0
  %v1326 = vadd.f32 %v1324, %v1325
  %v1327 = vsel %vm1152, %v806, 0.0
  %v1328 = vadd.f32 %v1326, %v1327
  %v1329 = vsel %vm1152, %v809, 0.0
  %v1330 = vadd.f32 %v1328, %v1329
  %v1331 = vsel %vm1152, %v812, 0.0
  %v1332 = vadd.f32 %v1330, %v1331
  %v1333 = vsel %vm1152, %v815, 0.0
  %v1334 = vadd.f32 %v1332, %v1333
  %v1335 = vsel %vm1152, %v818, 0.0
  %v1336 = vadd.f32 %v1334, %v1335
  %v1337 = vsel %vm1152, %v821, 0.0
  %v1338 = vadd.f32 %v1336, %v1337
  %v1339 = vsel %vm1152, %v824, 0.0
  %v1340 = vadd.f32 %v1338, %v1339
  %v1341 = vsel %vm1152, %v827, 0.0
  %v1342 = vadd.f32 %v1340, %v1341
  %v1343 = vsel %vm1152, %v830, 0.0
  %v1344 = vadd.f32 %v1342, %v1343
  %v1345 = vsel %vm1152, %v833, 0.0
  %v1346 = vadd.f32 %v1344, %v1345
  %v1347 = vsel %vm1152, %v836, 0.0
  %v1348 = vadd.f32 %v1346, %v1347
  %v1349 = vsel %vm1152, %v839, 0.0
  %v1350 = vadd.f32 %v1348, %v1349
  %v1351 = vsel %vm1152, %v842, 0.0
  %v1352 = vadd.f32 %v1350, %v1351
  %v1353 = vsel %vm1152, %v845, 0.0
  %v1354 = vadd.f32 %v1352, %v1353
  %v1355 = vsel %vm1152, %v848, 0.0
  %v1356 = vadd.f32 %v1354, %v1355
  %v1357 = vsel %vm1152, %v851, 0.0
  %v1358 = vadd.f32 %v1356, %v1357
  %v1359 = vsel %vm1152, %v854, 0.0
  %v1360 = vadd.f32 %v1358, %v1359
  %v1361 = vsel %vm1152, %v857, 0.0
  %v1362 = vadd.f32 %v1360, %v1361
  %v1363 = vsel %vm1152, %v860, 0.0
  %v1364 = vadd.f32 %v1362, %v1363
  %v1365 = vsel %vm1152, %v863, 0.0
  %v1366 = vadd.f32 %v1364, %v1365
  %v1367 = vsel %vm1152, %v866, 0.0
  %v1368 = vadd.f32 %v1366, %v1367
  %v1369 = vsel %vm1152, %v869, 0.0
  %v1370 = vadd.f32 %v1368, %v1369
  %v1371 = vsel %vm1152, %v872, 0.0
  %v1372 = vadd.f32 %v1370, %v1371
  %v1373 = vsel %vm1152, %v875, 0.0
  %v1374 = vadd.f32 %v1372, %v1373
  %v1375 = vsel %vm1152, %v878, 0.0
  %v1376 = vadd.f32 %v1374, %v1375
  %v1377 = vsel %vm1152, %v881, 0.0
  %v1378 = vadd.f32 %v1376, %v1377
  %v1379 = vrot.slane %v1378, 4
  %v1380 = vadd.f32 %v1378, %v1379
  %v1381 = vrot.slane %v1380, 2
  %v1382 = vadd.f32 %v1380, %v1381
  %v1383 = vrot.slane %v1382, 1
  %v1384 = vadd.f32 %v1382, %v1383
  %v1385 = vadd.f32 %v1307, %v1384
  %v1386 = vsel %vm1152, %v1045, 0.0
  %v1387 = vsel %vm1152, %v1048, 0.0
  %v1388 = vadd.f32 %v1386, %v1387
  %v1389 = vsel %vm1152, %v1051, 0.0
  %v1390 = vadd.f32 %v1388, %v1389
  %v1391 = vsel %vm1152, %v1054, 0.0
  %v1392 = vadd.f32 %v1390, %v1391
  %v1393 = vsel %vm1152, %v1057, 0.0
  %v1394 = vadd.f32 %v1392, %v1393
  %v1395 = vsel %vm1152, %v1060, 0.0
  %v1396 = vadd.f32 %v1394, %v1395
  %v1397 = vsel %vm1152, %v1063, 0.0
  %v1398 = vadd.f32 %v1396, %v1397
  %v1399 = vsel %vm1152, %v1066, 0.0
  %v1400 = vadd.f32 %v1398, %v1399
  %v1401 = vsel %vm1152, %v1069, 0.0
  %v1402 = vadd.f32 %v1400, %v1401
  %v1403 = vsel %vm1152, %v1072, 0.0
  %v1404 = vadd.f32 %v1402, %v1403
  %v1405 = vsel %vm1152, %v1075, 0.0
  %v1406 = vadd.f32 %v1404, %v1405
  %v1407 = vsel %vm1152, %v1078, 0.0
  %v1408 = vadd.f32 %v1406, %v1407
  %v1409 = vsel %vm1152, %v1081, 0.0
  %v1410 = vadd.f32 %v1408, %v1409
  %v1411 = vsel %vm1152, %v1084, 0.0
  %v1412 = vadd.f32 %v1410, %v1411
  %v1413 = vsel %vm1152, %v1087, 0.0
  %v1414 = vadd.f32 %v1412, %v1413
  %v1415 = vsel %vm1152, %v1090, 0.0
  %v1416 = vadd.f32 %v1414, %v1415
  %v1417 = vsel %vm1152, %v1093, 0.0
  %v1418 = vadd.f32 %v1416, %v1417
  %v1419 = vsel %vm1152, %v1096, 0.0
  %v1420 = vadd.f32 %v1418, %v1419
  %v1421 = vsel %vm1152, %v1099, 0.0
  %v1422 = vadd.f32 %v1420, %v1421
  %v1423 = vsel %vm1152, %v1102, 0.0
  %v1424 = vadd.f32 %v1422, %v1423
  %v1425 = vsel %vm1152, %v1105, 0.0
  %v1426 = vadd.f32 %v1424, %v1425
  %v1427 = vsel %vm1152, %v1108, 0.0
  %v1428 = vadd.f32 %v1426, %v1427
  %v1429 = vsel %vm1152, %v1111, 0.0
  %v1430 = vadd.f32 %v1428, %v1429
  %v1431 = vsel %vm1152, %v1114, 0.0
  %v1432 = vadd.f32 %v1430, %v1431
  %v1433 = vsel %vm1152, %v1117, 0.0
  %v1434 = vadd.f32 %v1432, %v1433
  %v1435 = vsel %vm1152, %v1120, 0.0
  %v1436 = vadd.f32 %v1434, %v1435
  %v1437 = vsel %vm1152, %v1123, 0.0
  %v1438 = vadd.f32 %v1436, %v1437
  %v1439 = vsel %vm1152, %v1126, 0.0
  %v1440 = vadd.f32 %v1438, %v1439
  %v1441 = vsel %vm1152, %v1129, 0.0
  %v1442 = vadd.f32 %v1440, %v1441
  %v1443 = vsel %vm1152, %v1132, 0.0
  %v1444 = vadd.f32 %v1442, %v1443
  %v1445 = vsel %vm1152, %v1135, 0.0
  %v1446 = vadd.f32 %v1444, %v1445
  %v1447 = vsel %vm1152, %v1138, 0.0
  %v1448 = vadd.f32 %v1446, %v1447
  %v1449 = vsel %vm1152, %v1141, 0.0
  %v1450 = vadd.f32 %v1448, %v1449
  %v1451 = vsel %vm1152, %v1144, 0.0
  %v1452 = vadd.f32 %v1450, %v1451
  %v1453 = vsel %vm1152, %v1147, 0.0
  %v1454 = vadd.f32 %v1452, %v1453
  %v1455 = vsel %vm1152, %v1150, 0.0
  %v1456 = vadd.f32 %v1454, %v1455
  %v1457 = vrot.slane %v1456, 4
  %v1458 = vadd.f32 %v1456, %v1457
  %v1459 = vrot.slane %v1458, 2
  %v1460 = vadd.f32 %v1458, %v1459
  %v1461 = vrot.slane %v1460, 1
  %v1462 = vadd.f32 %v1460, %v1461
  %v1463 = vadd.f32 %v1385, %v1462
  %v1464 = vrcp.pop 1152.0
  %v1465 = vmul.f32 1152.0, %v1464
  %v1466 = vsub.f32 1.0, %v1465
  %v1467 = vmul.f32 %v1464, %v1466
  %v1468 = vadd.f32 %v1464, %v1467
  %vm1469 = vweird.f32 %v1464
  %v1470 = vsel %vm1469, %v1464, %v1468
  %v1471 = vmul.f32 %v1463, %v1470
  %v1472 = vsub.f32 %v238, %v1471
  %v1473 = vsub.f32 %v241, %v1471
  %v1474 = vsub.f32 %v244, %v1471
  %v1475 = vsub.f32 %v247, %v1471
  %v1476 = vsub.f32 %v250, %v1471
  %v1477 = vsub.f32 %v253, %v1471
  %v1478 = vsub.f32 %v256, %v1471
  %v1479 = vsub.f32 %v259, %v1471
  %v1480 = vsub.f32 %v262, %v1471
  %v1481 = vsub.f32 %v265, %v1471
  %v1482 = vsub.f32 %v268, %v1471
  %v1483 = vsub.f32 %v271, %v1471
  %v1484 = vsub.f32 %v274, %v1471
  %v1485 = vsub.f32 %v277, %v1471
  %v1486 = vsub.f32 %v280, %v1471
  %v1487 = vsub.f32 %v283, %v1471
  %v1488 = vsub.f32 %v286, %v1471
  %v1489 = vsub.f32 %v289, %v1471
  %v1490 = vsub.f32 %v292, %v1471
  %v1491 = vsub.f32 %v295, %v1471
  %v1492 = vsub.f32 %v298, %v1471
  %v1493 = vsub.f32 %v301, %v1471
  %v1494 = vsub.f32 %v304, %v1471
  %v1495 = vsub.f32 %v307, %v1471
  %v1496 = vsub.f32 %v310, %v1471
  %v1497 = vsub.f32 %v313, %v1471
  %v1498 = vsub.f32 %v316, %v1471
  %v1499 = vsub.f32 %v319, %v1471
  %v1500 = vsub.f32 %v322, %v1471
  %v1501 = vsub.f32 %v325, %v1471
  %v1502 = vsub.f32 %v328, %v1471
  %v1503 = vsub.f32 %v331, %v1471
  %v1504 = vsub.f32 %v334, %v1471
  %v1505 = vsub.f32 %v337, %v1471
  %v1506 = vsub.f32 %v340, %v1471
  %v1507 = vsub.f32 %v343, %v1471
  %v1508 = vmul.f32 %v1472, %v1472
  %v1509 = vmul.f32 %v1473, %v1473
  %v1510 = vmul.f32 %v1474, %v1474
  %v1511 = vmul.f32 %v1475, %v1475
  %v1512 = vmul.f32 %v1476, %v1476
  %v1513 = vmul.f32 %v1477, %v1477
  %v1514 = vmul.f32 %v1478, %v1478
  %v1515 = vmul.f32 %v1479, %v1479
  %v1516 = vmul.f32 %v1480, %v1480
  %v1517 = vmul.f32 %v1481, %v1481
  %v1518 = vmul.f32 %v1482, %v1482
  %v1519 = vmul.f32 %v1483, %v1483
  %v1520 = vmul.f32 %v1484, %v1484
  %v1521 = vmul.f32 %v1485, %v1485
  %v1522 = vmul.f32 %v1486, %v1486
  %v1523 = vmul.f32 %v1487, %v1487
  %v1524 = vmul.f32 %v1488, %v1488
  %v1525 = vmul.f32 %v1489, %v1489
  %v1526 = vmul.f32 %v1490, %v1490
  %v1527 = vmul.f32 %v1491, %v1491
  %v1528 = vmul.f32 %v1492, %v1492
  %v1529 = vmul.f32 %v1493, %v1493
  %v1530 = vmul.f32 %v1494, %v1494
  %v1531 = vmul.f32 %v1495, %v1495
  %v1532 = vmul.f32 %v1496, %v1496
  %v1533 = vmul.f32 %v1497, %v1497
  %v1534 = vmul.f32 %v1498, %v1498
  %v1535 = vmul.f32 %v1499, %v1499
  %v1536 = vmul.f32 %v1500, %v1500
  %v1537 = vmul.f32 %v1501, %v1501
  %v1538 = vmul.f32 %v1502, %v1502
  %v1539 = vmul.f32 %v1503, %v1503
  %v1540 = vmul.f32 %v1504, %v1504
  %v1541 = vmul.f32 %v1505, %v1505
  %v1542 = vmul.f32 %v1506, %v1506
  %v1543 = vmul.f32 %v1507, %v1507
  %v1544 = vsel %vm1152, %v1508, 0.0
  %v1545 = vsel %vm1152, %v1509, 0.0
  %v1546 = vadd.f32 %v1544, %v1545
  %v1547 = vsel %vm1152, %v1510, 0.0
  %v1548 = vadd.f32 %v1546, %v1547
  %v1549 = vsel %vm1152, %v1511, 0.0
  %v1550 = vadd.f32 %v1548, %v1549
  %v1551 = vsel %vm1152, %v1512, 0.0
  %v1552 = vadd.f32 %v1550, %v1551
  %v1553 = vsel %vm1152, %v1513, 0.0
  %v1554 = vadd.f32 %v1552, %v1553
  %v1555 = vsel %vm1152, %v1514, 0.0
  %v1556 = vadd.f32 %v1554, %v1555
  %v1557 = vsel %vm1152, %v1515, 0.0
  %v1558 = vadd.f32 %v1556, %v1557
  %v1559 = vsel %vm1152, %v1516, 0.0
  %v1560 = vadd.f32 %v1558, %v1559
  %v1561 = vsel %vm1152, %v1517, 0.0
  %v1562 = vadd.f32 %v1560, %v1561
  %v1563 = vsel %vm1152, %v1518, 0.0
  %v1564 = vadd.f32 %v1562, %v1563
  %v1565 = vsel %vm1152, %v1519, 0.0
  %v1566 = vadd.f32 %v1564, %v1565
  %v1567 = vsel %vm1152, %v1520, 0.0
  %v1568 = vadd.f32 %v1566, %v1567
  %v1569 = vsel %vm1152, %v1521, 0.0
  %v1570 = vadd.f32 %v1568, %v1569
  %v1571 = vsel %vm1152, %v1522, 0.0
  %v1572 = vadd.f32 %v1570, %v1571
  %v1573 = vsel %vm1152, %v1523, 0.0
  %v1574 = vadd.f32 %v1572, %v1573
  %v1575 = vsel %vm1152, %v1524, 0.0
  %v1576 = vadd.f32 %v1574, %v1575
  %v1577 = vsel %vm1152, %v1525, 0.0
  %v1578 = vadd.f32 %v1576, %v1577
  %v1579 = vsel %vm1152, %v1526, 0.0
  %v1580 = vadd.f32 %v1578, %v1579
  %v1581 = vsel %vm1152, %v1527, 0.0
  %v1582 = vadd.f32 %v1580, %v1581
  %v1583 = vsel %vm1152, %v1528, 0.0
  %v1584 = vadd.f32 %v1582, %v1583
  %v1585 = vsel %vm1152, %v1529, 0.0
  %v1586 = vadd.f32 %v1584, %v1585
  %v1587 = vsel %vm1152, %v1530, 0.0
  %v1588 = vadd.f32 %v1586, %v1587
  %v1589 = vsel %vm1152, %v1531, 0.0
  %v1590 = vadd.f32 %v1588, %v1589
  %v1591 = vsel %vm1152, %v1532, 0.0
  %v1592 = vadd.f32 %v1590, %v1591
  %v1593 = vsel %vm1152, %v1533, 0.0
  %v1594 = vadd.f32 %v1592, %v1593
  %v1595 = vsel %vm1152, %v1534, 0.0
  %v1596 = vadd.f32 %v1594, %v1595
  %v1597 = vsel %vm1152, %v1535, 0.0
  %v1598 = vadd.f32 %v1596, %v1597
  %v1599 = vsel %vm1152, %v1536, 0.0
  %v1600 = vadd.f32 %v1598, %v1599
  %v1601 = vsel %vm1152, %v1537, 0.0
  %v1602 = vadd.f32 %v1600, %v1601
  %v1603 = vsel %vm1152, %v1538, 0.0
  %v1604 = vadd.f32 %v1602, %v1603
  %v1605 = vsel %vm1152, %v1539, 0.0
  %v1606 = vadd.f32 %v1604, %v1605
  %v1607 = vsel %vm1152, %v1540, 0.0
  %v1608 = vadd.f32 %v1606, %v1607
  %v1609 = vsel %vm1152, %v1541, 0.0
  %v1610 = vadd.f32 %v1608, %v1609
  %v1611 = vsel %vm1152, %v1542, 0.0
  %v1612 = vadd.f32 %v1610, %v1611
  %v1613 = vsel %vm1152, %v1543, 0.0
  %v1614 = vadd.f32 %v1612, %v1613
  %v1615 = vrot.slane %v1614, 4
  %v1616 = vadd.f32 %v1614, %v1615
  %v1617 = vrot.slane %v1616, 2
  %v1618 = vadd.f32 %v1616, %v1617
  %v1619 = vrot.slane %v1618, 1
  %v1620 = vadd.f32 %v1618, %v1619
  %v1621 = vsub.f32 %v507, %v1471
  %v1622 = vsub.f32 %v510, %v1471
  %v1623 = vsub.f32 %v513, %v1471
  %v1624 = vsub.f32 %v516, %v1471
  %v1625 = vsub.f32 %v519, %v1471
  %v1626 = vsub.f32 %v522, %v1471
  %v1627 = vsub.f32 %v525, %v1471
  %v1628 = vsub.f32 %v528, %v1471
  %v1629 = vsub.f32 %v531, %v1471
  %v1630 = vsub.f32 %v534, %v1471
  %v1631 = vsub.f32 %v537, %v1471
  %v1632 = vsub.f32 %v540, %v1471
  %v1633 = vsub.f32 %v543, %v1471
  %v1634 = vsub.f32 %v546, %v1471
  %v1635 = vsub.f32 %v549, %v1471
  %v1636 = vsub.f32 %v552, %v1471
  %v1637 = vsub.f32 %v555, %v1471
  %v1638 = vsub.f32 %v558, %v1471
  %v1639 = vsub.f32 %v561, %v1471
  %v1640 = vsub.f32 %v564, %v1471
  %v1641 = vsub.f32 %v567, %v1471
  %v1642 = vsub.f32 %v570, %v1471
  %v1643 = vsub.f32 %v573, %v1471
  %v1644 = vsub.f32 %v576, %v1471
  %v1645 = vsub.f32 %v579, %v1471
  %v1646 = vsub.f32 %v582, %v1471
  %v1647 = vsub.f32 %v585, %v1471
  %v1648 = vsub.f32 %v588, %v1471
  %v1649 = vsub.f32 %v591, %v1471
  %v1650 = vsub.f32 %v594, %v1471
  %v1651 = vsub.f32 %v597, %v1471
  %v1652 = vsub.f32 %v600, %v1471
  %v1653 = vsub.f32 %v603, %v1471
  %v1654 = vsub.f32 %v606, %v1471
  %v1655 = vsub.f32 %v609, %v1471
  %v1656 = vsub.f32 %v612, %v1471
  %v1657 = vmul.f32 %v1621, %v1621
  %v1658 = vmul.f32 %v1622, %v1622
  %v1659 = vmul.f32 %v1623, %v1623
  %v1660 = vmul.f32 %v1624, %v1624
  %v1661 = vmul.f32 %v1625, %v1625
  %v1662 = vmul.f32 %v1626, %v1626
  %v1663 = vmul.f32 %v1627, %v1627
  %v1664 = vmul.f32 %v1628, %v1628
  %v1665 = vmul.f32 %v1629, %v1629
  %v1666 = vmul.f32 %v1630, %v1630
  %v1667 = vmul.f32 %v1631, %v1631
  %v1668 = vmul.f32 %v1632, %v1632
  %v1669 = vmul.f32 %v1633, %v1633
  %v1670 = vmul.f32 %v1634, %v1634
  %v1671 = vmul.f32 %v1635, %v1635
  %v1672 = vmul.f32 %v1636, %v1636
  %v1673 = vmul.f32 %v1637, %v1637
  %v1674 = vmul.f32 %v1638, %v1638
  %v1675 = vmul.f32 %v1639, %v1639
  %v1676 = vmul.f32 %v1640, %v1640
  %v1677 = vmul.f32 %v1641, %v1641
  %v1678 = vmul.f32 %v1642, %v1642
  %v1679 = vmul.f32 %v1643, %v1643
  %v1680 = vmul.f32 %v1644, %v1644
  %v1681 = vmul.f32 %v1645, %v1645
  %v1682 = vmul.f32 %v1646, %v1646
  %v1683 = vmul.f32 %v1647, %v1647
  %v1684 = vmul.f32 %v1648, %v1648
  %v1685 = vmul.f32 %v1649, %v1649
  %v1686 = vmul.f32 %v1650, %v1650
  %v1687 = vmul.f32 %v1651, %v1651
  %v1688 = vmul.f32 %v1652, %v1652
  %v1689 = vmul.f32 %v1653, %v1653
  %v1690 = vmul.f32 %v1654, %v1654
  %v1691 = vmul.f32 %v1655, %v1655
  %v1692 = vmul.f32 %v1656, %v1656
  %v1693 = vsel %vm1152, %v1657, 0.0
  %v1694 = vsel %vm1152, %v1658, 0.0
  %v1695 = vadd.f32 %v1693, %v1694
  %v1696 = vsel %vm1152, %v1659, 0.0
  %v1697 = vadd.f32 %v1695, %v1696
  %v1698 = vsel %vm1152, %v1660, 0.0
  %v1699 = vadd.f32 %v1697, %v1698
  %v1700 = vsel %vm1152, %v1661, 0.0
  %v1701 = vadd.f32 %v1699, %v1700
  %v1702 = vsel %vm1152, %v1662, 0.0
  %v1703 = vadd.f32 %v1701, %v1702
  %v1704 = vsel %vm1152, %v1663, 0.0
  %v1705 = vadd.f32 %v1703, %v1704
  %v1706 = vsel %vm1152, %v1664, 0.0
  %v1707 = vadd.f32 %v1705, %v1706
  %v1708 = vsel %vm1152, %v1665, 0.0
  %v1709 = vadd.f32 %v1707, %v1708
  %v1710 = vsel %vm1152, %v1666, 0.0
  %v1711 = vadd.f32 %v1709, %v1710
  %v1712 = vsel %vm1152, %v1667, 0.0
  %v1713 = vadd.f32 %v1711, %v1712
  %v1714 = vsel %vm1152, %v1668, 0.0
  %v1715 = vadd.f32 %v1713, %v1714
  %v1716 = vsel %vm1152, %v1669, 0.0
  %v1717 = vadd.f32 %v1715, %v1716
  %v1718 = vsel %vm1152, %v1670, 0.0
  %v1719 = vadd.f32 %v1717, %v1718
  %v1720 = vsel %vm1152, %v1671, 0.0
  %v1721 = vadd.f32 %v1719, %v1720
  %v1722 = vsel %vm1152, %v1672, 0.0
  %v1723 = vadd.f32 %v1721, %v1722
  %v1724 = vsel %vm1152, %v1673, 0.0
  %v1725 = vadd.f32 %v1723, %v1724
  %v1726 = vsel %vm1152, %v1674, 0.0
  %v1727 = vadd.f32 %v1725, %v1726
  %v1728 = vsel %vm1152, %v1675, 0.0
  %v1729 = vadd.f32 %v1727, %v1728
  %v1730 = vsel %vm1152, %v1676, 0.0
  %v1731 = vadd.f32 %v1729, %v1730
  %v1732 = vsel %vm1152, %v1677, 0.0
  %v1733 = vadd.f32 %v1731, %v1732
  %v1734 = vsel %vm1152, %v1678, 0.0
  %v1735 = vadd.f32 %v1733, %v1734
  %v1736 = vsel %vm1152, %v1679, 0.0
  %v1737 = vadd.f32 %v1735, %v1736
  %v1738 = vsel %vm1152, %v1680, 0.0
  %v1739 = vadd.f32 %v1737, %v1738
  %v1740 = vsel %vm1152, %v1681, 0.0
  %v1741 = vadd.f32 %v1739, %v1740
  %v1742 = vsel %vm1152, %v1682, 0.0
  %v1743 = vadd.f32 %v1741, %v1742
  %v1744 = vsel %vm1152, %v1683, 0.0
  %v1745 = vadd.f32 %v1743, %v1744
  %v1746 = vsel %vm1152, %v1684, 0.0
  %v1747 = vadd.f32 %v1745, %v1746
  %v1748 = vsel %vm1152, %v1685, 0.0
  %v1749 = vadd.f32 %v1747, %v1748
  %v1750 = vsel %vm1152, %v1686, 0.0
  %v1751 = vadd.f32 %v1749, %v1750
  %v1752 = vsel %vm1152, %v1687, 0.0
  %v1753 = vadd.f32 %v1751, %v1752
  %v1754 = vsel %vm1152, %v1688, 0.0
  %v1755 = vadd.f32 %v1753, %v1754
  %v1756 = vsel %vm1152, %v1689, 0.0
  %v1757 = vadd.f32 %v1755, %v1756
  %v1758 = vsel %vm1152, %v1690, 0.0
  %v1759 = vadd.f32 %v1757, %v1758
  %v1760 = vsel %vm1152, %v1691, 0.0
  %v1761 = vadd.f32 %v1759, %v1760
  %v1762 = vsel %vm1152, %v1692, 0.0
  %v1763 = vadd.f32 %v1761, %v1762
  %v1764 = vrot.slane %v1763, 4
  %v1765 = vadd.f32 %v1763, %v1764
  %v1766 = vrot.slane %v1765, 2
  %v1767 = vadd.f32 %v1765, %v1766
  %v1768 = vrot.slane %v1767, 1
  %v1769 = vadd.f32 %v1767, %v1768
  %v1770 = vadd.f32 %v1620, %v1769
  %v1771 = vsub.f32 %v776, %v1471
  %v1772 = vsub.f32 %v779, %v1471
  %v1773 = vsub.f32 %v782, %v1471
  %v1774 = vsub.f32 %v785, %v1471
  %v1775 = vsub.f32 %v788, %v1471
  %v1776 = vsub.f32 %v791, %v1471
  %v1777 = vsub.f32 %v794, %v1471
  %v1778 = vsub.f32 %v797, %v1471
  %v1779 = vsub.f32 %v800, %v1471
  %v1780 = vsub.f32 %v803, %v1471
  %v1781 = vsub.f32 %v806, %v1471
  %v1782 = vsub.f32 %v809, %v1471
  %v1783 = vsub.f32 %v812, %v1471
  %v1784 = vsub.f32 %v815, %v1471
  %v1785 = vsub.f32 %v818, %v1471
  %v1786 = vsub.f32 %v821, %v1471
  %v1787 = vsub.f32 %v824, %v1471
  %v1788 = vsub.f32 %v827, %v1471
  %v1789 = vsub.f32 %v830, %v1471
  %v1790 = vsub.f32 %v833, %v1471
  %v1791 = vsub.f32 %v836, %v1471
  %v1792 = vsub.f32 %v839, %v1471
  %v1793 = vsub.f32 %v842, %v1471
  %v1794 = vsub.f32 %v845, %v1471
  %v1795 = vsub.f32 %v848, %v1471
  %v1796 = vsub.f32 %v851, %v1471
  %v1797 = vsub.f32 %v854, %v1471
  %v1798 = vsub.f32 %v857, %v1471
  %v1799 = vsub.f32 %v860, %v1471
  %v1800 = vsub.f32 %v863, %v1471
  %v1801 = vsub.f32 %v866, %v1471
  %v1802 = vsub.f32 %v869, %v1471
  %v1803 = vsub.f32 %v872, %v1471
  %v1804 = vsub.f32 %v875, %v1471
  %v1805 = vsub.f32 %v878, %v1471
  %v1806 = vsub.f32 %v881, %v1471
  %v1807 = vmul.f32 %v1771, %v1771
  %v1808 = vmul.f32 %v1772, %v1772
  %v1809 = vmul.f32 %v1773, %v1773
  %v1810 = vmul.f32 %v1774, %v1774
  %v1811 = vmul.f32 %v1775, %v1775
  %v1812 = vmul.f32 %v1776, %v1776
  %v1813 = vmul.f32 %v1777, %v1777
  %v1814 = vmul.f32 %v1778, %v1778
  %v1815 = vmul.f32 %v1779, %v1779
  %v1816 = vmul.f32 %v1780, %v1780
  %v1817 = vmul.f32 %v1781, %v1781
  %v1818 = vmul.f32 %v1782, %v1782
  %v1819 = vmul.f32 %v1783, %v1783
  %v1820 = vmul.f32 %v1784, %v1784
  %v1821 = vmul.f32 %v1785, %v1785
  %v1822 = vmul.f32 %v1786, %v1786
  %v1823 = vmul.f32 %v1787, %v1787
  %v1824 = vmul.f32 %v1788, %v1788
  %v1825 = vmul.f32 %v1789, %v1789
  %v1826 = vmul.f32 %v1790, %v1790
  %v1827 = vmul.f32 %v1791, %v1791
  %v1828 = vmul.f32 %v1792, %v1792
  %v1829 = vmul.f32 %v1793, %v1793
  %v1830 = vmul.f32 %v1794, %v1794
  %v1831 = vmul.f32 %v1795, %v1795
  %v1832 = vmul.f32 %v1796, %v1796
  %v1833 = vmul.f32 %v1797, %v1797
  %v1834 = vmul.f32 %v1798, %v1798
  %v1835 = vmul.f32 %v1799, %v1799
  %v1836 = vmul.f32 %v1800, %v1800
  %v1837 = vmul.f32 %v1801, %v1801
  %v1838 = vmul.f32 %v1802, %v1802
  %v1839 = vmul.f32 %v1803, %v1803
  %v1840 = vmul.f32 %v1804, %v1804
  %v1841 = vmul.f32 %v1805, %v1805
  %v1842 = vmul.f32 %v1806, %v1806
  %v1843 = vsel %vm1152, %v1807, 0.0
  %v1844 = vsel %vm1152, %v1808, 0.0
  %v1845 = vadd.f32 %v1843, %v1844
  %v1846 = vsel %vm1152, %v1809, 0.0
  %v1847 = vadd.f32 %v1845, %v1846
  %v1848 = vsel %vm1152, %v1810, 0.0
  %v1849 = vadd.f32 %v1847, %v1848
  %v1850 = vsel %vm1152, %v1811, 0.0
  %v1851 = vadd.f32 %v1849, %v1850
  %v1852 = vsel %vm1152, %v1812, 0.0
  %v1853 = vadd.f32 %v1851, %v1852
  %v1854 = vsel %vm1152, %v1813, 0.0
  %v1855 = vadd.f32 %v1853, %v1854
  %v1856 = vsel %vm1152, %v1814, 0.0
  %v1857 = vadd.f32 %v1855, %v1856
  %v1858 = vsel %vm1152, %v1815, 0.0
  %v1859 = vadd.f32 %v1857, %v1858
  %v1860 = vsel %vm1152, %v1816, 0.0
  %v1861 = vadd.f32 %v1859, %v1860
  %v1862 = vsel %vm1152, %v1817, 0.0
  %v1863 = vadd.f32 %v1861, %v1862
  %v1864 = vsel %vm1152, %v1818, 0.0
  %v1865 = vadd.f32 %v1863, %v1864
  %v1866 = vsel %vm1152, %v1819, 0.0
  %v1867 = vadd.f32 %v1865, %v1866
  %v1868 = vsel %vm1152, %v1820, 0.0
  %v1869 = vadd.f32 %v1867, %v1868
  %v1870 = vsel %vm1152, %v1821, 0.0
  %v1871 = vadd.f32 %v1869, %v1870
  %v1872 = vsel %vm1152, %v1822, 0.0
  %v1873 = vadd.f32 %v1871, %v1872
  %v1874 = vsel %vm1152, %v1823, 0.0
  %v1875 = vadd.f32 %v1873, %v1874
  %v1876 = vsel %vm1152, %v1824, 0.0
  %v1877 = vadd.f32 %v1875, %v1876
  %v1878 = vsel %vm1152, %v1825, 0.0
  %v1879 = vadd.f32 %v1877, %v1878
  %v1880 = vsel %vm1152, %v1826, 0.0
  %v1881 = vadd.f32 %v1879, %v1880
  %v1882 = vsel %vm1152, %v1827, 0.0
  %v1883 = vadd.f32 %v1881, %v1882
  %v1884 = vsel %vm1152, %v1828, 0.0
  %v1885 = vadd.f32 %v1883, %v1884
  %v1886 = vsel %vm1152, %v1829, 0.0
  %v1887 = vadd.f32 %v1885, %v1886
  %v1888 = vsel %vm1152, %v1830, 0.0
  %v1889 = vadd.f32 %v1887, %v1888
  %v1890 = vsel %vm1152, %v1831, 0.0
  %v1891 = vadd.f32 %v1889, %v1890
  %v1892 = vsel %vm1152, %v1832, 0.0
  %v1893 = vadd.f32 %v1891, %v1892
  %v1894 = vsel %vm1152, %v1833, 0.0
  %v1895 = vadd.f32 %v1893, %v1894
  %v1896 = vsel %vm1152, %v1834, 0.0
  %v1897 = vadd.f32 %v1895, %v1896
  %v1898 = vsel %vm1152, %v1835, 0.0
  %v1899 = vadd.f32 %v1897, %v1898
  %v1900 = vsel %vm1152, %v1836, 0.0
  %v1901 = vadd.f32 %v1899, %v1900
  %v1902 = vsel %vm1152, %v1837, 0.0
  %v1903 = vadd.f32 %v1901, %v1902
  %v1904 = vsel %vm1152, %v1838, 0.0
  %v1905 = vadd.f32 %v1903, %v1904
  %v1906 = vsel %vm1152, %v1839, 0.0
  %v1907 = vadd.f32 %v1905, %v1906
  %v1908 = vsel %vm1152, %v1840, 0.0
  %v1909 = vadd.f32 %v1907, %v1908
  %v1910 = vsel %vm1152, %v1841, 0.0
  %v1911 = vadd.f32 %v1909, %v1910
  %v1912 = vsel %vm1152, %v1842, 0.0
  %v1913 = vadd.f32 %v1911, %v1912
  %v1914 = vrot.slane %v1913, 4
  %v1915 = vadd.f32 %v1913, %v1914
  %v1916 = vrot.slane %v1915, 2
  %v1917 = vadd.f32 %v1915, %v1916
  %v1918 = vrot.slane %v1917, 1
  %v1919 = vadd.f32 %v1917, %v1918
  %v1920 = vadd.f32 %v1770, %v1919
  %v1921 = vsub.f32 %v1045, %v1471
  %v1922 = vsub.f32 %v1048, %v1471
  %v1923 = vsub.f32 %v1051, %v1471
  %v1924 = vsub.f32 %v1054, %v1471
  %v1925 = vsub.f32 %v1057, %v1471
  %v1926 = vsub.f32 %v1060, %v1471
  %v1927 = vsub.f32 %v1063, %v1471
  %v1928 = vsub.f32 %v1066, %v1471
  %v1929 = vsub.f32 %v1069, %v1471
  %v1930 = vsub.f32 %v1072, %v1471
  %v1931 = vsub.f32 %v1075, %v1471
  %v1932 = vsub.f32 %v1078, %v1471
  %v1933 = vsub.f32 %v1081, %v1471
  %v1934 = vsub.f32 %v1084, %v1471
  %v1935 = vsub.f32 %v1087, %v1471
  %v1936 = vsub.f32 %v1090, %v1471
  %v1937 = vsub.f32 %v1093, %v1471
  %v1938 = vsub.f32 %v1096, %v1471
  %v1939 = vsub.f32 %v1099, %v1471
  %v1940 = vsub.f32 %v1102, %v1471
  %v1941 = vsub.f32 %v1105, %v1471
  %v1942 = vsub.f32 %v1108, %v1471
  %v1943 = vsub.f32 %v1111, %v1471
  %v1944 = vsub.f32 %v1114, %v1471
  %v1945 = vsub.f32 %v1117, %v1471
  %v1946 = vsub.f32 %v1120, %v1471
  %v1947 = vsub.f32 %v1123, %v1471
  %v1948 = vsub.f32 %v1126, %v1471
  %v1949 = vsub.f32 %v1129, %v1471
  %v1950 = vsub.f32 %v1132, %v1471
  %v1951 = vsub.f32 %v1135, %v1471
  %v1952 = vsub.f32 %v1138, %v1471
  %v1953 = vsub.f32 %v1141, %v1471
  %v1954 = vsub.f32 %v1144, %v1471
  %v1955 = vsub.f32 %v1147, %v1471
  %v1956 = vsub.f32 %v1150, %v1471
  %v1957 = vmul.f32 %v1921, %v1921
  %v1958 = vmul.f32 %v1922, %v1922
  %v1959 = vmul.f32 %v1923, %v1923
  %v1960 = vmul.f32 %v1924, %v1924
  %v1961 = vmul.f32 %v1925, %v1925
  %v1962 = vmul.f32 %v1926, %v1926
  %v1963 = vmul.f32 %v1927, %v1927
  %v1964 = vmul.f32 %v1928, %v1928
  %v1965 = vmul.f32 %v1929, %v1929
  %v1966 = vmul.f32 %v1930, %v1930
  %v1967 = vmul.f32 %v1931, %v1931
  %v1968 = vmul.f32 %v1932, %v1932
  %v1969 = vmul.f32 %v1933, %v1933
  %v1970 = vmul.f32 %v1934, %v1934
  %v1971 = vmul.f32 %v1935, %v1935
  %v1972 = vmul.f32 %v1936, %v1936
  %v1973 = vmul.f32 %v1937, %v1937
  %v1974 = vmul.f32 %v1938, %v1938
  %v1975 = vmul.f32 %v1939, %v1939
  %v1976 = vmul.f32 %v1940, %v1940
  %v1977 = vmul.f32 %v1941, %v1941
  %v1978 = vmul.f32 %v1942, %v1942
  %v1979 = vmul.f32 %v1943, %v1943
  %v1980 = vmul.f32 %v1944, %v1944
  %v1981 = vmul.f32 %v1945, %v1945
  %v1982 = vmul.f32 %v1946, %v1946
  %v1983 = vmul.f32 %v1947, %v1947
  %v1984 = vmul.f32 %v1948, %v1948
  %v1985 = vmul.f32 %v1949, %v1949
  %v1986 = vmul.f32 %v1950, %v1950
  %v1987 = vmul.f32 %v1951, %v1951
  %v1988 = vmul.f32 %v1952, %v1952
  %v1989 = vmul.f32 %v1953, %v1953
  %v1990 = vmul.f32 %v1954, %v1954
  %v1991 = vmul.f32 %v1955, %v1955
  %v1992 = vmul.f32 %v1956, %v1956
  %v1993 = vsel %vm1152, %v1957, 0.0
  %v1994 = vsel %vm1152, %v1958, 0.0
  %v1995 = vadd.f32 %v1993, %v1994
  %v1996 = vsel %vm1152, %v1959, 0.0
  %v1997 = vadd.f32 %v1995, %v1996
  %v1998 = vsel %vm1152, %v1960, 0.0
  %v1999 = vadd.f32 %v1997, %v1998
  %v2000 = vsel %vm1152, %v1961, 0.0
  %v2001 = vadd.f32 %v1999, %v2000
  %v2002 = vsel %vm1152, %v1962, 0.0
  %v2003 = vadd.f32 %v2001, %v2002
  %v2004 = vsel %vm1152, %v1963, 0.0
  %v2005 = vadd.f32 %v2003, %v2004
  %v2006 = vsel %vm1152, %v1964, 0.0
  %v2007 = vadd.f32 %v2005, %v2006
  %v2008 = vsel %vm1152, %v1965, 0.0
  %v2009 = vadd.f32 %v2007, %v2008
  %v2010 = vsel %vm1152, %v1966, 0.0
  %v2011 = vadd.f32 %v2009, %v2010
  %v2012 = vsel %vm1152, %v1967, 0.0
  %v2013 = vadd.f32 %v2011, %v2012
  %v2014 = vsel %vm1152, %v1968, 0.0
  %v2015 = vadd.f32 %v2013, %v2014
  %v2016 = vsel %vm1152, %v1969, 0.0
  %v2017 = vadd.f32 %v2015, %v2016
  %v2018 = vsel %vm1152, %v1970, 0.0
  %v2019 = vadd.f32 %v2017, %v2018
  %v2020 = vsel %vm1152, %v1971, 0.0
  %v2021 = vadd.f32 %v2019, %v2020
  %v2022 = vsel %vm1152, %v1972, 0.0
  %v2023 = vadd.f32 %v2021, %v2022
  %v2024 = vsel %vm1152, %v1973, 0.0
  %v2025 = vadd.f32 %v2023, %v2024
  %v2026 = vsel %vm1152, %v1974, 0.0
  %v2027 = vadd.f32 %v2025, %v2026
  %v2028 = vsel %vm1152, %v1975, 0.0
  %v2029 = vadd.f32 %v2027, %v2028
  %v2030 = vsel %vm1152, %v1976, 0.0
  %v2031 = vadd.f32 %v2029, %v2030
  %v2032 = vsel %vm1152, %v1977, 0.0
  %v2033 = vadd.f32 %v2031, %v2032
  %v2034 = vsel %vm1152, %v1978, 0.0
  %v2035 = vadd.f32 %v2033, %v2034
  %v2036 = vsel %vm1152, %v1979, 0.0
  %v2037 = vadd.f32 %v2035, %v2036
  %v2038 = vsel %vm1152, %v1980, 0.0
  %v2039 = vadd.f32 %v2037, %v2038
  %v2040 = vsel %vm1152, %v1981, 0.0
  %v2041 = vadd.f32 %v2039, %v2040
  %v2042 = vsel %vm1152, %v1982, 0.0
  %v2043 = vadd.f32 %v2041, %v2042
  %v2044 = vsel %vm1152, %v1983, 0.0
  %v2045 = vadd.f32 %v2043, %v2044
  %v2046 = vsel %vm1152, %v1984, 0.0
  %v2047 = vadd.f32 %v2045, %v2046
  %v2048 = vsel %vm1152, %v1985, 0.0
  %v2049 = vadd.f32 %v2047, %v2048
  %v2050 = vsel %vm1152, %v1986, 0.0
  %v2051 = vadd.f32 %v2049, %v2050
  %v2052 = vsel %vm1152, %v1987, 0.0
  %v2053 = vadd.f32 %v2051, %v2052
  %v2054 = vsel %vm1152, %v1988, 0.0
  %v2055 = vadd.f32 %v2053, %v2054
  %v2056 = vsel %vm1152, %v1989, 0.0
  %v2057 = vadd.f32 %v2055, %v2056
  %v2058 = vsel %vm1152, %v1990, 0.0
  %v2059 = vadd.f32 %v2057, %v2058
  %v2060 = vsel %vm1152, %v1991, 0.0
  %v2061 = vadd.f32 %v2059, %v2060
  %v2062 = vsel %vm1152, %v1992, 0.0
  %v2063 = vadd.f32 %v2061, %v2062
  %v2064 = vrot.slane %v2063, 4
  %v2065 = vadd.f32 %v2063, %v2064
  %v2066 = vrot.slane %v2065, 2
  %v2067 = vadd.f32 %v2065, %v2066
  %v2068 = vrot.slane %v2067, 1
  %v2069 = vadd.f32 %v2067, %v2068
  %v2070 = vadd.f32 %v1920, %v2069
  %v2071 = vmul.f32 %v2070, %v1470
  %v2072 = vadd.f32 %v2071, 1e-05
  %v2073 = vrsqrt.pop %v2072
  %v2074 = vmul.f32 %v2073, %v2072
  %v2075 = vmul.f32 %v2074, %v2073
  %v2076 = vmul.f32 0.5, %v2075
  %v2077 = vsub.f32 1.5, %v2076
  %v2078 = vmul.f32 %v2073, %v2077
  %vm2079 = vweird.f32 %v2072
  %vm2080 = vweird.f32 %v2073
  %vm2081 = vmor %vm2079, %vm2080
  %v2082 = vsel %vm2081, %v2073, %v2078
  %v2083 = vld [vmem:[%s7] sm:$0x1]
  %v2084 = vmul.f32 %v2082, %v2083
  %v2085 = vld [vmem:[%s8] sm:$0x1]
  %v2086 = vperm.slane %v2084, 0
  %v2087 = vmul.f32 %v1472, %v2086
  %v2088 = vmul.f32 %v1473, %v2086
  %v2089 = vmul.f32 %v1474, %v2086
  %v2090 = vmul.f32 %v1475, %v2086
  %v2091 = vmul.f32 %v1476, %v2086
  %v2092 = vmul.f32 %v1477, %v2086
  %v2093 = vmul.f32 %v1478, %v2086
  %v2094 = vmul.f32 %v1479, %v2086
  %v2095 = vmul.f32 %v1480, %v2086
  %v2096 = vmul.f32 %v1481, %v2086
  %v2097 = vmul.f32 %v1482, %v2086
  %v2098 = vmul.f32 %v1483, %v2086
  %v2099 = vmul.f32 %v1484, %v2086
  %v2100 = vmul.f32 %v1485, %v2086
  %v2101 = vmul.f32 %v1486, %v2086
  %v2102 = vmul.f32 %v1487, %v2086
  %v2103 = vmul.f32 %v1488, %v2086
  %v2104 = vmul.f32 %v1489, %v2086
  %v2105 = vmul.f32 %v1490, %v2086
  %v2106 = vmul.f32 %v1491, %v2086
  %v2107 = vmul.f32 %v1492, %v2086
  %v2108 = vmul.f32 %v1493, %v2086
  %v2109 = vmul.f32 %v1494, %v2086
  %v2110 = vmul.f32 %v1495, %v2086
  %v2111 = vmul.f32 %v1496, %v2086
  %v2112 = vmul.f32 %v1497, %v2086
  %v2113 = vmul.f32 %v1498, %v2086
  %v2114 = vmul.f32 %v1499, %v2086
  %v2115 = vmul.f32 %v1500, %v2086
  %v2116 = vmul.f32 %v1501, %v2086
  %v2117 = vmul.f32 %v1502, %v2086
  %v2118 = vmul.f32 %v1503, %v2086
  %v2119 = vmul.f32 %v1504, %v2086
  %v2120 = vmul.f32 %v1505, %v2086
  %v2121 = vmul.f32 %v1506, %v2086
  %v2122 = vmul.f32 %v1507, %v2086
  %v2124 = vperm.slane %v2085, 0
  %v2126 = vadd.f32 %v2087, %v2124
  %v2127 = vadd.f32 %v2088, %v2124
  %v2128 = vadd.f32 %v2089, %v2124
  %v2129 = vadd.f32 %v2090, %v2124
  %v2130 = vadd.f32 %v2091, %v2124
  %v2131 = vadd.f32 %v2092, %v2124
  %v2132 = vadd.f32 %v2093, %v2124
  %v2133 = vadd.f32 %v2094, %v2124
  %v2134 = vadd.f32 %v2095, %v2124
  %v2135 = vadd.f32 %v2096, %v2124
  %v2136 = vadd.f32 %v2097, %v2124
  %v2137 = vadd.f32 %v2098, %v2124
  %v2138 = vadd.f32 %v2099, %v2124
  %v2139 = vadd.f32 %v2100, %v2124
  %v2140 = vadd.f32 %v2101, %v2124
  %v2141 = vadd.f32 %v2102, %v2124
  %v2142 = vadd.f32 %v2103, %v2124
  %v2143 = vadd.f32 %v2104, %v2124
  %v2144 = vadd.f32 %v2105, %v2124
  %v2145 = vadd.f32 %v2106, %v2124
  %v2146 = vadd.f32 %v2107, %v2124
  %v2147 = vadd.f32 %v2108, %v2124
  %v2148 = vadd.f32 %v2109, %v2124
  %v2149 = vadd.f32 %v2110, %v2124
  %v2150 = vadd.f32 %v2111, %v2124
  %v2151 = vadd.f32 %v2112, %v2124
  %v2152 = vadd.f32 %v2113, %v2124
  %v2153 = vadd.f32 %v2114, %v2124
  %v2154 = vadd.f32 %v2115, %v2124
  %v2155 = vadd.f32 %v2116, %v2124
  %v2156 = vadd.f32 %v2117, %v2124
  %v2157 = vadd.f32 %v2118, %v2124
  %v2158 = vadd.f32 %v2119, %v2124
  %v2159 = vadd.f32 %v2120, %v2124
  %v2160 = vadd.f32 %v2121, %v2124
  %v2161 = vadd.f32 %v2122, %v2124
  %v2162 = vmax.f32 %v2126, 0.0
  %v2163 = vmax.f32 %v2127, 0.0
  %v2164 = vmax.f32 %v2128, 0.0
  %v2165 = vmax.f32 %v2129, 0.0
  %v2166 = vmax.f32 %v2130, 0.0
  %v2167 = vmax.f32 %v2131, 0.0
  %v2168 = vmax.f32 %v2132, 0.0
  %v2169 = vmax.f32 %v2133, 0.0
  %v2170 = vmax.f32 %v2134, 0.0
  %v2171 = vmax.f32 %v2135, 0.0
  %v2172 = vmax.f32 %v2136, 0.0
  %v2173 = vmax.f32 %v2137, 0.0
  %v2174 = vmax.f32 %v2138, 0.0
  %v2175 = vmax.f32 %v2139, 0.0
  %v2176 = vmax.f32 %v2140, 0.0
  %v2177 = vmax.f32 %v2141, 0.0
  %v2178 = vmax.f32 %v2142, 0.0
  %v2179 = vmax.f32 %v2143, 0.0
  %v2180 = vmax.f32 %v2144, 0.0
  %v2181 = vmax.f32 %v2145, 0.0
  %v2182 = vmax.f32 %v2146, 0.0
  %v2183 = vmax.f32 %v2147, 0.0
  %v2184 = vmax.f32 %v2148, 0.0
  %v2185 = vmax.f32 %v2149, 0.0
  %v2186 = vmax.f32 %v2150, 0.0
  %v2187 = vmax.f32 %v2151, 0.0
  %v2188 = vmax.f32 %v2152, 0.0
  %v2189 = vmax.f32 %v2153, 0.0
  %v2190 = vmax.f32 %v2154, 0.0
  %v2191 = vmax.f32 %v2155, 0.0
  %v2192 = vmax.f32 %v2156, 0.0
  %v2193 = vmax.f32 %v2157, 0.0
  %v2194 = vmax.f32 %v2158, 0.0
  %v2195 = vmax.f32 %v2159, 0.0
  %v2196 = vmax.f32 %v2160, 0.0
  %v2197 = vmax.f32 %v2161, 0.0
  %v2198 = vmul.f32 %v1621, %v2086
  %v2199 = vmul.f32 %v1622, %v2086
  %v2200 = vmul.f32 %v1623, %v2086
  %v2201 = vmul.f32 %v1624, %v2086
  %v2202 = vmul.f32 %v1625, %v2086
  %v2203 = vmul.f32 %v1626, %v2086
  %v2204 = vmul.f32 %v1627, %v2086
  %v2205 = vmul.f32 %v1628, %v2086
  %v2206 = vmul.f32 %v1629, %v2086
  %v2207 = vmul.f32 %v1630, %v2086
  %v2208 = vmul.f32 %v1631, %v2086
  %v2209 = vmul.f32 %v1632, %v2086
  %v2210 = vmul.f32 %v1633, %v2086
  %v2211 = vmul.f32 %v1634, %v2086
  %v2212 = vmul.f32 %v1635, %v2086
  %v2213 = vmul.f32 %v1636, %v2086
  %v2214 = vmul.f32 %v1637, %v2086
  %v2215 = vmul.f32 %v1638, %v2086
  %v2216 = vmul.f32 %v1639, %v2086
  %v2217 = vmul.f32 %v1640, %v2086
  %v2218 = vmul.f32 %v1641, %v2086
  %v2219 = vmul.f32 %v1642, %v2086
  %v2220 = vmul.f32 %v1643, %v2086
  %v2221 = vmul.f32 %v1644, %v2086
  %v2222 = vmul.f32 %v1645, %v2086
  %v2223 = vmul.f32 %v1646, %v2086
  %v2224 = vmul.f32 %v1647, %v2086
  %v2225 = vmul.f32 %v1648, %v2086
  %v2226 = vmul.f32 %v1649, %v2086
  %v2227 = vmul.f32 %v1650, %v2086
  %v2228 = vmul.f32 %v1651, %v2086
  %v2229 = vmul.f32 %v1652, %v2086
  %v2230 = vmul.f32 %v1653, %v2086
  %v2231 = vmul.f32 %v1654, %v2086
  %v2232 = vmul.f32 %v1655, %v2086
  %v2233 = vmul.f32 %v1656, %v2086
  %v2234 = vadd.f32 %v2198, %v2124
  %v2235 = vadd.f32 %v2199, %v2124
  %v2236 = vadd.f32 %v2200, %v2124
  %v2237 = vadd.f32 %v2201, %v2124
  %v2238 = vadd.f32 %v2202, %v2124
  %v2239 = vadd.f32 %v2203, %v2124
  %v2240 = vadd.f32 %v2204, %v2124
  %v2241 = vadd.f32 %v2205, %v2124
  %v2242 = vadd.f32 %v2206, %v2124
  %v2243 = vadd.f32 %v2207, %v2124
  %v2244 = vadd.f32 %v2208, %v2124
  %v2245 = vadd.f32 %v2209, %v2124
  %v2246 = vadd.f32 %v2210, %v2124
  %v2247 = vadd.f32 %v2211, %v2124
  %v2248 = vadd.f32 %v2212, %v2124
  %v2249 = vadd.f32 %v2213, %v2124
  %v2250 = vadd.f32 %v2214, %v2124
  %v2251 = vadd.f32 %v2215, %v2124
  %v2252 = vadd.f32 %v2216, %v2124
  %v2253 = vadd.f32 %v2217, %v2124
  %v2254 = vadd.f32 %v2218, %v2124
  %v2255 = vadd.f32 %v2219, %v2124
  %v2256 = vadd.f32 %v2220, %v2124
  %v2257 = vadd.f32 %v2221, %v2124
  %v2258 = vadd.f32 %v2222, %v2124
  %v2259 = vadd.f32 %v2223, %v2124
  %v2260 = vadd.f32 %v2224, %v2124
  %v2261 = vadd.f32 %v2225, %v2124
  %v2262 = vadd.f32 %v2226, %v2124
  %v2263 = vadd.f32 %v2227, %v2124
  %v2264 = vadd.f32 %v2228, %v2124
  %v2265 = vadd.f32 %v2229, %v2124
  %v2266 = vadd.f32 %v2230, %v2124
  %v2267 = vadd.f32 %v2231, %v2124
  %v2268 = vadd.f32 %v2232, %v2124
  %v2269 = vadd.f32 %v2233, %v2124
  %v2270 = vmax.f32 %v2234, 0.0
  %v2271 = vmax.f32 %v2235, 0.0
  %v2272 = vmax.f32 %v2236, 0.0
  %v2273 = vmax.f32 %v2237, 0.0
  %v2274 = vmax.f32 %v2238, 0.0
  %v2275 = vmax.f32 %v2239, 0.0
  %v2276 = vmax.f32 %v2240, 0.0
  %v2277 = vmax.f32 %v2241, 0.0
  %v2278 = vmax.f32 %v2242, 0.0
  %v2279 = vmax.f32 %v2243, 0.0
  %v2280 = vmax.f32 %v2244, 0.0
  %v2281 = vmax.f32 %v2245, 0.0
  %v2282 = vmax.f32 %v2246, 0.0
  %v2283 = vmax.f32 %v2247, 0.0
  %v2284 = vmax.f32 %v2248, 0.0
  %v2285 = vmax.f32 %v2249, 0.0
  %v2286 = vmax.f32 %v2250, 0.0
  %v2287 = vmax.f32 %v2251, 0.0
  %v2288 = vmax.f32 %v2252, 0.0
  %v2289 = vmax.f32 %v2253, 0.0
  %v2290 = vmax.f32 %v2254, 0.0
  %v2291 = vmax.f32 %v2255, 0.0
  %v2292 = vmax.f32 %v2256, 0.0
  %v2293 = vmax.f32 %v2257, 0.0
  %v2294 = vmax.f32 %v2258, 0.0
  %v2295 = vmax.f32 %v2259, 0.0
  %v2296 = vmax.f32 %v2260, 0.0
  %v2297 = vmax.f32 %v2261, 0.0
  %v2298 = vmax.f32 %v2262, 0.0
  %v2299 = vmax.f32 %v2263, 0.0
  %v2300 = vmax.f32 %v2264, 0.0
  %v2301 = vmax.f32 %v2265, 0.0
  %v2302 = vmax.f32 %v2266, 0.0
  %v2303 = vmax.f32 %v2267, 0.0
  %v2304 = vmax.f32 %v2268, 0.0
  %v2305 = vmax.f32 %v2269, 0.0
  %v2306 = vmul.f32 %v1771, %v2086
  %v2307 = vmul.f32 %v1772, %v2086
  %v2308 = vmul.f32 %v1773, %v2086
  %v2309 = vmul.f32 %v1774, %v2086
  %v2310 = vmul.f32 %v1775, %v2086
  %v2311 = vmul.f32 %v1776, %v2086
  %v2312 = vmul.f32 %v1777, %v2086
  %v2313 = vmul.f32 %v1778, %v2086
  %v2314 = vmul.f32 %v1779, %v2086
  %v2315 = vmul.f32 %v1780, %v2086
  %v2316 = vmul.f32 %v1781, %v2086
  %v2317 = vmul.f32 %v1782, %v2086
  %v2318 = vmul.f32 %v1783, %v2086
  %v2319 = vmul.f32 %v1784, %v2086
  %v2320 = vmul.f32 %v1785, %v2086
  %v2321 = vmul.f32 %v1786, %v2086
  %v2322 = vmul.f32 %v1787, %v2086
  %v2323 = vmul.f32 %v1788, %v2086
  %v2324 = vmul.f32 %v1789, %v2086
  %v2325 = vmul.f32 %v1790, %v2086
  %v2326 = vmul.f32 %v1791, %v2086
  %v2327 = vmul.f32 %v1792, %v2086
  %v2328 = vmul.f32 %v1793, %v2086
  %v2329 = vmul.f32 %v1794, %v2086
  %v2330 = vmul.f32 %v1795, %v2086
  %v2331 = vmul.f32 %v1796, %v2086
  %v2332 = vmul.f32 %v1797, %v2086
  %v2333 = vmul.f32 %v1798, %v2086
  %v2334 = vmul.f32 %v1799, %v2086
  %v2335 = vmul.f32 %v1800, %v2086
  %v2336 = vmul.f32 %v1801, %v2086
  %v2337 = vmul.f32 %v1802, %v2086
  %v2338 = vmul.f32 %v1803, %v2086
  %v2339 = vmul.f32 %v1804, %v2086
  %v2340 = vmul.f32 %v1805, %v2086
  %v2341 = vmul.f32 %v1806, %v2086
  %v2342 = vadd.f32 %v2306, %v2124
  %v2343 = vadd.f32 %v2307, %v2124
  %v2344 = vadd.f32 %v2308, %v2124
  %v2345 = vadd.f32 %v2309, %v2124
  %v2346 = vadd.f32 %v2310, %v2124
  %v2347 = vadd.f32 %v2311, %v2124
  %v2348 = vadd.f32 %v2312, %v2124
  %v2349 = vadd.f32 %v2313, %v2124
  %v2350 = vadd.f32 %v2314, %v2124
  %v2351 = vadd.f32 %v2315, %v2124
  %v2352 = vadd.f32 %v2316, %v2124
  %v2353 = vadd.f32 %v2317, %v2124
  %v2354 = vadd.f32 %v2318, %v2124
  %v2355 = vadd.f32 %v2319, %v2124
  %v2356 = vadd.f32 %v2320, %v2124
  %v2357 = vadd.f32 %v2321, %v2124
  %v2358 = vadd.f32 %v2322, %v2124
  %v2359 = vadd.f32 %v2323, %v2124
  %v2360 = vadd.f32 %v2324, %v2124
  %v2361 = vadd.f32 %v2325, %v2124
  %v2362 = vadd.f32 %v2326, %v2124
  %v2363 = vadd.f32 %v2327, %v2124
  %v2364 = vadd.f32 %v2328, %v2124
  %v2365 = vadd.f32 %v2329, %v2124
  %v2366 = vadd.f32 %v2330, %v2124
  %v2367 = vadd.f32 %v2331, %v2124
  %v2368 = vadd.f32 %v2332, %v2124
  %v2369 = vadd.f32 %v2333, %v2124
  %v2370 = vadd.f32 %v2334, %v2124
  %v2371 = vadd.f32 %v2335, %v2124
  %v2372 = vadd.f32 %v2336, %v2124
  %v2373 = vadd.f32 %v2337, %v2124
  %v2374 = vadd.f32 %v2338, %v2124
  %v2375 = vadd.f32 %v2339, %v2124
  %v2376 = vadd.f32 %v2340, %v2124
  %v2377 = vadd.f32 %v2341, %v2124
  %v2378 = vmax.f32 %v2342, 0.0
  %v2379 = vmax.f32 %v2343, 0.0
  %v2380 = vmax.f32 %v2344, 0.0
  %v2381 = vmax.f32 %v2345, 0.0
  %v2382 = vmax.f32 %v2346, 0.0
  %v2383 = vmax.f32 %v2347, 0.0
  %v2384 = vmax.f32 %v2348, 0.0
  %v2385 = vmax.f32 %v2349, 0.0
  %v2386 = vmax.f32 %v2350, 0.0
  %v2387 = vmax.f32 %v2351, 0.0
  %v2388 = vmax.f32 %v2352, 0.0
  %v2389 = vmax.f32 %v2353, 0.0
  %v2390 = vmax.f32 %v2354, 0.0
  %v2391 = vmax.f32 %v2355, 0.0
  %v2392 = vmax.f32 %v2356, 0.0
  %v2393 = vmax.f32 %v2357, 0.0
  %v2394 = vmax.f32 %v2358, 0.0
  %v2395 = vmax.f32 %v2359, 0.0
  %v2396 = vmax.f32 %v2360, 0.0
  %v2397 = vmax.f32 %v2361, 0.0
  %v2398 = vmax.f32 %v2362, 0.0
  %v2399 = vmax.f32 %v2363, 0.0
  %v2400 = vmax.f32 %v2364, 0.0
  %v2401 = vmax.f32 %v2365, 0.0
  %v2402 = vmax.f32 %v2366, 0.0
  %v2403 = vmax.f32 %v2367, 0.0
  %v2404 = vmax.f32 %v2368, 0.0
  %v2405 = vmax.f32 %v2369, 0.0
  %v2406 = vmax.f32 %v2370, 0.0
  %v2407 = vmax.f32 %v2371, 0.0
  %v2408 = vmax.f32 %v2372, 0.0
  %v2409 = vmax.f32 %v2373, 0.0
  %v2410 = vmax.f32 %v2374, 0.0
  %v2411 = vmax.f32 %v2375, 0.0
  %v2412 = vmax.f32 %v2376, 0.0
  %v2413 = vmax.f32 %v2377, 0.0
  %v2414 = vmul.f32 %v1921, %v2086
  %v2415 = vmul.f32 %v1922, %v2086
  %v2416 = vmul.f32 %v1923, %v2086
  %v2417 = vmul.f32 %v1924, %v2086
  %v2418 = vmul.f32 %v1925, %v2086
  %v2419 = vmul.f32 %v1926, %v2086
  %v2420 = vmul.f32 %v1927, %v2086
  %v2421 = vmul.f32 %v1928, %v2086
  %v2422 = vmul.f32 %v1929, %v2086
  %v2423 = vmul.f32 %v1930, %v2086
  %v2424 = vmul.f32 %v1931, %v2086
  %v2425 = vmul.f32 %v1932, %v2086
  %v2426 = vmul.f32 %v1933, %v2086
  %v2427 = vmul.f32 %v1934, %v2086
  %v2428 = vmul.f32 %v1935, %v2086
  %v2429 = vmul.f32 %v1936, %v2086
  %v2430 = vmul.f32 %v1937, %v2086
  %v2431 = vmul.f32 %v1938, %v2086
  %v2432 = vmul.f32 %v1939, %v2086
  %v2433 = vmul.f32 %v1940, %v2086
  %v2434 = vmul.f32 %v1941, %v2086
  %v2435 = vmul.f32 %v1942, %v2086
  %v2436 = vmul.f32 %v1943, %v2086
  %v2437 = vmul.f32 %v1944, %v2086
  %v2438 = vmul.f32 %v1945, %v2086
  %v2439 = vmul.f32 %v1946, %v2086
  %v2440 = vmul.f32 %v1947, %v2086
  %v2441 = vmul.f32 %v1948, %v2086
  %v2442 = vmul.f32 %v1949, %v2086
  %v2443 = vmul.f32 %v1950, %v2086
  %v2444 = vmul.f32 %v1951, %v2086
  %v2445 = vmul.f32 %v1952, %v2086
  %v2446 = vmul.f32 %v1953, %v2086
  %v2447 = vmul.f32 %v1954, %v2086
  %v2448 = vmul.f32 %v1955, %v2086
  %v2449 = vmul.f32 %v1956, %v2086
  %v2450 = vadd.f32 %v2414, %v2124
  %v2451 = vadd.f32 %v2415, %v2124
  %v2452 = vadd.f32 %v2416, %v2124
  %v2453 = vadd.f32 %v2417, %v2124
  %v2454 = vadd.f32 %v2418, %v2124
  %v2455 = vadd.f32 %v2419, %v2124
  %v2456 = vadd.f32 %v2420, %v2124
  %v2457 = vadd.f32 %v2421, %v2124
  %v2458 = vadd.f32 %v2422, %v2124
  %v2459 = vadd.f32 %v2423, %v2124
  %v2460 = vadd.f32 %v2424, %v2124
  %v2461 = vadd.f32 %v2425, %v2124
  %v2462 = vadd.f32 %v2426, %v2124
  %v2463 = vadd.f32 %v2427, %v2124
  %v2464 = vadd.f32 %v2428, %v2124
  %v2465 = vadd.f32 %v2429, %v2124
  %v2466 = vadd.f32 %v2430, %v2124
  %v2467 = vadd.f32 %v2431, %v2124
  %v2468 = vadd.f32 %v2432, %v2124
  %v2469 = vadd.f32 %v2433, %v2124
  %v2470 = vadd.f32 %v2434, %v2124
  %v2471 = vadd.f32 %v2435, %v2124
  %v2472 = vadd.f32 %v2436, %v2124
  %v2473 = vadd.f32 %v2437, %v2124
  %v2474 = vadd.f32 %v2438, %v2124
  %v2475 = vadd.f32 %v2439, %v2124
  %v2476 = vadd.f32 %v2440, %v2124
  %v2477 = vadd.f32 %v2441, %v2124
  %v2478 = vadd.f32 %v2442, %v2124
  %v2479 = vadd.f32 %v2443, %v2124
  %v2480 = vadd.f32 %v2444, %v2124
  %v2481 = vadd.f32 %v2445, %v2124
  %v2482 = vadd.f32 %v2446, %v2124
  %v2483 = vadd.f32 %v2447, %v2124
  %v2484 = vadd.f32 %v2448, %v2124
  %v2485 = vadd.f32 %v2449, %v2124
  %v2486 = vmax.f32 %v2450, 0.0
  %v2487 = vmax.f32 %v2451, 0.0
  %v2488 = vmax.f32 %v2452, 0.0
  %v2489 = vmax.f32 %v2453, 0.0
  %v2490 = vmax.f32 %v2454, 0.0
  %v2491 = vmax.f32 %v2455, 0.0
  %v2492 = vmax.f32 %v2456, 0.0
  %v2493 = vmax.f32 %v2457, 0.0
  %v2494 = vmax.f32 %v2458, 0.0
  %v2495 = vmax.f32 %v2459, 0.0
  %v2496 = vmax.f32 %v2460, 0.0
  %v2497 = vmax.f32 %v2461, 0.0
  %v2498 = vmax.f32 %v2462, 0.0
  %v2499 = vmax.f32 %v2463, 0.0
  %v2500 = vmax.f32 %v2464, 0.0
  %v2501 = vmax.f32 %v2465, 0.0
  %v2502 = vmax.f32 %v2466, 0.0
  %v2503 = vmax.f32 %v2467, 0.0
  %v2504 = vmax.f32 %v2468, 0.0
  %v2505 = vmax.f32 %v2469, 0.0
  %v2506 = vmax.f32 %v2470, 0.0
  %v2507 = vmax.f32 %v2471, 0.0
  %v2508 = vmax.f32 %v2472, 0.0
  %v2509 = vmax.f32 %v2473, 0.0
  %v2510 = vmax.f32 %v2474, 0.0
  %v2511 = vmax.f32 %v2475, 0.0
  %v2512 = vmax.f32 %v2476, 0.0
  %v2513 = vmax.f32 %v2477, 0.0
  %v2514 = vmax.f32 %v2478, 0.0
  %v2515 = vmax.f32 %v2479, 0.0
  %v2516 = vmax.f32 %v2480, 0.0
  %v2517 = vmax.f32 %v2481, 0.0
  %v2518 = vmax.f32 %v2482, 0.0
  %v2519 = vmax.f32 %v2483, 0.0
  %v2520 = vmax.f32 %v2484, 0.0
  %v2521 = vmax.f32 %v2485, 0.0
  %v2522 = vmax.f32 %v2162, %v2270
  %v2523 = vmax.f32 %v2163, %v2271
  %v2524 = vmax.f32 %v2164, %v2272
  %v2525 = vmax.f32 %v2165, %v2273
  %v2526 = vmax.f32 %v2166, %v2274
  %v2527 = vmax.f32 %v2167, %v2275
  %v2528 = vmax.f32 %v2168, %v2276
  %v2529 = vmax.f32 %v2169, %v2277
  %v2530 = vmax.f32 %v2170, %v2278
  %v2531 = vmax.f32 %v2171, %v2279
  %v2532 = vmax.f32 %v2172, %v2280
  %v2533 = vmax.f32 %v2173, %v2281
  %v2534 = vmax.f32 %v2174, %v2282
  %v2535 = vmax.f32 %v2175, %v2283
  %v2536 = vmax.f32 %v2176, %v2284
  %v2537 = vmax.f32 %v2177, %v2285
  %v2538 = vmax.f32 %v2178, %v2286
  %v2539 = vmax.f32 %v2179, %v2287
  %v2540 = vmax.f32 %v2180, %v2288
  %v2541 = vmax.f32 %v2181, %v2289
  %v2542 = vmax.f32 %v2182, %v2290
  %v2543 = vmax.f32 %v2183, %v2291
  %v2544 = vmax.f32 %v2184, %v2292
  %v2545 = vmax.f32 %v2185, %v2293
  %v2546 = vmax.f32 %v2186, %v2294
  %v2547 = vmax.f32 %v2187, %v2295
  %v2548 = vmax.f32 %v2188, %v2296
  %v2549 = vmax.f32 %v2189, %v2297
  %v2550 = vmax.f32 %v2190, %v2298
  %v2551 = vmax.f32 %v2191, %v2299
  %v2552 = vmax.f32 %v2192, %v2300
  %v2553 = vmax.f32 %v2193, %v2301
  %v2554 = vmax.f32 %v2194, %v2302
  %v2555 = vmax.f32 %v2195, %v2303
  %v2556 = vmax.f32 %v2196, %v2304
  %v2557 = vmax.f32 %v2197, %v2305
  %v2558 = vmax.f32 %v2378, %v2486
  %v2559 = vmax.f32 %v2379, %v2487
  %v2560 = vmax.f32 %v2380, %v2488
  %v2561 = vmax.f32 %v2381, %v2489
  %v2562 = vmax.f32 %v2382, %v2490
  %v2563 = vmax.f32 %v2383, %v2491
  %v2564 = vmax.f32 %v2384, %v2492
  %v2565 = vmax.f32 %v2385, %v2493
  %v2566 = vmax.f32 %v2386, %v2494
  %v2567 = vmax.f32 %v2387, %v2495
  %v2568 = vmax.f32 %v2388, %v2496
  %v2569 = vmax.f32 %v2389, %v2497
  %v2570 = vmax.f32 %v2390, %v2498
  %v2571 = vmax.f32 %v2391, %v2499
  %v2572 = vmax.f32 %v2392, %v2500
  %v2573 = vmax.f32 %v2393, %v2501
  %v2574 = vmax.f32 %v2394, %v2502
  %v2575 = vmax.f32 %v2395, %v2503
  %v2576 = vmax.f32 %v2396, %v2504
  %v2577 = vmax.f32 %v2397, %v2505
  %v2578 = vmax.f32 %v2398, %v2506
  %v2579 = vmax.f32 %v2399, %v2507
  %v2580 = vmax.f32 %v2400, %v2508
  %v2581 = vmax.f32 %v2401, %v2509
  %v2582 = vmax.f32 %v2402, %v2510
  %v2583 = vmax.f32 %v2403, %v2511
  %v2584 = vmax.f32 %v2404, %v2512
  %v2585 = vmax.f32 %v2405, %v2513
  %v2586 = vmax.f32 %v2406, %v2514
  %v2587 = vmax.f32 %v2407, %v2515
  %v2588 = vmax.f32 %v2408, %v2516
  %v2589 = vmax.f32 %v2409, %v2517
  %v2590 = vmax.f32 %v2410, %v2518
  %v2591 = vmax.f32 %v2411, %v2519
  %v2592 = vmax.f32 %v2412, %v2520
  %v2593 = vmax.f32 %v2413, %v2521
  %v2594 = vmax.f32 %v2522, %v2558
  %v2595 = vmax.f32 %v2523, %v2559
  %v2596 = vmax.f32 %v2524, %v2560
  %v2597 = vmax.f32 %v2525, %v2561
  %v2598 = vmax.f32 %v2526, %v2562
  %v2599 = vmax.f32 %v2527, %v2563
  %v2600 = vmax.f32 %v2528, %v2564
  %v2601 = vmax.f32 %v2529, %v2565
  %v2602 = vmax.f32 %v2530, %v2566
  %v2603 = vmax.f32 %v2531, %v2567
  %v2604 = vmax.f32 %v2532, %v2568
  %v2605 = vmax.f32 %v2533, %v2569
  %v2606 = vmax.f32 %v2534, %v2570
  %v2607 = vmax.f32 %v2535, %v2571
  %v2608 = vmax.f32 %v2536, %v2572
  %v2609 = vmax.f32 %v2537, %v2573
  %v2610 = vmax.f32 %v2538, %v2574
  %v2611 = vmax.f32 %v2539, %v2575
  %v2612 = vmax.f32 %v2540, %v2576
  %v2613 = vmax.f32 %v2541, %v2577
  %v2614 = vmax.f32 %v2542, %v2578
  %v2615 = vmax.f32 %v2543, %v2579
  %v2616 = vmax.f32 %v2544, %v2580
  %v2617 = vmax.f32 %v2545, %v2581
  %v2618 = vmax.f32 %v2546, %v2582
  %v2619 = vmax.f32 %v2547, %v2583
  %v2620 = vmax.f32 %v2548, %v2584
  %v2621 = vmax.f32 %v2549, %v2585
  %v2622 = vmax.f32 %v2550, %v2586
  %v2623 = vmax.f32 %v2551, %v2587
  %v2624 = vmax.f32 %v2552, %v2588
  %v2625 = vmax.f32 %v2553, %v2589
  %v2626 = vmax.f32 %v2554, %v2590
  %v2627 = vmax.f32 %v2555, %v2591
  %v2628 = vmax.f32 %v2556, %v2592
  %v2629 = vmax.f32 %v2557, %v2593
  %v2630 = vld [vmem:[%s9] sm:$0x1]
  %v2632 = vperm.slane %v2630, 0
  %v2634 = vmul.f32 %v2594, %v2632
  %v2635 = vmul.f32 %v2595, %v2632
  %v2636 = vmul.f32 %v2596, %v2632
  %v2637 = vmul.f32 %v2597, %v2632
  %v2638 = vmul.f32 %v2598, %v2632
  %v2639 = vmul.f32 %v2599, %v2632
  %v2640 = vmul.f32 %v2600, %v2632
  %v2641 = vmul.f32 %v2601, %v2632
  %v2642 = vmul.f32 %v2602, %v2632
  %v2643 = vmul.f32 %v2603, %v2632
  %v2644 = vmul.f32 %v2604, %v2632
  %v2645 = vmul.f32 %v2605, %v2632
  %v2646 = vmul.f32 %v2606, %v2632
  %v2647 = vmul.f32 %v2607, %v2632
  %v2648 = vmul.f32 %v2608, %v2632
  %v2649 = vmul.f32 %v2609, %v2632
  %v2650 = vmul.f32 %v2610, %v2632
  %v2651 = vmul.f32 %v2611, %v2632
  %v2652 = vmul.f32 %v2612, %v2632
  %v2653 = vmul.f32 %v2613, %v2632
  %v2654 = vmul.f32 %v2614, %v2632
  %v2655 = vmul.f32 %v2615, %v2632
  %v2656 = vmul.f32 %v2616, %v2632
  %v2657 = vmul.f32 %v2617, %v2632
  %v2658 = vmul.f32 %v2618, %v2632
  %v2659 = vmul.f32 %v2619, %v2632
  %v2660 = vmul.f32 %v2620, %v2632
  %v2661 = vmul.f32 %v2621, %v2632
  %v2662 = vmul.f32 %v2622, %v2632
  %v2663 = vmul.f32 %v2623, %v2632
  %v2664 = vmul.f32 %v2624, %v2632
  %v2665 = vmul.f32 %v2625, %v2632
  %v2666 = vmul.f32 %v2626, %v2632
  %v2667 = vmul.f32 %v2627, %v2632
  %v2668 = vmul.f32 %v2628, %v2632
  %v2669 = vmul.f32 %v2629, %v2632
  %2670 = vst.msk [vmem:[%s10] sm:$0xff] %vm1152, %v2634
  %2671 = vst.msk [vmem:[%s10 + $0x8] sm:$0xff] %vm1152, %v2635
  %2672 = vst.msk [vmem:[%s10 + $0x10] sm:$0xff] %vm1152, %v2636
  %2673 = vst.msk [vmem:[%s10 + $0x18] sm:$0xff] %vm1152, %v2637
  %2674 = vst.msk [vmem:[%s10 + $0x20] sm:$0xff] %vm1152, %v2638
  %2675 = vst.msk [vmem:[%s10 + $0x28] sm:$0xff] %vm1152, %v2639
  %2676 = vst.msk [vmem:[%s10 + $0x30] sm:$0xff] %vm1152, %v2640
  %2677 = vst.msk [vmem:[%s10 + $0x38] sm:$0xff] %vm1152, %v2641
  %2678 = vst.msk [vmem:[%s10 + $0x40] sm:$0xff] %vm1152, %v2642
  %2679 = vst.msk [vmem:[%s10 + $0x48] sm:$0xff] %vm1152, %v2643
  %2680 = vst.msk [vmem:[%s10 + $0x50] sm:$0xff] %vm1152, %v2644
  %2681 = vst.msk [vmem:[%s10 + $0x58] sm:$0xff] %vm1152, %v2645
  %2682 = vst.msk [vmem:[%s10 + $0x60] sm:$0xff] %vm1152, %v2646
  %2683 = vst.msk [vmem:[%s10 + $0x68] sm:$0xff] %vm1152, %v2647
  %2684 = vst.msk [vmem:[%s10 + $0x70] sm:$0xff] %vm1152, %v2648
  %2685 = vst.msk [vmem:[%s10 + $0x78] sm:$0xff] %vm1152, %v2649
  %2686 = vst.msk [vmem:[%s10 + $0x80] sm:$0xff] %vm1152, %v2650
  %2687 = vst.msk [vmem:[%s10 + $0x88] sm:$0xff] %vm1152, %v2651
  %2688 = vst.msk [vmem:[%s10 + $0x90] sm:$0xff] %vm1152, %v2652
  %2689 = vst.msk [vmem:[%s10 + $0x98] sm:$0xff] %vm1152, %v2653
  %2690 = vst.msk [vmem:[%s10 + $0xa0] sm:$0xff] %vm1152, %v2654
  %2691 = vst.msk [vmem:[%s10 + $0xa8] sm:$0xff] %vm1152, %v2655
  %2692 = vst.msk [vmem:[%s10 + $0xb0] sm:$0xff] %vm1152, %v2656
  %2693 = vst.msk [vmem:[%s10 + $0xb8] sm:$0xff] %vm1152, %v2657
  %2694 = vst.msk [vmem:[%s10 + $0xc0] sm:$0xff] %vm1152, %v2658
  %2695 = vst.msk [vmem:[%s10 + $0xc8] sm:$0xff] %vm1152, %v2659
  %2696 = vst.msk [vmem:[%s10 + $0xd0] sm:$0xff] %vm1152, %v2660
  %2697 = vst.msk [vmem:[%s10 + $0xd8] sm:$0xff] %vm1152, %v2661
  %2698 = vst.msk [vmem:[%s10 + $0xe0] sm:$0xff] %vm1152, %v2662
  %2699 = vst.msk [vmem:[%s10 + $0xe8] sm:$0xff] %vm1152, %v2663
  %2700 = vst.msk [vmem:[%s10 + $0xf0] sm:$0xff] %vm1152, %v2664
  %2701 = vst.msk [vmem:[%s10 + $0xf8] sm:$0xff] %vm1152, %v2665
  %2702 = vst.msk [vmem:[%s10 + $0x100] sm:$0xff] %vm1152, %v2666
  %2703 = vst.msk [vmem:[%s10 + $0x108] sm:$0xff] %vm1152, %v2667
  %2704 = vst.msk [vmem:[%s10 + $0x110] sm:$0xff] %vm1152, %v2668
  %2705 = vst.msk [vmem:[%s10 + $0x118] sm:$0xff] %vm1152, %v2669
  // Predicated region
  $region42: #{simple_cnn_with_te_apply.5} parent=0 // pred_check
    _
  $region43: #{simple_cnn_with_te_apply.5} parent=0 // pred_check_branch
    %2707 = sbr.rel (0) target = $region45
  $region44: #{simple_cnn_with_te_apply.5} parent=0 // pred_region
    _
  $region45: #{simple_cnn_with_te_apply.5} parent=0 // pred_fallthru
    _
  // Predicated region
  $region46: #{simple_cnn_with_te_apply.5} parent=0 // pred_check
    _
  $region47: #{simple_cnn_with_te_apply.5} parent=0 // pred_check_branch
    %2709 = sbr.rel (0) target = $region49
  $region48: #{simple_cnn_with_te_apply.5} parent=0 // pred_region
    _
  $region49: #{simple_cnn_with_te_apply.5} parent=0 // pred_fallthru
    _

// kernel: simple_cnn_with_te_apply.6
$region0: #{simple_cnn_with_te_apply.6}
  #allocation0 [shape = 'u32[]', space=smem, size = 0x4, offset = 0x4, fixed_abs, tag = 'smem constant byte address 0x4 - core index']
  #allocation1 [shape = 'u32[72,128]{1,0:T(1,128)}', space=vmem, size = 0x9000, scoped, tag = 'internal scratch']
  %s0 = inlined_call_operand.vmem [shape: f32[32,800], index: 0, kind: input, shape index: {}]
  %s1 = inlined_call_operand.vmem [shape: f32[32,800], index: 1, kind: input, shape index: {}]
  %s2 = inlined_call_operand.vmem [shape: f32[32,800], index: 2, kind: input, shape index: {}]
  %s3 = inlined_call_operand.vmem [shape: f32[32,800], index: 3, kind: input, shape index: {}]
  %s4 = inlined_call_operand.vmem [shape: f32[800,64], index: 4, kind: input, shape index: {}]
  %s5 = inlined_call_operand.vmem [shape: f32[800,1], index: 5, kind: input, shape index: {}]
  %s6 = inlined_call_operand.vmem [shape: f32[1,64], index: 6, kind: input, shape index: {}]
  %s7 = inlined_call_operand.vmem [shape: f32[1,64], index: 7, kind: input, shape index: {}]
  %s8 = inlined_call_operand.vmem [shape: f32[1,64], index: 8, kind: input, shape index: {}]
  %s9 = inlined_call_operand.vmem [shape: f32[1,64], index: 9, kind: input, shape index: {}]
  %s10 = inlined_call_operand.vmem [shape: f32[32,64], index: 10, kind: output, shape index: {}]
  %s11 = sld [smem:[#allocation0]]
  $region50: #{simple_cnn_with_te_apply.6} parent=0
    _
  %s13 = ssub.s32 1, %s11
  %s14 = scalar_select 0, %s13, %s11
  // Predicated region
  $region2: #{simple_cnn_with_te_apply.6} parent=0 // pred_check
    _
  $region3: #{simple_cnn_with_te_apply.6} parent=0 // pred_check_branch
    %16 = sbr.rel (0) target = $region5
  $region4: #{simple_cnn_with_te_apply.6} parent=0 // pred_region
    _
  $region5: #{simple_cnn_with_te_apply.6} parent=0 // pred_fallthru
    _
  // Predicated region
  $region6: #{simple_cnn_with_te_apply.6} parent=0 // pred_check
    _
  $region7: #{simple_cnn_with_te_apply.6} parent=0 // pred_check_branch
    %18 = sbr.rel (0) target = $region9
  $region8: #{simple_cnn_with_te_apply.6} parent=0 // pred_region
    _
  $region9: #{simple_cnn_with_te_apply.6} parent=0 // pred_fallthru
    _
  // Predicated region
  $region10: #{simple_cnn_with_te_apply.6} parent=0 // pred_check
    _
  $region11: #{simple_cnn_with_te_apply.6} parent=0 // pred_check_branch
    %20 = sbr.rel (0) target = $region13
  $region12: #{simple_cnn_with_te_apply.6} parent=0 // pred_region
    _
  $region13: #{simple_cnn_with_te_apply.6} parent=0 // pred_fallthru
    _
  // Predicated region
  $region14: #{simple_cnn_with_te_apply.6} parent=0 // pred_check
    _
  $region15: #{simple_cnn_with_te_apply.6} parent=0 // pred_check_branch
    %22 = sbr.rel (0) target = $region17
  $region16: #{simple_cnn_with_te_apply.6} parent=0 // pred_region
    _
  $region17: #{simple_cnn_with_te_apply.6} parent=0 // pred_fallthru
    _
  // Predicated region
  $region18: #{simple_cnn_with_te_apply.6} parent=0 // pred_check
    _
  $region19: #{simple_cnn_with_te_apply.6} parent=0 // pred_check_branch
    %24 = sbr.rel (0) target = $region21
  $region20: #{simple_cnn_with_te_apply.6} parent=0 // pred_region
    _
  $region21: #{simple_cnn_with_te_apply.6} parent=0 // pred_fallthru
    _
  // Predicated region
  $region22: #{simple_cnn_with_te_apply.6} parent=0 // pred_check
    _
  $region23: #{simple_cnn_with_te_apply.6} parent=0 // pred_check_branch
    %26 = sbr.rel (0) target = $region25
  $region24: #{simple_cnn_with_te_apply.6} parent=0 // pred_region
    _
  $region25: #{simple_cnn_with_te_apply.6} parent=0 // pred_fallthru
    _
  // Predicated region
  $region26: #{simple_cnn_with_te_apply.6} parent=0 // pred_check
    _
  $region27: #{simple_cnn_with_te_apply.6} parent=0 // pred_check_branch
    %28 = sbr.rel (0) target = $region29
  $region28: #{simple_cnn_with_te_apply.6} parent=0 // pred_region
    _
  $region29: #{simple_cnn_with_te_apply.6} parent=0 // pred_fallthru
    _
  // Predicated region
  $region30: #{simple_cnn_with_te_apply.6} parent=0 // pred_check
    _
  $region31: #{simple_cnn_with_te_apply.6} parent=0 // pred_check_branch
    %30 = sbr.rel (0) target = $region33
  $region32: #{simple_cnn_with_te_apply.6} parent=0 // pred_region
    _
  $region33: #{simple_cnn_with_te_apply.6} parent=0 // pred_fallthru
    _
  // Predicated region
  $region34: #{simple_cnn_with_te_apply.6} parent=0 // pred_check
    _
  $region35: #{simple_cnn_with_te_apply.6} parent=0 // pred_check_branch
    %32 = sbr.rel (0) target = $region37
  $region36: #{simple_cnn_with_te_apply.6} parent=0 // pred_region
    _
  $region37: #{simple_cnn_with_te_apply.6} parent=0 // pred_fallthru
    _
  // Predicated region
  $region38: #{simple_cnn_with_te_apply.6} parent=0 // pred_check
    _
  $region39: #{simple_cnn_with_te_apply.6} parent=0 // pred_check_branch
    %34 = sbr.rel (0) target = $region41
  $region40: #{simple_cnn_with_te_apply.6} parent=0 // pred_region
    _
  $region41: #{simple_cnn_with_te_apply.6} parent=0 // pred_fallthru
    _
  %v35 = vld [vmem:[%s4] sm:$0xff]
  %v36 = vld [vmem:[%s4 + $0x8] sm:$0xff]
  %v37 = vld [vmem:[%s4 + $0x10] sm:$0xff]
  %v38 = vld [vmem:[%s4 + $0x18] sm:$0xff]
  %v39 = vld [vmem:[%s4 + $0x20] sm:$0xff]
  %v40 = vld [vmem:[%s4 + $0x28] sm:$0xff]
  %v41 = vld [vmem:[%s4 + $0x30] sm:$0xff]
  %v42 = vld [vmem:[%s4 + $0x38] sm:$0xff]
  %v43 = vld [vmem:[%s4 + $0x40] sm:$0xff]
  %v44 = vld [vmem:[%s4 + $0x48] sm:$0xff]
  %v45 = vld [vmem:[%s4 + $0x50] sm:$0xff]
  %v46 = vld [vmem:[%s4 + $0x58] sm:$0xff]
  %v47 = vld [vmem:[%s4 + $0x60] sm:$0xff]
  %v48 = vld [vmem:[%s4 + $0x68] sm:$0xff]
  %v49 = vld [vmem:[%s4 + $0x70] sm:$0xff]
  %v50 = vld [vmem:[%s4 + $0x78] sm:$0xff]
  %v51 = vld [vmem:[%s4 + $0x80] sm:$0xff]
  %v52 = vld [vmem:[%s4 + $0x88] sm:$0xff]
  %v53 = vld [vmem:[%s4 + $0x90] sm:$0xff]
  %v54 = vld [vmem:[%s4 + $0x98] sm:$0xff]
  %v55 = vld [vmem:[%s4 + $0xa0] sm:$0xff]
  %v56 = vld [vmem:[%s4 + $0xa8] sm:$0xff]
  %v57 = vld [vmem:[%s4 + $0xb0] sm:$0xff]
  %v58 = vld [vmem:[%s4 + $0xb8] sm:$0xff]
  %v59 = vld [vmem:[%s4 + $0xc0] sm:$0xff]
  %v60 = vld [vmem:[%s4 + $0xc8] sm:$0xff]
  %v61 = vld [vmem:[%s4 + $0xd0] sm:$0xff]
  %v62 = vld [vmem:[%s4 + $0xd8] sm:$0xff]
  %v63 = vld [vmem:[%s4 + $0xe0] sm:$0xff]
  %v64 = vld [vmem:[%s4 + $0xe8] sm:$0xff]
  %v65 = vld [vmem:[%s4 + $0xf0] sm:$0xff]
  %v66 = vld [vmem:[%s4 + $0xf8] sm:$0xff]
  %v67 = vld [vmem:[%s4 + $0x100] sm:$0xff]
  %v68 = vld [vmem:[%s4 + $0x108] sm:$0xff]
  %v69 = vld [vmem:[%s4 + $0x110] sm:$0xff]
  %v70 = vld [vmem:[%s4 + $0x118] sm:$0xff]
  %v71 = vld [vmem:[%s4 + $0x120] sm:$0xff]
  %v72 = vld [vmem:[%s4 + $0x128] sm:$0xff]
  %v73 = vld [vmem:[%s4 + $0x130] sm:$0xff]
  %v74 = vld [vmem:[%s4 + $0x138] sm:$0xff]
  %v75 = vld [vmem:[%s4 + $0x140] sm:$0xff]
  %v76 = vld [vmem:[%s4 + $0x148] sm:$0xff]
  %v77 = vld [vmem:[%s4 + $0x150] sm:$0xff]
  %v78 = vld [vmem:[%s4 + $0x158] sm:$0xff]
  %v79 = vld [vmem:[%s4 + $0x160] sm:$0xff]
  %v80 = vld [vmem:[%s4 + $0x168] sm:$0xff]
  %v81 = vld [vmem:[%s4 + $0x170] sm:$0xff]
  %v82 = vld [vmem:[%s4 + $0x178] sm:$0xff]
  %v83 = vld [vmem:[%s4 + $0x180] sm:$0xff]
  %v84 = vld [vmem:[%s4 + $0x188] sm:$0xff]
  %v85 = vld [vmem:[%s4 + $0x190] sm:$0xff]
  %v86 = vld [vmem:[%s4 + $0x198] sm:$0xff]
  %v87 = vld [vmem:[%s4 + $0x1a0] sm:$0xff]
  %v88 = vld [vmem:[%s4 + $0x1a8] sm:$0xff]
  %v89 = vld [vmem:[%s4 + $0x1b0] sm:$0xff]
  %v90 = vld [vmem:[%s4 + $0x1b8] sm:$0xff]
  %v91 = vld [vmem:[%s4 + $0x1c0] sm:$0xff]
  %v92 = vld [vmem:[%s4 + $0x1c8] sm:$0xff]
  %v93 = vld [vmem:[%s4 + $0x1d0] sm:$0xff]
  %v94 = vld [vmem:[%s4 + $0x1d8] sm:$0xff]
  %v95 = vld [vmem:[%s4 + $0x1e0] sm:$0xff]
  %v96 = vld [vmem:[%s4 + $0x1e8] sm:$0xff]
  %v97 = vld [vmem:[%s4 + $0x1f0] sm:$0xff]
  %v98 = vld [vmem:[%s4 + $0x1f8] sm:$0xff]
  %v99 = vld [vmem:[%s4 + $0x200] sm:$0xff]
  %v100 = vld [vmem:[%s4 + $0x208] sm:$0xff]
  %v101 = vld [vmem:[%s4 + $0x210] sm:$0xff]
  %v102 = vld [vmem:[%s4 + $0x218] sm:$0xff]
  %v103 = vld [vmem:[%s4 + $0x220] sm:$0xff]
  %v104 = vld [vmem:[%s4 + $0x228] sm:$0xff]
  %v105 = vld [vmem:[%s4 + $0x230] sm:$0xff]
  %v106 = vld [vmem:[%s4 + $0x238] sm:$0xff]
  %v107 = vld [vmem:[%s4 + $0x240] sm:$0xff]
  %v108 = vld [vmem:[%s4 + $0x248] sm:$0xff]
  %v109 = vld [vmem:[%s4 + $0x250] sm:$0xff]
  %v110 = vld [vmem:[%s4 + $0x258] sm:$0xff]
  %v111 = vld [vmem:[%s4 + $0x260] sm:$0xff]
  %v112 = vld [vmem:[%s4 + $0x268] sm:$0xff]
  %v113 = vld [vmem:[%s4 + $0x270] sm:$0xff]
  %v114 = vld [vmem:[%s4 + $0x278] sm:$0xff]
  %v115 = vld [vmem:[%s4 + $0x280] sm:$0xff]
  %v116 = vld [vmem:[%s4 + $0x288] sm:$0xff]
  %v117 = vld [vmem:[%s4 + $0x290] sm:$0xff]
  %v118 = vld [vmem:[%s4 + $0x298] sm:$0xff]
  %v119 = vld [vmem:[%s4 + $0x2a0] sm:$0xff]
  %v120 = vld [vmem:[%s4 + $0x2a8] sm:$0xff]
  %v121 = vld [vmem:[%s4 + $0x2b0] sm:$0xff]
  %v122 = vld [vmem:[%s4 + $0x2b8] sm:$0xff]
  %v123 = vld [vmem:[%s4 + $0x2c0] sm:$0xff]
  %v124 = vld [vmem:[%s4 + $0x2c8] sm:$0xff]
  %v125 = vld [vmem:[%s4 + $0x2d0] sm:$0xff]
  %v126 = vld [vmem:[%s4 + $0x2d8] sm:$0xff]
  %v127 = vld [vmem:[%s4 + $0x2e0] sm:$0xff]
  %v128 = vld [vmem:[%s4 + $0x2e8] sm:$0xff]
  %v129 = vld [vmem:[%s4 + $0x2f0] sm:$0xff]
  %v130 = vld [vmem:[%s4 + $0x2f8] sm:$0xff]
  %v131 = vld [vmem:[%s4 + $0x300] sm:$0xff]
  %v132 = vld [vmem:[%s4 + $0x308] sm:$0xff]
  %v133 = vld [vmem:[%s4 + $0x310] sm:$0xff]
  %v134 = vld [vmem:[%s4 + $0x318] sm:$0xff]
  %v135 = vld [vmem:[%s5] sm:$0xff]
  %v136 = vld [vmem:[%s5 + $0x8] sm:$0xff]
  %v137 = vld [vmem:[%s5 + $0x10] sm:$0xff]
  %v138 = vld [vmem:[%s5 + $0x18] sm:$0xff]
  %v139 = vld [vmem:[%s5 + $0x20] sm:$0xff]
  %v140 = vld [vmem:[%s5 + $0x28] sm:$0xff]
  %v141 = vld [vmem:[%s5 + $0x30] sm:$0xff]
  %v142 = vld [vmem:[%s5 + $0x38] sm:$0xff]
  %v143 = vld [vmem:[%s5 + $0x40] sm:$0xff]
  %v144 = vld [vmem:[%s5 + $0x48] sm:$0xff]
  %v145 = vld [vmem:[%s5 + $0x50] sm:$0xff]
  %v146 = vld [vmem:[%s5 + $0x58] sm:$0xff]
  %v147 = vld [vmem:[%s5 + $0x60] sm:$0xff]
  %v148 = vld [vmem:[%s5 + $0x68] sm:$0xff]
  %v149 = vld [vmem:[%s5 + $0x70] sm:$0xff]
  %v150 = vld [vmem:[%s5 + $0x78] sm:$0xff]
  %v151 = vld [vmem:[%s5 + $0x80] sm:$0xff]
  %v152 = vld [vmem:[%s5 + $0x88] sm:$0xff]
  %v153 = vld [vmem:[%s5 + $0x90] sm:$0xff]
  %v154 = vld [vmem:[%s5 + $0x98] sm:$0xff]
  %v155 = vld [vmem:[%s5 + $0xa0] sm:$0xff]
  %v156 = vld [vmem:[%s5 + $0xa8] sm:$0xff]
  %v157 = vld [vmem:[%s5 + $0xb0] sm:$0xff]
  %v158 = vld [vmem:[%s5 + $0xb8] sm:$0xff]
  %v159 = vld [vmem:[%s5 + $0xc0] sm:$0xff]
  %v160 = vld [vmem:[%s5 + $0xc8] sm:$0xff]
  %v161 = vld [vmem:[%s5 + $0xd0] sm:$0xff]
  %v162 = vld [vmem:[%s5 + $0xd8] sm:$0xff]
  %v163 = vld [vmem:[%s5 + $0xe0] sm:$0xff]
  %v164 = vld [vmem:[%s5 + $0xe8] sm:$0xff]
  %v165 = vld [vmem:[%s5 + $0xf0] sm:$0xff]
  %v166 = vld [vmem:[%s5 + $0xf8] sm:$0xff]
  %v167 = vld [vmem:[%s5 + $0x100] sm:$0xff]
  %v168 = vld [vmem:[%s5 + $0x108] sm:$0xff]
  %v169 = vld [vmem:[%s5 + $0x110] sm:$0xff]
  %v170 = vld [vmem:[%s5 + $0x118] sm:$0xff]
  %v171 = vld [vmem:[%s5 + $0x120] sm:$0xff]
  %v172 = vld [vmem:[%s5 + $0x128] sm:$0xff]
  %v173 = vld [vmem:[%s5 + $0x130] sm:$0xff]
  %v174 = vld [vmem:[%s5 + $0x138] sm:$0xff]
  %v175 = vld [vmem:[%s5 + $0x140] sm:$0xff]
  %v176 = vld [vmem:[%s5 + $0x148] sm:$0xff]
  %v177 = vld [vmem:[%s5 + $0x150] sm:$0xff]
  %v178 = vld [vmem:[%s5 + $0x158] sm:$0xff]
  %v179 = vld [vmem:[%s5 + $0x160] sm:$0xff]
  %v180 = vld [vmem:[%s5 + $0x168] sm:$0xff]
  %v181 = vld [vmem:[%s5 + $0x170] sm:$0xff]
  %v182 = vld [vmem:[%s5 + $0x178] sm:$0xff]
  %v183 = vld [vmem:[%s5 + $0x180] sm:$0xff]
  %v184 = vld [vmem:[%s5 + $0x188] sm:$0xff]
  %v185 = vld [vmem:[%s5 + $0x190] sm:$0xff]
  %v186 = vld [vmem:[%s5 + $0x198] sm:$0xff]
  %v187 = vld [vmem:[%s5 + $0x1a0] sm:$0xff]
  %v188 = vld [vmem:[%s5 + $0x1a8] sm:$0xff]
  %v189 = vld [vmem:[%s5 + $0x1b0] sm:$0xff]
  %v190 = vld [vmem:[%s5 + $0x1b8] sm:$0xff]
  %v191 = vld [vmem:[%s5 + $0x1c0] sm:$0xff]
  %v192 = vld [vmem:[%s5 + $0x1c8] sm:$0xff]
  %v193 = vld [vmem:[%s5 + $0x1d0] sm:$0xff]
  %v194 = vld [vmem:[%s5 + $0x1d8] sm:$0xff]
  %v195 = vld [vmem:[%s5 + $0x1e0] sm:$0xff]
  %v196 = vld [vmem:[%s5 + $0x1e8] sm:$0xff]
  %v197 = vld [vmem:[%s5 + $0x1f0] sm:$0xff]
  %v198 = vld [vmem:[%s5 + $0x1f8] sm:$0xff]
  %v199 = vld [vmem:[%s5 + $0x200] sm:$0xff]
  %v200 = vld [vmem:[%s5 + $0x208] sm:$0xff]
  %v201 = vld [vmem:[%s5 + $0x210] sm:$0xff]
  %v202 = vld [vmem:[%s5 + $0x218] sm:$0xff]
  %v203 = vld [vmem:[%s5 + $0x220] sm:$0xff]
  %v204 = vld [vmem:[%s5 + $0x228] sm:$0xff]
  %v205 = vld [vmem:[%s5 + $0x230] sm:$0xff]
  %v206 = vld [vmem:[%s5 + $0x238] sm:$0xff]
  %v207 = vld [vmem:[%s5 + $0x240] sm:$0xff]
  %v208 = vld [vmem:[%s5 + $0x248] sm:$0xff]
  %v209 = vld [vmem:[%s5 + $0x250] sm:$0xff]
  %v210 = vld [vmem:[%s5 + $0x258] sm:$0xff]
  %v211 = vld [vmem:[%s5 + $0x260] sm:$0xff]
  %v212 = vld [vmem:[%s5 + $0x268] sm:$0xff]
  %v213 = vld [vmem:[%s5 + $0x270] sm:$0xff]
  %v214 = vld [vmem:[%s5 + $0x278] sm:$0xff]
  %v215 = vld [vmem:[%s5 + $0x280] sm:$0xff]
  %v216 = vld [vmem:[%s5 + $0x288] sm:$0xff]
  %v217 = vld [vmem:[%s5 + $0x290] sm:$0xff]
  %v218 = vld [vmem:[%s5 + $0x298] sm:$0xff]
  %v219 = vld [vmem:[%s5 + $0x2a0] sm:$0xff]
  %v220 = vld [vmem:[%s5 + $0x2a8] sm:$0xff]
  %v221 = vld [vmem:[%s5 + $0x2b0] sm:$0xff]
  %v222 = vld [vmem:[%s5 + $0x2b8] sm:$0xff]
  %v223 = vld [vmem:[%s5 + $0x2c0] sm:$0xff]
  %v224 = vld [vmem:[%s5 + $0x2c8] sm:$0xff]
  %v225 = vld [vmem:[%s5 + $0x2d0] sm:$0xff]
  %v226 = vld [vmem:[%s5 + $0x2d8] sm:$0xff]
  %v227 = vld [vmem:[%s5 + $0x2e0] sm:$0xff]
  %v228 = vld [vmem:[%s5 + $0x2e8] sm:$0xff]
  %v229 = vld [vmem:[%s5 + $0x2f0] sm:$0xff]
  %v230 = vld [vmem:[%s5 + $0x2f8] sm:$0xff]
  %v231 = vld [vmem:[%s5 + $0x300] sm:$0xff]
  %v232 = vld [vmem:[%s5 + $0x308] sm:$0xff]
  %v233 = vld [vmem:[%s5 + $0x310] sm:$0xff]
  %v234 = vld [vmem:[%s5 + $0x318] sm:$0xff]
  %236 = vset.pattern.permute.xlu0 0
  %237 = vperm.xlu0 %236, %v135
  %v238 = vpop.permute.xlu0 %237
  %241 = vset.pattern.permute.xlu0 0
  %242 = vperm.xlu0 %241, %v136
  %v243 = vpop.permute.xlu0 %242
  %246 = vset.pattern.permute.xlu0 0
  %247 = vperm.xlu0 %246, %v137
  %v248 = vpop.permute.xlu0 %247
  %251 = vset.pattern.permute.xlu0 0
  %252 = vperm.xlu0 %251, %v138
  %v253 = vpop.permute.xlu0 %252
  %256 = vset.pattern.permute.xlu0 0
  %257 = vperm.xlu0 %256, %v139
  %v258 = vpop.permute.xlu0 %257
  %261 = vset.pattern.permute.xlu0 0
  %262 = vperm.xlu0 %261, %v140
  %v263 = vpop.permute.xlu0 %262
  %266 = vset.pattern.permute.xlu0 0
  %267 = vperm.xlu0 %266, %v141
  %v268 = vpop.permute.xlu0 %267
  %271 = vset.pattern.permute.xlu0 0
  %272 = vperm.xlu0 %271, %v142
  %v273 = vpop.permute.xlu0 %272
  %276 = vset.pattern.permute.xlu0 0
  %277 = vperm.xlu0 %276, %v143
  %v278 = vpop.permute.xlu0 %277
  %281 = vset.pattern.permute.xlu0 0
  %282 = vperm.xlu0 %281, %v144
  %v283 = vpop.permute.xlu0 %282
  %286 = vset.pattern.permute.xlu0 0
  %287 = vperm.xlu0 %286, %v145
  %v288 = vpop.permute.xlu0 %287
  %291 = vset.pattern.permute.xlu0 0
  %292 = vperm.xlu0 %291, %v146
  %v293 = vpop.permute.xlu0 %292
  %296 = vset.pattern.permute.xlu0 0
  %297 = vperm.xlu0 %296, %v147
  %v298 = vpop.permute.xlu0 %297
  %301 = vset.pattern.permute.xlu0 0
  %302 = vperm.xlu0 %301, %v148
  %v303 = vpop.permute.xlu0 %302
  %306 = vset.pattern.permute.xlu0 0
  %307 = vperm.xlu0 %306, %v149
  %v308 = vpop.permute.xlu0 %307
  %311 = vset.pattern.permute.xlu0 0
  %312 = vperm.xlu0 %311, %v150
  %v313 = vpop.permute.xlu0 %312
  %316 = vset.pattern.permute.xlu0 0
  %317 = vperm.xlu0 %316, %v151
  %v318 = vpop.permute.xlu0 %317
  %321 = vset.pattern.permute.xlu0 0
  %322 = vperm.xlu0 %321, %v152
  %v323 = vpop.permute.xlu0 %322
  %326 = vset.pattern.permute.xlu0 0
  %327 = vperm.xlu0 %326, %v153
  %v328 = vpop.permute.xlu0 %327
  %331 = vset.pattern.permute.xlu0 0
  %332 = vperm.xlu0 %331, %v154
  %v333 = vpop.permute.xlu0 %332
  %336 = vset.pattern.permute.xlu0 0
  %337 = vperm.xlu0 %336, %v155
  %v338 = vpop.permute.xlu0 %337
  %341 = vset.pattern.permute.xlu0 0
  %342 = vperm.xlu0 %341, %v156
  %v343 = vpop.permute.xlu0 %342
  %346 = vset.pattern.permute.xlu0 0
  %347 = vperm.xlu0 %346, %v157
  %v348 = vpop.permute.xlu0 %347
  %351 = vset.pattern.permute.xlu0 0
  %352 = vperm.xlu0 %351, %v158
  %v353 = vpop.permute.xlu0 %352
  %356 = vset.pattern.permute.xlu0 0
  %357 = vperm.xlu0 %356, %v159
  %v358 = vpop.permute.xlu0 %357
  %361 = vset.pattern.permute.xlu0 0
  %362 = vperm.xlu0 %361, %v160
  %v363 = vpop.permute.xlu0 %362
  %366 = vset.pattern.permute.xlu0 0
  %367 = vperm.xlu0 %366, %v161
  %v368 = vpop.permute.xlu0 %367
  %371 = vset.pattern.permute.xlu0 0
  %372 = vperm.xlu0 %371, %v162
  %v373 = vpop.permute.xlu0 %372
  %376 = vset.pattern.permute.xlu0 0
  %377 = vperm.xlu0 %376, %v163
  %v378 = vpop.permute.xlu0 %377
  %381 = vset.pattern.permute.xlu0 0
  %382 = vperm.xlu0 %381, %v164
  %v383 = vpop.permute.xlu0 %382
  %386 = vset.pattern.permute.xlu0 0
  %387 = vperm.xlu0 %386, %v165
  %v388 = vpop.permute.xlu0 %387
  %391 = vset.pattern.permute.xlu0 0
  %392 = vperm.xlu0 %391, %v166
  %v393 = vpop.permute.xlu0 %392
  %396 = vset.pattern.permute.xlu0 0
  %397 = vperm.xlu0 %396, %v167
  %v398 = vpop.permute.xlu0 %397
  %401 = vset.pattern.permute.xlu0 0
  %402 = vperm.xlu0 %401, %v168
  %v403 = vpop.permute.xlu0 %402
  %406 = vset.pattern.permute.xlu0 0
  %407 = vperm.xlu0 %406, %v169
  %v408 = vpop.permute.xlu0 %407
  %411 = vset.pattern.permute.xlu0 0
  %412 = vperm.xlu0 %411, %v170
  %v413 = vpop.permute.xlu0 %412
  %416 = vset.pattern.permute.xlu0 0
  %417 = vperm.xlu0 %416, %v171
  %v418 = vpop.permute.xlu0 %417
  %421 = vset.pattern.permute.xlu0 0
  %422 = vperm.xlu0 %421, %v172
  %v423 = vpop.permute.xlu0 %422
  %426 = vset.pattern.permute.xlu0 0
  %427 = vperm.xlu0 %426, %v173
  %v428 = vpop.permute.xlu0 %427
  %431 = vset.pattern.permute.xlu0 0
  %432 = vperm.xlu0 %431, %v174
  %v433 = vpop.permute.xlu0 %432
  %436 = vset.pattern.permute.xlu0 0
  %437 = vperm.xlu0 %436, %v175
  %v438 = vpop.permute.xlu0 %437
  %441 = vset.pattern.permute.xlu0 0
  %442 = vperm.xlu0 %441, %v176
  %v443 = vpop.permute.xlu0 %442
  %446 = vset.pattern.permute.xlu0 0
  %447 = vperm.xlu0 %446, %v177
  %v448 = vpop.permute.xlu0 %447
  %451 = vset.pattern.permute.xlu0 0
  %452 = vperm.xlu0 %451, %v178
  %v453 = vpop.permute.xlu0 %452
  %456 = vset.pattern.permute.xlu0 0
  %457 = vperm.xlu0 %456, %v179
  %v458 = vpop.permute.xlu0 %457
  %461 = vset.pattern.permute.xlu0 0
  %462 = vperm.xlu0 %461, %v180
  %v463 = vpop.permute.xlu0 %462
  %466 = vset.pattern.permute.xlu0 0
  %467 = vperm.xlu0 %466, %v181
  %v468 = vpop.permute.xlu0 %467
  %471 = vset.pattern.permute.xlu0 0
  %472 = vperm.xlu0 %471, %v182
  %v473 = vpop.permute.xlu0 %472
  %476 = vset.pattern.permute.xlu0 0
  %477 = vperm.xlu0 %476, %v183
  %v478 = vpop.permute.xlu0 %477
  %481 = vset.pattern.permute.xlu0 0
  %482 = vperm.xlu0 %481, %v184
  %v483 = vpop.permute.xlu0 %482
  %486 = vset.pattern.permute.xlu0 0
  %487 = vperm.xlu0 %486, %v185
  %v488 = vpop.permute.xlu0 %487
  %491 = vset.pattern.permute.xlu0 0
  %492 = vperm.xlu0 %491, %v186
  %v493 = vpop.permute.xlu0 %492
  %496 = vset.pattern.permute.xlu0 0
  %497 = vperm.xlu0 %496, %v187
  %v498 = vpop.permute.xlu0 %497
  %501 = vset.pattern.permute.xlu0 0
  %502 = vperm.xlu0 %501, %v188
  %v503 = vpop.permute.xlu0 %502
  %506 = vset.pattern.permute.xlu0 0
  %507 = vperm.xlu0 %506, %v189
  %v508 = vpop.permute.xlu0 %507
  %511 = vset.pattern.permute.xlu0 0
  %512 = vperm.xlu0 %511, %v190
  %v513 = vpop.permute.xlu0 %512
  %516 = vset.pattern.permute.xlu0 0
  %517 = vperm.xlu0 %516, %v191
  %v518 = vpop.permute.xlu0 %517
  %521 = vset.pattern.permute.xlu0 0
  %522 = vperm.xlu0 %521, %v192
  %v523 = vpop.permute.xlu0 %522
  %526 = vset.pattern.permute.xlu0 0
  %527 = vperm.xlu0 %526, %v193
  %v528 = vpop.permute.xlu0 %527
  %531 = vset.pattern.permute.xlu0 0
  %532 = vperm.xlu0 %531, %v194
  %v533 = vpop.permute.xlu0 %532
  %536 = vset.pattern.permute.xlu0 0
  %537 = vperm.xlu0 %536, %v195
  %v538 = vpop.permute.xlu0 %537
  %541 = vset.pattern.permute.xlu0 0
  %542 = vperm.xlu0 %541, %v196
  %v543 = vpop.permute.xlu0 %542
  %546 = vset.pattern.permute.xlu0 0
  %547 = vperm.xlu0 %546, %v197
  %v548 = vpop.permute.xlu0 %547
  %551 = vset.pattern.permute.xlu0 0
  %552 = vperm.xlu0 %551, %v198
  %v553 = vpop.permute.xlu0 %552
  %556 = vset.pattern.permute.xlu0 0
  %557 = vperm.xlu0 %556, %v199
  %v558 = vpop.permute.xlu0 %557
  %561 = vset.pattern.permute.xlu0 0
  %562 = vperm.xlu0 %561, %v200
  %v563 = vpop.permute.xlu0 %562
  %566 = vset.pattern.permute.xlu0 0
  %567 = vperm.xlu0 %566, %v201
  %v568 = vpop.permute.xlu0 %567
  %571 = vset.pattern.permute.xlu0 0
  %572 = vperm.xlu0 %571, %v202
  %v573 = vpop.permute.xlu0 %572
  %576 = vset.pattern.permute.xlu0 0
  %577 = vperm.xlu0 %576, %v203
  %v578 = vpop.permute.xlu0 %577
  %581 = vset.pattern.permute.xlu0 0
  %582 = vperm.xlu0 %581, %v204
  %v583 = vpop.permute.xlu0 %582
  %586 = vset.pattern.permute.xlu0 0
  %587 = vperm.xlu0 %586, %v205
  %v588 = vpop.permute.xlu0 %587
  %591 = vset.pattern.permute.xlu0 0
  %592 = vperm.xlu0 %591, %v206
  %v593 = vpop.permute.xlu0 %592
  %596 = vset.pattern.permute.xlu0 0
  %597 = vperm.xlu0 %596, %v207
  %v598 = vpop.permute.xlu0 %597
  %601 = vset.pattern.permute.xlu0 0
  %602 = vperm.xlu0 %601, %v208
  %v603 = vpop.permute.xlu0 %602
  %606 = vset.pattern.permute.xlu0 0
  %607 = vperm.xlu0 %606, %v209
  %v608 = vpop.permute.xlu0 %607
  %611 = vset.pattern.permute.xlu0 0
  %612 = vperm.xlu0 %611, %v210
  %v613 = vpop.permute.xlu0 %612
  %616 = vset.pattern.permute.xlu0 0
  %617 = vperm.xlu0 %616, %v211
  %v618 = vpop.permute.xlu0 %617
  %621 = vset.pattern.permute.xlu0 0
  %622 = vperm.xlu0 %621, %v212
  %v623 = vpop.permute.xlu0 %622
  %626 = vset.pattern.permute.xlu0 0
  %627 = vperm.xlu0 %626, %v213
  %v628 = vpop.permute.xlu0 %627
  %631 = vset.pattern.permute.xlu0 0
  %632 = vperm.xlu0 %631, %v214
  %v633 = vpop.permute.xlu0 %632
  %636 = vset.pattern.permute.xlu0 0
  %637 = vperm.xlu0 %636, %v215
  %v638 = vpop.permute.xlu0 %637
  %641 = vset.pattern.permute.xlu0 0
  %642 = vperm.xlu0 %641, %v216
  %v643 = vpop.permute.xlu0 %642
  %646 = vset.pattern.permute.xlu0 0
  %647 = vperm.xlu0 %646, %v217
  %v648 = vpop.permute.xlu0 %647
  %651 = vset.pattern.permute.xlu0 0
  %652 = vperm.xlu0 %651, %v218
  %v653 = vpop.permute.xlu0 %652
  %656 = vset.pattern.permute.xlu0 0
  %657 = vperm.xlu0 %656, %v219
  %v658 = vpop.permute.xlu0 %657
  %661 = vset.pattern.permute.xlu0 0
  %662 = vperm.xlu0 %661, %v220
  %v663 = vpop.permute.xlu0 %662
  %666 = vset.pattern.permute.xlu0 0
  %667 = vperm.xlu0 %666, %v221
  %v668 = vpop.permute.xlu0 %667
  %671 = vset.pattern.permute.xlu0 0
  %672 = vperm.xlu0 %671, %v222
  %v673 = vpop.permute.xlu0 %672
  %676 = vset.pattern.permute.xlu0 0
  %677 = vperm.xlu0 %676, %v223
  %v678 = vpop.permute.xlu0 %677
  %681 = vset.pattern.permute.xlu0 0
  %682 = vperm.xlu0 %681, %v224
  %v683 = vpop.permute.xlu0 %682
  %686 = vset.pattern.permute.xlu0 0
  %687 = vperm.xlu0 %686, %v225
  %v688 = vpop.permute.xlu0 %687
  %691 = vset.pattern.permute.xlu0 0
  %692 = vperm.xlu0 %691, %v226
  %v693 = vpop.permute.xlu0 %692
  %696 = vset.pattern.permute.xlu0 0
  %697 = vperm.xlu0 %696, %v227
  %v698 = vpop.permute.xlu0 %697
  %701 = vset.pattern.permute.xlu0 0
  %702 = vperm.xlu0 %701, %v228
  %v703 = vpop.permute.xlu0 %702
  %706 = vset.pattern.permute.xlu0 0
  %707 = vperm.xlu0 %706, %v229
  %v708 = vpop.permute.xlu0 %707
  %711 = vset.pattern.permute.xlu0 0
  %712 = vperm.xlu0 %711, %v230
  %v713 = vpop.permute.xlu0 %712
  %716 = vset.pattern.permute.xlu0 0
  %717 = vperm.xlu0 %716, %v231
  %v718 = vpop.permute.xlu0 %717
  %721 = vset.pattern.permute.xlu0 0
  %722 = vperm.xlu0 %721, %v232
  %v723 = vpop.permute.xlu0 %722
  %726 = vset.pattern.permute.xlu0 0
  %727 = vperm.xlu0 %726, %v233
  %v728 = vpop.permute.xlu0 %727
  %731 = vset.pattern.permute.xlu0 0
  %732 = vperm.xlu0 %731, %v234
  %v733 = vpop.permute.xlu0 %732
  %v735 = vmul.f32 %v35, %v238
  %v736 = vmul.f32 %v36, %v243
  %v737 = vmul.f32 %v37, %v248
  %v738 = vmul.f32 %v38, %v253
  %v739 = vmul.f32 %v39, %v258
  %v740 = vmul.f32 %v40, %v263
  %v741 = vmul.f32 %v41, %v268
  %v742 = vmul.f32 %v42, %v273
  %v743 = vmul.f32 %v43, %v278
  %v744 = vmul.f32 %v44, %v283
  %v745 = vmul.f32 %v45, %v288
  %v746 = vmul.f32 %v46, %v293
  %v747 = vmul.f32 %v47, %v298
  %v748 = vmul.f32 %v48, %v303
  %v749 = vmul.f32 %v49, %v308
  %v750 = vmul.f32 %v50, %v313
  %v751 = vmul.f32 %v51, %v318
  %v752 = vmul.f32 %v52, %v323
  %v753 = vmul.f32 %v53, %v328
  %v754 = vmul.f32 %v54, %v333
  %v755 = vmul.f32 %v55, %v338
  %v756 = vmul.f32 %v56, %v343
  %v757 = vmul.f32 %v57, %v348
  %v758 = vmul.f32 %v58, %v353
  %v759 = vmul.f32 %v59, %v358
  %v760 = vmul.f32 %v60, %v363
  %v761 = vmul.f32 %v61, %v368
  %v762 = vmul.f32 %v62, %v373
  %v763 = vmul.f32 %v63, %v378
  %v764 = vmul.f32 %v64, %v383
  %v765 = vmul.f32 %v65, %v388
  %v766 = vmul.f32 %v66, %v393
  %v767 = vmul.f32 %v67, %v398
  %v768 = vmul.f32 %v68, %v403
  %v769 = vmul.f32 %v69, %v408
  %v770 = vmul.f32 %v70, %v413
  %v771 = vmul.f32 %v71, %v418
  %v772 = vmul.f32 %v72, %v423
  %v773 = vmul.f32 %v73, %v428
  %v774 = vmul.f32 %v74, %v433
  %v775 = vmul.f32 %v75, %v438
  %v776 = vmul.f32 %v76, %v443
  %v777 = vmul.f32 %v77, %v448
  %v778 = vmul.f32 %v78, %v453
  %v779 = vmul.f32 %v79, %v458
  %v780 = vmul.f32 %v80, %v463
  %v781 = vmul.f32 %v81, %v468
  %v782 = vmul.f32 %v82, %v473
  %v783 = vmul.f32 %v83, %v478
  %v784 = vmul.f32 %v84, %v483
  %v785 = vmul.f32 %v85, %v488
  %v786 = vmul.f32 %v86, %v493
  %v787 = vmul.f32 %v87, %v498
  %v788 = vmul.f32 %v88, %v503
  %v789 = vmul.f32 %v89, %v508
  %v790 = vmul.f32 %v90, %v513
  %v791 = vmul.f32 %v91, %v518
  %v792 = vmul.f32 %v92, %v523
  %v793 = vmul.f32 %v93, %v528
  %v794 = vmul.f32 %v94, %v533
  %v795 = vmul.f32 %v95, %v538
  %v796 = vmul.f32 %v96, %v543
  %v797 = vmul.f32 %v97, %v548
  %v798 = vmul.f32 %v98, %v553
  %v799 = vmul.f32 %v99, %v558
  %v800 = vmul.f32 %v100, %v563
  %v801 = vmul.f32 %v101, %v568
  %v802 = vmul.f32 %v102, %v573
  %v803 = vmul.f32 %v103, %v578
  %v804 = vmul.f32 %v104, %v583
  %v805 = vmul.f32 %v105, %v588
  %v806 = vmul.f32 %v106, %v593
  %v807 = vmul.f32 %v107, %v598
  %v808 = vmul.f32 %v108, %v603
  %v809 = vmul.f32 %v109, %v608
  %v810 = vmul.f32 %v110, %v613
  %v811 = vmul.f32 %v111, %v618
  %v812 = vmul.f32 %v112, %v623
  %v813 = vmul.f32 %v113, %v628
  %v814 = vmul.f32 %v114, %v633
  %v815 = vmul.f32 %v115, %v638
  %v816 = vmul.f32 %v116, %v643
  %v817 = vmul.f32 %v117, %v648
  %v818 = vmul.f32 %v118, %v653
  %v819 = vmul.f32 %v119, %v658
  %v820 = vmul.f32 %v120, %v663
  %v821 = vmul.f32 %v121, %v668
  %v822 = vmul.f32 %v122, %v673
  %v823 = vmul.f32 %v123, %v678
  %v824 = vmul.f32 %v124, %v683
  %v825 = vmul.f32 %v125, %v688
  %v826 = vmul.f32 %v126, %v693
  %v827 = vmul.f32 %v127, %v698
  %v828 = vmul.f32 %v128, %v703
  %v829 = vmul.f32 %v129, %v708
  %v830 = vmul.f32 %v130, %v713
  %v831 = vmul.f32 %v131, %v718
  %v832 = vmul.f32 %v132, %v723
  %v833 = vmul.f32 %v133, %v728
  %v834 = vmul.f32 %v134, %v733
  %v835 = vld [vmem:[%s6] sm:$0x1]
  %v836 = vld [vmem:[%s0] sm:$0xff]
  %v837 = vld [vmem:[%s0 + $0x8] sm:$0xff]
  %v838 = vld [vmem:[%s0 + $0x10] sm:$0xff]
  %v839 = vld [vmem:[%s0 + $0x18] sm:$0xff]
  %v840 = vld [vmem:[%s0 + $0x20] sm:$0xff]
  %v841 = vld [vmem:[%s0 + $0x28] sm:$0xff]
  %v842 = vld [vmem:[%s0 + $0x30] sm:$0xff]
  %v843 = vld [vmem:[%s0 + $0x38] sm:$0xff]
  %v844 = vld [vmem:[%s0 + $0x40] sm:$0xff]
  %v845 = vld [vmem:[%s0 + $0x48] sm:$0xff]
  %v846 = vld [vmem:[%s0 + $0x50] sm:$0xff]
  %v847 = vld [vmem:[%s0 + $0x58] sm:$0xff]
  %v848 = vld [vmem:[%s0 + $0x60] sm:$0xff]
  %v849 = vld [vmem:[%s0 + $0x68] sm:$0xff]
  %v850 = vld [vmem:[%s0 + $0x70] sm:$0xff]
  %v851 = vld [vmem:[%s0 + $0x78] sm:$0xff]
  %v852 = vld [vmem:[%s0 + $0x80] sm:$0xff]
  %v853 = vld [vmem:[%s0 + $0x88] sm:$0xff]
  %v854 = vld [vmem:[%s0 + $0x90] sm:$0xff]
  %v855 = vld [vmem:[%s0 + $0x98] sm:$0xff]
  %v856 = vld [vmem:[%s0 + $0xa0] sm:$0xff]
  %v857 = vld [vmem:[%s0 + $0xa8] sm:$0xff]
  %v858 = vld [vmem:[%s0 + $0xb0] sm:$0xff]
  %v859 = vld [vmem:[%s0 + $0xb8] sm:$0xff]
  %v860 = vld [vmem:[%s0 + $0xc0] sm:$0xff]
  %v861 = vld [vmem:[%s0 + $0xc8] sm:$0xff]
  %v862 = vld [vmem:[%s0 + $0xd0] sm:$0xff]
  %v863 = vld [vmem:[%s0 + $0xd8] sm:$0xff]
  %v865 = vperm.slane %v835, 0
  %vm867 = vcmask 261120
  %v869 = vsel %vm867, %v842, 0
  %v872 = vsel %vm867, %v849, 0
  %v875 = vsel %vm867, %v856, 0
  %v878 = vsel %vm867, %v863, 0
  %880 = vmatpush.msra.mxu0 %v750
  %881 = vmatpush.msra.mxu0 %v749
  %882 = vmatpush.msra.mxu0 %v748
  %883 = vmatpush.msra.mxu0 %v747
  %884 = vmatpush.msra.mxu0 %v746
  %885 = vmatpush.msra.mxu0 %v745
  %886 = vmatpush.msra.mxu0 %v744
  %887 = vmatpush.msra.mxu0 %v743
  %888 = vmatpush.msra.mxu0 %v742
  %889 = vmatpush.msra.mxu0 %v741
  %890 = vmatpush.msra.mxu0 %v740
  %891 = vmatpush.msra.mxu0 %v739
  %892 = vmatpush.msra.mxu0 %v738
  %893 = vmatpush.msra.mxu0 %v737
  %894 = vmatpush.msra.mxu0 %v736
  %895 = vmatpush.msra.mxu0 %v735
  %896 = vmatmul.f32.gmra.mxu0 %v836
  %v897 = vpop.f32.mrf.mxu0
  %v898 = vadd.f32 %v865, %v897
  %899 = vmatmul.f32.gmra.mxu0 %v843
  %v900 = vpop.f32.mrf.mxu0
  %v901 = vadd.f32 %v865, %v900
  %902 = vmatmul.f32.gmra.mxu0 %v850
  %v903 = vpop.f32.mrf.mxu0
  %v904 = vadd.f32 %v865, %v903
  %905 = vmatmul.f32.gmra.mxu0 %v857
  %v906 = vpop.f32.mrf.mxu0
  %v907 = vadd.f32 %v865, %v906
  %908 = vdwg.mxu0
  %909 = vmatpush.msra.mxu0 %v766
  %910 = vmatpush.msra.mxu0 %v765
  %911 = vmatpush.msra.mxu0 %v764
  %912 = vmatpush.msra.mxu0 %v763
  %913 = vmatpush.msra.mxu0 %v762
  %914 = vmatpush.msra.mxu0 %v761
  %915 = vmatpush.msra.mxu0 %v760
  %916 = vmatpush.msra.mxu0 %v759
  %917 = vmatpush.msra.mxu0 %v758
  %918 = vmatpush.msra.mxu0 %v757
  %919 = vmatpush.msra.mxu0 %v756
  %920 = vmatpush.msra.mxu0 %v755
  %921 = vmatpush.msra.mxu0 %v754
  %922 = vmatpush.msra.mxu0 %v753
  %923 = vmatpush.msra.mxu0 %v752
  %924 = vmatpush.msra.mxu0 %v751
  %925 = vmatmul.f32.gmra.mxu0 %v837
  %v926 = vpop.f32.mrf.mxu0
  %v927 = vadd.f32 %v898, %v926
  %928 = vmatmul.f32.gmra.mxu0 %v844
  %v929 = vpop.f32.mrf.mxu0
  %v930 = vadd.f32 %v901, %v929
  %931 = vmatmul.f32.gmra.mxu0 %v851
  %v932 = vpop.f32.mrf.mxu0
  %v933 = vadd.f32 %v904, %v932
  %934 = vmatmul.f32.gmra.mxu0 %v858
  %v935 = vpop.f32.mrf.mxu0
  %v936 = vadd.f32 %v907, %v935
  %937 = vdwg.mxu0
  %938 = vmatpush.msra.mxu0 %v782
  %939 = vmatpush.msra.mxu0 %v781
  %940 = vmatpush.msra.mxu0 %v780
  %941 = vmatpush.msra.mxu0 %v779
  %942 = vmatpush.msra.mxu0 %v778
  %943 = vmatpush.msra.mxu0 %v777
  %944 = vmatpush.msra.mxu0 %v776
  %945 = vmatpush.msra.mxu0 %v775
  %946 = vmatpush.msra.mxu0 %v774
  %947 = vmatpush.msra.mxu0 %v773
  %948 = vmatpush.msra.mxu0 %v772
  %949 = vmatpush.msra.mxu0 %v771
  %950 = vmatpush.msra.mxu0 %v770
  %951 = vmatpush.msra.mxu0 %v769
  %952 = vmatpush.msra.mxu0 %v768
  %953 = vmatpush.msra.mxu0 %v767
  %954 = vmatmul.f32.gmra.mxu0 %v838
  %v955 = vpop.f32.mrf.mxu0
  %v956 = vadd.f32 %v927, %v955
  %957 = vmatmul.f32.gmra.mxu0 %v845
  %v958 = vpop.f32.mrf.mxu0
  %v959 = vadd.f32 %v930, %v958
  %960 = vmatmul.f32.gmra.mxu0 %v852
  %v961 = vpop.f32.mrf.mxu0
  %v962 = vadd.f32 %v933, %v961
  %963 = vmatmul.f32.gmra.mxu0 %v859
  %v964 = vpop.f32.mrf.mxu0
  %v965 = vadd.f32 %v936, %v964
  %966 = vdwg.mxu0
  %967 = vmatpush.msra.mxu0 %v798
  %968 = vmatpush.msra.mxu0 %v797
  %969 = vmatpush.msra.mxu0 %v796
  %970 = vmatpush.msra.mxu0 %v795
  %971 = vmatpush.msra.mxu0 %v794
  %972 = vmatpush.msra.mxu0 %v793
  %973 = vmatpush.msra.mxu0 %v792
  %974 = vmatpush.msra.mxu0 %v791
  %975 = vmatpush.msra.mxu0 %v790
  %976 = vmatpush.msra.mxu0 %v789
  %977 = vmatpush.msra.mxu0 %v788
  %978 = vmatpush.msra.mxu0 %v787
  %979 = vmatpush.msra.mxu0 %v786
  %980 = vmatpush.msra.mxu0 %v785
  %981 = vmatpush.msra.mxu0 %v784
  %982 = vmatpush.msra.mxu0 %v783
  %983 = vmatmul.f32.gmra.mxu0 %v839
  %v984 = vpop.f32.mrf.mxu0
  %v985 = vadd.f32 %v956, %v984
  %986 = vmatmul.f32.gmra.mxu0 %v846
  %v987 = vpop.f32.mrf.mxu0
  %v988 = vadd.f32 %v959, %v987
  %989 = vmatmul.f32.gmra.mxu0 %v853
  %v990 = vpop.f32.mrf.mxu0
  %v991 = vadd.f32 %v962, %v990
  %992 = vmatmul.f32.gmra.mxu0 %v860
  %v993 = vpop.f32.mrf.mxu0
  %v994 = vadd.f32 %v965, %v993
  %995 = vdwg.mxu0
  %996 = vmatpush.msra.mxu0 %v814
  %997 = vmatpush.msra.mxu0 %v813
  %998 = vmatpush.msra.mxu0 %v812
  %999 = vmatpush.msra.mxu0 %v811
  %1000 = vmatpush.msra.mxu0 %v810
  %1001 = vmatpush.msra.mxu0 %v809
  %1002 = vmatpush.msra.mxu0 %v808
  %1003 = vmatpush.msra.mxu0 %v807
  %1004 = vmatpush.msra.mxu0 %v806
  %1005 = vmatpush.msra.mxu0 %v805
  %1006 = vmatpush.msra.mxu0 %v804
  %1007 = vmatpush.msra.mxu0 %v803
  %1008 = vmatpush.msra.mxu0 %v802
  %1009 = vmatpush.msra.mxu0 %v801
  %1010 = vmatpush.msra.mxu0 %v800
  %1011 = vmatpush.msra.mxu0 %v799
  %1012 = vmatmul.f32.gmra.mxu0 %v840
  %v1013 = vpop.f32.mrf.mxu0
  %v1014 = vadd.f32 %v985, %v1013
  %1015 = vmatmul.f32.gmra.mxu0 %v847
  %v1016 = vpop.f32.mrf.mxu0
  %v1017 = vadd.f32 %v988, %v1016
  %1018 = vmatmul.f32.gmra.mxu0 %v854
  %v1019 = vpop.f32.mrf.mxu0
  %v1020 = vadd.f32 %v991, %v1019
  %1021 = vmatmul.f32.gmra.mxu0 %v861
  %v1022 = vpop.f32.mrf.mxu0
  %v1023 = vadd.f32 %v994, %v1022
  %1024 = vdwg.mxu0
  %1025 = vmatpush.msra.mxu0 %v830
  %1026 = vmatpush.msra.mxu0 %v829
  %1027 = vmatpush.msra.mxu0 %v828
  %1028 = vmatpush.msra.mxu0 %v827
  %1029 = vmatpush.msra.mxu0 %v826
  %1030 = vmatpush.msra.mxu0 %v825
  %1031 = vmatpush.msra.mxu0 %v824
  %1032 = vmatpush.msra.mxu0 %v823
  %1033 = vmatpush.msra.mxu0 %v822
  %1034 = vmatpush.msra.mxu0 %v821
  %1035 = vmatpush.msra.mxu0 %v820
  %1036 = vmatpush.msra.mxu0 %v819
  %1037 = vmatpush.msra.mxu0 %v818
  %1038 = vmatpush.msra.mxu0 %v817
  %1039 = vmatpush.msra.mxu0 %v816
  %1040 = vmatpush.msra.mxu0 %v815
  %1041 = vmatmul.f32.gmra.mxu0 %v841
  %v1042 = vpop.f32.mrf.mxu0
  %v1043 = vadd.f32 %v1014, %v1042
  %1044 = vmatmul.f32.gmra.mxu0 %v848
  %v1045 = vpop.f32.mrf.mxu0
  %v1046 = vadd.f32 %v1017, %v1045
  %1047 = vmatmul.f32.gmra.mxu0 %v855
  %v1048 = vpop.f32.mrf.mxu0
  %v1049 = vadd.f32 %v1020, %v1048
  %1050 = vmatmul.f32.gmra.mxu0 %v862
  %v1051 = vpop.f32.mrf.mxu0
  %v1052 = vadd.f32 %v1023, %v1051
  %1053 = vdwg.mxu0
  %1054 = vmatpush.msra.mxu0 0.0
  %1055 = vmatpush.msra.mxu0 0.0
  %1056 = vmatpush.msra.mxu0 0.0
  %1057 = vmatpush.msra.mxu0 0.0
  %1058 = vmatpush.msra.mxu0 0.0
  %1059 = vmatpush.msra.mxu0 0.0
  %1060 = vmatpush.msra.mxu0 0.0
  %1061 = vmatpush.msra.mxu0 0.0
  %1062 = vmatpush.msra.mxu0 0.0
  %1063 = vmatpush.msra.mxu0 0.0
  %1064 = vmatpush.msra.mxu0 0.0
  %1065 = vmatpush.msra.mxu0 0.0
  %1066 = vmatpush.msra.mxu0 %v834
  %1067 = vmatpush.msra.mxu0 %v833
  %1068 = vmatpush.msra.mxu0 %v832
  %1069 = vmatpush.msra.mxu0 %v831
  %1070 = vmatmul.f32.gmra.mxu0 %v869
  %v1071 = vpop.f32.mrf.mxu0
  %v1072 = vadd.f32 %v1043, %v1071
  %1073 = vmatmul.f32.gmra.mxu0 %v872
  %v1074 = vpop.f32.mrf.mxu0
  %v1075 = vadd.f32 %v1046, %v1074
  %1076 = vmatmul.f32.gmra.mxu0 %v875
  %v1077 = vpop.f32.mrf.mxu0
  %v1078 = vadd.f32 %v1049, %v1077
  %1079 = vmatmul.f32.gmra.mxu0 %v878
  %v1080 = vpop.f32.mrf.mxu0
  %v1081 = vadd.f32 %v1052, %v1080
  %1082 = vdwg.mxu0
  %v1083 = vld [vmem:[%s1] sm:$0xff]
  %v1084 = vld [vmem:[%s1 + $0x8] sm:$0xff]
  %v1085 = vld [vmem:[%s1 + $0x10] sm:$0xff]
  %v1086 = vld [vmem:[%s1 + $0x18] sm:$0xff]
  %v1087 = vld [vmem:[%s1 + $0x20] sm:$0xff]
  %v1088 = vld [vmem:[%s1 + $0x28] sm:$0xff]
  %v1089 = vld [vmem:[%s1 + $0x30] sm:$0xff]
  %v1090 = vld [vmem:[%s1 + $0x38] sm:$0xff]
  %v1091 = vld [vmem:[%s1 + $0x40] sm:$0xff]
  %v1092 = vld [vmem:[%s1 + $0x48] sm:$0xff]
  %v1093 = vld [vmem:[%s1 + $0x50] sm:$0xff]
  %v1094 = vld [vmem:[%s1 + $0x58] sm:$0xff]
  %v1095 = vld [vmem:[%s1 + $0x60] sm:$0xff]
  %v1096 = vld [vmem:[%s1 + $0x68] sm:$0xff]
  %v1097 = vld [vmem:[%s1 + $0x70] sm:$0xff]
  %v1098 = vld [vmem:[%s1 + $0x78] sm:$0xff]
  %v1099 = vld [vmem:[%s1 + $0x80] sm:$0xff]
  %v1100 = vld [vmem:[%s1 + $0x88] sm:$0xff]
  %v1101 = vld [vmem:[%s1 + $0x90] sm:$0xff]
  %v1102 = vld [vmem:[%s1 + $0x98] sm:$0xff]
  %v1103 = vld [vmem:[%s1 + $0xa0] sm:$0xff]
  %v1104 = vld [vmem:[%s1 + $0xa8] sm:$0xff]
  %v1105 = vld [vmem:[%s1 + $0xb0] sm:$0xff]
  %v1106 = vld [vmem:[%s1 + $0xb8] sm:$0xff]
  %v1107 = vld [vmem:[%s1 + $0xc0] sm:$0xff]
  %v1108 = vld [vmem:[%s1 + $0xc8] sm:$0xff]
  %v1109 = vld [vmem:[%s1 + $0xd0] sm:$0xff]
  %v1110 = vld [vmem:[%s1 + $0xd8] sm:$0xff]
  %v1112 = vsel %vm867, %v1089, 0
  %v1115 = vsel %vm867, %v1096, 0
  %v1118 = vsel %vm867, %v1103, 0
  %v1121 = vsel %vm867, %v1110, 0
  %1123 = vmatpush.msra.mxu0 %v750
  %1124 = vmatpush.msra.mxu0 %v749
  %1125 = vmatpush.msra.mxu0 %v748
  %1126 = vmatpush.msra.mxu0 %v747
  %1127 = vmatpush.msra.mxu0 %v746
  %1128 = vmatpush.msra.mxu0 %v745
  %1129 = vmatpush.msra.mxu0 %v744
  %1130 = vmatpush.msra.mxu0 %v743
  %1131 = vmatpush.msra.mxu0 %v742
  %1132 = vmatpush.msra.mxu0 %v741
  %1133 = vmatpush.msra.mxu0 %v740
  %1134 = vmatpush.msra.mxu0 %v739
  %1135 = vmatpush.msra.mxu0 %v738
  %1136 = vmatpush.msra.mxu0 %v737
  %1137 = vmatpush.msra.mxu0 %v736
  %1138 = vmatpush.msra.mxu0 %v735
  %1139 = vmatmul.f32.gmra.mxu0 %v1083
  %v1140 = vpop.f32.mrf.mxu0
  %v1141 = vadd.f32 %v865, %v1140
  %1142 = vmatmul.f32.gmra.mxu0 %v1090
  %v1143 = vpop.f32.mrf.mxu0
  %v1144 = vadd.f32 %v865, %v1143
  %1145 = vmatmul.f32.gmra.mxu0 %v1097
  %v1146 = vpop.f32.mrf.mxu0
  %v1147 = vadd.f32 %v865, %v1146
  %1148 = vmatmul.f32.gmra.mxu0 %v1104
  %v1149 = vpop.f32.mrf.mxu0
  %v1150 = vadd.f32 %v865, %v1149
  %1151 = vdwg.mxu0
  %1152 = vmatpush.msra.mxu0 %v766
  %1153 = vmatpush.msra.mxu0 %v765
  %1154 = vmatpush.msra.mxu0 %v764
  %1155 = vmatpush.msra.mxu0 %v763
  %1156 = vmatpush.msra.mxu0 %v762
  %1157 = vmatpush.msra.mxu0 %v761
  %1158 = vmatpush.msra.mxu0 %v760
  %1159 = vmatpush.msra.mxu0 %v759
  %1160 = vmatpush.msra.mxu0 %v758
  %1161 = vmatpush.msra.mxu0 %v757
  %1162 = vmatpush.msra.mxu0 %v756
  %1163 = vmatpush.msra.mxu0 %v755
  %1164 = vmatpush.msra.mxu0 %v754
  %1165 = vmatpush.msra.mxu0 %v753
  %1166 = vmatpush.msra.mxu0 %v752
  %1167 = vmatpush.msra.mxu0 %v751
  %1168 = vmatmul.f32.gmra.mxu0 %v1084
  %v1169 = vpop.f32.mrf.mxu0
  %v1170 = vadd.f32 %v1141, %v1169
  %1171 = vmatmul.f32.gmra.mxu0 %v1091
  %v1172 = vpop.f32.mrf.mxu0
  %v1173 = vadd.f32 %v1144, %v1172
  %1174 = vmatmul.f32.gmra.mxu0 %v1098
  %v1175 = vpop.f32.mrf.mxu0
  %v1176 = vadd.f32 %v1147, %v1175
  %1177 = vmatmul.f32.gmra.mxu0 %v1105
  %v1178 = vpop.f32.mrf.mxu0
  %v1179 = vadd.f32 %v1150, %v1178
  %1180 = vdwg.mxu0
  %1181 = vmatpush.msra.mxu0 %v782
  %1182 = vmatpush.msra.mxu0 %v781
  %1183 = vmatpush.msra.mxu0 %v780
  %1184 = vmatpush.msra.mxu0 %v779
  %1185 = vmatpush.msra.mxu0 %v778
  %1186 = vmatpush.msra.mxu0 %v777
  %1187 = vmatpush.msra.mxu0 %v776
  %1188 = vmatpush.msra.mxu0 %v775
  %1189 = vmatpush.msra.mxu0 %v774
  %1190 = vmatpush.msra.mxu0 %v773
  %1191 = vmatpush.msra.mxu0 %v772
  %1192 = vmatpush.msra.mxu0 %v771
  %1193 = vmatpush.msra.mxu0 %v770
  %1194 = vmatpush.msra.mxu0 %v769
  %1195 = vmatpush.msra.mxu0 %v768
  %1196 = vmatpush.msra.mxu0 %v767
  %1197 = vmatmul.f32.gmra.mxu0 %v1085
  %v1198 = vpop.f32.mrf.mxu0
  %v1199 = vadd.f32 %v1170, %v1198
  %1200 = vmatmul.f32.gmra.mxu0 %v1092
  %v1201 = vpop.f32.mrf.mxu0
  %v1202 = vadd.f32 %v1173, %v1201
  %1203 = vmatmul.f32.gmra.mxu0 %v1099
  %v1204 = vpop.f32.mrf.mxu0
  %v1205 = vadd.f32 %v1176, %v1204
  %1206 = vmatmul.f32.gmra.mxu0 %v1106
  %v1207 = vpop.f32.mrf.mxu0
  %v1208 = vadd.f32 %v1179, %v1207
  %1209 = vdwg.mxu0
  %1210 = vmatpush.msra.mxu0 %v798
  %1211 = vmatpush.msra.mxu0 %v797
  %1212 = vmatpush.msra.mxu0 %v796
  %1213 = vmatpush.msra.mxu0 %v795
  %1214 = vmatpush.msra.mxu0 %v794
  %1215 = vmatpush.msra.mxu0 %v793
  %1216 = vmatpush.msra.mxu0 %v792
  %1217 = vmatpush.msra.mxu0 %v791
  %1218 = vmatpush.msra.mxu0 %v790
  %1219 = vmatpush.msra.mxu0 %v789
  %1220 = vmatpush.msra.mxu0 %v788
  %1221 = vmatpush.msra.mxu0 %v787
  %1222 = vmatpush.msra.mxu0 %v786
  %1223 = vmatpush.msra.mxu0 %v785
  %1224 = vmatpush.msra.mxu0 %v784
  %1225 = vmatpush.msra.mxu0 %v783
  %1226 = vmatmul.f32.gmra.mxu0 %v1086
  %v1227 = vpop.f32.mrf.mxu0
  %v1228 = vadd.f32 %v1199, %v1227
  %1229 = vmatmul.f32.gmra.mxu0 %v1093
  %v1230 = vpop.f32.mrf.mxu0
  %v1231 = vadd.f32 %v1202, %v1230
  %1232 = vmatmul.f32.gmra.mxu0 %v1100
  %v1233 = vpop.f32.mrf.mxu0
  %v1234 = vadd.f32 %v1205, %v1233
  %1235 = vmatmul.f32.gmra.mxu0 %v1107
  %v1236 = vpop.f32.mrf.mxu0
  %v1237 = vadd.f32 %v1208, %v1236
  %1238 = vdwg.mxu0
  %1239 = vmatpush.msra.mxu0 %v814
  %1240 = vmatpush.msra.mxu0 %v813
  %1241 = vmatpush.msra.mxu0 %v812
  %1242 = vmatpush.msra.mxu0 %v811
  %1243 = vmatpush.msra.mxu0 %v810
  %1244 = vmatpush.msra.mxu0 %v809
  %1245 = vmatpush.msra.mxu0 %v808
  %1246 = vmatpush.msra.mxu0 %v807
  %1247 = vmatpush.msra.mxu0 %v806
  %1248 = vmatpush.msra.mxu0 %v805
  %1249 = vmatpush.msra.mxu0 %v804
  %1250 = vmatpush.msra.mxu0 %v803
  %1251 = vmatpush.msra.mxu0 %v802
  %1252 = vmatpush.msra.mxu0 %v801
  %1253 = vmatpush.msra.mxu0 %v800
  %1254 = vmatpush.msra.mxu0 %v799
  %1255 = vmatmul.f32.gmra.mxu0 %v1087
  %v1256 = vpop.f32.mrf.mxu0
  %v1257 = vadd.f32 %v1228, %v1256
  %1258 = vmatmul.f32.gmra.mxu0 %v1094
  %v1259 = vpop.f32.mrf.mxu0
  %v1260 = vadd.f32 %v1231, %v1259
  %1261 = vmatmul.f32.gmra.mxu0 %v1101
  %v1262 = vpop.f32.mrf.mxu0
  %v1263 = vadd.f32 %v1234, %v1262
  %1264 = vmatmul.f32.gmra.mxu0 %v1108
  %v1265 = vpop.f32.mrf.mxu0
  %v1266 = vadd.f32 %v1237, %v1265
  %1267 = vdwg.mxu0
  %1268 = vmatpush.msra.mxu0 %v830
  %1269 = vmatpush.msra.mxu0 %v829
  %1270 = vmatpush.msra.mxu0 %v828
  %1271 = vmatpush.msra.mxu0 %v827
  %1272 = vmatpush.msra.mxu0 %v826
  %1273 = vmatpush.msra.mxu0 %v825
  %1274 = vmatpush.msra.mxu0 %v824
  %1275 = vmatpush.msra.mxu0 %v823
  %1276 = vmatpush.msra.mxu0 %v822
  %1277 = vmatpush.msra.mxu0 %v821
  %1278 = vmatpush.msra.mxu0 %v820
  %1279 = vmatpush.msra.mxu0 %v819
  %1280 = vmatpush.msra.mxu0 %v818
  %1281 = vmatpush.msra.mxu0 %v817
  %1282 = vmatpush.msra.mxu0 %v816
  %1283 = vmatpush.msra.mxu0 %v815
  %1284 = vmatmul.f32.gmra.mxu0 %v1088
  %v1285 = vpop.f32.mrf.mxu0
  %v1286 = vadd.f32 %v1257, %v1285
  %1287 = vmatmul.f32.gmra.mxu0 %v1095
  %v1288 = vpop.f32.mrf.mxu0
  %v1289 = vadd.f32 %v1260, %v1288
  %1290 = vmatmul.f32.gmra.mxu0 %v1102
  %v1291 = vpop.f32.mrf.mxu0
  %v1292 = vadd.f32 %v1263, %v1291
  %1293 = vmatmul.f32.gmra.mxu0 %v1109
  %v1294 = vpop.f32.mrf.mxu0
  %v1295 = vadd.f32 %v1266, %v1294
  %1296 = vdwg.mxu0
  %1297 = vmatpush.msra.mxu0 0.0
  %1298 = vmatpush.msra.mxu0 0.0
  %1299 = vmatpush.msra.mxu0 0.0
  %1300 = vmatpush.msra.mxu0 0.0
  %1301 = vmatpush.msra.mxu0 0.0
  %1302 = vmatpush.msra.mxu0 0.0
  %1303 = vmatpush.msra.mxu0 0.0
  %1304 = vmatpush.msra.mxu0 0.0
  %1305 = vmatpush.msra.mxu0 0.0
  %1306 = vmatpush.msra.mxu0 0.0
  %1307 = vmatpush.msra.mxu0 0.0
  %1308 = vmatpush.msra.mxu0 0.0
  %1309 = vmatpush.msra.mxu0 %v834
  %1310 = vmatpush.msra.mxu0 %v833
  %1311 = vmatpush.msra.mxu0 %v832
  %1312 = vmatpush.msra.mxu0 %v831
  %1313 = vmatmul.f32.gmra.mxu0 %v1112
  %v1314 = vpop.f32.mrf.mxu0
  %v1315 = vadd.f32 %v1286, %v1314
  %1316 = vmatmul.f32.gmra.mxu0 %v1115
  %v1317 = vpop.f32.mrf.mxu0
  %v1318 = vadd.f32 %v1289, %v1317
  %1319 = vmatmul.f32.gmra.mxu0 %v1118
  %v1320 = vpop.f32.mrf.mxu0
  %v1321 = vadd.f32 %v1292, %v1320
  %1322 = vmatmul.f32.gmra.mxu0 %v1121
  %v1323 = vpop.f32.mrf.mxu0
  %v1324 = vadd.f32 %v1295, %v1323
  %1325 = vdwg.mxu0
  %v1326 = vld [vmem:[%s2] sm:$0xff]
  %v1327 = vld [vmem:[%s2 + $0x8] sm:$0xff]
  %v1328 = vld [vmem:[%s2 + $0x10] sm:$0xff]
  %v1329 = vld [vmem:[%s2 + $0x18] sm:$0xff]
  %v1330 = vld [vmem:[%s2 + $0x20] sm:$0xff]
  %v1331 = vld [vmem:[%s2 + $0x28] sm:$0xff]
  %v1332 = vld [vmem:[%s2 + $0x30] sm:$0xff]
  %v1333 = vld [vmem:[%s2 + $0x38] sm:$0xff]
  %v1334 = vld [vmem:[%s2 + $0x40] sm:$0xff]
  %v1335 = vld [vmem:[%s2 + $0x48] sm:$0xff]
  %v1336 = vld [vmem:[%s2 + $0x50] sm:$0xff]
  %v1337 = vld [vmem:[%s2 + $0x58] sm:$0xff]
  %v1338 = vld [vmem:[%s2 + $0x60] sm:$0xff]
  %v1339 = vld [vmem:[%s2 + $0x68] sm:$0xff]
  %v1340 = vld [vmem:[%s2 + $0x70] sm:$0xff]
  %v1341 = vld [vmem:[%s2 + $0x78] sm:$0xff]
  %v1342 = vld [vmem:[%s2 + $0x80] sm:$0xff]
  %v1343 = vld [vmem:[%s2 + $0x88] sm:$0xff]
  %v1344 = vld [vmem:[%s2 + $0x90] sm:$0xff]
  %v1345 = vld [vmem:[%s2 + $0x98] sm:$0xff]
  %v1346 = vld [vmem:[%s2 + $0xa0] sm:$0xff]
  %v1347 = vld [vmem:[%s2 + $0xa8] sm:$0xff]
  %v1348 = vld [vmem:[%s2 + $0xb0] sm:$0xff]
  %v1349 = vld [vmem:[%s2 + $0xb8] sm:$0xff]
  %v1350 = vld [vmem:[%s2 + $0xc0] sm:$0xff]
  %v1351 = vld [vmem:[%s2 + $0xc8] sm:$0xff]
  %v1352 = vld [vmem:[%s2 + $0xd0] sm:$0xff]
  %v1353 = vld [vmem:[%s2 + $0xd8] sm:$0xff]
  %v1355 = vsel %vm867, %v1332, 0
  %v1358 = vsel %vm867, %v1339, 0
  %v1361 = vsel %vm867, %v1346, 0
  %v1364 = vsel %vm867, %v1353, 0
  %1366 = vmatpush.msra.mxu0 %v750
  %1367 = vmatpush.msra.mxu0 %v749
  %1368 = vmatpush.msra.mxu0 %v748
  %1369 = vmatpush.msra.mxu0 %v747
  %1370 = vmatpush.msra.mxu0 %v746
  %1371 = vmatpush.msra.mxu0 %v745
  %1372 = vmatpush.msra.mxu0 %v744
  %1373 = vmatpush.msra.mxu0 %v743
  %1374 = vmatpush.msra.mxu0 %v742
  %1375 = vmatpush.msra.mxu0 %v741
  %1376 = vmatpush.msra.mxu0 %v740
  %1377 = vmatpush.msra.mxu0 %v739
  %1378 = vmatpush.msra.mxu0 %v738
  %1379 = vmatpush.msra.mxu0 %v737
  %1380 = vmatpush.msra.mxu0 %v736
  %1381 = vmatpush.msra.mxu0 %v735
  %1382 = vmatmul.f32.gmra.mxu0 %v1326
  %v1383 = vpop.f32.mrf.mxu0
  %v1384 = vadd.f32 %v865, %v1383
  %1385 = vmatmul.f32.gmra.mxu0 %v1333
  %v1386 = vpop.f32.mrf.mxu0
  %v1387 = vadd.f32 %v865, %v1386
  %1388 = vmatmul.f32.gmra.mxu0 %v1340
  %v1389 = vpop.f32.mrf.mxu0
  %v1390 = vadd.f32 %v865, %v1389
  %1391 = vmatmul.f32.gmra.mxu0 %v1347
  %v1392 = vpop.f32.mrf.mxu0
  %v1393 = vadd.f32 %v865, %v1392
  %1394 = vdwg.mxu0
  %1395 = vmatpush.msra.mxu0 %v766
  %1396 = vmatpush.msra.mxu0 %v765
  %1397 = vmatpush.msra.mxu0 %v764
  %1398 = vmatpush.msra.mxu0 %v763
  %1399 = vmatpush.msra.mxu0 %v762
  %1400 = vmatpush.msra.mxu0 %v761
  %1401 = vmatpush.msra.mxu0 %v760
  %1402 = vmatpush.msra.mxu0 %v759
  %1403 = vmatpush.msra.mxu0 %v758
  %1404 = vmatpush.msra.mxu0 %v757
  %1405 = vmatpush.msra.mxu0 %v756
  %1406 = vmatpush.msra.mxu0 %v755
  %1407 = vmatpush.msra.mxu0 %v754
  %1408 = vmatpush.msra.mxu0 %v753
  %1409 = vmatpush.msra.mxu0 %v752
  %1410 = vmatpush.msra.mxu0 %v751
  %1411 = vmatmul.f32.gmra.mxu0 %v1327
  %v1412 = vpop.f32.mrf.mxu0
  %v1413 = vadd.f32 %v1384, %v1412
  %1414 = vmatmul.f32.gmra.mxu0 %v1334
  %v1415 = vpop.f32.mrf.mxu0
  %v1416 = vadd.f32 %v1387, %v1415
  %1417 = vmatmul.f32.gmra.mxu0 %v1341
  %v1418 = vpop.f32.mrf.mxu0
  %v1419 = vadd.f32 %v1390, %v1418
  %1420 = vmatmul.f32.gmra.mxu0 %v1348
  %v1421 = vpop.f32.mrf.mxu0
  %v1422 = vadd.f32 %v1393, %v1421
  %1423 = vdwg.mxu0
  %1424 = vmatpush.msra.mxu0 %v782
  %1425 = vmatpush.msra.mxu0 %v781
  %1426 = vmatpush.msra.mxu0 %v780
  %1427 = vmatpush.msra.mxu0 %v779
  %1428 = vmatpush.msra.mxu0 %v778
  %1429 = vmatpush.msra.mxu0 %v777
  %1430 = vmatpush.msra.mxu0 %v776
  %1431 = vmatpush.msra.mxu0 %v775
  %1432 = vmatpush.msra.mxu0 %v774
  %1433 = vmatpush.msra.mxu0 %v773
  %1434 = vmatpush.msra.mxu0 %v772
  %1435 = vmatpush.msra.mxu0 %v771
  %1436 = vmatpush.msra.mxu0 %v770
  %1437 = vmatpush.msra.mxu0 %v769
  %1438 = vmatpush.msra.mxu0 %v768
  %1439 = vmatpush.msra.mxu0 %v767
  %1440 = vmatmul.f32.gmra.mxu0 %v1328
  %v1441 = vpop.f32.mrf.mxu0
  %v1442 = vadd.f32 %v1413, %v1441
  %1443 = vmatmul.f32.gmra.mxu0 %v1335
  %v1444 = vpop.f32.mrf.mxu0
  %v1445 = vadd.f32 %v1416, %v1444
  %1446 = vmatmul.f32.gmra.mxu0 %v1342
  %v1447 = vpop.f32.mrf.mxu0
  %v1448 = vadd.f32 %v1419, %v1447
  %1449 = vmatmul.f32.gmra.mxu0 %v1349
  %v1450 = vpop.f32.mrf.mxu0
  %v1451 = vadd.f32 %v1422, %v1450
  %1452 = vdwg.mxu0
  %1453 = vmatpush.msra.mxu0 %v798
  %1454 = vmatpush.msra.mxu0 %v797
  %1455 = vmatpush.msra.mxu0 %v796
  %1456 = vmatpush.msra.mxu0 %v795
  %1457 = vmatpush.msra.mxu0 %v794
  %1458 = vmatpush.msra.mxu0 %v793
  %1459 = vmatpush.msra.mxu0 %v792
  %1460 = vmatpush.msra.mxu0 %v791
  %1461 = vmatpush.msra.mxu0 %v790
  %1462 = vmatpush.msra.mxu0 %v789
  %1463 = vmatpush.msra.mxu0 %v788
  %1464 = vmatpush.msra.mxu0 %v787
  %1465 = vmatpush.msra.mxu0 %v786
  %1466 = vmatpush.msra.mxu0 %v785
  %1467 = vmatpush.msra.mxu0 %v784
  %1468 = vmatpush.msra.mxu0 %v783
  %1469 = vmatmul.f32.gmra.mxu0 %v1329
  %v1470 = vpop.f32.mrf.mxu0
  %v1471 = vadd.f32 %v1442, %v1470
  %1472 = vmatmul.f32.gmra.mxu0 %v1336
  %v1473 = vpop.f32.mrf.mxu0
  %v1474 = vadd.f32 %v1445, %v1473
  %1475 = vmatmul.f32.gmra.mxu0 %v1343
  %v1476 = vpop.f32.mrf.mxu0
  %v1477 = vadd.f32 %v1448, %v1476
  %1478 = vmatmul.f32.gmra.mxu0 %v1350
  %v1479 = vpop.f32.mrf.mxu0
  %v1480 = vadd.f32 %v1451, %v1479
  %1481 = vdwg.mxu0
  %1482 = vmatpush.msra.mxu0 %v814
  %1483 = vmatpush.msra.mxu0 %v813
  %1484 = vmatpush.msra.mxu0 %v812
  %1485 = vmatpush.msra.mxu0 %v811
  %1486 = vmatpush.msra.mxu0 %v810
  %1487 = vmatpush.msra.mxu0 %v809
  %1488 = vmatpush.msra.mxu0 %v808
  %1489 = vmatpush.msra.mxu0 %v807
  %1490 = vmatpush.msra.mxu0 %v806
  %1491 = vmatpush.msra.mxu0 %v805
  %1492 = vmatpush.msra.mxu0 %v804
  %1493 = vmatpush.msra.mxu0 %v803
  %1494 = vmatpush.msra.mxu0 %v802
  %1495 = vmatpush.msra.mxu0 %v801
  %1496 = vmatpush.msra.mxu0 %v800
  %1497 = vmatpush.msra.mxu0 %v799
  %1498 = vmatmul.f32.gmra.mxu0 %v1330
  %v1499 = vpop.f32.mrf.mxu0
  %v1500 = vadd.f32 %v1471, %v1499
  %1501 = vmatmul.f32.gmra.mxu0 %v1337
  %v1502 = vpop.f32.mrf.mxu0
  %v1503 = vadd.f32 %v1474, %v1502
  %1504 = vmatmul.f32.gmra.mxu0 %v1344
  %v1505 = vpop.f32.mrf.mxu0
  %v1506 = vadd.f32 %v1477, %v1505
  %1507 = vmatmul.f32.gmra.mxu0 %v1351
  %v1508 = vpop.f32.mrf.mxu0
  %v1509 = vadd.f32 %v1480, %v1508
  %1510 = vdwg.mxu0
  %1511 = vmatpush.msra.mxu0 %v830
  %1512 = vmatpush.msra.mxu0 %v829
  %1513 = vmatpush.msra.mxu0 %v828
  %1514 = vmatpush.msra.mxu0 %v827
  %1515 = vmatpush.msra.mxu0 %v826
  %1516 = vmatpush.msra.mxu0 %v825
  %1517 = vmatpush.msra.mxu0 %v824
  %1518 = vmatpush.msra.mxu0 %v823
  %1519 = vmatpush.msra.mxu0 %v822
  %1520 = vmatpush.msra.mxu0 %v821
  %1521 = vmatpush.msra.mxu0 %v820
  %1522 = vmatpush.msra.mxu0 %v819
  %1523 = vmatpush.msra.mxu0 %v818
  %1524 = vmatpush.msra.mxu0 %v817
  %1525 = vmatpush.msra.mxu0 %v816
  %1526 = vmatpush.msra.mxu0 %v815
  %1527 = vmatmul.f32.gmra.mxu0 %v1331
  %v1528 = vpop.f32.mrf.mxu0
  %v1529 = vadd.f32 %v1500, %v1528
  %1530 = vmatmul.f32.gmra.mxu0 %v1338
  %v1531 = vpop.f32.mrf.mxu0
  %v1532 = vadd.f32 %v1503, %v1531
  %1533 = vmatmul.f32.gmra.mxu0 %v1345
  %v1534 = vpop.f32.mrf.mxu0
  %v1535 = vadd.f32 %v1506, %v1534
  %1536 = vmatmul.f32.gmra.mxu0 %v1352
  %v1537 = vpop.f32.mrf.mxu0
  %v1538 = vadd.f32 %v1509, %v1537
  %1539 = vdwg.mxu0
  %1540 = vmatpush.msra.mxu0 0.0
  %1541 = vmatpush.msra.mxu0 0.0
  %1542 = vmatpush.msra.mxu0 0.0
  %1543 = vmatpush.msra.mxu0 0.0
  %1544 = vmatpush.msra.mxu0 0.0
  %1545 = vmatpush.msra.mxu0 0.0
  %1546 = vmatpush.msra.mxu0 0.0
  %1547 = vmatpush.msra.mxu0 0.0
  %1548 = vmatpush.msra.mxu0 0.0
  %1549 = vmatpush.msra.mxu0 0.0
  %1550 = vmatpush.msra.mxu0 0.0
  %1551 = vmatpush.msra.mxu0 0.0
  %1552 = vmatpush.msra.mxu0 %v834
  %1553 = vmatpush.msra.mxu0 %v833
  %1554 = vmatpush.msra.mxu0 %v832
  %1555 = vmatpush.msra.mxu0 %v831
  %1556 = vmatmul.f32.gmra.mxu0 %v1355
  %v1557 = vpop.f32.mrf.mxu0
  %v1558 = vadd.f32 %v1529, %v1557
  %1559 = vmatmul.f32.gmra.mxu0 %v1358
  %v1560 = vpop.f32.mrf.mxu0
  %v1561 = vadd.f32 %v1532, %v1560
  %1562 = vmatmul.f32.gmra.mxu0 %v1361
  %v1563 = vpop.f32.mrf.mxu0
  %v1564 = vadd.f32 %v1535, %v1563
  %1565 = vmatmul.f32.gmra.mxu0 %v1364
  %v1566 = vpop.f32.mrf.mxu0
  %v1567 = vadd.f32 %v1538, %v1566
  %1568 = vdwg.mxu0
  %v1569 = vld [vmem:[%s3] sm:$0xff]
  %v1570 = vld [vmem:[%s3 + $0x8] sm:$0xff]
  %v1571 = vld [vmem:[%s3 + $0x10] sm:$0xff]
  %v1572 = vld [vmem:[%s3 + $0x18] sm:$0xff]
  %v1573 = vld [vmem:[%s3 + $0x20] sm:$0xff]
  %v1574 = vld [vmem:[%s3 + $0x28] sm:$0xff]
  %v1575 = vld [vmem:[%s3 + $0x30] sm:$0xff]
  %v1576 = vld [vmem:[%s3 + $0x38] sm:$0xff]
  %v1577 = vld [vmem:[%s3 + $0x40] sm:$0xff]
  %v1578 = vld [vmem:[%s3 + $0x48] sm:$0xff]
  %v1579 = vld [vmem:[%s3 + $0x50] sm:$0xff]
  %v1580 = vld [vmem:[%s3 + $0x58] sm:$0xff]
  %v1581 = vld [vmem:[%s3 + $0x60] sm:$0xff]
  %v1582 = vld [vmem:[%s3 + $0x68] sm:$0xff]
  %v1583 = vld [vmem:[%s3 + $0x70] sm:$0xff]
  %v1584 = vld [vmem:[%s3 + $0x78] sm:$0xff]
  %v1585 = vld [vmem:[%s3 + $0x80] sm:$0xff]
  %v1586 = vld [vmem:[%s3 + $0x88] sm:$0xff]
  %v1587 = vld [vmem:[%s3 + $0x90] sm:$0xff]
  %v1588 = vld [vmem:[%s3 + $0x98] sm:$0xff]
  %v1589 = vld [vmem:[%s3 + $0xa0] sm:$0xff]
  %v1590 = vld [vmem:[%s3 + $0xa8] sm:$0xff]
  %v1591 = vld [vmem:[%s3 + $0xb0] sm:$0xff]
  %v1592 = vld [vmem:[%s3 + $0xb8] sm:$0xff]
  %v1593 = vld [vmem:[%s3 + $0xc0] sm:$0xff]
  %v1594 = vld [vmem:[%s3 + $0xc8] sm:$0xff]
  %v1595 = vld [vmem:[%s3 + $0xd0] sm:$0xff]
  %v1596 = vld [vmem:[%s3 + $0xd8] sm:$0xff]
  %v1598 = vsel %vm867, %v1575, 0
  %v1601 = vsel %vm867, %v1582, 0
  %v1604 = vsel %vm867, %v1589, 0
  %v1607 = vsel %vm867, %v1596, 0
  %1609 = vmatpush.msra.mxu0 %v750
  %1610 = vmatpush.msra.mxu0 %v749
  %1611 = vmatpush.msra.mxu0 %v748
  %1612 = vmatpush.msra.mxu0 %v747
  %1613 = vmatpush.msra.mxu0 %v746
  %1614 = vmatpush.msra.mxu0 %v745
  %1615 = vmatpush.msra.mxu0 %v744
  %1616 = vmatpush.msra.mxu0 %v743
  %1617 = vmatpush.msra.mxu0 %v742
  %1618 = vmatpush.msra.mxu0 %v741
  %1619 = vmatpush.msra.mxu0 %v740
  %1620 = vmatpush.msra.mxu0 %v739
  %1621 = vmatpush.msra.mxu0 %v738
  %1622 = vmatpush.msra.mxu0 %v737
  %1623 = vmatpush.msra.mxu0 %v736
  %1624 = vmatpush.msra.mxu0 %v735
  %1625 = vmatmul.f32.gmra.mxu0 %v1569
  %v1626 = vpop.f32.mrf.mxu0
  %v1627 = vadd.f32 %v865, %v1626
  %1628 = vmatmul.f32.gmra.mxu0 %v1576
  %v1629 = vpop.f32.mrf.mxu0
  %v1630 = vadd.f32 %v865, %v1629
  %1631 = vmatmul.f32.gmra.mxu0 %v1583
  %v1632 = vpop.f32.mrf.mxu0
  %v1633 = vadd.f32 %v865, %v1632
  %1634 = vmatmul.f32.gmra.mxu0 %v1590
  %v1635 = vpop.f32.mrf.mxu0
  %v1636 = vadd.f32 %v865, %v1635
  %1637 = vdwg.mxu0
  %1638 = vmatpush.msra.mxu0 %v766
  %1639 = vmatpush.msra.mxu0 %v765
  %1640 = vmatpush.msra.mxu0 %v764
  %1641 = vmatpush.msra.mxu0 %v763
  %1642 = vmatpush.msra.mxu0 %v762
  %1643 = vmatpush.msra.mxu0 %v761
  %1644 = vmatpush.msra.mxu0 %v760
  %1645 = vmatpush.msra.mxu0 %v759
  %1646 = vmatpush.msra.mxu0 %v758
  %1647 = vmatpush.msra.mxu0 %v757
  %1648 = vmatpush.msra.mxu0 %v756
  %1649 = vmatpush.msra.mxu0 %v755
  %1650 = vmatpush.msra.mxu0 %v754
  %1651 = vmatpush.msra.mxu0 %v753
  %1652 = vmatpush.msra.mxu0 %v752
  %1653 = vmatpush.msra.mxu0 %v751
  %1654 = vmatmul.f32.gmra.mxu0 %v1570
  %v1655 = vpop.f32.mrf.mxu0
  %v1656 = vadd.f32 %v1627, %v1655
  %1657 = vmatmul.f32.gmra.mxu0 %v1577
  %v1658 = vpop.f32.mrf.mxu0
  %v1659 = vadd.f32 %v1630, %v1658
  %1660 = vmatmul.f32.gmra.mxu0 %v1584
  %v1661 = vpop.f32.mrf.mxu0
  %v1662 = vadd.f32 %v1633, %v1661
  %1663 = vmatmul.f32.gmra.mxu0 %v1591
  %v1664 = vpop.f32.mrf.mxu0
  %v1665 = vadd.f32 %v1636, %v1664
  %1666 = vdwg.mxu0
  %1667 = vmatpush.msra.mxu0 %v782
  %1668 = vmatpush.msra.mxu0 %v781
  %1669 = vmatpush.msra.mxu0 %v780
  %1670 = vmatpush.msra.mxu0 %v779
  %1671 = vmatpush.msra.mxu0 %v778
  %1672 = vmatpush.msra.mxu0 %v777
  %1673 = vmatpush.msra.mxu0 %v776
  %1674 = vmatpush.msra.mxu0 %v775
  %1675 = vmatpush.msra.mxu0 %v774
  %1676 = vmatpush.msra.mxu0 %v773
  %1677 = vmatpush.msra.mxu0 %v772
  %1678 = vmatpush.msra.mxu0 %v771
  %1679 = vmatpush.msra.mxu0 %v770
  %1680 = vmatpush.msra.mxu0 %v769
  %1681 = vmatpush.msra.mxu0 %v768
  %1682 = vmatpush.msra.mxu0 %v767
  %1683 = vmatmul.f32.gmra.mxu0 %v1571
  %v1684 = vpop.f32.mrf.mxu0
  %v1685 = vadd.f32 %v1656, %v1684
  %1686 = vmatmul.f32.gmra.mxu0 %v1578
  %v1687 = vpop.f32.mrf.mxu0
  %v1688 = vadd.f32 %v1659, %v1687
  %1689 = vmatmul.f32.gmra.mxu0 %v1585
  %v1690 = vpop.f32.mrf.mxu0
  %v1691 = vadd.f32 %v1662, %v1690
  %1692 = vmatmul.f32.gmra.mxu0 %v1592
  %v1693 = vpop.f32.mrf.mxu0
  %v1694 = vadd.f32 %v1665, %v1693
  %1695 = vdwg.mxu0
  %1696 = vmatpush.msra.mxu0 %v798
  %1697 = vmatpush.msra.mxu0 %v797
  %1698 = vmatpush.msra.mxu0 %v796
  %1699 = vmatpush.msra.mxu0 %v795
  %1700 = vmatpush.msra.mxu0 %v794
  %1701 = vmatpush.msra.mxu0 %v793
  %1702 = vmatpush.msra.mxu0 %v792
  %1703 = vmatpush.msra.mxu0 %v791
  %1704 = vmatpush.msra.mxu0 %v790
  %1705 = vmatpush.msra.mxu0 %v789
  %1706 = vmatpush.msra.mxu0 %v788
  %1707 = vmatpush.msra.mxu0 %v787
  %1708 = vmatpush.msra.mxu0 %v786
  %1709 = vmatpush.msra.mxu0 %v785
  %1710 = vmatpush.msra.mxu0 %v784
  %1711 = vmatpush.msra.mxu0 %v783
  %1712 = vmatmul.f32.gmra.mxu0 %v1572
  %v1713 = vpop.f32.mrf.mxu0
  %v1714 = vadd.f32 %v1685, %v1713
  %1715 = vmatmul.f32.gmra.mxu0 %v1579
  %v1716 = vpop.f32.mrf.mxu0
  %v1717 = vadd.f32 %v1688, %v1716
  %1718 = vmatmul.f32.gmra.mxu0 %v1586
  %v1719 = vpop.f32.mrf.mxu0
  %v1720 = vadd.f32 %v1691, %v1719
  %1721 = vmatmul.f32.gmra.mxu0 %v1593
  %v1722 = vpop.f32.mrf.mxu0
  %v1723 = vadd.f32 %v1694, %v1722
  %1724 = vdwg.mxu0
  %1725 = vmatpush.msra.mxu0 %v814
  %1726 = vmatpush.msra.mxu0 %v813
  %1727 = vmatpush.msra.mxu0 %v812
  %1728 = vmatpush.msra.mxu0 %v811
  %1729 = vmatpush.msra.mxu0 %v810
  %1730 = vmatpush.msra.mxu0 %v809
  %1731 = vmatpush.msra.mxu0 %v808
  %1732 = vmatpush.msra.mxu0 %v807
  %1733 = vmatpush.msra.mxu0 %v806
  %1734 = vmatpush.msra.mxu0 %v805
  %1735 = vmatpush.msra.mxu0 %v804
  %1736 = vmatpush.msra.mxu0 %v803
  %1737 = vmatpush.msra.mxu0 %v802
  %1738 = vmatpush.msra.mxu0 %v801
  %1739 = vmatpush.msra.mxu0 %v800
  %1740 = vmatpush.msra.mxu0 %v799
  %1741 = vmatmul.f32.gmra.mxu0 %v1573
  %v1742 = vpop.f32.mrf.mxu0
  %v1743 = vadd.f32 %v1714, %v1742
  %1744 = vmatmul.f32.gmra.mxu0 %v1580
  %v1745 = vpop.f32.mrf.mxu0
  %v1746 = vadd.f32 %v1717, %v1745
  %1747 = vmatmul.f32.gmra.mxu0 %v1587
  %v1748 = vpop.f32.mrf.mxu0
  %v1749 = vadd.f32 %v1720, %v1748
  %1750 = vmatmul.f32.gmra.mxu0 %v1594
  %v1751 = vpop.f32.mrf.mxu0
  %v1752 = vadd.f32 %v1723, %v1751
  %1753 = vdwg.mxu0
  %1754 = vmatpush.msra.mxu0 %v830
  %1755 = vmatpush.msra.mxu0 %v829
  %1756 = vmatpush.msra.mxu0 %v828
  %1757 = vmatpush.msra.mxu0 %v827
  %1758 = vmatpush.msra.mxu0 %v826
  %1759 = vmatpush.msra.mxu0 %v825
  %1760 = vmatpush.msra.mxu0 %v824
  %1761 = vmatpush.msra.mxu0 %v823
  %1762 = vmatpush.msra.mxu0 %v822
  %1763 = vmatpush.msra.mxu0 %v821
  %1764 = vmatpush.msra.mxu0 %v820
  %1765 = vmatpush.msra.mxu0 %v819
  %1766 = vmatpush.msra.mxu0 %v818
  %1767 = vmatpush.msra.mxu0 %v817
  %1768 = vmatpush.msra.mxu0 %v816
  %1769 = vmatpush.msra.mxu0 %v815
  %1770 = vmatmul.f32.gmra.mxu0 %v1574
  %v1771 = vpop.f32.mrf.mxu0
  %v1772 = vadd.f32 %v1743, %v1771
  %1773 = vmatmul.f32.gmra.mxu0 %v1581
  %v1774 = vpop.f32.mrf.mxu0
  %v1775 = vadd.f32 %v1746, %v1774
  %1776 = vmatmul.f32.gmra.mxu0 %v1588
  %v1777 = vpop.f32.mrf.mxu0
  %v1778 = vadd.f32 %v1749, %v1777
  %1779 = vmatmul.f32.gmra.mxu0 %v1595
  %v1780 = vpop.f32.mrf.mxu0
  %v1781 = vadd.f32 %v1752, %v1780
  %1782 = vdwg.mxu0
  %1783 = vmatpush.msra.mxu0 0.0
  %1784 = vmatpush.msra.mxu0 0.0
  %1785 = vmatpush.msra.mxu0 0.0
  %1786 = vmatpush.msra.mxu0 0.0
  %1787 = vmatpush.msra.mxu0 0.0
  %1788 = vmatpush.msra.mxu0 0.0
  %1789 = vmatpush.msra.mxu0 0.0
  %1790 = vmatpush.msra.mxu0 0.0
  %1791 = vmatpush.msra.mxu0 0.0
  %1792 = vmatpush.msra.mxu0 0.0
  %1793 = vmatpush.msra.mxu0 0.0
  %1794 = vmatpush.msra.mxu0 0.0
  %1795 = vmatpush.msra.mxu0 %v834
  %1796 = vmatpush.msra.mxu0 %v833
  %1797 = vmatpush.msra.mxu0 %v832
  %1798 = vmatpush.msra.mxu0 %v831
  %1799 = vmatmul.f32.gmra.mxu0 %v1598
  %v1800 = vpop.f32.mrf.mxu0
  %v1801 = vadd.f32 %v1772, %v1800
  %1802 = vmatmul.f32.gmra.mxu0 %v1601
  %v1803 = vpop.f32.mrf.mxu0
  %v1804 = vadd.f32 %v1775, %v1803
  %1805 = vmatmul.f32.gmra.mxu0 %v1604
  %v1806 = vpop.f32.mrf.mxu0
  %v1807 = vadd.f32 %v1778, %v1806
  %1808 = vmatmul.f32.gmra.mxu0 %v1607
  %v1809 = vpop.f32.mrf.mxu0
  %v1810 = vadd.f32 %v1781, %v1809
  %1811 = vdwg.mxu0
  %vm1812 = vcmask 523264
  %v1813 = vsel %vm1812, %v1072, 0.0
  %v1814 = vsel %vm1812, %v1075, 0.0
  %v1815 = vadd.f32 %v1813, %v1814
  %v1816 = vsel %vm1812, %v1078, 0.0
  %v1817 = vadd.f32 %v1815, %v1816
  %v1818 = vsel %vm1812, %v1081, 0.0
  %v1819 = vadd.f32 %v1817, %v1818
  %v1820 = vrot.slane %v1819, 4
  %v1821 = vadd.f32 %v1819, %v1820
  %v1822 = vrot.slane %v1821, 2
  %v1823 = vadd.f32 %v1821, %v1822
  %v1824 = vrot.slane %v1823, 1
  %v1825 = vadd.f32 %v1823, %v1824
  %v1826 = vsel %vm1812, %v1315, 0.0
  %v1827 = vsel %vm1812, %v1318, 0.0
  %v1828 = vadd.f32 %v1826, %v1827
  %v1829 = vsel %vm1812, %v1321, 0.0
  %v1830 = vadd.f32 %v1828, %v1829
  %v1831 = vsel %vm1812, %v1324, 0.0
  %v1832 = vadd.f32 %v1830, %v1831
  %v1833 = vrot.slane %v1832, 4
  %v1834 = vadd.f32 %v1832, %v1833
  %v1835 = vrot.slane %v1834, 2
  %v1836 = vadd.f32 %v1834, %v1835
  %v1837 = vrot.slane %v1836, 1
  %v1838 = vadd.f32 %v1836, %v1837
  %v1839 = vadd.f32 %v1825, %v1838
  %v1840 = vsel %vm1812, %v1558, 0.0
  %v1841 = vsel %vm1812, %v1561, 0.0
  %v1842 = vadd.f32 %v1840, %v1841
  %v1843 = vsel %vm1812, %v1564, 0.0
  %v1844 = vadd.f32 %v1842, %v1843
  %v1845 = vsel %vm1812, %v1567, 0.0
  %v1846 = vadd.f32 %v1844, %v1845
  %v1847 = vrot.slane %v1846, 4
  %v1848 = vadd.f32 %v1846, %v1847
  %v1849 = vrot.slane %v1848, 2
  %v1850 = vadd.f32 %v1848, %v1849
  %v1851 = vrot.slane %v1850, 1
  %v1852 = vadd.f32 %v1850, %v1851
  %v1853 = vadd.f32 %v1839, %v1852
  %v1854 = vsel %vm1812, %v1801, 0.0
  %v1855 = vsel %vm1812, %v1804, 0.0
  %v1856 = vadd.f32 %v1854, %v1855
  %v1857 = vsel %vm1812, %v1807, 0.0
  %v1858 = vadd.f32 %v1856, %v1857
  %v1859 = vsel %vm1812, %v1810, 0.0
  %v1860 = vadd.f32 %v1858, %v1859
  %v1861 = vrot.slane %v1860, 4
  %v1862 = vadd.f32 %v1860, %v1861
  %v1863 = vrot.slane %v1862, 2
  %v1864 = vadd.f32 %v1862, %v1863
  %v1865 = vrot.slane %v1864, 1
  %v1866 = vadd.f32 %v1864, %v1865
  %v1867 = vadd.f32 %v1853, %v1866
  %v1868 = vrcp.pop 128.0
  %v1869 = vmul.f32 128.0, %v1868
  %v1870 = vsub.f32 1.0, %v1869
  %v1871 = vmul.f32 %v1868, %v1870
  %v1872 = vadd.f32 %v1868, %v1871
  %vm1873 = vweird.f32 %v1868
  %v1874 = vsel %vm1873, %v1868, %v1872
  %v1875 = vmul.f32 %v1867, %v1874
  %v1876 = vsub.f32 %v1072, %v1875
  %v1877 = vsub.f32 %v1075, %v1875
  %v1878 = vsub.f32 %v1078, %v1875
  %v1879 = vsub.f32 %v1081, %v1875
  %v1880 = vmul.f32 %v1876, %v1876
  %v1881 = vmul.f32 %v1877, %v1877
  %v1882 = vmul.f32 %v1878, %v1878
  %v1883 = vmul.f32 %v1879, %v1879
  %v1884 = vsel %vm1812, %v1880, 0.0
  %v1885 = vsel %vm1812, %v1881, 0.0
  %v1886 = vadd.f32 %v1884, %v1885
  %v1887 = vsel %vm1812, %v1882, 0.0
  %v1888 = vadd.f32 %v1886, %v1887
  %v1889 = vsel %vm1812, %v1883, 0.0
  %v1890 = vadd.f32 %v1888, %v1889
  %v1891 = vrot.slane %v1890, 4
  %v1892 = vadd.f32 %v1890, %v1891
  %v1893 = vrot.slane %v1892, 2
  %v1894 = vadd.f32 %v1892, %v1893
  %v1895 = vrot.slane %v1894, 1
  %v1896 = vadd.f32 %v1894, %v1895
  %v1897 = vsub.f32 %v1315, %v1875
  %v1898 = vsub.f32 %v1318, %v1875
  %v1899 = vsub.f32 %v1321, %v1875
  %v1900 = vsub.f32 %v1324, %v1875
  %v1901 = vmul.f32 %v1897, %v1897
  %v1902 = vmul.f32 %v1898, %v1898
  %v1903 = vmul.f32 %v1899, %v1899
  %v1904 = vmul.f32 %v1900, %v1900
  %v1905 = vsel %vm1812, %v1901, 0.0
  %v1906 = vsel %vm1812, %v1902, 0.0
  %v1907 = vadd.f32 %v1905, %v1906
  %v1908 = vsel %vm1812, %v1903, 0.0
  %v1909 = vadd.f32 %v1907, %v1908
  %v1910 = vsel %vm1812, %v1904, 0.0
  %v1911 = vadd.f32 %v1909, %v1910
  %v1912 = vrot.slane %v1911, 4
  %v1913 = vadd.f32 %v1911, %v1912
  %v1914 = vrot.slane %v1913, 2
  %v1915 = vadd.f32 %v1913, %v1914
  %v1916 = vrot.slane %v1915, 1
  %v1917 = vadd.f32 %v1915, %v1916
  %v1918 = vadd.f32 %v1896, %v1917
  %v1919 = vsub.f32 %v1558, %v1875
  %v1920 = vsub.f32 %v1561, %v1875
  %v1921 = vsub.f32 %v1564, %v1875
  %v1922 = vsub.f32 %v1567, %v1875
  %v1923 = vmul.f32 %v1919, %v1919
  %v1924 = vmul.f32 %v1920, %v1920
  %v1925 = vmul.f32 %v1921, %v1921
  %v1926 = vmul.f32 %v1922, %v1922
  %v1927 = vsel %vm1812, %v1923, 0.0
  %v1928 = vsel %vm1812, %v1924, 0.0
  %v1929 = vadd.f32 %v1927, %v1928
  %v1930 = vsel %vm1812, %v1925, 0.0
  %v1931 = vadd.f32 %v1929, %v1930
  %v1932 = vsel %vm1812, %v1926, 0.0
  %v1933 = vadd.f32 %v1931, %v1932
  %v1934 = vrot.slane %v1933, 4
  %v1935 = vadd.f32 %v1933, %v1934
  %v1936 = vrot.slane %v1935, 2
  %v1937 = vadd.f32 %v1935, %v1936
  %v1938 = vrot.slane %v1937, 1
  %v1939 = vadd.f32 %v1937, %v1938
  %v1940 = vadd.f32 %v1918, %v1939
  %v1941 = vsub.f32 %v1801, %v1875
  %v1942 = vsub.f32 %v1804, %v1875
  %v1943 = vsub.f32 %v1807, %v1875
  %v1944 = vsub.f32 %v1810, %v1875
  %v1945 = vmul.f32 %v1941, %v1941
  %v1946 = vmul.f32 %v1942, %v1942
  %v1947 = vmul.f32 %v1943, %v1943
  %v1948 = vmul.f32 %v1944, %v1944
  %v1949 = vsel %vm1812, %v1945, 0.0
  %v1950 = vsel %vm1812, %v1946, 0.0
  %v1951 = vadd.f32 %v1949, %v1950
  %v1952 = vsel %vm1812, %v1947, 0.0
  %v1953 = vadd.f32 %v1951, %v1952
  %v1954 = vsel %vm1812, %v1948, 0.0
  %v1955 = vadd.f32 %v1953, %v1954
  %v1956 = vrot.slane %v1955, 4
  %v1957 = vadd.f32 %v1955, %v1956
  %v1958 = vrot.slane %v1957, 2
  %v1959 = vadd.f32 %v1957, %v1958
  %v1960 = vrot.slane %v1959, 1
  %v1961 = vadd.f32 %v1959, %v1960
  %v1962 = vadd.f32 %v1940, %v1961
  %v1963 = vmul.f32 %v1962, %v1874
  %v1964 = vadd.f32 %v1963, 1e-05
  %v1965 = vrsqrt.pop %v1964
  %v1966 = vmul.f32 %v1965, %v1964
  %v1967 = vmul.f32 %v1966, %v1965
  %v1968 = vmul.f32 0.5, %v1967
  %v1969 = vsub.f32 1.5, %v1968
  %v1970 = vmul.f32 %v1965, %v1969
  %vm1971 = vweird.f32 %v1964
  %vm1972 = vweird.f32 %v1965
  %vm1973 = vmor %vm1971, %vm1972
  %v1974 = vsel %vm1973, %v1965, %v1970
  %v1975 = vld [vmem:[%s7] sm:$0x1]
  %v1976 = vmul.f32 %v1974, %v1975
  %v1977 = vld [vmem:[%s8] sm:$0x1]
  %v1978 = vperm.slane %v1976, 0
  %v1979 = vmul.f32 %v1876, %v1978
  %v1980 = vmul.f32 %v1877, %v1978
  %v1981 = vmul.f32 %v1878, %v1978
  %v1982 = vmul.f32 %v1879, %v1978
  %v1984 = vperm.slane %v1977, 0
  %v1986 = vadd.f32 %v1979, %v1984
  %v1987 = vadd.f32 %v1980, %v1984
  %v1988 = vadd.f32 %v1981, %v1984
  %v1989 = vadd.f32 %v1982, %v1984
  %v1990 = vmax.f32 %v1986, 0.0
  %v1991 = vmax.f32 %v1987, 0.0
  %v1992 = vmax.f32 %v1988, 0.0
  %v1993 = vmax.f32 %v1989, 0.0
  %v1994 = vmul.f32 %v1897, %v1978
  %v1995 = vmul.f32 %v1898, %v1978
  %v1996 = vmul.f32 %v1899, %v1978
  %v1997 = vmul.f32 %v1900, %v1978
  %v1998 = vadd.f32 %v1994, %v1984
  %v1999 = vadd.f32 %v1995, %v1984
  %v2000 = vadd.f32 %v1996, %v1984
  %v2001 = vadd.f32 %v1997, %v1984
  %v2002 = vmax.f32 %v1998, 0.0
  %v2003 = vmax.f32 %v1999, 0.0
  %v2004 = vmax.f32 %v2000, 0.0
  %v2005 = vmax.f32 %v2001, 0.0
  %v2006 = vmul.f32 %v1919, %v1978
  %v2007 = vmul.f32 %v1920, %v1978
  %v2008 = vmul.f32 %v1921, %v1978
  %v2009 = vmul.f32 %v1922, %v1978
  %v2010 = vadd.f32 %v2006, %v1984
  %v2011 = vadd.f32 %v2007, %v1984
  %v2012 = vadd.f32 %v2008, %v1984
  %v2013 = vadd.f32 %v2009, %v1984
  %v2014 = vmax.f32 %v2010, 0.0
  %v2015 = vmax.f32 %v2011, 0.0
  %v2016 = vmax.f32 %v2012, 0.0
  %v2017 = vmax.f32 %v2013, 0.0
  %v2018 = vmul.f32 %v1941, %v1978
  %v2019 = vmul.f32 %v1942, %v1978
  %v2020 = vmul.f32 %v1943, %v1978
  %v2021 = vmul.f32 %v1944, %v1978
  %v2022 = vadd.f32 %v2018, %v1984
  %v2023 = vadd.f32 %v2019, %v1984
  %v2024 = vadd.f32 %v2020, %v1984
  %v2025 = vadd.f32 %v2021, %v1984
  %v2026 = vmax.f32 %v2022, 0.0
  %v2027 = vmax.f32 %v2023, 0.0
  %v2028 = vmax.f32 %v2024, 0.0
  %v2029 = vmax.f32 %v2025, 0.0
  %v2030 = vmax.f32 %v1990, %v2002
  %v2031 = vmax.f32 %v1991, %v2003
  %v2032 = vmax.f32 %v1992, %v2004
  %v2033 = vmax.f32 %v1993, %v2005
  %v2034 = vmax.f32 %v2014, %v2026
  %v2035 = vmax.f32 %v2015, %v2027
  %v2036 = vmax.f32 %v2016, %v2028
  %v2037 = vmax.f32 %v2017, %v2029
  %v2038 = vmax.f32 %v2030, %v2034
  %v2039 = vmax.f32 %v2031, %v2035
  %v2040 = vmax.f32 %v2032, %v2036
  %v2041 = vmax.f32 %v2033, %v2037
  %v2042 = vld [vmem:[%s9] sm:$0x1]
  %v2044 = vperm.slane %v2042, 0
  %v2046 = vmul.f32 %v2038, %v2044
  %v2047 = vmul.f32 %v2039, %v2044
  %v2048 = vmul.f32 %v2040, %v2044
  %v2049 = vmul.f32 %v2041, %v2044
  %2050 = vst.msk [vmem:[%s10] sm:$0xff] %vm1812, %v2046
  %2051 = vst.msk [vmem:[%s10 + $0x8] sm:$0xff] %vm1812, %v2047
  %2052 = vst.msk [vmem:[%s10 + $0x10] sm:$0xff] %vm1812, %v2048
  %2053 = vst.msk [vmem:[%s10 + $0x18] sm:$0xff] %vm1812, %v2049
  // Predicated region
  $region42: #{simple_cnn_with_te_apply.6} parent=0 // pred_check
    _
  $region43: #{simple_cnn_with_te_apply.6} parent=0 // pred_check_branch
    %2055 = sbr.rel (0) target = $region45
  $region44: #{simple_cnn_with_te_apply.6} parent=0 // pred_region
    _
  $region45: #{simple_cnn_with_te_apply.6} parent=0 // pred_fallthru
    _
  // Predicated region
  $region46: #{simple_cnn_with_te_apply.6} parent=0 // pred_check
    _
  $region47: #{simple_cnn_with_te_apply.6} parent=0 // pred_check_branch
    %2057 = sbr.rel (0) target = $region49
  $region48: #{simple_cnn_with_te_apply.6} parent=0 // pred_region
    _
  $region49: #{simple_cnn_with_te_apply.6} parent=0 // pred_fallthru
    _

// kernel: simple_cnn_with_te_apply.7
$region0: #{simple_cnn_with_te_apply.7}
  #allocation0 [shape = 'u32[]', space=smem, size = 0x4, offset = 0x4, fixed_abs, tag = 'smem constant byte address 0x4 - core index']
  #allocation1 [shape = 'u32[72,128]{1,0:T(1,128)}', space=vmem, size = 0x9000, scoped, tag = 'internal scratch']
  %s0 = inlined_call_operand.vmem [shape: f32[2,1024], index: 0, kind: input, shape index: {}]
  %s1 = inlined_call_operand.vmem [shape: f32[1024,100], index: 1, kind: input, shape index: {}]
  %s2 = inlined_call_operand.vmem [shape: f32[1,100], index: 2, kind: input, shape index: {}]
  %s3 = inlined_call_operand.vmem [shape: f32[100,200], index: 3, kind: input, shape index: {}]
  %s4 = inlined_call_operand.vmem [shape: f32[1,200], index: 4, kind: input, shape index: {}]
  %s5 = inlined_call_operand.vmem [shape: f32[200,200], index: 5, kind: input, shape index: {}]
  %s6 = inlined_call_operand.vmem [shape: f32[1,200], index: 6, kind: input, shape index: {}]
  %s7 = inlined_call_operand.vmem [shape: f32[200,1632], index: 7, kind: input, shape index: {}]
  %s8 = inlined_call_operand.vmem [shape: f32[1,1632], index: 8, kind: input, shape index: {}]
  %s9 = inlined_call_operand.vmem [shape: f32[1,1632], index: 9, kind: output, shape index: {}]
  %s10 = sld [smem:[#allocation0]]
  $region46: #{simple_cnn_with_te_apply.7} parent=0
    _
  %s12 = ssub.s32 1, %s10
  %s13 = scalar_select 0, %s12, %s10
  // Predicated region
  $region2: #{simple_cnn_with_te_apply.7} parent=0 // pred_check
    _
  $region3: #{simple_cnn_with_te_apply.7} parent=0 // pred_check_branch
    %15 = sbr.rel (0) target = $region5
  $region4: #{simple_cnn_with_te_apply.7} parent=0 // pred_region
    _
  $region5: #{simple_cnn_with_te_apply.7} parent=0 // pred_fallthru
    _
  // Predicated region
  $region6: #{simple_cnn_with_te_apply.7} parent=0 // pred_check
    _
  $region7: #{simple_cnn_with_te_apply.7} parent=0 // pred_check_branch
    %17 = sbr.rel (0) target = $region9
  $region8: #{simple_cnn_with_te_apply.7} parent=0 // pred_region
    _
  $region9: #{simple_cnn_with_te_apply.7} parent=0 // pred_fallthru
    _
  // Predicated region
  $region10: #{simple_cnn_with_te_apply.7} parent=0 // pred_check
    _
  $region11: #{simple_cnn_with_te_apply.7} parent=0 // pred_check_branch
    %19 = sbr.rel (0) target = $region13
  $region12: #{simple_cnn_with_te_apply.7} parent=0 // pred_region
    _
  $region13: #{simple_cnn_with_te_apply.7} parent=0 // pred_fallthru
    _
  // Predicated region
  $region14: #{simple_cnn_with_te_apply.7} parent=0 // pred_check
    _
  $region15: #{simple_cnn_with_te_apply.7} parent=0 // pred_check_branch
    %21 = sbr.rel (0) target = $region17
  $region16: #{simple_cnn_with_te_apply.7} parent=0 // pred_region
    _
  $region17: #{simple_cnn_with_te_apply.7} parent=0 // pred_fallthru
    _
  // Predicated region
  $region18: #{simple_cnn_with_te_apply.7} parent=0 // pred_check
    _
  $region19: #{simple_cnn_with_te_apply.7} parent=0 // pred_check_branch
    %23 = sbr.rel (0) target = $region21
  $region20: #{simple_cnn_with_te_apply.7} parent=0 // pred_region
    _
  $region21: #{simple_cnn_with_te_apply.7} parent=0 // pred_fallthru
    _
  // Predicated region
  $region22: #{simple_cnn_with_te_apply.7} parent=0 // pred_check
    _
  $region23: #{simple_cnn_with_te_apply.7} parent=0 // pred_check_branch
    %25 = sbr.rel (0) target = $region25
  $region24: #{simple_cnn_with_te_apply.7} parent=0 // pred_region
    _
  $region25: #{simple_cnn_with_te_apply.7} parent=0 // pred_fallthru
    _
  // Predicated region
  $region26: #{simple_cnn_with_te_apply.7} parent=0 // pred_check
    _
  $region27: #{simple_cnn_with_te_apply.7} parent=0 // pred_check_branch
    %27 = sbr.rel (0) target = $region29
  $region28: #{simple_cnn_with_te_apply.7} parent=0 // pred_region
    _
  $region29: #{simple_cnn_with_te_apply.7} parent=0 // pred_fallthru
    _
  // Predicated region
  $region30: #{simple_cnn_with_te_apply.7} parent=0 // pred_check
    _
  $region31: #{simple_cnn_with_te_apply.7} parent=0 // pred_check_branch
    %29 = sbr.rel (0) target = $region33
  $region32: #{simple_cnn_with_te_apply.7} parent=0 // pred_region
    _
  $region33: #{simple_cnn_with_te_apply.7} parent=0 // pred_fallthru
    _
  // Predicated region
  $region34: #{simple_cnn_with_te_apply.7} parent=0 // pred_check
    _
  $region35: #{simple_cnn_with_te_apply.7} parent=0 // pred_check_branch
    %31 = sbr.rel (0) target = $region37
  $region36: #{simple_cnn_with_te_apply.7} parent=0 // pred_region
    _
  $region37: #{simple_cnn_with_te_apply.7} parent=0 // pred_fallthru
    _
  %v32 = vld [vmem:[%s0] sm:$0xff]
  %v33 = vld [vmem:[%s0 + $0x8] sm:$0xff]
  %v34 = vld [vmem:[%s1] sm:$0xff]
  %v35 = vld [vmem:[%s1 + $0x8] sm:$0xff]
  %v36 = vld [vmem:[%s1 + $0x10] sm:$0xff]
  %v37 = vld [vmem:[%s1 + $0x18] sm:$0xff]
  %v38 = vld [vmem:[%s1 + $0x20] sm:$0xff]
  %v39 = vld [vmem:[%s1 + $0x28] sm:$0xff]
  %v40 = vld [vmem:[%s1 + $0x30] sm:$0xff]
  %v41 = vld [vmem:[%s1 + $0x38] sm:$0xff]
  %v42 = vld [vmem:[%s1 + $0x40] sm:$0xff]
  %v43 = vld [vmem:[%s1 + $0x48] sm:$0xff]
  %v44 = vld [vmem:[%s1 + $0x50] sm:$0xff]
  %v45 = vld [vmem:[%s1 + $0x58] sm:$0xff]
  %v46 = vld [vmem:[%s1 + $0x60] sm:$0xff]
  %v47 = vld [vmem:[%s1 + $0x68] sm:$0xff]
  %v48 = vld [vmem:[%s1 + $0x70] sm:$0xff]
  %v49 = vld [vmem:[%s1 + $0x78] sm:$0xff]
  %v50 = vld [vmem:[%s1 + $0x80] sm:$0xff]
  %v51 = vld [vmem:[%s1 + $0x88] sm:$0xff]
  %v52 = vld [vmem:[%s1 + $0x90] sm:$0xff]
  %v53 = vld [vmem:[%s1 + $0x98] sm:$0xff]
  %v54 = vld [vmem:[%s1 + $0xa0] sm:$0xff]
  %v55 = vld [vmem:[%s1 + $0xa8] sm:$0xff]
  %v56 = vld [vmem:[%s1 + $0xb0] sm:$0xff]
  %v57 = vld [vmem:[%s1 + $0xb8] sm:$0xff]
  %v58 = vld [vmem:[%s1 + $0xc0] sm:$0xff]
  %v59 = vld [vmem:[%s1 + $0xc8] sm:$0xff]
  %v60 = vld [vmem:[%s1 + $0xd0] sm:$0xff]
  %v61 = vld [vmem:[%s1 + $0xd8] sm:$0xff]
  %v62 = vld [vmem:[%s1 + $0xe0] sm:$0xff]
  %v63 = vld [vmem:[%s1 + $0xe8] sm:$0xff]
  %v64 = vld [vmem:[%s1 + $0xf0] sm:$0xff]
  %v65 = vld [vmem:[%s1 + $0xf8] sm:$0xff]
  %v66 = vld [vmem:[%s1 + $0x100] sm:$0xff]
  %v67 = vld [vmem:[%s1 + $0x108] sm:$0xff]
  %v68 = vld [vmem:[%s1 + $0x110] sm:$0xff]
  %v69 = vld [vmem:[%s1 + $0x118] sm:$0xff]
  %v70 = vld [vmem:[%s1 + $0x120] sm:$0xff]
  %v71 = vld [vmem:[%s1 + $0x128] sm:$0xff]
  %v72 = vld [vmem:[%s1 + $0x130] sm:$0xff]
  %v73 = vld [vmem:[%s1 + $0x138] sm:$0xff]
  %v74 = vld [vmem:[%s1 + $0x140] sm:$0xff]
  %v75 = vld [vmem:[%s1 + $0x148] sm:$0xff]
  %v76 = vld [vmem:[%s1 + $0x150] sm:$0xff]
  %v77 = vld [vmem:[%s1 + $0x158] sm:$0xff]
  %v78 = vld [vmem:[%s1 + $0x160] sm:$0xff]
  %v79 = vld [vmem:[%s1 + $0x168] sm:$0xff]
  %v80 = vld [vmem:[%s1 + $0x170] sm:$0xff]
  %v81 = vld [vmem:[%s1 + $0x178] sm:$0xff]
  %v82 = vld [vmem:[%s1 + $0x180] sm:$0xff]
  %v83 = vld [vmem:[%s1 + $0x188] sm:$0xff]
  %v84 = vld [vmem:[%s1 + $0x190] sm:$0xff]
  %v85 = vld [vmem:[%s1 + $0x198] sm:$0xff]
  %v86 = vld [vmem:[%s1 + $0x1a0] sm:$0xff]
  %v87 = vld [vmem:[%s1 + $0x1a8] sm:$0xff]
  %v88 = vld [vmem:[%s1 + $0x1b0] sm:$0xff]
  %v89 = vld [vmem:[%s1 + $0x1b8] sm:$0xff]
  %v90 = vld [vmem:[%s1 + $0x1c0] sm:$0xff]
  %v91 = vld [vmem:[%s1 + $0x1c8] sm:$0xff]
  %v92 = vld [vmem:[%s1 + $0x1d0] sm:$0xff]
  %v93 = vld [vmem:[%s1 + $0x1d8] sm:$0xff]
  %v94 = vld [vmem:[%s1 + $0x1e0] sm:$0xff]
  %v95 = vld [vmem:[%s1 + $0x1e8] sm:$0xff]
  %v96 = vld [vmem:[%s1 + $0x1f0] sm:$0xff]
  %v97 = vld [vmem:[%s1 + $0x1f8] sm:$0xff]
  %v98 = vld [vmem:[%s1 + $0x200] sm:$0xff]
  %v99 = vld [vmem:[%s1 + $0x208] sm:$0xff]
  %v100 = vld [vmem:[%s1 + $0x210] sm:$0xff]
  %v101 = vld [vmem:[%s1 + $0x218] sm:$0xff]
  %v102 = vld [vmem:[%s1 + $0x220] sm:$0xff]
  %v103 = vld [vmem:[%s1 + $0x228] sm:$0xff]
  %v104 = vld [vmem:[%s1 + $0x230] sm:$0xff]
  %v105 = vld [vmem:[%s1 + $0x238] sm:$0xff]
  %v106 = vld [vmem:[%s1 + $0x240] sm:$0xff]
  %v107 = vld [vmem:[%s1 + $0x248] sm:$0xff]
  %v108 = vld [vmem:[%s1 + $0x250] sm:$0xff]
  %v109 = vld [vmem:[%s1 + $0x258] sm:$0xff]
  %v110 = vld [vmem:[%s1 + $0x260] sm:$0xff]
  %v111 = vld [vmem:[%s1 + $0x268] sm:$0xff]
  %v112 = vld [vmem:[%s1 + $0x270] sm:$0xff]
  %v113 = vld [vmem:[%s1 + $0x278] sm:$0xff]
  %v114 = vld [vmem:[%s1 + $0x280] sm:$0xff]
  %v115 = vld [vmem:[%s1 + $0x288] sm:$0xff]
  %v116 = vld [vmem:[%s1 + $0x290] sm:$0xff]
  %v117 = vld [vmem:[%s1 + $0x298] sm:$0xff]
  %v118 = vld [vmem:[%s1 + $0x2a0] sm:$0xff]
  %v119 = vld [vmem:[%s1 + $0x2a8] sm:$0xff]
  %v120 = vld [vmem:[%s1 + $0x2b0] sm:$0xff]
  %v121 = vld [vmem:[%s1 + $0x2b8] sm:$0xff]
  %v122 = vld [vmem:[%s1 + $0x2c0] sm:$0xff]
  %v123 = vld [vmem:[%s1 + $0x2c8] sm:$0xff]
  %v124 = vld [vmem:[%s1 + $0x2d0] sm:$0xff]
  %v125 = vld [vmem:[%s1 + $0x2d8] sm:$0xff]
  %v126 = vld [vmem:[%s1 + $0x2e0] sm:$0xff]
  %v127 = vld [vmem:[%s1 + $0x2e8] sm:$0xff]
  %v128 = vld [vmem:[%s1 + $0x2f0] sm:$0xff]
  %v129 = vld [vmem:[%s1 + $0x2f8] sm:$0xff]
  %v130 = vld [vmem:[%s1 + $0x300] sm:$0xff]
  %v131 = vld [vmem:[%s1 + $0x308] sm:$0xff]
  %v132 = vld [vmem:[%s1 + $0x310] sm:$0xff]
  %v133 = vld [vmem:[%s1 + $0x318] sm:$0xff]
  %v134 = vld [vmem:[%s1 + $0x320] sm:$0xff]
  %v135 = vld [vmem:[%s1 + $0x328] sm:$0xff]
  %v136 = vld [vmem:[%s1 + $0x330] sm:$0xff]
  %v137 = vld [vmem:[%s1 + $0x338] sm:$0xff]
  %v138 = vld [vmem:[%s1 + $0x340] sm:$0xff]
  %v139 = vld [vmem:[%s1 + $0x348] sm:$0xff]
  %v140 = vld [vmem:[%s1 + $0x350] sm:$0xff]
  %v141 = vld [vmem:[%s1 + $0x358] sm:$0xff]
  %v142 = vld [vmem:[%s1 + $0x360] sm:$0xff]
  %v143 = vld [vmem:[%s1 + $0x368] sm:$0xff]
  %v144 = vld [vmem:[%s1 + $0x370] sm:$0xff]
  %v145 = vld [vmem:[%s1 + $0x378] sm:$0xff]
  %v146 = vld [vmem:[%s1 + $0x380] sm:$0xff]
  %v147 = vld [vmem:[%s1 + $0x388] sm:$0xff]
  %v148 = vld [vmem:[%s1 + $0x390] sm:$0xff]
  %v149 = vld [vmem:[%s1 + $0x398] sm:$0xff]
  %v150 = vld [vmem:[%s1 + $0x3a0] sm:$0xff]
  %v151 = vld [vmem:[%s1 + $0x3a8] sm:$0xff]
  %v152 = vld [vmem:[%s1 + $0x3b0] sm:$0xff]
  %v153 = vld [vmem:[%s1 + $0x3b8] sm:$0xff]
  %v154 = vld [vmem:[%s1 + $0x3c0] sm:$0xff]
  %v155 = vld [vmem:[%s1 + $0x3c8] sm:$0xff]
  %v156 = vld [vmem:[%s1 + $0x3d0] sm:$0xff]
  %v157 = vld [vmem:[%s1 + $0x3d8] sm:$0xff]
  %v158 = vld [vmem:[%s1 + $0x3e0] sm:$0xff]
  %v159 = vld [vmem:[%s1 + $0x3e8] sm:$0xff]
  %v160 = vld [vmem:[%s1 + $0x3f0] sm:$0xff]
  %v161 = vld [vmem:[%s1 + $0x3f8] sm:$0xff]
  %v162 = vld [vmem:[%s2] sm:$0x1]
  %v164 = vperm.slane %v162, 0
  %168 = vst [vmem:[#allocation1] ss:$4 sm:$0xff] %v32
  %s169 = scalar_lea.vmem [#allocation1], 32
  %170 = vst [vmem:[%s169] ss:$4 sm:$0xff] %v33
  %v171 = vld.sshfl [vmem:[#allocation1] sm:$0xff pattern:$0x73625140]
  %v172 = vld.sshfl [vmem:[#allocation1 + $0x8] sm:$0xff pattern:$0x73625140]
  %v173 = vld.sshfl [vmem:[#allocation1 + $0x10] sm:$0xff pattern:$0x73625140]
  %v174 = vld.sshfl [vmem:[#allocation1 + $0x18] sm:$0xff pattern:$0x73625140]
  %v175 = vld.sshfl [vmem:[#allocation1 + $0x20] sm:$0xff pattern:$0x73625140]
  %v176 = vld.sshfl [vmem:[#allocation1 + $0x28] sm:$0xff pattern:$0x73625140]
  %v177 = vld.sshfl [vmem:[#allocation1 + $0x30] sm:$0xff pattern:$0x73625140]
  %v178 = vld.sshfl [vmem:[#allocation1 + $0x38] sm:$0xff pattern:$0x73625140]
  %187 = vmatpush.msra.mxu0 %v49
  %188 = vmatpush.msra.mxu0 %v48
  %189 = vmatpush.msra.mxu0 %v47
  %190 = vmatpush.msra.mxu0 %v46
  %191 = vmatpush.msra.mxu0 %v45
  %192 = vmatpush.msra.mxu0 %v44
  %193 = vmatpush.msra.mxu0 %v43
  %194 = vmatpush.msra.mxu0 %v42
  %195 = vmatpush.msra.mxu0 %v41
  %196 = vmatpush.msra.mxu0 %v40
  %197 = vmatpush.msra.mxu0 %v39
  %198 = vmatpush.msra.mxu0 %v38
  %199 = vmatpush.msra.mxu0 %v37
  %200 = vmatpush.msra.mxu0 %v36
  %201 = vmatpush.msra.mxu0 %v35
  %202 = vmatpush.msra.mxu0 %v34
  %203 = vmatmul.f32.gmra.mxu0 %v171
  %v204 = vpop.f32.mrf.mxu0
  %v205 = vadd.f32 %v164, %v204
  %206 = vdwg.mxu0
  %207 = vmatpush.msra.mxu0 %v65
  %208 = vmatpush.msra.mxu0 %v64
  %209 = vmatpush.msra.mxu0 %v63
  %210 = vmatpush.msra.mxu0 %v62
  %211 = vmatpush.msra.mxu0 %v61
  %212 = vmatpush.msra.mxu0 %v60
  %213 = vmatpush.msra.mxu0 %v59
  %214 = vmatpush.msra.mxu0 %v58
  %215 = vmatpush.msra.mxu0 %v57
  %216 = vmatpush.msra.mxu0 %v56
  %217 = vmatpush.msra.mxu0 %v55
  %218 = vmatpush.msra.mxu0 %v54
  %219 = vmatpush.msra.mxu0 %v53
  %220 = vmatpush.msra.mxu0 %v52
  %221 = vmatpush.msra.mxu0 %v51
  %222 = vmatpush.msra.mxu0 %v50
  %223 = vmatmul.f32.gmra.mxu0 %v172
  %v224 = vpop.f32.mrf.mxu0
  %v225 = vadd.f32 %v205, %v224
  %226 = vdwg.mxu0
  %227 = vmatpush.msra.mxu0 %v81
  %228 = vmatpush.msra.mxu0 %v80
  %229 = vmatpush.msra.mxu0 %v79
  %230 = vmatpush.msra.mxu0 %v78
  %231 = vmatpush.msra.mxu0 %v77
  %232 = vmatpush.msra.mxu0 %v76
  %233 = vmatpush.msra.mxu0 %v75
  %234 = vmatpush.msra.mxu0 %v74
  %235 = vmatpush.msra.mxu0 %v73
  %236 = vmatpush.msra.mxu0 %v72
  %237 = vmatpush.msra.mxu0 %v71
  %238 = vmatpush.msra.mxu0 %v70
  %239 = vmatpush.msra.mxu0 %v69
  %240 = vmatpush.msra.mxu0 %v68
  %241 = vmatpush.msra.mxu0 %v67
  %242 = vmatpush.msra.mxu0 %v66
  %243 = vmatmul.f32.gmra.mxu0 %v173
  %v244 = vpop.f32.mrf.mxu0
  %v245 = vadd.f32 %v225, %v244
  %246 = vdwg.mxu0
  %247 = vmatpush.msra.mxu0 %v97
  %248 = vmatpush.msra.mxu0 %v96
  %249 = vmatpush.msra.mxu0 %v95
  %250 = vmatpush.msra.mxu0 %v94
  %251 = vmatpush.msra.mxu0 %v93
  %252 = vmatpush.msra.mxu0 %v92
  %253 = vmatpush.msra.mxu0 %v91
  %254 = vmatpush.msra.mxu0 %v90
  %255 = vmatpush.msra.mxu0 %v89
  %256 = vmatpush.msra.mxu0 %v88
  %257 = vmatpush.msra.mxu0 %v87
  %258 = vmatpush.msra.mxu0 %v86
  %259 = vmatpush.msra.mxu0 %v85
  %260 = vmatpush.msra.mxu0 %v84
  %261 = vmatpush.msra.mxu0 %v83
  %262 = vmatpush.msra.mxu0 %v82
  %263 = vmatmul.f32.gmra.mxu0 %v174
  %v264 = vpop.f32.mrf.mxu0
  %v265 = vadd.f32 %v245, %v264
  %266 = vdwg.mxu0
  %267 = vmatpush.msra.mxu0 %v113
  %268 = vmatpush.msra.mxu0 %v112
  %269 = vmatpush.msra.mxu0 %v111
  %270 = vmatpush.msra.mxu0 %v110
  %271 = vmatpush.msra.mxu0 %v109
  %272 = vmatpush.msra.mxu0 %v108
  %273 = vmatpush.msra.mxu0 %v107
  %274 = vmatpush.msra.mxu0 %v106
  %275 = vmatpush.msra.mxu0 %v105
  %276 = vmatpush.msra.mxu0 %v104
  %277 = vmatpush.msra.mxu0 %v103
  %278 = vmatpush.msra.mxu0 %v102
  %279 = vmatpush.msra.mxu0 %v101
  %280 = vmatpush.msra.mxu0 %v100
  %281 = vmatpush.msra.mxu0 %v99
  %282 = vmatpush.msra.mxu0 %v98
  %283 = vmatmul.f32.gmra.mxu0 %v175
  %v284 = vpop.f32.mrf.mxu0
  %v285 = vadd.f32 %v265, %v284
  %286 = vdwg.mxu0
  %287 = vmatpush.msra.mxu0 %v129
  %288 = vmatpush.msra.mxu0 %v128
  %289 = vmatpush.msra.mxu0 %v127
  %290 = vmatpush.msra.mxu0 %v126
  %291 = vmatpush.msra.mxu0 %v125
  %292 = vmatpush.msra.mxu0 %v124
  %293 = vmatpush.msra.mxu0 %v123
  %294 = vmatpush.msra.mxu0 %v122
  %295 = vmatpush.msra.mxu0 %v121
  %296 = vmatpush.msra.mxu0 %v120
  %297 = vmatpush.msra.mxu0 %v119
  %298 = vmatpush.msra.mxu0 %v118
  %299 = vmatpush.msra.mxu0 %v117
  %300 = vmatpush.msra.mxu0 %v116
  %301 = vmatpush.msra.mxu0 %v115
  %302 = vmatpush.msra.mxu0 %v114
  %303 = vmatmul.f32.gmra.mxu0 %v176
  %v304 = vpop.f32.mrf.mxu0
  %v305 = vadd.f32 %v285, %v304
  %306 = vdwg.mxu0
  %307 = vmatpush.msra.mxu0 %v145
  %308 = vmatpush.msra.mxu0 %v144
  %309 = vmatpush.msra.mxu0 %v143
  %310 = vmatpush.msra.mxu0 %v142
  %311 = vmatpush.msra.mxu0 %v141
  %312 = vmatpush.msra.mxu0 %v140
  %313 = vmatpush.msra.mxu0 %v139
  %314 = vmatpush.msra.mxu0 %v138
  %315 = vmatpush.msra.mxu0 %v137
  %316 = vmatpush.msra.mxu0 %v136
  %317 = vmatpush.msra.mxu0 %v135
  %318 = vmatpush.msra.mxu0 %v134
  %319 = vmatpush.msra.mxu0 %v133
  %320 = vmatpush.msra.mxu0 %v132
  %321 = vmatpush.msra.mxu0 %v131
  %322 = vmatpush.msra.mxu0 %v130
  %323 = vmatmul.f32.gmra.mxu0 %v177
  %v324 = vpop.f32.mrf.mxu0
  %v325 = vadd.f32 %v305, %v324
  %326 = vdwg.mxu0
  %327 = vmatpush.msra.mxu0 %v161
  %328 = vmatpush.msra.mxu0 %v160
  %329 = vmatpush.msra.mxu0 %v159
  %330 = vmatpush.msra.mxu0 %v158
  %331 = vmatpush.msra.mxu0 %v157
  %332 = vmatpush.msra.mxu0 %v156
  %333 = vmatpush.msra.mxu0 %v155
  %334 = vmatpush.msra.mxu0 %v154
  %335 = vmatpush.msra.mxu0 %v153
  %336 = vmatpush.msra.mxu0 %v152
  %337 = vmatpush.msra.mxu0 %v151
  %338 = vmatpush.msra.mxu0 %v150
  %339 = vmatpush.msra.mxu0 %v149
  %340 = vmatpush.msra.mxu0 %v148
  %341 = vmatpush.msra.mxu0 %v147
  %342 = vmatpush.msra.mxu0 %v146
  %343 = vmatmul.f32.gmra.mxu0 %v178
  %v344 = vpop.f32.mrf.mxu0
  %v345 = vadd.f32 %v325, %v344
  %346 = vdwg.mxu0
  %v347 = vmax.f32 %v345, 0.0
  %v348 = vld [vmem:[%s3] sm:$0xff]
  %v349 = vld [vmem:[%s3 + $0x8] sm:$0xff]
  %v350 = vld [vmem:[%s3 + $0x10] sm:$0xff]
  %v351 = vld [vmem:[%s3 + $0x18] sm:$0xff]
  %v352 = vld [vmem:[%s3 + $0x20] sm:$0xff]
  %v353 = vld [vmem:[%s3 + $0x28] sm:$0xff]
  %v354 = vld [vmem:[%s3 + $0x30] sm:$0xff]
  %v355 = vld [vmem:[%s3 + $0x38] sm:$0xff]
  %v356 = vld [vmem:[%s3 + $0x40] sm:$0xff]
  %v357 = vld [vmem:[%s3 + $0x48] sm:$0xff]
  %v358 = vld [vmem:[%s3 + $0x50] sm:$0xff]
  %v359 = vld [vmem:[%s3 + $0x58] sm:$0xff]
  %v360 = vld [vmem:[%s3 + $0x60] sm:$0xff]
  %v361 = vld [vmem:[%s3 + $0x68] sm:$0xff]
  %v362 = vld [vmem:[%s3 + $0x70] sm:$0xff]
  %v363 = vld [vmem:[%s3 + $0x78] sm:$0xff]
  %v364 = vld [vmem:[%s3 + $0x80] sm:$0xff]
  %v365 = vld [vmem:[%s3 + $0x88] sm:$0xff]
  %v366 = vld [vmem:[%s3 + $0x90] sm:$0xff]
  %v367 = vld [vmem:[%s3 + $0x98] sm:$0xff]
  %v368 = vld [vmem:[%s3 + $0xa0] sm:$0xff]
  %v369 = vld [vmem:[%s3 + $0xa8] sm:$0xff]
  %v370 = vld [vmem:[%s3 + $0xb0] sm:$0xff]
  %v371 = vld [vmem:[%s3 + $0xb8] sm:$0xff]
  %v372 = vld [vmem:[%s3 + $0xc0] sm:$0xf]
  %v373 = vld [vmem:[%s3 + $0xc8] sm:$0xf]
  %v374 = vld [vmem:[%s4] sm:$0x3]
  %v376 = vperm.slane %v374, 0
  %v377 = vperm.slane %v374, 1
  %vm380 = vcmask 818176
  %v382 = vsel %vm380, %v347, 0
  %vm384 = vcmask 1043456
  %v386 = vsel %vm384, %v372, 0
  %v389 = vsel %vm384, %v373, 0
  %391 = vmatpush.msra.mxu0 0.0
  %392 = vmatpush.msra.mxu0 0.0
  %393 = vmatpush.msra.mxu0 0.0
  %394 = vmatpush.msra.mxu0 %v386
  %395 = vmatpush.msra.mxu0 %v370
  %396 = vmatpush.msra.mxu0 %v368
  %397 = vmatpush.msra.mxu0 %v366
  %398 = vmatpush.msra.mxu0 %v364
  %399 = vmatpush.msra.mxu0 %v362
  %400 = vmatpush.msra.mxu0 %v360
  %401 = vmatpush.msra.mxu0 %v358
  %402 = vmatpush.msra.mxu0 %v356
  %403 = vmatpush.msra.mxu0 %v354
  %404 = vmatpush.msra.mxu0 %v352
  %405 = vmatpush.msra.mxu0 %v350
  %406 = vmatpush.msra.mxu0 %v348
  %407 = vmatmul.f32.gmra.mxu0 %v382
  %v408 = vpop.f32.mrf.mxu0
  %v409 = vadd.f32 %v376, %v408
  %410 = vdwg.mxu0
  %411 = vmatpush.msra.mxu0 0.0
  %412 = vmatpush.msra.mxu0 0.0
  %413 = vmatpush.msra.mxu0 0.0
  %414 = vmatpush.msra.mxu0 %v389
  %415 = vmatpush.msra.mxu0 %v371
  %416 = vmatpush.msra.mxu0 %v369
  %417 = vmatpush.msra.mxu0 %v367
  %418 = vmatpush.msra.mxu0 %v365
  %419 = vmatpush.msra.mxu0 %v363
  %420 = vmatpush.msra.mxu0 %v361
  %421 = vmatpush.msra.mxu0 %v359
  %422 = vmatpush.msra.mxu0 %v357
  %423 = vmatpush.msra.mxu0 %v355
  %424 = vmatpush.msra.mxu0 %v353
  %425 = vmatpush.msra.mxu0 %v351
  %426 = vmatpush.msra.mxu0 %v349
  %427 = vmatmul.f32.gmra.mxu0 %v382
  %v428 = vpop.f32.mrf.mxu0
  %v429 = vadd.f32 %v377, %v428
  %430 = vdwg.mxu0
  %v431 = vmax.f32 %v409, 0.0
  %v432 = vmax.f32 %v429, 0.0
  %vm433 = vcmask 1041408
  %v434 = vsel %vm433, %v431, 0.0
  %v435 = vrot.slane %v434, 4
  %v436 = vadd.f32 %v434, %v435
  %v437 = vrot.slane %v436, 2
  %v438 = vadd.f32 %v436, %v437
  %v439 = vrot.slane %v438, 1
  %v440 = vadd.f32 %v438, %v439
  %vm441 = vcmask 582656
  %v442 = vsel %vm441, %v432, 0.0
  %v443 = vrot.slane %v442, 4
  %v444 = vadd.f32 %v442, %v443
  %v445 = vrot.slane %v444, 2
  %v446 = vadd.f32 %v444, %v445
  %v447 = vrot.slane %v446, 1
  %v448 = vadd.f32 %v446, %v447
  %v449 = vrcp.pop 2.0
  %v450 = vmul.f32 2.0, %v449
  %v451 = vsub.f32 1.0, %v450
  %v452 = vmul.f32 %v449, %v451
  %v453 = vadd.f32 %v449, %v452
  %vm454 = vweird.f32 %v449
  %v455 = vsel %vm454, %v449, %v453
  %v456 = vmul.f32 %v440, %v455
  %v457 = vmul.f32 %v448, %v455
  %v458 = vld [vmem:[%s5] sm:$0xff]
  %v459 = vld [vmem:[%s5 + $0x8] sm:$0xff]
  %v460 = vld [vmem:[%s5 + $0x10] sm:$0xff]
  %v461 = vld [vmem:[%s5 + $0x18] sm:$0xff]
  %v462 = vld [vmem:[%s5 + $0x20] sm:$0xff]
  %v463 = vld [vmem:[%s5 + $0x28] sm:$0xff]
  %v464 = vld [vmem:[%s5 + $0x30] sm:$0xff]
  %v465 = vld [vmem:[%s5 + $0x38] sm:$0xff]
  %v466 = vld [vmem:[%s5 + $0x40] sm:$0xff]
  %v467 = vld [vmem:[%s5 + $0x48] sm:$0xff]
  %v468 = vld [vmem:[%s5 + $0x50] sm:$0xff]
  %v469 = vld [vmem:[%s5 + $0x58] sm:$0xff]
  %v470 = vld [vmem:[%s5 + $0x60] sm:$0xff]
  %v471 = vld [vmem:[%s5 + $0x68] sm:$0xff]
  %v472 = vld [vmem:[%s5 + $0x70] sm:$0xff]
  %v473 = vld [vmem:[%s5 + $0x78] sm:$0xff]
  %v474 = vld [vmem:[%s5 + $0x80] sm:$0xff]
  %v475 = vld [vmem:[%s5 + $0x88] sm:$0xff]
  %v476 = vld [vmem:[%s5 + $0x90] sm:$0xff]
  %v477 = vld [vmem:[%s5 + $0x98] sm:$0xff]
  %v478 = vld [vmem:[%s5 + $0xa0] sm:$0xff]
  %v479 = vld [vmem:[%s5 + $0xa8] sm:$0xff]
  %v480 = vld [vmem:[%s5 + $0xb0] sm:$0xff]
  %v481 = vld [vmem:[%s5 + $0xb8] sm:$0xff]
  %v482 = vld [vmem:[%s5 + $0xc0] sm:$0xff]
  %v483 = vld [vmem:[%s5 + $0xc8] sm:$0xff]
  %v484 = vld [vmem:[%s5 + $0xd0] sm:$0xff]
  %v485 = vld [vmem:[%s5 + $0xd8] sm:$0xff]
  %v486 = vld [vmem:[%s5 + $0xe0] sm:$0xff]
  %v487 = vld [vmem:[%s5 + $0xe8] sm:$0xff]
  %v488 = vld [vmem:[%s5 + $0xf0] sm:$0xff]
  %v489 = vld [vmem:[%s5 + $0xf8] sm:$0xff]
  %v490 = vld [vmem:[%s5 + $0x100] sm:$0xff]
  %v491 = vld [vmem:[%s5 + $0x108] sm:$0xff]
  %v492 = vld [vmem:[%s5 + $0x110] sm:$0xff]
  %v493 = vld [vmem:[%s5 + $0x118] sm:$0xff]
  %v494 = vld [vmem:[%s5 + $0x120] sm:$0xff]
  %v495 = vld [vmem:[%s5 + $0x128] sm:$0xff]
  %v496 = vld [vmem:[%s5 + $0x130] sm:$0xff]
  %v497 = vld [vmem:[%s5 + $0x138] sm:$0xff]
  %v498 = vld [vmem:[%s5 + $0x140] sm:$0xff]
  %v499 = vld [vmem:[%s5 + $0x148] sm:$0xff]
  %v500 = vld [vmem:[%s5 + $0x150] sm:$0xff]
  %v501 = vld [vmem:[%s5 + $0x158] sm:$0xff]
  %v502 = vld [vmem:[%s5 + $0x160] sm:$0xff]
  %v503 = vld [vmem:[%s5 + $0x168] sm:$0xff]
  %v504 = vld [vmem:[%s5 + $0x170] sm:$0xff]
  %v505 = vld [vmem:[%s5 + $0x178] sm:$0xff]
  %v506 = vld [vmem:[%s5 + $0x180] sm:$0xff]
  %v507 = vld [vmem:[%s5 + $0x188] sm:$0xff]
  %v508 = vld [vmem:[%s6] sm:$0x3]
  %v510 = vperm.slane %v508, 0
  %v511 = vperm.slane %v508, 1
  %vm514 = vcmask 588800
  %v516 = vsel %vm514, %v457, 0
  %518 = vmatpush.msra.mxu0 %v488
  %519 = vmatpush.msra.mxu0 %v486
  %520 = vmatpush.msra.mxu0 %v484
  %521 = vmatpush.msra.mxu0 %v482
  %522 = vmatpush.msra.mxu0 %v480
  %523 = vmatpush.msra.mxu0 %v478
  %524 = vmatpush.msra.mxu0 %v476
  %525 = vmatpush.msra.mxu0 %v474
  %526 = vmatpush.msra.mxu0 %v472
  %527 = vmatpush.msra.mxu0 %v470
  %528 = vmatpush.msra.mxu0 %v468
  %529 = vmatpush.msra.mxu0 %v466
  %530 = vmatpush.msra.mxu0 %v464
  %531 = vmatpush.msra.mxu0 %v462
  %532 = vmatpush.msra.mxu0 %v460
  %533 = vmatpush.msra.mxu0 %v458
  %534 = vmatmul.f32.gmra.mxu0 %v456
  %v535 = vpop.f32.mrf.mxu0
  %v536 = vadd.f32 %v510, %v535
  %537 = vdwg.mxu0
  %538 = vmatpush.msra.mxu0 0.0
  %539 = vmatpush.msra.mxu0 0.0
  %540 = vmatpush.msra.mxu0 0.0
  %541 = vmatpush.msra.mxu0 0.0
  %542 = vmatpush.msra.mxu0 0.0
  %543 = vmatpush.msra.mxu0 0.0
  %544 = vmatpush.msra.mxu0 0.0
  %545 = vmatpush.msra.mxu0 %v506
  %546 = vmatpush.msra.mxu0 %v504
  %547 = vmatpush.msra.mxu0 %v502
  %548 = vmatpush.msra.mxu0 %v500
  %549 = vmatpush.msra.mxu0 %v498
  %550 = vmatpush.msra.mxu0 %v496
  %551 = vmatpush.msra.mxu0 %v494
  %552 = vmatpush.msra.mxu0 %v492
  %553 = vmatpush.msra.mxu0 %v490
  %554 = vmatmul.f32.gmra.mxu0 %v516
  %v555 = vpop.f32.mrf.mxu0
  %v556 = vadd.f32 %v536, %v555
  %557 = vdwg.mxu0
  %558 = vmatpush.msra.mxu0 %v489
  %559 = vmatpush.msra.mxu0 %v487
  %560 = vmatpush.msra.mxu0 %v485
  %561 = vmatpush.msra.mxu0 %v483
  %562 = vmatpush.msra.mxu0 %v481
  %563 = vmatpush.msra.mxu0 %v479
  %564 = vmatpush.msra.mxu0 %v477
  %565 = vmatpush.msra.mxu0 %v475
  %566 = vmatpush.msra.mxu0 %v473
  %567 = vmatpush.msra.mxu0 %v471
  %568 = vmatpush.msra.mxu0 %v469
  %569 = vmatpush.msra.mxu0 %v467
  %570 = vmatpush.msra.mxu0 %v465
  %571 = vmatpush.msra.mxu0 %v463
  %572 = vmatpush.msra.mxu0 %v461
  %573 = vmatpush.msra.mxu0 %v459
  %574 = vmatmul.f32.gmra.mxu0 %v456
  %v575 = vpop.f32.mrf.mxu0
  %v576 = vadd.f32 %v511, %v575
  %577 = vdwg.mxu0
  %578 = vmatpush.msra.mxu0 0.0
  %579 = vmatpush.msra.mxu0 0.0
  %580 = vmatpush.msra.mxu0 0.0
  %581 = vmatpush.msra.mxu0 0.0
  %582 = vmatpush.msra.mxu0 0.0
  %583 = vmatpush.msra.mxu0 0.0
  %584 = vmatpush.msra.mxu0 0.0
  %585 = vmatpush.msra.mxu0 %v507
  %586 = vmatpush.msra.mxu0 %v505
  %587 = vmatpush.msra.mxu0 %v503
  %588 = vmatpush.msra.mxu0 %v501
  %589 = vmatpush.msra.mxu0 %v499
  %590 = vmatpush.msra.mxu0 %v497
  %591 = vmatpush.msra.mxu0 %v495
  %592 = vmatpush.msra.mxu0 %v493
  %593 = vmatpush.msra.mxu0 %v491
  %594 = vmatmul.f32.gmra.mxu0 %v516
  %v595 = vpop.f32.mrf.mxu0
  %v596 = vadd.f32 %v576, %v595
  %597 = vdwg.mxu0
  %v598 = vmax.f32 %v556, 0.0
  %v599 = vmax.f32 %v596, 0.0
  %v600 = vld [vmem:[%s7] sm:$0xff]
  %v601 = vld [vmem:[%s7 + $0x8] sm:$0xff]
  %v602 = vld [vmem:[%s7 + $0x10] sm:$0xff]
  %v603 = vld [vmem:[%s7 + $0x18] sm:$0xff]
  %v604 = vld [vmem:[%s7 + $0x20] sm:$0xff]
  %v605 = vld [vmem:[%s7 + $0x28] sm:$0xff]
  %v606 = vld [vmem:[%s7 + $0x30] sm:$0xff]
  %v607 = vld [vmem:[%s7 + $0x38] sm:$0xff]
  %v608 = vld [vmem:[%s7 + $0x40] sm:$0xff]
  %v609 = vld [vmem:[%s7 + $0x48] sm:$0xff]
  %v610 = vld [vmem:[%s7 + $0x50] sm:$0xff]
  %v611 = vld [vmem:[%s7 + $0x58] sm:$0xff]
  %v612 = vld [vmem:[%s7 + $0x60] sm:$0xff]
  %v613 = vld [vmem:[%s7 + $0x68] sm:$0xff]
  %v614 = vld [vmem:[%s7 + $0x70] sm:$0xff]
  %v615 = vld [vmem:[%s7 + $0x78] sm:$0xff]
  %v616 = vld [vmem:[%s7 + $0x80] sm:$0xff]
  %v617 = vld [vmem:[%s7 + $0x88] sm:$0xff]
  %v618 = vld [vmem:[%s7 + $0x90] sm:$0xff]
  %v619 = vld [vmem:[%s7 + $0x98] sm:$0xff]
  %v620 = vld [vmem:[%s7 + $0xa0] sm:$0xff]
  %v621 = vld [vmem:[%s7 + $0xa8] sm:$0xff]
  %v622 = vld [vmem:[%s7 + $0xb0] sm:$0xff]
  %v623 = vld [vmem:[%s7 + $0xb8] sm:$0xff]
  %v624 = vld [vmem:[%s7 + $0xc0] sm:$0xff]
  %v625 = vld [vmem:[%s7 + $0xc8] sm:$0xff]
  %v626 = vld [vmem:[%s7 + $0xd0] sm:$0xff]
  %v627 = vld [vmem:[%s7 + $0xd8] sm:$0xff]
  %v628 = vld [vmem:[%s7 + $0xe0] sm:$0xff]
  %v629 = vld [vmem:[%s7 + $0xe8] sm:$0xff]
  %v630 = vld [vmem:[%s7 + $0xf0] sm:$0xff]
  %v631 = vld [vmem:[%s7 + $0xf8] sm:$0xff]
  %v632 = vld [vmem:[%s7 + $0x100] sm:$0xff]
  %v633 = vld [vmem:[%s7 + $0x108] sm:$0xff]
  %v634 = vld [vmem:[%s7 + $0x110] sm:$0xff]
  %v635 = vld [vmem:[%s7 + $0x118] sm:$0xff]
  %v636 = vld [vmem:[%s7 + $0x120] sm:$0xff]
  %v637 = vld [vmem:[%s7 + $0x128] sm:$0xff]
  %v638 = vld [vmem:[%s7 + $0x130] sm:$0xff]
  %v639 = vld [vmem:[%s7 + $0x138] sm:$0xff]
  %v640 = vld [vmem:[%s7 + $0x140] sm:$0xff]
  %v641 = vld [vmem:[%s7 + $0x148] sm:$0xff]
  %v642 = vld [vmem:[%s7 + $0x150] sm:$0xff]
  %v643 = vld [vmem:[%s7 + $0x158] sm:$0xff]
  %v644 = vld [vmem:[%s7 + $0x160] sm:$0xff]
  %v645 = vld [vmem:[%s7 + $0x168] sm:$0xff]
  %v646 = vld [vmem:[%s7 + $0x170] sm:$0xff]
  %v647 = vld [vmem:[%s7 + $0x178] sm:$0xff]
  %v648 = vld [vmem:[%s7 + $0x180] sm:$0xff]
  %v649 = vld [vmem:[%s7 + $0x188] sm:$0xff]
  %v650 = vld [vmem:[%s7 + $0x190] sm:$0xff]
  %v651 = vld [vmem:[%s7 + $0x198] sm:$0xff]
  %v652 = vld [vmem:[%s7 + $0x1a0] sm:$0xff]
  %v653 = vld [vmem:[%s7 + $0x1a8] sm:$0xff]
  %v654 = vld [vmem:[%s7 + $0x1b0] sm:$0xff]
  %v655 = vld [vmem:[%s7 + $0x1b8] sm:$0xff]
  %v656 = vld [vmem:[%s7 + $0x1c0] sm:$0xff]
  %v657 = vld [vmem:[%s7 + $0x1c8] sm:$0xff]
  %v658 = vld [vmem:[%s7 + $0x1d0] sm:$0xff]
  %v659 = vld [vmem:[%s7 + $0x1d8] sm:$0xff]
  %v660 = vld [vmem:[%s7 + $0x1e0] sm:$0xff]
  %v661 = vld [vmem:[%s7 + $0x1e8] sm:$0xff]
  %v662 = vld [vmem:[%s7 + $0x1f0] sm:$0xff]
  %v663 = vld [vmem:[%s7 + $0x1f8] sm:$0xff]
  %v664 = vld [vmem:[%s7 + $0x200] sm:$0xff]
  %v665 = vld [vmem:[%s7 + $0x208] sm:$0xff]
  %v666 = vld [vmem:[%s7 + $0x210] sm:$0xff]
  %v667 = vld [vmem:[%s7 + $0x218] sm:$0xff]
  %v668 = vld [vmem:[%s7 + $0x220] sm:$0xff]
  %v669 = vld [vmem:[%s7 + $0x228] sm:$0xff]
  %v670 = vld [vmem:[%s7 + $0x230] sm:$0xff]
  %v671 = vld [vmem:[%s7 + $0x238] sm:$0xff]
  %v672 = vld [vmem:[%s7 + $0x240] sm:$0xff]
  %v673 = vld [vmem:[%s7 + $0x248] sm:$0xff]
  %v674 = vld [vmem:[%s7 + $0x250] sm:$0xff]
  %v675 = vld [vmem:[%s7 + $0x258] sm:$0xff]
  %v676 = vld [vmem:[%s7 + $0x260] sm:$0xff]
  %v677 = vld [vmem:[%s7 + $0x268] sm:$0xff]
  %v678 = vld [vmem:[%s7 + $0x270] sm:$0xff]
  %v679 = vld [vmem:[%s7 + $0x278] sm:$0xff]
  %v680 = vld [vmem:[%s7 + $0x280] sm:$0xff]
  %v681 = vld [vmem:[%s7 + $0x288] sm:$0xff]
  %v682 = vld [vmem:[%s7 + $0x290] sm:$0xff]
  %v683 = vld [vmem:[%s7 + $0x298] sm:$0xff]
  %v684 = vld [vmem:[%s7 + $0x2a0] sm:$0xff]
  %v685 = vld [vmem:[%s7 + $0x2a8] sm:$0xff]
  %v686 = vld [vmem:[%s7 + $0x2b0] sm:$0xff]
  %v687 = vld [vmem:[%s7 + $0x2b8] sm:$0xff]
  %v688 = vld [vmem:[%s7 + $0x2c0] sm:$0xff]
  %v689 = vld [vmem:[%s7 + $0x2c8] sm:$0xff]
  %v690 = vld [vmem:[%s7 + $0x2d0] sm:$0xff]
  %v691 = vld [vmem:[%s7 + $0x2d8] sm:$0xff]
  %v692 = vld [vmem:[%s7 + $0x2e0] sm:$0xff]
  %v693 = vld [vmem:[%s7 + $0x2e8] sm:$0xff]
  %v694 = vld [vmem:[%s7 + $0x2f0] sm:$0xff]
  %v695 = vld [vmem:[%s7 + $0x2f8] sm:$0xff]
  %v696 = vld [vmem:[%s7 + $0x300] sm:$0xff]
  %v697 = vld [vmem:[%s7 + $0x308] sm:$0xff]
  %v698 = vld [vmem:[%s7 + $0x310] sm:$0xff]
  %v699 = vld [vmem:[%s7 + $0x318] sm:$0xff]
  %v700 = vld [vmem:[%s7 + $0x320] sm:$0xff]
  %v701 = vld [vmem:[%s7 + $0x328] sm:$0xff]
  %v702 = vld [vmem:[%s7 + $0x330] sm:$0xff]
  %v703 = vld [vmem:[%s7 + $0x338] sm:$0xff]
  %v704 = vld [vmem:[%s7 + $0x340] sm:$0xff]
  %v705 = vld [vmem:[%s7 + $0x348] sm:$0xff]
  %v706 = vld [vmem:[%s7 + $0x350] sm:$0xff]
  %v707 = vld [vmem:[%s7 + $0x358] sm:$0xff]
  %v708 = vld [vmem:[%s7 + $0x360] sm:$0xff]
  %v709 = vld [vmem:[%s7 + $0x368] sm:$0xff]
  %v710 = vld [vmem:[%s7 + $0x370] sm:$0xff]
  %v711 = vld [vmem:[%s7 + $0x378] sm:$0xff]
  %v712 = vld [vmem:[%s7 + $0x380] sm:$0xff]
  %v713 = vld [vmem:[%s7 + $0x388] sm:$0xff]
  %v714 = vld [vmem:[%s7 + $0x390] sm:$0xff]
  %v715 = vld [vmem:[%s7 + $0x398] sm:$0xff]
  %v716 = vld [vmem:[%s7 + $0x3a0] sm:$0xff]
  %v717 = vld [vmem:[%s7 + $0x3a8] sm:$0xff]
  %v718 = vld [vmem:[%s7 + $0x3b0] sm:$0xff]
  %v719 = vld [vmem:[%s7 + $0x3b8] sm:$0xff]
  %v720 = vld [vmem:[%s7 + $0x3c0] sm:$0xff]
  %v721 = vld [vmem:[%s7 + $0x3c8] sm:$0xff]
  %v722 = vld [vmem:[%s7 + $0x3d0] sm:$0xff]
  %v723 = vld [vmem:[%s7 + $0x3d8] sm:$0xff]
  %v724 = vld [vmem:[%s7 + $0x3e0] sm:$0xff]
  %v725 = vld [vmem:[%s7 + $0x3e8] sm:$0xff]
  %v726 = vld [vmem:[%s7 + $0x3f0] sm:$0xff]
  %v727 = vld [vmem:[%s7 + $0x3f8] sm:$0xff]
  %v728 = vld [vmem:[%s7 + $0x400] sm:$0xff]
  %v729 = vld [vmem:[%s7 + $0x408] sm:$0xff]
  %v730 = vld [vmem:[%s7 + $0x410] sm:$0xff]
  %v731 = vld [vmem:[%s7 + $0x418] sm:$0xff]
  %v732 = vld [vmem:[%s7 + $0x420] sm:$0xff]
  %v733 = vld [vmem:[%s7 + $0x428] sm:$0xff]
  %v734 = vld [vmem:[%s7 + $0x430] sm:$0xff]
  %v735 = vld [vmem:[%s7 + $0x438] sm:$0xff]
  %v736 = vld [vmem:[%s7 + $0x440] sm:$0xff]
  %v737 = vld [vmem:[%s7 + $0x448] sm:$0xff]
  %v738 = vld [vmem:[%s7 + $0x450] sm:$0xff]
  %v739 = vld [vmem:[%s7 + $0x458] sm:$0xff]
  %v740 = vld [vmem:[%s7 + $0x460] sm:$0xff]
  %v741 = vld [vmem:[%s7 + $0x468] sm:$0xff]
  %v742 = vld [vmem:[%s7 + $0x470] sm:$0xff]
  %v743 = vld [vmem:[%s7 + $0x478] sm:$0xff]
  %v744 = vld [vmem:[%s7 + $0x480] sm:$0xff]
  %v745 = vld [vmem:[%s7 + $0x488] sm:$0xff]
  %v746 = vld [vmem:[%s7 + $0x490] sm:$0xff]
  %v747 = vld [vmem:[%s7 + $0x498] sm:$0xff]
  %v748 = vld [vmem:[%s7 + $0x4a0] sm:$0xff]
  %v749 = vld [vmem:[%s7 + $0x4a8] sm:$0xff]
  %v750 = vld [vmem:[%s7 + $0x4b0] sm:$0xff]
  %v751 = vld [vmem:[%s7 + $0x4b8] sm:$0xff]
  %v752 = vld [vmem:[%s7 + $0x4c0] sm:$0xff]
  %v753 = vld [vmem:[%s7 + $0x4c8] sm:$0xff]
  %v754 = vld [vmem:[%s7 + $0x4d0] sm:$0xff]
  %v755 = vld [vmem:[%s7 + $0x4d8] sm:$0xff]
  %v756 = vld [vmem:[%s7 + $0x4e0] sm:$0xff]
  %v757 = vld [vmem:[%s7 + $0x4e8] sm:$0xff]
  %v758 = vld [vmem:[%s7 + $0x4f0] sm:$0xff]
  %v759 = vld [vmem:[%s7 + $0x4f8] sm:$0xff]
  %v760 = vld [vmem:[%s7 + $0x500] sm:$0xff]
  %v761 = vld [vmem:[%s7 + $0x508] sm:$0xff]
  %v762 = vld [vmem:[%s7 + $0x510] sm:$0xff]
  %v763 = vld [vmem:[%s7 + $0x518] sm:$0xff]
  %v764 = vld [vmem:[%s7 + $0x520] sm:$0xff]
  %v765 = vld [vmem:[%s7 + $0x528] sm:$0xff]
  %v766 = vld [vmem:[%s7 + $0x530] sm:$0xff]
  %v767 = vld [vmem:[%s7 + $0x538] sm:$0xff]
  %v768 = vld [vmem:[%s7 + $0x540] sm:$0xff]
  %v769 = vld [vmem:[%s7 + $0x548] sm:$0xff]
  %v770 = vld [vmem:[%s7 + $0x550] sm:$0xff]
  %v771 = vld [vmem:[%s7 + $0x558] sm:$0xff]
  %v772 = vld [vmem:[%s7 + $0x560] sm:$0xff]
  %v773 = vld [vmem:[%s7 + $0x568] sm:$0xff]
  %v774 = vld [vmem:[%s7 + $0x570] sm:$0xff]
  %v775 = vld [vmem:[%s7 + $0x578] sm:$0xff]
  %v776 = vld [vmem:[%s7 + $0x580] sm:$0xff]
  %v777 = vld [vmem:[%s7 + $0x588] sm:$0xff]
  %v778 = vld [vmem:[%s7 + $0x590] sm:$0xff]
  %v779 = vld [vmem:[%s7 + $0x598] sm:$0xff]
  %v780 = vld [vmem:[%s7 + $0x5a0] sm:$0xff]
  %v781 = vld [vmem:[%s7 + $0x5a8] sm:$0xff]
  %v782 = vld [vmem:[%s7 + $0x5b0] sm:$0xff]
  %v783 = vld [vmem:[%s7 + $0x5b8] sm:$0xff]
  %v784 = vld [vmem:[%s7 + $0x5c0] sm:$0xff]
  %v785 = vld [vmem:[%s7 + $0x5c8] sm:$0xff]
  %v786 = vld [vmem:[%s7 + $0x5d0] sm:$0xff]
  %v787 = vld [vmem:[%s7 + $0x5d8] sm:$0xff]
  %v788 = vld [vmem:[%s7 + $0x5e0] sm:$0xff]
  %v789 = vld [vmem:[%s7 + $0x5e8] sm:$0xff]
  %v790 = vld [vmem:[%s7 + $0x5f0] sm:$0xff]
  %v791 = vld [vmem:[%s7 + $0x5f8] sm:$0xff]
  %v792 = vld [vmem:[%s7 + $0x600] sm:$0xff]
  %v793 = vld [vmem:[%s7 + $0x608] sm:$0xff]
  %v794 = vld [vmem:[%s7 + $0x610] sm:$0xff]
  %v795 = vld [vmem:[%s7 + $0x618] sm:$0xff]
  %v796 = vld [vmem:[%s7 + $0x620] sm:$0xff]
  %v797 = vld [vmem:[%s7 + $0x628] sm:$0xff]
  %v798 = vld [vmem:[%s7 + $0x630] sm:$0xff]
  %v799 = vld [vmem:[%s7 + $0x638] sm:$0xff]
  %v800 = vld [vmem:[%s7 + $0x640] sm:$0xff]
  %v801 = vld [vmem:[%s7 + $0x648] sm:$0xff]
  %v802 = vld [vmem:[%s7 + $0x650] sm:$0xff]
  %v803 = vld [vmem:[%s7 + $0x658] sm:$0xff]
  %v804 = vld [vmem:[%s7 + $0x660] sm:$0xff]
  %v805 = vld [vmem:[%s7 + $0x668] sm:$0xff]
  %v806 = vld [vmem:[%s7 + $0x670] sm:$0xff]
  %v807 = vld [vmem:[%s7 + $0x678] sm:$0xff]
  %v808 = vld [vmem:[%s7 + $0x680] sm:$0xff]
  %v809 = vld [vmem:[%s7 + $0x688] sm:$0xff]
  %v810 = vld [vmem:[%s7 + $0x690] sm:$0xff]
  %v811 = vld [vmem:[%s7 + $0x698] sm:$0xff]
  %v812 = vld [vmem:[%s7 + $0x6a0] sm:$0xff]
  %v813 = vld [vmem:[%s7 + $0x6a8] sm:$0xff]
  %v814 = vld [vmem:[%s7 + $0x6b0] sm:$0xff]
  %v815 = vld [vmem:[%s7 + $0x6b8] sm:$0xff]
  %v816 = vld [vmem:[%s7 + $0x6c0] sm:$0xff]
  %v817 = vld [vmem:[%s7 + $0x6c8] sm:$0xff]
  %v818 = vld [vmem:[%s7 + $0x6d0] sm:$0xff]
  %v819 = vld [vmem:[%s7 + $0x6d8] sm:$0xff]
  %v820 = vld [vmem:[%s7 + $0x6e0] sm:$0xff]
  %v821 = vld [vmem:[%s7 + $0x6e8] sm:$0xff]
  %v822 = vld [vmem:[%s7 + $0x6f0] sm:$0xff]
  %v823 = vld [vmem:[%s7 + $0x6f8] sm:$0xff]
  %v824 = vld [vmem:[%s7 + $0x700] sm:$0xff]
  %v825 = vld [vmem:[%s7 + $0x708] sm:$0xff]
  %v826 = vld [vmem:[%s7 + $0x710] sm:$0xff]
  %v827 = vld [vmem:[%s7 + $0x718] sm:$0xff]
  %v828 = vld [vmem:[%s7 + $0x720] sm:$0xff]
  %v829 = vld [vmem:[%s7 + $0x728] sm:$0xff]
  %v830 = vld [vmem:[%s7 + $0x730] sm:$0xff]
  %v831 = vld [vmem:[%s7 + $0x738] sm:$0xff]
  %v832 = vld [vmem:[%s7 + $0x740] sm:$0xff]
  %v833 = vld [vmem:[%s7 + $0x748] sm:$0xff]
  %v834 = vld [vmem:[%s7 + $0x750] sm:$0xff]
  %v835 = vld [vmem:[%s7 + $0x758] sm:$0xff]
  %v836 = vld [vmem:[%s7 + $0x760] sm:$0xff]
  %v837 = vld [vmem:[%s7 + $0x768] sm:$0xff]
  %v838 = vld [vmem:[%s7 + $0x770] sm:$0xff]
  %v839 = vld [vmem:[%s7 + $0x778] sm:$0xff]
  %v840 = vld [vmem:[%s7 + $0x780] sm:$0xff]
  %v841 = vld [vmem:[%s7 + $0x788] sm:$0xff]
  %v842 = vld [vmem:[%s7 + $0x790] sm:$0xff]
  %v843 = vld [vmem:[%s7 + $0x798] sm:$0xff]
  %v844 = vld [vmem:[%s7 + $0x7a0] sm:$0xff]
  %v845 = vld [vmem:[%s7 + $0x7a8] sm:$0xff]
  %v846 = vld [vmem:[%s7 + $0x7b0] sm:$0xff]
  %v847 = vld [vmem:[%s7 + $0x7b8] sm:$0xff]
  %v848 = vld [vmem:[%s7 + $0x7c0] sm:$0xff]
  %v849 = vld [vmem:[%s7 + $0x7c8] sm:$0xff]
  %v850 = vld [vmem:[%s7 + $0x7d0] sm:$0xff]
  %v851 = vld [vmem:[%s7 + $0x7d8] sm:$0xff]
  %v852 = vld [vmem:[%s7 + $0x7e0] sm:$0xff]
  %v853 = vld [vmem:[%s7 + $0x7e8] sm:$0xff]
  %v854 = vld [vmem:[%s7 + $0x7f0] sm:$0xff]
  %v855 = vld [vmem:[%s7 + $0x7f8] sm:$0xff]
  %v856 = vld [vmem:[%s7 + $0x800] sm:$0xff]
  %v857 = vld [vmem:[%s7 + $0x808] sm:$0xff]
  %v858 = vld [vmem:[%s7 + $0x810] sm:$0xff]
  %v859 = vld [vmem:[%s7 + $0x818] sm:$0xff]
  %v860 = vld [vmem:[%s7 + $0x820] sm:$0xff]
  %v861 = vld [vmem:[%s7 + $0x828] sm:$0xff]
  %v862 = vld [vmem:[%s7 + $0x830] sm:$0xff]
  %v863 = vld [vmem:[%s7 + $0x838] sm:$0xff]
  %v864 = vld [vmem:[%s7 + $0x840] sm:$0xff]
  %v865 = vld [vmem:[%s7 + $0x848] sm:$0xff]
  %v866 = vld [vmem:[%s7 + $0x850] sm:$0xff]
  %v867 = vld [vmem:[%s7 + $0x858] sm:$0xff]
  %v868 = vld [vmem:[%s7 + $0x860] sm:$0xff]
  %v869 = vld [vmem:[%s7 + $0x868] sm:$0xff]
  %v870 = vld [vmem:[%s7 + $0x870] sm:$0xff]
  %v871 = vld [vmem:[%s7 + $0x878] sm:$0xff]
  %v872 = vld [vmem:[%s7 + $0x880] sm:$0xff]
  %v873 = vld [vmem:[%s7 + $0x888] sm:$0xff]
  %v874 = vld [vmem:[%s7 + $0x890] sm:$0xff]
  %v875 = vld [vmem:[%s7 + $0x898] sm:$0xff]
  %v876 = vld [vmem:[%s7 + $0x8a0] sm:$0xff]
  %v877 = vld [vmem:[%s7 + $0x8a8] sm:$0xff]
  %v878 = vld [vmem:[%s7 + $0x8b0] sm:$0xff]
  %v879 = vld [vmem:[%s7 + $0x8b8] sm:$0xff]
  %v880 = vld [vmem:[%s7 + $0x8c0] sm:$0xff]
  %v881 = vld [vmem:[%s7 + $0x8c8] sm:$0xff]
  %v882 = vld [vmem:[%s7 + $0x8d0] sm:$0xff]
  %v883 = vld [vmem:[%s7 + $0x8d8] sm:$0xff]
  %v884 = vld [vmem:[%s7 + $0x8e0] sm:$0xff]
  %v885 = vld [vmem:[%s7 + $0x8e8] sm:$0xff]
  %v886 = vld [vmem:[%s7 + $0x8f0] sm:$0xff]
  %v887 = vld [vmem:[%s7 + $0x8f8] sm:$0xff]
  %v888 = vld [vmem:[%s7 + $0x900] sm:$0xff]
  %v889 = vld [vmem:[%s7 + $0x908] sm:$0xff]
  %v890 = vld [vmem:[%s7 + $0x910] sm:$0xff]
  %v891 = vld [vmem:[%s7 + $0x918] sm:$0xff]
  %v892 = vld [vmem:[%s7 + $0x920] sm:$0xff]
  %v893 = vld [vmem:[%s7 + $0x928] sm:$0xff]
  %v894 = vld [vmem:[%s7 + $0x930] sm:$0xff]
  %v895 = vld [vmem:[%s7 + $0x938] sm:$0xff]
  %v896 = vld [vmem:[%s7 + $0x940] sm:$0xff]
  %v897 = vld [vmem:[%s7 + $0x948] sm:$0xff]
  %v898 = vld [vmem:[%s7 + $0x950] sm:$0xff]
  %v899 = vld [vmem:[%s7 + $0x958] sm:$0xff]
  %v900 = vld [vmem:[%s7 + $0x960] sm:$0xff]
  %v901 = vld [vmem:[%s7 + $0x968] sm:$0xff]
  %v902 = vld [vmem:[%s7 + $0x970] sm:$0xff]
  %v903 = vld [vmem:[%s7 + $0x978] sm:$0xff]
  %v904 = vld [vmem:[%s7 + $0x980] sm:$0xff]
  %v905 = vld [vmem:[%s7 + $0x988] sm:$0xff]
  %v906 = vld [vmem:[%s7 + $0x990] sm:$0xff]
  %v907 = vld [vmem:[%s7 + $0x998] sm:$0xff]
  %v908 = vld [vmem:[%s7 + $0x9a0] sm:$0xff]
  %v909 = vld [vmem:[%s7 + $0x9a8] sm:$0xff]
  %v910 = vld [vmem:[%s7 + $0x9b0] sm:$0xff]
  %v911 = vld [vmem:[%s7 + $0x9b8] sm:$0xff]
  %v912 = vld [vmem:[%s7 + $0x9c0] sm:$0xff]
  %v913 = vld [vmem:[%s7 + $0x9c8] sm:$0xff]
  %v914 = vld [vmem:[%s7 + $0x9d0] sm:$0xff]
  %v915 = vld [vmem:[%s7 + $0x9d8] sm:$0xff]
  %v916 = vld [vmem:[%s7 + $0x9e0] sm:$0xff]
  %v917 = vld [vmem:[%s7 + $0x9e8] sm:$0xff]
  %v918 = vld [vmem:[%s7 + $0x9f0] sm:$0xff]
  %v919 = vld [vmem:[%s7 + $0x9f8] sm:$0xff]
  %v920 = vld [vmem:[%s7 + $0xa00] sm:$0xff]
  %v921 = vld [vmem:[%s7 + $0xa08] sm:$0xff]
  %v922 = vld [vmem:[%s7 + $0xa10] sm:$0xff]
  %v923 = vld [vmem:[%s7 + $0xa18] sm:$0xff]
  %v924 = vld [vmem:[%s7 + $0xa20] sm:$0xff]
  %v925 = vld [vmem:[%s8] sm:$0xff]
  %v926 = vld [vmem:[%s8 + $0x8] sm:$0x1f]
  %v929 = vperm.slane %v925, 0
  %v930 = vperm.slane %v925, 1
  %v931 = vperm.slane %v925, 2
  %v932 = vperm.slane %v925, 3
  %v933 = vperm.slane %v925, 4
  %v934 = vperm.slane %v925, 5
  %v935 = vperm.slane %v925, 6
  %v936 = vperm.slane %v925, 7
  %v937 = vperm.slane %v926, 0
  %v938 = vperm.slane %v926, 1
  %v939 = vperm.slane %v926, 2
  %v940 = vperm.slane %v926, 3
  %v941 = vperm.slane %v926, 4
  %v956 = vsel %vm514, %v599, 0
  %958 = vmatpush.msra.mxu0 %v795
  %959 = vmatpush.msra.mxu0 %v782
  %960 = vmatpush.msra.mxu0 %v769
  %961 = vmatpush.msra.mxu0 %v756
  %962 = vmatpush.msra.mxu0 %v743
  %963 = vmatpush.msra.mxu0 %v730
  %964 = vmatpush.msra.mxu0 %v717
  %965 = vmatpush.msra.mxu0 %v704
  %966 = vmatpush.msra.mxu0 %v691
  %967 = vmatpush.msra.mxu0 %v678
  %968 = vmatpush.msra.mxu0 %v665
  %969 = vmatpush.msra.mxu0 %v652
  %970 = vmatpush.msra.mxu0 %v639
  %971 = vmatpush.msra.mxu0 %v626
  %972 = vmatpush.msra.mxu0 %v613
  %973 = vmatpush.msra.mxu0 %v600
  %974 = vmatmul.f32.gmra.mxu0 %v598
  %v975 = vpop.f32.mrf.mxu0
  %v976 = vadd.f32 %v929, %v975
  %977 = vdwg.mxu0
  %978 = vmatpush.msra.mxu0 0.0
  %979 = vmatpush.msra.mxu0 0.0
  %980 = vmatpush.msra.mxu0 0.0
  %981 = vmatpush.msra.mxu0 0.0
  %982 = vmatpush.msra.mxu0 0.0
  %983 = vmatpush.msra.mxu0 0.0
  %984 = vmatpush.msra.mxu0 0.0
  %985 = vmatpush.msra.mxu0 %v912
  %986 = vmatpush.msra.mxu0 %v899
  %987 = vmatpush.msra.mxu0 %v886
  %988 = vmatpush.msra.mxu0 %v873
  %989 = vmatpush.msra.mxu0 %v860
  %990 = vmatpush.msra.mxu0 %v847
  %991 = vmatpush.msra.mxu0 %v834
  %992 = vmatpush.msra.mxu0 %v821
  %993 = vmatpush.msra.mxu0 %v808
  %994 = vmatmul.f32.gmra.mxu0 %v956
  %v995 = vpop.f32.mrf.mxu0
  %v996 = vadd.f32 %v976, %v995
  %997 = vdwg.mxu0
  %998 = vmatpush.msra.mxu0 %v796
  %999 = vmatpush.msra.mxu0 %v783
  %1000 = vmatpush.msra.mxu0 %v770
  %1001 = vmatpush.msra.mxu0 %v757
  %1002 = vmatpush.msra.mxu0 %v744
  %1003 = vmatpush.msra.mxu0 %v731
  %1004 = vmatpush.msra.mxu0 %v718
  %1005 = vmatpush.msra.mxu0 %v705
  %1006 = vmatpush.msra.mxu0 %v692
  %1007 = vmatpush.msra.mxu0 %v679
  %1008 = vmatpush.msra.mxu0 %v666
  %1009 = vmatpush.msra.mxu0 %v653
  %1010 = vmatpush.msra.mxu0 %v640
  %1011 = vmatpush.msra.mxu0 %v627
  %1012 = vmatpush.msra.mxu0 %v614
  %1013 = vmatpush.msra.mxu0 %v601
  %1014 = vmatmul.f32.gmra.mxu0 %v598
  %v1015 = vpop.f32.mrf.mxu0
  %v1016 = vadd.f32 %v930, %v1015
  %1017 = vdwg.mxu0
  %1018 = vmatpush.msra.mxu0 0.0
  %1019 = vmatpush.msra.mxu0 0.0
  %1020 = vmatpush.msra.mxu0 0.0
  %1021 = vmatpush.msra.mxu0 0.0
  %1022 = vmatpush.msra.mxu0 0.0
  %1023 = vmatpush.msra.mxu0 0.0
  %1024 = vmatpush.msra.mxu0 0.0
  %1025 = vmatpush.msra.mxu0 %v913
  %1026 = vmatpush.msra.mxu0 %v900
  %1027 = vmatpush.msra.mxu0 %v887
  %1028 = vmatpush.msra.mxu0 %v874
  %1029 = vmatpush.msra.mxu0 %v861
  %1030 = vmatpush.msra.mxu0 %v848
  %1031 = vmatpush.msra.mxu0 %v835
  %1032 = vmatpush.msra.mxu0 %v822
  %1033 = vmatpush.msra.mxu0 %v809
  %1034 = vmatmul.f32.gmra.mxu0 %v956
  %v1035 = vpop.f32.mrf.mxu0
  %v1036 = vadd.f32 %v1016, %v1035
  %1037 = vdwg.mxu0
  %1038 = vmatpush.msra.mxu0 %v797
  %1039 = vmatpush.msra.mxu0 %v784
  %1040 = vmatpush.msra.mxu0 %v771
  %1041 = vmatpush.msra.mxu0 %v758
  %1042 = vmatpush.msra.mxu0 %v745
  %1043 = vmatpush.msra.mxu0 %v732
  %1044 = vmatpush.msra.mxu0 %v719
  %1045 = vmatpush.msra.mxu0 %v706
  %1046 = vmatpush.msra.mxu0 %v693
  %1047 = vmatpush.msra.mxu0 %v680
  %1048 = vmatpush.msra.mxu0 %v667
  %1049 = vmatpush.msra.mxu0 %v654
  %1050 = vmatpush.msra.mxu0 %v641
  %1051 = vmatpush.msra.mxu0 %v628
  %1052 = vmatpush.msra.mxu0 %v615
  %1053 = vmatpush.msra.mxu0 %v602
  %1054 = vmatmul.f32.gmra.mxu0 %v598
  %v1055 = vpop.f32.mrf.mxu0
  %v1056 = vadd.f32 %v931, %v1055
  %1057 = vdwg.mxu0
  %1058 = vmatpush.msra.mxu0 0.0
  %1059 = vmatpush.msra.mxu0 0.0
  %1060 = vmatpush.msra.mxu0 0.0
  %1061 = vmatpush.msra.mxu0 0.0
  %1062 = vmatpush.msra.mxu0 0.0
  %1063 = vmatpush.msra.mxu0 0.0
  %1064 = vmatpush.msra.mxu0 0.0
  %1065 = vmatpush.msra.mxu0 %v914
  %1066 = vmatpush.msra.mxu0 %v901
  %1067 = vmatpush.msra.mxu0 %v888
  %1068 = vmatpush.msra.mxu0 %v875
  %1069 = vmatpush.msra.mxu0 %v862
  %1070 = vmatpush.msra.mxu0 %v849
  %1071 = vmatpush.msra.mxu0 %v836
  %1072 = vmatpush.msra.mxu0 %v823
  %1073 = vmatpush.msra.mxu0 %v810
  %1074 = vmatmul.f32.gmra.mxu0 %v956
  %v1075 = vpop.f32.mrf.mxu0
  %v1076 = vadd.f32 %v1056, %v1075
  %1077 = vdwg.mxu0
  %1078 = vmatpush.msra.mxu0 %v798
  %1079 = vmatpush.msra.mxu0 %v785
  %1080 = vmatpush.msra.mxu0 %v772
  %1081 = vmatpush.msra.mxu0 %v759
  %1082 = vmatpush.msra.mxu0 %v746
  %1083 = vmatpush.msra.mxu0 %v733
  %1084 = vmatpush.msra.mxu0 %v720
  %1085 = vmatpush.msra.mxu0 %v707
  %1086 = vmatpush.msra.mxu0 %v694
  %1087 = vmatpush.msra.mxu0 %v681
  %1088 = vmatpush.msra.mxu0 %v668
  %1089 = vmatpush.msra.mxu0 %v655
  %1090 = vmatpush.msra.mxu0 %v642
  %1091 = vmatpush.msra.mxu0 %v629
  %1092 = vmatpush.msra.mxu0 %v616
  %1093 = vmatpush.msra.mxu0 %v603
  %1094 = vmatmul.f32.gmra.mxu0 %v598
  %v1095 = vpop.f32.mrf.mxu0
  %v1096 = vadd.f32 %v932, %v1095
  %1097 = vdwg.mxu0
  %1098 = vmatpush.msra.mxu0 0.0
  %1099 = vmatpush.msra.mxu0 0.0
  %1100 = vmatpush.msra.mxu0 0.0
  %1101 = vmatpush.msra.mxu0 0.0
  %1102 = vmatpush.msra.mxu0 0.0
  %1103 = vmatpush.msra.mxu0 0.0
  %1104 = vmatpush.msra.mxu0 0.0
  %1105 = vmatpush.msra.mxu0 %v915
  %1106 = vmatpush.msra.mxu0 %v902
  %1107 = vmatpush.msra.mxu0 %v889
  %1108 = vmatpush.msra.mxu0 %v876
  %1109 = vmatpush.msra.mxu0 %v863
  %1110 = vmatpush.msra.mxu0 %v850
  %1111 = vmatpush.msra.mxu0 %v837
  %1112 = vmatpush.msra.mxu0 %v824
  %1113 = vmatpush.msra.mxu0 %v811
  %1114 = vmatmul.f32.gmra.mxu0 %v956
  %v1115 = vpop.f32.mrf.mxu0
  %v1116 = vadd.f32 %v1096, %v1115
  %1117 = vdwg.mxu0
  %1118 = vmatpush.msra.mxu0 %v799
  %1119 = vmatpush.msra.mxu0 %v786
  %1120 = vmatpush.msra.mxu0 %v773
  %1121 = vmatpush.msra.mxu0 %v760
  %1122 = vmatpush.msra.mxu0 %v747
  %1123 = vmatpush.msra.mxu0 %v734
  %1124 = vmatpush.msra.mxu0 %v721
  %1125 = vmatpush.msra.mxu0 %v708
  %1126 = vmatpush.msra.mxu0 %v695
  %1127 = vmatpush.msra.mxu0 %v682
  %1128 = vmatpush.msra.mxu0 %v669
  %1129 = vmatpush.msra.mxu0 %v656
  %1130 = vmatpush.msra.mxu0 %v643
  %1131 = vmatpush.msra.mxu0 %v630
  %1132 = vmatpush.msra.mxu0 %v617
  %1133 = vmatpush.msra.mxu0 %v604
  %1134 = vmatmul.f32.gmra.mxu0 %v598
  %v1135 = vpop.f32.mrf.mxu0
  %v1136 = vadd.f32 %v933, %v1135
  %1137 = vdwg.mxu0
  %1138 = vmatpush.msra.mxu0 0.0
  %1139 = vmatpush.msra.mxu0 0.0
  %1140 = vmatpush.msra.mxu0 0.0
  %1141 = vmatpush.msra.mxu0 0.0
  %1142 = vmatpush.msra.mxu0 0.0
  %1143 = vmatpush.msra.mxu0 0.0
  %1144 = vmatpush.msra.mxu0 0.0
  %1145 = vmatpush.msra.mxu0 %v916
  %1146 = vmatpush.msra.mxu0 %v903
  %1147 = vmatpush.msra.mxu0 %v890
  %1148 = vmatpush.msra.mxu0 %v877
  %1149 = vmatpush.msra.mxu0 %v864
  %1150 = vmatpush.msra.mxu0 %v851
  %1151 = vmatpush.msra.mxu0 %v838
  %1152 = vmatpush.msra.mxu0 %v825
  %1153 = vmatpush.msra.mxu0 %v812
  %1154 = vmatmul.f32.gmra.mxu0 %v956
  %v1155 = vpop.f32.mrf.mxu0
  %v1156 = vadd.f32 %v1136, %v1155
  %1157 = vdwg.mxu0
  %1158 = vmatpush.msra.mxu0 %v800
  %1159 = vmatpush.msra.mxu0 %v787
  %1160 = vmatpush.msra.mxu0 %v774
  %1161 = vmatpush.msra.mxu0 %v761
  %1162 = vmatpush.msra.mxu0 %v748
  %1163 = vmatpush.msra.mxu0 %v735
  %1164 = vmatpush.msra.mxu0 %v722
  %1165 = vmatpush.msra.mxu0 %v709
  %1166 = vmatpush.msra.mxu0 %v696
  %1167 = vmatpush.msra.mxu0 %v683
  %1168 = vmatpush.msra.mxu0 %v670
  %1169 = vmatpush.msra.mxu0 %v657
  %1170 = vmatpush.msra.mxu0 %v644
  %1171 = vmatpush.msra.mxu0 %v631
  %1172 = vmatpush.msra.mxu0 %v618
  %1173 = vmatpush.msra.mxu0 %v605
  %1174 = vmatmul.f32.gmra.mxu0 %v598
  %v1175 = vpop.f32.mrf.mxu0
  %v1176 = vadd.f32 %v934, %v1175
  %1177 = vdwg.mxu0
  %1178 = vmatpush.msra.mxu0 0.0
  %1179 = vmatpush.msra.mxu0 0.0
  %1180 = vmatpush.msra.mxu0 0.0
  %1181 = vmatpush.msra.mxu0 0.0
  %1182 = vmatpush.msra.mxu0 0.0
  %1183 = vmatpush.msra.mxu0 0.0
  %1184 = vmatpush.msra.mxu0 0.0
  %1185 = vmatpush.msra.mxu0 %v917
  %1186 = vmatpush.msra.mxu0 %v904
  %1187 = vmatpush.msra.mxu0 %v891
  %1188 = vmatpush.msra.mxu0 %v878
  %1189 = vmatpush.msra.mxu0 %v865
  %1190 = vmatpush.msra.mxu0 %v852
  %1191 = vmatpush.msra.mxu0 %v839
  %1192 = vmatpush.msra.mxu0 %v826
  %1193 = vmatpush.msra.mxu0 %v813
  %1194 = vmatmul.f32.gmra.mxu0 %v956
  %v1195 = vpop.f32.mrf.mxu0
  %v1196 = vadd.f32 %v1176, %v1195
  %1197 = vdwg.mxu0
  %1198 = vmatpush.msra.mxu0 %v801
  %1199 = vmatpush.msra.mxu0 %v788
  %1200 = vmatpush.msra.mxu0 %v775
  %1201 = vmatpush.msra.mxu0 %v762
  %1202 = vmatpush.msra.mxu0 %v749
  %1203 = vmatpush.msra.mxu0 %v736
  %1204 = vmatpush.msra.mxu0 %v723
  %1205 = vmatpush.msra.mxu0 %v710
  %1206 = vmatpush.msra.mxu0 %v697
  %1207 = vmatpush.msra.mxu0 %v684
  %1208 = vmatpush.msra.mxu0 %v671
  %1209 = vmatpush.msra.mxu0 %v658
  %1210 = vmatpush.msra.mxu0 %v645
  %1211 = vmatpush.msra.mxu0 %v632
  %1212 = vmatpush.msra.mxu0 %v619
  %1213 = vmatpush.msra.mxu0 %v606
  %1214 = vmatmul.f32.gmra.mxu0 %v598
  %v1215 = vpop.f32.mrf.mxu0
  %v1216 = vadd.f32 %v935, %v1215
  %1217 = vdwg.mxu0
  %1218 = vmatpush.msra.mxu0 0.0
  %1219 = vmatpush.msra.mxu0 0.0
  %1220 = vmatpush.msra.mxu0 0.0
  %1221 = vmatpush.msra.mxu0 0.0
  %1222 = vmatpush.msra.mxu0 0.0
  %1223 = vmatpush.msra.mxu0 0.0
  %1224 = vmatpush.msra.mxu0 0.0
  %1225 = vmatpush.msra.mxu0 %v918
  %1226 = vmatpush.msra.mxu0 %v905
  %1227 = vmatpush.msra.mxu0 %v892
  %1228 = vmatpush.msra.mxu0 %v879
  %1229 = vmatpush.msra.mxu0 %v866
  %1230 = vmatpush.msra.mxu0 %v853
  %1231 = vmatpush.msra.mxu0 %v840
  %1232 = vmatpush.msra.mxu0 %v827
  %1233 = vmatpush.msra.mxu0 %v814
  %1234 = vmatmul.f32.gmra.mxu0 %v956
  %v1235 = vpop.f32.mrf.mxu0
  %v1236 = vadd.f32 %v1216, %v1235
  %1237 = vdwg.mxu0
  %1238 = vmatpush.msra.mxu0 %v802
  %1239 = vmatpush.msra.mxu0 %v789
  %1240 = vmatpush.msra.mxu0 %v776
  %1241 = vmatpush.msra.mxu0 %v763
  %1242 = vmatpush.msra.mxu0 %v750
  %1243 = vmatpush.msra.mxu0 %v737
  %1244 = vmatpush.msra.mxu0 %v724
  %1245 = vmatpush.msra.mxu0 %v711
  %1246 = vmatpush.msra.mxu0 %v698
  %1247 = vmatpush.msra.mxu0 %v685
  %1248 = vmatpush.msra.mxu0 %v672
  %1249 = vmatpush.msra.mxu0 %v659
  %1250 = vmatpush.msra.mxu0 %v646
  %1251 = vmatpush.msra.mxu0 %v633
  %1252 = vmatpush.msra.mxu0 %v620
  %1253 = vmatpush.msra.mxu0 %v607
  %1254 = vmatmul.f32.gmra.mxu0 %v598
  %v1255 = vpop.f32.mrf.mxu0
  %v1256 = vadd.f32 %v936, %v1255
  %1257 = vdwg.mxu0
  %1258 = vmatpush.msra.mxu0 0.0
  %1259 = vmatpush.msra.mxu0 0.0
  %1260 = vmatpush.msra.mxu0 0.0
  %1261 = vmatpush.msra.mxu0 0.0
  %1262 = vmatpush.msra.mxu0 0.0
  %1263 = vmatpush.msra.mxu0 0.0
  %1264 = vmatpush.msra.mxu0 0.0
  %1265 = vmatpush.msra.mxu0 %v919
  %1266 = vmatpush.msra.mxu0 %v906
  %1267 = vmatpush.msra.mxu0 %v893
  %1268 = vmatpush.msra.mxu0 %v880
  %1269 = vmatpush.msra.mxu0 %v867
  %1270 = vmatpush.msra.mxu0 %v854
  %1271 = vmatpush.msra.mxu0 %v841
  %1272 = vmatpush.msra.mxu0 %v828
  %1273 = vmatpush.msra.mxu0 %v815
  %1274 = vmatmul.f32.gmra.mxu0 %v956
  %v1275 = vpop.f32.mrf.mxu0
  %v1276 = vadd.f32 %v1256, %v1275
  %1277 = vdwg.mxu0
  %1278 = vmatpush.msra.mxu0 %v803
  %1279 = vmatpush.msra.mxu0 %v790
  %1280 = vmatpush.msra.mxu0 %v777
  %1281 = vmatpush.msra.mxu0 %v764
  %1282 = vmatpush.msra.mxu0 %v751
  %1283 = vmatpush.msra.mxu0 %v738
  %1284 = vmatpush.msra.mxu0 %v725
  %1285 = vmatpush.msra.mxu0 %v712
  %1286 = vmatpush.msra.mxu0 %v699
  %1287 = vmatpush.msra.mxu0 %v686
  %1288 = vmatpush.msra.mxu0 %v673
  %1289 = vmatpush.msra.mxu0 %v660
  %1290 = vmatpush.msra.mxu0 %v647
  %1291 = vmatpush.msra.mxu0 %v634
  %1292 = vmatpush.msra.mxu0 %v621
  %1293 = vmatpush.msra.mxu0 %v608
  %1294 = vmatmul.f32.gmra.mxu0 %v598
  %v1295 = vpop.f32.mrf.mxu0
  %v1296 = vadd.f32 %v937, %v1295
  %1297 = vdwg.mxu0
  %1298 = vmatpush.msra.mxu0 0.0
  %1299 = vmatpush.msra.mxu0 0.0
  %1300 = vmatpush.msra.mxu0 0.0
  %1301 = vmatpush.msra.mxu0 0.0
  %1302 = vmatpush.msra.mxu0 0.0
  %1303 = vmatpush.msra.mxu0 0.0
  %1304 = vmatpush.msra.mxu0 0.0
  %1305 = vmatpush.msra.mxu0 %v920
  %1306 = vmatpush.msra.mxu0 %v907
  %1307 = vmatpush.msra.mxu0 %v894
  %1308 = vmatpush.msra.mxu0 %v881
  %1309 = vmatpush.msra.mxu0 %v868
  %1310 = vmatpush.msra.mxu0 %v855
  %1311 = vmatpush.msra.mxu0 %v842
  %1312 = vmatpush.msra.mxu0 %v829
  %1313 = vmatpush.msra.mxu0 %v816
  %1314 = vmatmul.f32.gmra.mxu0 %v956
  %v1315 = vpop.f32.mrf.mxu0
  %v1316 = vadd.f32 %v1296, %v1315
  %1317 = vdwg.mxu0
  %1318 = vmatpush.msra.mxu0 %v804
  %1319 = vmatpush.msra.mxu0 %v791
  %1320 = vmatpush.msra.mxu0 %v778
  %1321 = vmatpush.msra.mxu0 %v765
  %1322 = vmatpush.msra.mxu0 %v752
  %1323 = vmatpush.msra.mxu0 %v739
  %1324 = vmatpush.msra.mxu0 %v726
  %1325 = vmatpush.msra.mxu0 %v713
  %1326 = vmatpush.msra.mxu0 %v700
  %1327 = vmatpush.msra.mxu0 %v687
  %1328 = vmatpush.msra.mxu0 %v674
  %1329 = vmatpush.msra.mxu0 %v661
  %1330 = vmatpush.msra.mxu0 %v648
  %1331 = vmatpush.msra.mxu0 %v635
  %1332 = vmatpush.msra.mxu0 %v622
  %1333 = vmatpush.msra.mxu0 %v609
  %1334 = vmatmul.f32.gmra.mxu0 %v598
  %v1335 = vpop.f32.mrf.mxu0
  %v1336 = vadd.f32 %v938, %v1335
  %1337 = vdwg.mxu0
  %1338 = vmatpush.msra.mxu0 0.0
  %1339 = vmatpush.msra.mxu0 0.0
  %1340 = vmatpush.msra.mxu0 0.0
  %1341 = vmatpush.msra.mxu0 0.0
  %1342 = vmatpush.msra.mxu0 0.0
  %1343 = vmatpush.msra.mxu0 0.0
  %1344 = vmatpush.msra.mxu0 0.0
  %1345 = vmatpush.msra.mxu0 %v921
  %1346 = vmatpush.msra.mxu0 %v908
  %1347 = vmatpush.msra.mxu0 %v895
  %1348 = vmatpush.msra.mxu0 %v882
  %1349 = vmatpush.msra.mxu0 %v869
  %1350 = vmatpush.msra.mxu0 %v856
  %1351 = vmatpush.msra.mxu0 %v843
  %1352 = vmatpush.msra.mxu0 %v830
  %1353 = vmatpush.msra.mxu0 %v817
  %1354 = vmatmul.f32.gmra.mxu0 %v956
  %v1355 = vpop.f32.mrf.mxu0
  %v1356 = vadd.f32 %v1336, %v1355
  %1357 = vdwg.mxu0
  %1358 = vmatpush.msra.mxu0 %v805
  %1359 = vmatpush.msra.mxu0 %v792
  %1360 = vmatpush.msra.mxu0 %v779
  %1361 = vmatpush.msra.mxu0 %v766
  %1362 = vmatpush.msra.mxu0 %v753
  %1363 = vmatpush.msra.mxu0 %v740
  %1364 = vmatpush.msra.mxu0 %v727
  %1365 = vmatpush.msra.mxu0 %v714
  %1366 = vmatpush.msra.mxu0 %v701
  %1367 = vmatpush.msra.mxu0 %v688
  %1368 = vmatpush.msra.mxu0 %v675
  %1369 = vmatpush.msra.mxu0 %v662
  %1370 = vmatpush.msra.mxu0 %v649
  %1371 = vmatpush.msra.mxu0 %v636
  %1372 = vmatpush.msra.mxu0 %v623
  %1373 = vmatpush.msra.mxu0 %v610
  %1374 = vmatmul.f32.gmra.mxu0 %v598
  %v1375 = vpop.f32.mrf.mxu0
  %v1376 = vadd.f32 %v939, %v1375
  %1377 = vdwg.mxu0
  %1378 = vmatpush.msra.mxu0 0.0
  %1379 = vmatpush.msra.mxu0 0.0
  %1380 = vmatpush.msra.mxu0 0.0
  %1381 = vmatpush.msra.mxu0 0.0
  %1382 = vmatpush.msra.mxu0 0.0
  %1383 = vmatpush.msra.mxu0 0.0
  %1384 = vmatpush.msra.mxu0 0.0
  %1385 = vmatpush.msra.mxu0 %v922
  %1386 = vmatpush.msra.mxu0 %v909
  %1387 = vmatpush.msra.mxu0 %v896
  %1388 = vmatpush.msra.mxu0 %v883
  %1389 = vmatpush.msra.mxu0 %v870
  %1390 = vmatpush.msra.mxu0 %v857
  %1391 = vmatpush.msra.mxu0 %v844
  %1392 = vmatpush.msra.mxu0 %v831
  %1393 = vmatpush.msra.mxu0 %v818
  %1394 = vmatmul.f32.gmra.mxu0 %v956
  %v1395 = vpop.f32.mrf.mxu0
  %v1396 = vadd.f32 %v1376, %v1395
  %1397 = vdwg.mxu0
  %1398 = vmatpush.msra.mxu0 %v806
  %1399 = vmatpush.msra.mxu0 %v793
  %1400 = vmatpush.msra.mxu0 %v780
  %1401 = vmatpush.msra.mxu0 %v767
  %1402 = vmatpush.msra.mxu0 %v754
  %1403 = vmatpush.msra.mxu0 %v741
  %1404 = vmatpush.msra.mxu0 %v728
  %1405 = vmatpush.msra.mxu0 %v715
  %1406 = vmatpush.msra.mxu0 %v702
  %1407 = vmatpush.msra.mxu0 %v689
  %1408 = vmatpush.msra.mxu0 %v676
  %1409 = vmatpush.msra.mxu0 %v663
  %1410 = vmatpush.msra.mxu0 %v650
  %1411 = vmatpush.msra.mxu0 %v637
  %1412 = vmatpush.msra.mxu0 %v624
  %1413 = vmatpush.msra.mxu0 %v611
  %1414 = vmatmul.f32.gmra.mxu0 %v598
  %v1415 = vpop.f32.mrf.mxu0
  %v1416 = vadd.f32 %v940, %v1415
  %1417 = vdwg.mxu0
  %1418 = vmatpush.msra.mxu0 0.0
  %1419 = vmatpush.msra.mxu0 0.0
  %1420 = vmatpush.msra.mxu0 0.0
  %1421 = vmatpush.msra.mxu0 0.0
  %1422 = vmatpush.msra.mxu0 0.0
  %1423 = vmatpush.msra.mxu0 0.0
  %1424 = vmatpush.msra.mxu0 0.0
  %1425 = vmatpush.msra.mxu0 %v923
  %1426 = vmatpush.msra.mxu0 %v910
  %1427 = vmatpush.msra.mxu0 %v897
  %1428 = vmatpush.msra.mxu0 %v884
  %1429 = vmatpush.msra.mxu0 %v871
  %1430 = vmatpush.msra.mxu0 %v858
  %1431 = vmatpush.msra.mxu0 %v845
  %1432 = vmatpush.msra.mxu0 %v832
  %1433 = vmatpush.msra.mxu0 %v819
  %1434 = vmatmul.f32.gmra.mxu0 %v956
  %v1435 = vpop.f32.mrf.mxu0
  %v1436 = vadd.f32 %v1416, %v1435
  %1437 = vdwg.mxu0
  %1438 = vmatpush.msra.mxu0 %v807
  %1439 = vmatpush.msra.mxu0 %v794
  %1440 = vmatpush.msra.mxu0 %v781
  %1441 = vmatpush.msra.mxu0 %v768
  %1442 = vmatpush.msra.mxu0 %v755
  %1443 = vmatpush.msra.mxu0 %v742
  %1444 = vmatpush.msra.mxu0 %v729
  %1445 = vmatpush.msra.mxu0 %v716
  %1446 = vmatpush.msra.mxu0 %v703
  %1447 = vmatpush.msra.mxu0 %v690
  %1448 = vmatpush.msra.mxu0 %v677
  %1449 = vmatpush.msra.mxu0 %v664
  %1450 = vmatpush.msra.mxu0 %v651
  %1451 = vmatpush.msra.mxu0 %v638
  %1452 = vmatpush.msra.mxu0 %v625
  %1453 = vmatpush.msra.mxu0 %v612
  %1454 = vmatmul.f32.gmra.mxu0 %v598
  %v1455 = vpop.f32.mrf.mxu0
  %v1456 = vadd.f32 %v941, %v1455
  %1457 = vdwg.mxu0
  %1458 = vmatpush.msra.mxu0 0.0
  %1459 = vmatpush.msra.mxu0 0.0
  %1460 = vmatpush.msra.mxu0 0.0
  %1461 = vmatpush.msra.mxu0 0.0
  %1462 = vmatpush.msra.mxu0 0.0
  %1463 = vmatpush.msra.mxu0 0.0
  %1464 = vmatpush.msra.mxu0 0.0
  %1465 = vmatpush.msra.mxu0 %v924
  %1466 = vmatpush.msra.mxu0 %v911
  %1467 = vmatpush.msra.mxu0 %v898
  %1468 = vmatpush.msra.mxu0 %v885
  %1469 = vmatpush.msra.mxu0 %v872
  %1470 = vmatpush.msra.mxu0 %v859
  %1471 = vmatpush.msra.mxu0 %v846
  %1472 = vmatpush.msra.mxu0 %v833
  %1473 = vmatpush.msra.mxu0 %v820
  %1474 = vmatmul.f32.gmra.mxu0 %v956
  %v1475 = vpop.f32.mrf.mxu0
  %v1476 = vadd.f32 %v1456, %v1475
  %1477 = vdwg.mxu0
  %v1478 = vxor.u32 %v996, 2147483648
  %v1479 = vxor.u32 %v1036, 2147483648
  %v1480 = vxor.u32 %v1076, 2147483648
  %v1481 = vxor.u32 %v1116, 2147483648
  %v1482 = vxor.u32 %v1156, 2147483648
  %v1483 = vxor.u32 %v1196, 2147483648
  %v1484 = vxor.u32 %v1236, 2147483648
  %v1485 = vxor.u32 %v1276, 2147483648
  %v1486 = vxor.u32 %v1316, 2147483648
  %v1487 = vxor.u32 %v1356, 2147483648
  %v1488 = vxor.u32 %v1396, 2147483648
  %v1489 = vxor.u32 %v1436, 2147483648
  %v1490 = vxor.u32 %v1476, 2147483648
  %v1491 = vmul.f32 %v1478, 1.442695
  %v1492 = vpow.pop %v1491
  %v1493 = vmul.f32 %v1479, 1.442695
  %v1494 = vpow.pop %v1493
  %v1495 = vmul.f32 %v1480, 1.442695
  %v1496 = vpow.pop %v1495
  %v1497 = vmul.f32 %v1481, 1.442695
  %v1498 = vpow.pop %v1497
  %v1499 = vmul.f32 %v1482, 1.442695
  %v1500 = vpow.pop %v1499
  %v1501 = vmul.f32 %v1483, 1.442695
  %v1502 = vpow.pop %v1501
  %v1503 = vmul.f32 %v1484, 1.442695
  %v1504 = vpow.pop %v1503
  %v1505 = vmul.f32 %v1485, 1.442695
  %v1506 = vpow.pop %v1505
  %v1507 = vmul.f32 %v1486, 1.442695
  %v1508 = vpow.pop %v1507
  %v1509 = vmul.f32 %v1487, 1.442695
  %v1510 = vpow.pop %v1509
  %v1511 = vmul.f32 %v1488, 1.442695
  %v1512 = vpow.pop %v1511
  %v1513 = vmul.f32 %v1489, 1.442695
  %v1514 = vpow.pop %v1513
  %v1515 = vmul.f32 %v1490, 1.442695
  %v1516 = vpow.pop %v1515
  %v1517 = vadd.f32 %v1492, 1.0
  %v1518 = vadd.f32 %v1494, 1.0
  %v1519 = vadd.f32 %v1496, 1.0
  %v1520 = vadd.f32 %v1498, 1.0
  %v1521 = vadd.f32 %v1500, 1.0
  %v1522 = vadd.f32 %v1502, 1.0
  %v1523 = vadd.f32 %v1504, 1.0
  %v1524 = vadd.f32 %v1506, 1.0
  %v1525 = vadd.f32 %v1508, 1.0
  %v1526 = vadd.f32 %v1510, 1.0
  %v1527 = vadd.f32 %v1512, 1.0
  %v1528 = vadd.f32 %v1514, 1.0
  %v1529 = vadd.f32 %v1516, 1.0
  %v1530 = vrcp.pop %v1517
  %v1531 = vmul.f32 %v1517, %v1530
  %v1532 = vsub.f32 1.0, %v1531
  %v1533 = vmul.f32 %v1530, %v1532
  %v1534 = vadd.f32 %v1530, %v1533
  %vm1535 = vweird.f32 %v1517
  %vm1536 = vweird.f32 %v1530
  %vm1537 = vmor %vm1535, %vm1536
  %v1538 = vsel %vm1537, %v1530, %v1534
  %v1539 = vand.u32 2147483647, %v1517
  %vm1540 = vcmp.eq.f32.partialorder %v1539, 8.507059e+37
  %v1541 = vand.u32 %v1517, 2147483648
  %v1542 = vor.u32 1.1754944e-38, %v1541
  %v1543 = vsel %vm1540, %v1542, %v1538
  %v1544 = vmul.f32 1.0, %v1543
  %v1545 = vrcp.pop %v1518
  %v1546 = vmul.f32 %v1518, %v1545
  %v1547 = vsub.f32 1.0, %v1546
  %v1548 = vmul.f32 %v1545, %v1547
  %v1549 = vadd.f32 %v1545, %v1548
  %vm1550 = vweird.f32 %v1518
  %vm1551 = vweird.f32 %v1545
  %vm1552 = vmor %vm1550, %vm1551
  %v1553 = vsel %vm1552, %v1545, %v1549
  %v1554 = vand.u32 2147483647, %v1518
  %vm1555 = vcmp.eq.f32.partialorder %v1554, 8.507059e+37
  %v1556 = vand.u32 %v1518, 2147483648
  %v1557 = vor.u32 1.1754944e-38, %v1556
  %v1558 = vsel %vm1555, %v1557, %v1553
  %v1559 = vmul.f32 1.0, %v1558
  %v1560 = vrcp.pop %v1519
  %v1561 = vmul.f32 %v1519, %v1560
  %v1562 = vsub.f32 1.0, %v1561
  %v1563 = vmul.f32 %v1560, %v1562
  %v1564 = vadd.f32 %v1560, %v1563
  %vm1565 = vweird.f32 %v1519
  %vm1566 = vweird.f32 %v1560
  %vm1567 = vmor %vm1565, %vm1566
  %v1568 = vsel %vm1567, %v1560, %v1564
  %v1569 = vand.u32 2147483647, %v1519
  %vm1570 = vcmp.eq.f32.partialorder %v1569, 8.507059e+37
  %v1571 = vand.u32 %v1519, 2147483648
  %v1572 = vor.u32 1.1754944e-38, %v1571
  %v1573 = vsel %vm1570, %v1572, %v1568
  %v1574 = vmul.f32 1.0, %v1573
  %v1575 = vrcp.pop %v1520
  %v1576 = vmul.f32 %v1520, %v1575
  %v1577 = vsub.f32 1.0, %v1576
  %v1578 = vmul.f32 %v1575, %v1577
  %v1579 = vadd.f32 %v1575, %v1578
  %vm1580 = vweird.f32 %v1520
  %vm1581 = vweird.f32 %v1575
  %vm1582 = vmor %vm1580, %vm1581
  %v1583 = vsel %vm1582, %v1575, %v1579
  %v1584 = vand.u32 2147483647, %v1520
  %vm1585 = vcmp.eq.f32.partialorder %v1584, 8.507059e+37
  %v1586 = vand.u32 %v1520, 2147483648
  %v1587 = vor.u32 1.1754944e-38, %v1586
  %v1588 = vsel %vm1585, %v1587, %v1583
  %v1589 = vmul.f32 1.0, %v1588
  %v1590 = vrcp.pop %v1521
  %v1591 = vmul.f32 %v1521, %v1590
  %v1592 = vsub.f32 1.0, %v1591
  %v1593 = vmul.f32 %v1590, %v1592
  %v1594 = vadd.f32 %v1590, %v1593
  %vm1595 = vweird.f32 %v1521
  %vm1596 = vweird.f32 %v1590
  %vm1597 = vmor %vm1595, %vm1596
  %v1598 = vsel %vm1597, %v1590, %v1594
  %v1599 = vand.u32 2147483647, %v1521
  %vm1600 = vcmp.eq.f32.partialorder %v1599, 8.507059e+37
  %v1601 = vand.u32 %v1521, 2147483648
  %v1602 = vor.u32 1.1754944e-38, %v1601
  %v1603 = vsel %vm1600, %v1602, %v1598
  %v1604 = vmul.f32 1.0, %v1603
  %v1605 = vrcp.pop %v1522
  %v1606 = vmul.f32 %v1522, %v1605
  %v1607 = vsub.f32 1.0, %v1606
  %v1608 = vmul.f32 %v1605, %v1607
  %v1609 = vadd.f32 %v1605, %v1608
  %vm1610 = vweird.f32 %v1522
  %vm1611 = vweird.f32 %v1605
  %vm1612 = vmor %vm1610, %vm1611
  %v1613 = vsel %vm1612, %v1605, %v1609
  %v1614 = vand.u32 2147483647, %v1522
  %vm1615 = vcmp.eq.f32.partialorder %v1614, 8.507059e+37
  %v1616 = vand.u32 %v1522, 2147483648
  %v1617 = vor.u32 1.1754944e-38, %v1616
  %v1618 = vsel %vm1615, %v1617, %v1613
  %v1619 = vmul.f32 1.0, %v1618
  %v1620 = vrcp.pop %v1523
  %v1621 = vmul.f32 %v1523, %v1620
  %v1622 = vsub.f32 1.0, %v1621
  %v1623 = vmul.f32 %v1620, %v1622
  %v1624 = vadd.f32 %v1620, %v1623
  %vm1625 = vweird.f32 %v1523
  %vm1626 = vweird.f32 %v1620
  %vm1627 = vmor %vm1625, %vm1626
  %v1628 = vsel %vm1627, %v1620, %v1624
  %v1629 = vand.u32 2147483647, %v1523
  %vm1630 = vcmp.eq.f32.partialorder %v1629, 8.507059e+37
  %v1631 = vand.u32 %v1523, 2147483648
  %v1632 = vor.u32 1.1754944e-38, %v1631
  %v1633 = vsel %vm1630, %v1632, %v1628
  %v1634 = vmul.f32 1.0, %v1633
  %v1635 = vrcp.pop %v1524
  %v1636 = vmul.f32 %v1524, %v1635
  %v1637 = vsub.f32 1.0, %v1636
  %v1638 = vmul.f32 %v1635, %v1637
  %v1639 = vadd.f32 %v1635, %v1638
  %vm1640 = vweird.f32 %v1524
  %vm1641 = vweird.f32 %v1635
  %vm1642 = vmor %vm1640, %vm1641
  %v1643 = vsel %vm1642, %v1635, %v1639
  %v1644 = vand.u32 2147483647, %v1524
  %vm1645 = vcmp.eq.f32.partialorder %v1644, 8.507059e+37
  %v1646 = vand.u32 %v1524, 2147483648
  %v1647 = vor.u32 1.1754944e-38, %v1646
  %v1648 = vsel %vm1645, %v1647, %v1643
  %v1649 = vmul.f32 1.0, %v1648
  %v1650 = vrcp.pop %v1525
  %v1651 = vmul.f32 %v1525, %v1650
  %v1652 = vsub.f32 1.0, %v1651
  %v1653 = vmul.f32 %v1650, %v1652
  %v1654 = vadd.f32 %v1650, %v1653
  %vm1655 = vweird.f32 %v1525
  %vm1656 = vweird.f32 %v1650
  %vm1657 = vmor %vm1655, %vm1656
  %v1658 = vsel %vm1657, %v1650, %v1654
  %v1659 = vand.u32 2147483647, %v1525
  %vm1660 = vcmp.eq.f32.partialorder %v1659, 8.507059e+37
  %v1661 = vand.u32 %v1525, 2147483648
  %v1662 = vor.u32 1.1754944e-38, %v1661
  %v1663 = vsel %vm1660, %v1662, %v1658
  %v1664 = vmul.f32 1.0, %v1663
  %v1665 = vrcp.pop %v1526
  %v1666 = vmul.f32 %v1526, %v1665
  %v1667 = vsub.f32 1.0, %v1666
  %v1668 = vmul.f32 %v1665, %v1667
  %v1669 = vadd.f32 %v1665, %v1668
  %vm1670 = vweird.f32 %v1526
  %vm1671 = vweird.f32 %v1665
  %vm1672 = vmor %vm1670, %vm1671
  %v1673 = vsel %vm1672, %v1665, %v1669
  %v1674 = vand.u32 2147483647, %v1526
  %vm1675 = vcmp.eq.f32.partialorder %v1674, 8.507059e+37
  %v1676 = vand.u32 %v1526, 2147483648
  %v1677 = vor.u32 1.1754944e-38, %v1676
  %v1678 = vsel %vm1675, %v1677, %v1673
  %v1679 = vmul.f32 1.0, %v1678
  %v1680 = vrcp.pop %v1527
  %v1681 = vmul.f32 %v1527, %v1680
  %v1682 = vsub.f32 1.0, %v1681
  %v1683 = vmul.f32 %v1680, %v1682
  %v1684 = vadd.f32 %v1680, %v1683
  %vm1685 = vweird.f32 %v1527
  %vm1686 = vweird.f32 %v1680
  %vm1687 = vmor %vm1685, %vm1686
  %v1688 = vsel %vm1687, %v1680, %v1684
  %v1689 = vand.u32 2147483647, %v1527
  %vm1690 = vcmp.eq.f32.partialorder %v1689, 8.507059e+37
  %v1691 = vand.u32 %v1527, 2147483648
  %v1692 = vor.u32 1.1754944e-38, %v1691
  %v1693 = vsel %vm1690, %v1692, %v1688
  %v1694 = vmul.f32 1.0, %v1693
  %v1695 = vrcp.pop %v1528
  %v1696 = vmul.f32 %v1528, %v1695
  %v1697 = vsub.f32 1.0, %v1696
  %v1698 = vmul.f32 %v1695, %v1697
  %v1699 = vadd.f32 %v1695, %v1698
  %vm1700 = vweird.f32 %v1528
  %vm1701 = vweird.f32 %v1695
  %vm1702 = vmor %vm1700, %vm1701
  %v1703 = vsel %vm1702, %v1695, %v1699
  %v1704 = vand.u32 2147483647, %v1528
  %vm1705 = vcmp.eq.f32.partialorder %v1704, 8.507059e+37
  %v1706 = vand.u32 %v1528, 2147483648
  %v1707 = vor.u32 1.1754944e-38, %v1706
  %v1708 = vsel %vm1705, %v1707, %v1703
  %v1709 = vmul.f32 1.0, %v1708
  %v1710 = vrcp.pop %v1529
  %v1711 = vmul.f32 %v1529, %v1710
  %v1712 = vsub.f32 1.0, %v1711
  %v1713 = vmul.f32 %v1710, %v1712
  %v1714 = vadd.f32 %v1710, %v1713
  %vm1715 = vweird.f32 %v1529
  %vm1716 = vweird.f32 %v1710
  %vm1717 = vmor %vm1715, %vm1716
  %v1718 = vsel %vm1717, %v1710, %v1714
  %v1719 = vand.u32 2147483647, %v1529
  %vm1720 = vcmp.eq.f32.partialorder %v1719, 8.507059e+37
  %v1721 = vand.u32 %v1529, 2147483648
  %v1722 = vor.u32 1.1754944e-38, %v1721
  %v1723 = vsel %vm1720, %v1722, %v1718
  %v1724 = vmul.f32 1.0, %v1723
  %v1738 = vrot.slane %v1559, 7
  %v1739 = vrot.slane %v1574, 6
  %v1740 = vrot.slane %v1589, 5
  %v1741 = vrot.slane %v1604, 4
  %v1742 = vrot.slane %v1619, 3
  %v1743 = vrot.slane %v1634, 2
  %v1744 = vrot.slane %v1649, 1
  %v1745 = vrot.slane %v1679, 7
  %v1746 = vrot.slane %v1694, 6
  %v1747 = vrot.slane %v1709, 5
  %v1748 = vrot.slane %v1724, 4
  %vm1749 = vcmask 1040384
  %v1750 = vsel %vm1749, %v1544, %v1738
  %vm1751 = vcmask 1042434
  %v1752 = vsel %vm1751, %v1739, %v1740
  %v1753 = vsel %vm433, %v1750, %v1752
  %vm1754 = vcmask 1044484
  %v1755 = vsel %vm1754, %v1741, %v1742
  %vm1756 = vcmask 1046534
  %v1757 = vsel %vm1756, %v1743, %v1744
  %vm1758 = vcmask 1045508
  %v1759 = vsel %vm1758, %v1755, %v1757
  %v1760 = vsel %vm384, %v1753, %v1759
  %v1761 = vsel %vm1749, %v1664, %v1745
  %v1762 = vsel %vm433, %v1761, %v1746
  %vm1763 = vcmask 1043459
  %v1764 = vsel %vm1763, %v1747, %v1748
  %vm1765 = vcmask 1042432
  %v1766 = vsel %vm1765, %v1762, %v1764
  %1769 = vst [vmem:[%s9] sm:$0xff] %v1760
  %v1770 = vlaneseq
  %vm1771 = vcmp.ge.s32.totalorder %v1770, 0
  %vm1772 = vcmp.lt.s32.totalorder %v1770, 608
  %vm1773 = vmand %vm1771, %vm1772
  %1774 = vst.msk [vmem:[%s9 + $0x8] sm:$0x1f] %vm1773, %v1766
  // Predicated region
  $region38: #{simple_cnn_with_te_apply.7} parent=0 // pred_check
    _
  $region39: #{simple_cnn_with_te_apply.7} parent=0 // pred_check_branch
    %1776 = sbr.rel (0) target = $region41
  $region40: #{simple_cnn_with_te_apply.7} parent=0 // pred_region
    _
  $region41: #{simple_cnn_with_te_apply.7} parent=0 // pred_fallthru
    _
  // Predicated region
  $region42: #{simple_cnn_with_te_apply.7} parent=0 // pred_check
    _
  $region43: #{simple_cnn_with_te_apply.7} parent=0 // pred_check_branch
    %1778 = sbr.rel (0) target = $region45
  $region44: #{simple_cnn_with_te_apply.7} parent=0 // pred_region
    _
  $region45: #{simple_cnn_with_te_apply.7} parent=0 // pred_fallthru
    _

// kernel: simple_cnn_with_te_apply.9
$region0: #{simple_cnn_with_te_apply.9}
  #allocation0 [shape = 'u32[]', space=smem, size = 0x4, offset = 0x4, fixed_abs, tag = 'smem constant byte address 0x4 - core index']
  #allocation1 [shape = 'u32[72,128]{1,0:T(1,128)}', space=vmem, size = 0x9000, scoped, tag = 'internal scratch']
  %s0 = inlined_call_operand.vmem [shape: f32[2,1024], index: 0, kind: input, shape index: {}]
  %s1 = inlined_call_operand.vmem [shape: f32[1,1024], index: 1, kind: input, shape index: {}]
  %s2 = inlined_call_operand.vmem [shape: f32[1024,512], index: 2, kind: input, shape index: {}]
  %s3 = inlined_call_operand.vmem [shape: f32[1,512], index: 3, kind: input, shape index: {}]
  %s4 = inlined_call_operand.vmem [shape: f32[1,512], index: 4, kind: input, shape index: {}]
  %s5 = inlined_call_operand.vmem [shape: f32[1,512], index: 5, kind: input, shape index: {}]
  %s6 = inlined_call_operand.vmem [shape: f32[1,512], index: 6, kind: input, shape index: {}]
  %s7 = inlined_call_operand.vmem [shape: f32[512,10], index: 7, kind: input, shape index: {}]
  %s8 = inlined_call_operand.vmem [shape: f32[1,10], index: 8, kind: input, shape index: {}]
  %s9 = inlined_call_operand.hbm [shape: f32[2,10], index: 9, kind: output, shape index: {}]
  %s10 = sld [smem:[#allocation0]]
  $region46: #{simple_cnn_with_te_apply.9} parent=0
    _
  %s12 = ssub.s32 1, %s10
  %s13 = scalar_select 0, %s12, %s10
  $region1: #{simple_cnn_with_te_apply.9} parent=0
    #allocation2 [shape = 'u8[1024]{0}', space=vmem, size = 0x400, scoped, tag = 'output window, operand 0, single buffered']
    #allocation3 [shape = 's32[1]{0}', space=sflag, size = 0x4, scoped, tag = 'scoped memory for simple_cnn_with_te_apply.9']
    %14 = vsyncpa [#allocation3], 0
    // Predicated region
    $region2: #{simple_cnn_with_te_apply.9} parent=1 // pred_check
      _
    $region3: #{simple_cnn_with_te_apply.9} parent=1 // pred_check_branch
      %16 = sbr.rel (0) target = $region5
    $region4: #{simple_cnn_with_te_apply.9} parent=1 // pred_region
      _
    $region5: #{simple_cnn_with_te_apply.9} parent=1 // pred_fallthru
      _
    // Predicated region
    $region6: #{simple_cnn_with_te_apply.9} parent=1 // pred_check
      _
    $region7: #{simple_cnn_with_te_apply.9} parent=1 // pred_check_branch
      %18 = sbr.rel (0) target = $region9
    $region8: #{simple_cnn_with_te_apply.9} parent=1 // pred_region
      _
    $region9: #{simple_cnn_with_te_apply.9} parent=1 // pred_fallthru
      _
    // Predicated region
    $region10: #{simple_cnn_with_te_apply.9} parent=1 // pred_check
      _
    $region11: #{simple_cnn_with_te_apply.9} parent=1 // pred_check_branch
      %20 = sbr.rel (0) target = $region13
    $region12: #{simple_cnn_with_te_apply.9} parent=1 // pred_region
      _
    $region13: #{simple_cnn_with_te_apply.9} parent=1 // pred_fallthru
      _
    // Predicated region
    $region14: #{simple_cnn_with_te_apply.9} parent=1 // pred_check
      _
    $region15: #{simple_cnn_with_te_apply.9} parent=1 // pred_check_branch
      %22 = sbr.rel (0) target = $region17
    $region16: #{simple_cnn_with_te_apply.9} parent=1 // pred_region
      _
    $region17: #{simple_cnn_with_te_apply.9} parent=1 // pred_fallthru
      _
    // Predicated region
    $region18: #{simple_cnn_with_te_apply.9} parent=1 // pred_check
      _
    $region19: #{simple_cnn_with_te_apply.9} parent=1 // pred_check_branch
      %24 = sbr.rel (0) target = $region21
    $region20: #{simple_cnn_with_te_apply.9} parent=1 // pred_region
      _
    $region21: #{simple_cnn_with_te_apply.9} parent=1 // pred_fallthru
      _
    // Predicated region
    $region22: #{simple_cnn_with_te_apply.9} parent=1 // pred_check
      _
    $region23: #{simple_cnn_with_te_apply.9} parent=1 // pred_check_branch
      %26 = sbr.rel (0) target = $region25
    $region24: #{simple_cnn_with_te_apply.9} parent=1 // pred_region
      _
    $region25: #{simple_cnn_with_te_apply.9} parent=1 // pred_fallthru
      _
    // Predicated region
    $region26: #{simple_cnn_with_te_apply.9} parent=1 // pred_check
      _
    $region27: #{simple_cnn_with_te_apply.9} parent=1 // pred_check_branch
      %28 = sbr.rel (0) target = $region29
    $region28: #{simple_cnn_with_te_apply.9} parent=1 // pred_region
      _
    $region29: #{simple_cnn_with_te_apply.9} parent=1 // pred_fallthru
      _
    // Predicated region
    $region30: #{simple_cnn_with_te_apply.9} parent=1 // pred_check
      _
    $region31: #{simple_cnn_with_te_apply.9} parent=1 // pred_check_branch
      %30 = sbr.rel (0) target = $region33
    $region32: #{simple_cnn_with_te_apply.9} parent=1 // pred_region
      _
    $region33: #{simple_cnn_with_te_apply.9} parent=1 // pred_fallthru
      _
    // Predicated region
    $region34: #{simple_cnn_with_te_apply.9} parent=1 // pred_check
      _
    $region35: #{simple_cnn_with_te_apply.9} parent=1 // pred_check_branch
      %32 = sbr.rel (0) target = $region37
    $region36: #{simple_cnn_with_te_apply.9} parent=1 // pred_region
      _
    $region37: #{simple_cnn_with_te_apply.9} parent=1 // pred_fallthru
      _
    %v33 = vld [vmem:[%s0] sm:$0xff]
    %v34 = vld [vmem:[%s0 + $0x8] sm:$0xff]
    %v35 = vld [vmem:[%s1] sm:$0xff]
    %v37 = vperm.slane %v35, 0
    %v38 = vperm.slane %v35, 1
    %v39 = vperm.slane %v35, 2
    %v40 = vperm.slane %v35, 3
    %v41 = vperm.slane %v35, 4
    %v42 = vperm.slane %v35, 5
    %v43 = vperm.slane %v35, 6
    %v44 = vperm.slane %v35, 7
    %v45 = vrot.slane %v38, 6
    %v46 = vrot.slane %v39, 4
    %v47 = vrot.slane %v40, 2
    %v48 = vrot.slane %v42, 6
    %v49 = vrot.slane %v43, 4
    %v50 = vrot.slane %v44, 2
    %vm51 = vcmask 1041408
    %v52 = vsel %vm51, %v37, %v45
    %vm53 = vcmask 1045508
    %v54 = vsel %vm53, %v46, %v47
    %vm55 = vcmask 1043456
    %v56 = vsel %vm55, %v52, %v54
    %v57 = vsel %vm51, %v41, %v48
    %v58 = vsel %vm53, %v49, %v50
    %v59 = vsel %vm55, %v57, %v58
    %v62 = vmul.f32 %v33, %v56
    %v63 = vmul.f32 %v34, %v59
    %v64 = vld [vmem:[%s2] sm:$0xff]
    %v65 = vld [vmem:[%s2 + $0x8] sm:$0xff]
    %v66 = vld [vmem:[%s2 + $0x10] sm:$0xff]
    %v67 = vld [vmem:[%s2 + $0x18] sm:$0xff]
    %v68 = vld [vmem:[%s2 + $0x20] sm:$0xff]
    %v69 = vld [vmem:[%s2 + $0x28] sm:$0xff]
    %v70 = vld [vmem:[%s2 + $0x30] sm:$0xff]
    %v71 = vld [vmem:[%s2 + $0x38] sm:$0xff]
    %v72 = vld [vmem:[%s2 + $0x40] sm:$0xff]
    %v73 = vld [vmem:[%s2 + $0x48] sm:$0xff]
    %v74 = vld [vmem:[%s2 + $0x50] sm:$0xff]
    %v75 = vld [vmem:[%s2 + $0x58] sm:$0xff]
    %v76 = vld [vmem:[%s2 + $0x60] sm:$0xff]
    %v77 = vld [vmem:[%s2 + $0x68] sm:$0xff]
    %v78 = vld [vmem:[%s2 + $0x70] sm:$0xff]
    %v79 = vld [vmem:[%s2 + $0x78] sm:$0xff]
    %v80 = vld [vmem:[%s2 + $0x80] sm:$0xff]
    %v81 = vld [vmem:[%s2 + $0x88] sm:$0xff]
    %v82 = vld [vmem:[%s2 + $0x90] sm:$0xff]
    %v83 = vld [vmem:[%s2 + $0x98] sm:$0xff]
    %v84 = vld [vmem:[%s2 + $0xa0] sm:$0xff]
    %v85 = vld [vmem:[%s2 + $0xa8] sm:$0xff]
    %v86 = vld [vmem:[%s2 + $0xb0] sm:$0xff]
    %v87 = vld [vmem:[%s2 + $0xb8] sm:$0xff]
    %v88 = vld [vmem:[%s2 + $0xc0] sm:$0xff]
    %v89 = vld [vmem:[%s2 + $0xc8] sm:$0xff]
    %v90 = vld [vmem:[%s2 + $0xd0] sm:$0xff]
    %v91 = vld [vmem:[%s2 + $0xd8] sm:$0xff]
    %v92 = vld [vmem:[%s2 + $0xe0] sm:$0xff]
    %v93 = vld [vmem:[%s2 + $0xe8] sm:$0xff]
    %v94 = vld [vmem:[%s2 + $0xf0] sm:$0xff]
    %v95 = vld [vmem:[%s2 + $0xf8] sm:$0xff]
    %v96 = vld [vmem:[%s2 + $0x100] sm:$0xff]
    %v97 = vld [vmem:[%s2 + $0x108] sm:$0xff]
    %v98 = vld [vmem:[%s2 + $0x110] sm:$0xff]
    %v99 = vld [vmem:[%s2 + $0x118] sm:$0xff]
    %v100 = vld [vmem:[%s2 + $0x120] sm:$0xff]
    %v101 = vld [vmem:[%s2 + $0x128] sm:$0xff]
    %v102 = vld [vmem:[%s2 + $0x130] sm:$0xff]
    %v103 = vld [vmem:[%s2 + $0x138] sm:$0xff]
    %v104 = vld [vmem:[%s2 + $0x140] sm:$0xff]
    %v105 = vld [vmem:[%s2 + $0x148] sm:$0xff]
    %v106 = vld [vmem:[%s2 + $0x150] sm:$0xff]
    %v107 = vld [vmem:[%s2 + $0x158] sm:$0xff]
    %v108 = vld [vmem:[%s2 + $0x160] sm:$0xff]
    %v109 = vld [vmem:[%s2 + $0x168] sm:$0xff]
    %v110 = vld [vmem:[%s2 + $0x170] sm:$0xff]
    %v111 = vld [vmem:[%s2 + $0x178] sm:$0xff]
    %v112 = vld [vmem:[%s2 + $0x180] sm:$0xff]
    %v113 = vld [vmem:[%s2 + $0x188] sm:$0xff]
    %v114 = vld [vmem:[%s2 + $0x190] sm:$0xff]
    %v115 = vld [vmem:[%s2 + $0x198] sm:$0xff]
    %v116 = vld [vmem:[%s2 + $0x1a0] sm:$0xff]
    %v117 = vld [vmem:[%s2 + $0x1a8] sm:$0xff]
    %v118 = vld [vmem:[%s2 + $0x1b0] sm:$0xff]
    %v119 = vld [vmem:[%s2 + $0x1b8] sm:$0xff]
    %v120 = vld [vmem:[%s2 + $0x1c0] sm:$0xff]
    %v121 = vld [vmem:[%s2 + $0x1c8] sm:$0xff]
    %v122 = vld [vmem:[%s2 + $0x1d0] sm:$0xff]
    %v123 = vld [vmem:[%s2 + $0x1d8] sm:$0xff]
    %v124 = vld [vmem:[%s2 + $0x1e0] sm:$0xff]
    %v125 = vld [vmem:[%s2 + $0x1e8] sm:$0xff]
    %v126 = vld [vmem:[%s2 + $0x1f0] sm:$0xff]
    %v127 = vld [vmem:[%s2 + $0x1f8] sm:$0xff]
    %v128 = vld [vmem:[%s2 + $0x200] sm:$0xff]
    %v129 = vld [vmem:[%s2 + $0x208] sm:$0xff]
    %v130 = vld [vmem:[%s2 + $0x210] sm:$0xff]
    %v131 = vld [vmem:[%s2 + $0x218] sm:$0xff]
    %v132 = vld [vmem:[%s2 + $0x220] sm:$0xff]
    %v133 = vld [vmem:[%s2 + $0x228] sm:$0xff]
    %v134 = vld [vmem:[%s2 + $0x230] sm:$0xff]
    %v135 = vld [vmem:[%s2 + $0x238] sm:$0xff]
    %v136 = vld [vmem:[%s2 + $0x240] sm:$0xff]
    %v137 = vld [vmem:[%s2 + $0x248] sm:$0xff]
    %v138 = vld [vmem:[%s2 + $0x250] sm:$0xff]
    %v139 = vld [vmem:[%s2 + $0x258] sm:$0xff]
    %v140 = vld [vmem:[%s2 + $0x260] sm:$0xff]
    %v141 = vld [vmem:[%s2 + $0x268] sm:$0xff]
    %v142 = vld [vmem:[%s2 + $0x270] sm:$0xff]
    %v143 = vld [vmem:[%s2 + $0x278] sm:$0xff]
    %v144 = vld [vmem:[%s2 + $0x280] sm:$0xff]
    %v145 = vld [vmem:[%s2 + $0x288] sm:$0xff]
    %v146 = vld [vmem:[%s2 + $0x290] sm:$0xff]
    %v147 = vld [vmem:[%s2 + $0x298] sm:$0xff]
    %v148 = vld [vmem:[%s2 + $0x2a0] sm:$0xff]
    %v149 = vld [vmem:[%s2 + $0x2a8] sm:$0xff]
    %v150 = vld [vmem:[%s2 + $0x2b0] sm:$0xff]
    %v151 = vld [vmem:[%s2 + $0x2b8] sm:$0xff]
    %v152 = vld [vmem:[%s2 + $0x2c0] sm:$0xff]
    %v153 = vld [vmem:[%s2 + $0x2c8] sm:$0xff]
    %v154 = vld [vmem:[%s2 + $0x2d0] sm:$0xff]
    %v155 = vld [vmem:[%s2 + $0x2d8] sm:$0xff]
    %v156 = vld [vmem:[%s2 + $0x2e0] sm:$0xff]
    %v157 = vld [vmem:[%s2 + $0x2e8] sm:$0xff]
    %v158 = vld [vmem:[%s2 + $0x2f0] sm:$0xff]
    %v159 = vld [vmem:[%s2 + $0x2f8] sm:$0xff]
    %v160 = vld [vmem:[%s2 + $0x300] sm:$0xff]
    %v161 = vld [vmem:[%s2 + $0x308] sm:$0xff]
    %v162 = vld [vmem:[%s2 + $0x310] sm:$0xff]
    %v163 = vld [vmem:[%s2 + $0x318] sm:$0xff]
    %v164 = vld [vmem:[%s2 + $0x320] sm:$0xff]
    %v165 = vld [vmem:[%s2 + $0x328] sm:$0xff]
    %v166 = vld [vmem:[%s2 + $0x330] sm:$0xff]
    %v167 = vld [vmem:[%s2 + $0x338] sm:$0xff]
    %v168 = vld [vmem:[%s2 + $0x340] sm:$0xff]
    %v169 = vld [vmem:[%s2 + $0x348] sm:$0xff]
    %v170 = vld [vmem:[%s2 + $0x350] sm:$0xff]
    %v171 = vld [vmem:[%s2 + $0x358] sm:$0xff]
    %v172 = vld [vmem:[%s2 + $0x360] sm:$0xff]
    %v173 = vld [vmem:[%s2 + $0x368] sm:$0xff]
    %v174 = vld [vmem:[%s2 + $0x370] sm:$0xff]
    %v175 = vld [vmem:[%s2 + $0x378] sm:$0xff]
    %v176 = vld [vmem:[%s2 + $0x380] sm:$0xff]
    %v177 = vld [vmem:[%s2 + $0x388] sm:$0xff]
    %v178 = vld [vmem:[%s2 + $0x390] sm:$0xff]
    %v179 = vld [vmem:[%s2 + $0x398] sm:$0xff]
    %v180 = vld [vmem:[%s2 + $0x3a0] sm:$0xff]
    %v181 = vld [vmem:[%s2 + $0x3a8] sm:$0xff]
    %v182 = vld [vmem:[%s2 + $0x3b0] sm:$0xff]
    %v183 = vld [vmem:[%s2 + $0x3b8] sm:$0xff]
    %v184 = vld [vmem:[%s2 + $0x3c0] sm:$0xff]
    %v185 = vld [vmem:[%s2 + $0x3c8] sm:$0xff]
    %v186 = vld [vmem:[%s2 + $0x3d0] sm:$0xff]
    %v187 = vld [vmem:[%s2 + $0x3d8] sm:$0xff]
    %v188 = vld [vmem:[%s2 + $0x3e0] sm:$0xff]
    %v189 = vld [vmem:[%s2 + $0x3e8] sm:$0xff]
    %v190 = vld [vmem:[%s2 + $0x3f0] sm:$0xff]
    %v191 = vld [vmem:[%s2 + $0x3f8] sm:$0xff]
    %v192 = vld [vmem:[%s2 + $0x400] sm:$0xff]
    %v193 = vld [vmem:[%s2 + $0x408] sm:$0xff]
    %v194 = vld [vmem:[%s2 + $0x410] sm:$0xff]
    %v195 = vld [vmem:[%s2 + $0x418] sm:$0xff]
    %v196 = vld [vmem:[%s2 + $0x420] sm:$0xff]
    %v197 = vld [vmem:[%s2 + $0x428] sm:$0xff]
    %v198 = vld [vmem:[%s2 + $0x430] sm:$0xff]
    %v199 = vld [vmem:[%s2 + $0x438] sm:$0xff]
    %v200 = vld [vmem:[%s2 + $0x440] sm:$0xff]
    %v201 = vld [vmem:[%s2 + $0x448] sm:$0xff]
    %v202 = vld [vmem:[%s2 + $0x450] sm:$0xff]
    %v203 = vld [vmem:[%s2 + $0x458] sm:$0xff]
    %v204 = vld [vmem:[%s2 + $0x460] sm:$0xff]
    %v205 = vld [vmem:[%s2 + $0x468] sm:$0xff]
    %v206 = vld [vmem:[%s2 + $0x470] sm:$0xff]
    %v207 = vld [vmem:[%s2 + $0x478] sm:$0xff]
    %v208 = vld [vmem:[%s2 + $0x480] sm:$0xff]
    %v209 = vld [vmem:[%s2 + $0x488] sm:$0xff]
    %v210 = vld [vmem:[%s2 + $0x490] sm:$0xff]
    %v211 = vld [vmem:[%s2 + $0x498] sm:$0xff]
    %v212 = vld [vmem:[%s2 + $0x4a0] sm:$0xff]
    %v213 = vld [vmem:[%s2 + $0x4a8] sm:$0xff]
    %v214 = vld [vmem:[%s2 + $0x4b0] sm:$0xff]
    %v215 = vld [vmem:[%s2 + $0x4b8] sm:$0xff]
    %v216 = vld [vmem:[%s2 + $0x4c0] sm:$0xff]
    %v217 = vld [vmem:[%s2 + $0x4c8] sm:$0xff]
    %v218 = vld [vmem:[%s2 + $0x4d0] sm:$0xff]
    %v219 = vld [vmem:[%s2 + $0x4d8] sm:$0xff]
    %v220 = vld [vmem:[%s2 + $0x4e0] sm:$0xff]
    %v221 = vld [vmem:[%s2 + $0x4e8] sm:$0xff]
    %v222 = vld [vmem:[%s2 + $0x4f0] sm:$0xff]
    %v223 = vld [vmem:[%s2 + $0x4f8] sm:$0xff]
    %v224 = vld [vmem:[%s2 + $0x500] sm:$0xff]
    %v225 = vld [vmem:[%s2 + $0x508] sm:$0xff]
    %v226 = vld [vmem:[%s2 + $0x510] sm:$0xff]
    %v227 = vld [vmem:[%s2 + $0x518] sm:$0xff]
    %v228 = vld [vmem:[%s2 + $0x520] sm:$0xff]
    %v229 = vld [vmem:[%s2 + $0x528] sm:$0xff]
    %v230 = vld [vmem:[%s2 + $0x530] sm:$0xff]
    %v231 = vld [vmem:[%s2 + $0x538] sm:$0xff]
    %v232 = vld [vmem:[%s2 + $0x540] sm:$0xff]
    %v233 = vld [vmem:[%s2 + $0x548] sm:$0xff]
    %v234 = vld [vmem:[%s2 + $0x550] sm:$0xff]
    %v235 = vld [vmem:[%s2 + $0x558] sm:$0xff]
    %v236 = vld [vmem:[%s2 + $0x560] sm:$0xff]
    %v237 = vld [vmem:[%s2 + $0x568] sm:$0xff]
    %v238 = vld [vmem:[%s2 + $0x570] sm:$0xff]
    %v239 = vld [vmem:[%s2 + $0x578] sm:$0xff]
    %v240 = vld [vmem:[%s2 + $0x580] sm:$0xff]
    %v241 = vld [vmem:[%s2 + $0x588] sm:$0xff]
    %v242 = vld [vmem:[%s2 + $0x590] sm:$0xff]
    %v243 = vld [vmem:[%s2 + $0x598] sm:$0xff]
    %v244 = vld [vmem:[%s2 + $0x5a0] sm:$0xff]
    %v245 = vld [vmem:[%s2 + $0x5a8] sm:$0xff]
    %v246 = vld [vmem:[%s2 + $0x5b0] sm:$0xff]
    %v247 = vld [vmem:[%s2 + $0x5b8] sm:$0xff]
    %v248 = vld [vmem:[%s2 + $0x5c0] sm:$0xff]
    %v249 = vld [vmem:[%s2 + $0x5c8] sm:$0xff]
    %v250 = vld [vmem:[%s2 + $0x5d0] sm:$0xff]
    %v251 = vld [vmem:[%s2 + $0x5d8] sm:$0xff]
    %v252 = vld [vmem:[%s2 + $0x5e0] sm:$0xff]
    %v253 = vld [vmem:[%s2 + $0x5e8] sm:$0xff]
    %v254 = vld [vmem:[%s2 + $0x5f0] sm:$0xff]
    %v255 = vld [vmem:[%s2 + $0x5f8] sm:$0xff]
    %v256 = vld [vmem:[%s2 + $0x600] sm:$0xff]
    %v257 = vld [vmem:[%s2 + $0x608] sm:$0xff]
    %v258 = vld [vmem:[%s2 + $0x610] sm:$0xff]
    %v259 = vld [vmem:[%s2 + $0x618] sm:$0xff]
    %v260 = vld [vmem:[%s2 + $0x620] sm:$0xff]
    %v261 = vld [vmem:[%s2 + $0x628] sm:$0xff]
    %v262 = vld [vmem:[%s2 + $0x630] sm:$0xff]
    %v263 = vld [vmem:[%s2 + $0x638] sm:$0xff]
    %v264 = vld [vmem:[%s2 + $0x640] sm:$0xff]
    %v265 = vld [vmem:[%s2 + $0x648] sm:$0xff]
    %v266 = vld [vmem:[%s2 + $0x650] sm:$0xff]
    %v267 = vld [vmem:[%s2 + $0x658] sm:$0xff]
    %v268 = vld [vmem:[%s2 + $0x660] sm:$0xff]
    %v269 = vld [vmem:[%s2 + $0x668] sm:$0xff]
    %v270 = vld [vmem:[%s2 + $0x670] sm:$0xff]
    %v271 = vld [vmem:[%s2 + $0x678] sm:$0xff]
    %v272 = vld [vmem:[%s2 + $0x680] sm:$0xff]
    %v273 = vld [vmem:[%s2 + $0x688] sm:$0xff]
    %v274 = vld [vmem:[%s2 + $0x690] sm:$0xff]
    %v275 = vld [vmem:[%s2 + $0x698] sm:$0xff]
    %v276 = vld [vmem:[%s2 + $0x6a0] sm:$0xff]
    %v277 = vld [vmem:[%s2 + $0x6a8] sm:$0xff]
    %v278 = vld [vmem:[%s2 + $0x6b0] sm:$0xff]
    %v279 = vld [vmem:[%s2 + $0x6b8] sm:$0xff]
    %v280 = vld [vmem:[%s2 + $0x6c0] sm:$0xff]
    %v281 = vld [vmem:[%s2 + $0x6c8] sm:$0xff]
    %v282 = vld [vmem:[%s2 + $0x6d0] sm:$0xff]
    %v283 = vld [vmem:[%s2 + $0x6d8] sm:$0xff]
    %v284 = vld [vmem:[%s2 + $0x6e0] sm:$0xff]
    %v285 = vld [vmem:[%s2 + $0x6e8] sm:$0xff]
    %v286 = vld [vmem:[%s2 + $0x6f0] sm:$0xff]
    %v287 = vld [vmem:[%s2 + $0x6f8] sm:$0xff]
    %v288 = vld [vmem:[%s2 + $0x700] sm:$0xff]
    %v289 = vld [vmem:[%s2 + $0x708] sm:$0xff]
    %v290 = vld [vmem:[%s2 + $0x710] sm:$0xff]
    %v291 = vld [vmem:[%s2 + $0x718] sm:$0xff]
    %v292 = vld [vmem:[%s2 + $0x720] sm:$0xff]
    %v293 = vld [vmem:[%s2 + $0x728] sm:$0xff]
    %v294 = vld [vmem:[%s2 + $0x730] sm:$0xff]
    %v295 = vld [vmem:[%s2 + $0x738] sm:$0xff]
    %v296 = vld [vmem:[%s2 + $0x740] sm:$0xff]
    %v297 = vld [vmem:[%s2 + $0x748] sm:$0xff]
    %v298 = vld [vmem:[%s2 + $0x750] sm:$0xff]
    %v299 = vld [vmem:[%s2 + $0x758] sm:$0xff]
    %v300 = vld [vmem:[%s2 + $0x760] sm:$0xff]
    %v301 = vld [vmem:[%s2 + $0x768] sm:$0xff]
    %v302 = vld [vmem:[%s2 + $0x770] sm:$0xff]
    %v303 = vld [vmem:[%s2 + $0x778] sm:$0xff]
    %v304 = vld [vmem:[%s2 + $0x780] sm:$0xff]
    %v305 = vld [vmem:[%s2 + $0x788] sm:$0xff]
    %v306 = vld [vmem:[%s2 + $0x790] sm:$0xff]
    %v307 = vld [vmem:[%s2 + $0x798] sm:$0xff]
    %v308 = vld [vmem:[%s2 + $0x7a0] sm:$0xff]
    %v309 = vld [vmem:[%s2 + $0x7a8] sm:$0xff]
    %v310 = vld [vmem:[%s2 + $0x7b0] sm:$0xff]
    %v311 = vld [vmem:[%s2 + $0x7b8] sm:$0xff]
    %v312 = vld [vmem:[%s2 + $0x7c0] sm:$0xff]
    %v313 = vld [vmem:[%s2 + $0x7c8] sm:$0xff]
    %v314 = vld [vmem:[%s2 + $0x7d0] sm:$0xff]
    %v315 = vld [vmem:[%s2 + $0x7d8] sm:$0xff]
    %v316 = vld [vmem:[%s2 + $0x7e0] sm:$0xff]
    %v317 = vld [vmem:[%s2 + $0x7e8] sm:$0xff]
    %v318 = vld [vmem:[%s2 + $0x7f0] sm:$0xff]
    %v319 = vld [vmem:[%s2 + $0x7f8] sm:$0xff]
    %v320 = vld [vmem:[%s2 + $0x800] sm:$0xff]
    %v321 = vld [vmem:[%s2 + $0x808] sm:$0xff]
    %v322 = vld [vmem:[%s2 + $0x810] sm:$0xff]
    %v323 = vld [vmem:[%s2 + $0x818] sm:$0xff]
    %v324 = vld [vmem:[%s2 + $0x820] sm:$0xff]
    %v325 = vld [vmem:[%s2 + $0x828] sm:$0xff]
    %v326 = vld [vmem:[%s2 + $0x830] sm:$0xff]
    %v327 = vld [vmem:[%s2 + $0x838] sm:$0xff]
    %v328 = vld [vmem:[%s2 + $0x840] sm:$0xff]
    %v329 = vld [vmem:[%s2 + $0x848] sm:$0xff]
    %v330 = vld [vmem:[%s2 + $0x850] sm:$0xff]
    %v331 = vld [vmem:[%s2 + $0x858] sm:$0xff]
    %v332 = vld [vmem:[%s2 + $0x860] sm:$0xff]
    %v333 = vld [vmem:[%s2 + $0x868] sm:$0xff]
    %v334 = vld [vmem:[%s2 + $0x870] sm:$0xff]
    %v335 = vld [vmem:[%s2 + $0x878] sm:$0xff]
    %v336 = vld [vmem:[%s2 + $0x880] sm:$0xff]
    %v337 = vld [vmem:[%s2 + $0x888] sm:$0xff]
    %v338 = vld [vmem:[%s2 + $0x890] sm:$0xff]
    %v339 = vld [vmem:[%s2 + $0x898] sm:$0xff]
    %v340 = vld [vmem:[%s2 + $0x8a0] sm:$0xff]
    %v341 = vld [vmem:[%s2 + $0x8a8] sm:$0xff]
    %v342 = vld [vmem:[%s2 + $0x8b0] sm:$0xff]
    %v343 = vld [vmem:[%s2 + $0x8b8] sm:$0xff]
    %v344 = vld [vmem:[%s2 + $0x8c0] sm:$0xff]
    %v345 = vld [vmem:[%s2 + $0x8c8] sm:$0xff]
    %v346 = vld [vmem:[%s2 + $0x8d0] sm:$0xff]
    %v347 = vld [vmem:[%s2 + $0x8d8] sm:$0xff]
    %v348 = vld [vmem:[%s2 + $0x8e0] sm:$0xff]
    %v349 = vld [vmem:[%s2 + $0x8e8] sm:$0xff]
    %v350 = vld [vmem:[%s2 + $0x8f0] sm:$0xff]
    %v351 = vld [vmem:[%s2 + $0x8f8] sm:$0xff]
    %v352 = vld [vmem:[%s2 + $0x900] sm:$0xff]
    %v353 = vld [vmem:[%s2 + $0x908] sm:$0xff]
    %v354 = vld [vmem:[%s2 + $0x910] sm:$0xff]
    %v355 = vld [vmem:[%s2 + $0x918] sm:$0xff]
    %v356 = vld [vmem:[%s2 + $0x920] sm:$0xff]
    %v357 = vld [vmem:[%s2 + $0x928] sm:$0xff]
    %v358 = vld [vmem:[%s2 + $0x930] sm:$0xff]
    %v359 = vld [vmem:[%s2 + $0x938] sm:$0xff]
    %v360 = vld [vmem:[%s2 + $0x940] sm:$0xff]
    %v361 = vld [vmem:[%s2 + $0x948] sm:$0xff]
    %v362 = vld [vmem:[%s2 + $0x950] sm:$0xff]
    %v363 = vld [vmem:[%s2 + $0x958] sm:$0xff]
    %v364 = vld [vmem:[%s2 + $0x960] sm:$0xff]
    %v365 = vld [vmem:[%s2 + $0x968] sm:$0xff]
    %v366 = vld [vmem:[%s2 + $0x970] sm:$0xff]
    %v367 = vld [vmem:[%s2 + $0x978] sm:$0xff]
    %v368 = vld [vmem:[%s2 + $0x980] sm:$0xff]
    %v369 = vld [vmem:[%s2 + $0x988] sm:$0xff]
    %v370 = vld [vmem:[%s2 + $0x990] sm:$0xff]
    %v371 = vld [vmem:[%s2 + $0x998] sm:$0xff]
    %v372 = vld [vmem:[%s2 + $0x9a0] sm:$0xff]
    %v373 = vld [vmem:[%s2 + $0x9a8] sm:$0xff]
    %v374 = vld [vmem:[%s2 + $0x9b0] sm:$0xff]
    %v375 = vld [vmem:[%s2 + $0x9b8] sm:$0xff]
    %v376 = vld [vmem:[%s2 + $0x9c0] sm:$0xff]
    %v377 = vld [vmem:[%s2 + $0x9c8] sm:$0xff]
    %v378 = vld [vmem:[%s2 + $0x9d0] sm:$0xff]
    %v379 = vld [vmem:[%s2 + $0x9d8] sm:$0xff]
    %v380 = vld [vmem:[%s2 + $0x9e0] sm:$0xff]
    %v381 = vld [vmem:[%s2 + $0x9e8] sm:$0xff]
    %v382 = vld [vmem:[%s2 + $0x9f0] sm:$0xff]
    %v383 = vld [vmem:[%s2 + $0x9f8] sm:$0xff]
    %v384 = vld [vmem:[%s2 + $0xa00] sm:$0xff]
    %v385 = vld [vmem:[%s2 + $0xa08] sm:$0xff]
    %v386 = vld [vmem:[%s2 + $0xa10] sm:$0xff]
    %v387 = vld [vmem:[%s2 + $0xa18] sm:$0xff]
    %v388 = vld [vmem:[%s2 + $0xa20] sm:$0xff]
    %v389 = vld [vmem:[%s2 + $0xa28] sm:$0xff]
    %v390 = vld [vmem:[%s2 + $0xa30] sm:$0xff]
    %v391 = vld [vmem:[%s2 + $0xa38] sm:$0xff]
    %v392 = vld [vmem:[%s2 + $0xa40] sm:$0xff]
    %v393 = vld [vmem:[%s2 + $0xa48] sm:$0xff]
    %v394 = vld [vmem:[%s2 + $0xa50] sm:$0xff]
    %v395 = vld [vmem:[%s2 + $0xa58] sm:$0xff]
    %v396 = vld [vmem:[%s2 + $0xa60] sm:$0xff]
    %v397 = vld [vmem:[%s2 + $0xa68] sm:$0xff]
    %v398 = vld [vmem:[%s2 + $0xa70] sm:$0xff]
    %v399 = vld [vmem:[%s2 + $0xa78] sm:$0xff]
    %v400 = vld [vmem:[%s2 + $0xa80] sm:$0xff]
    %v401 = vld [vmem:[%s2 + $0xa88] sm:$0xff]
    %v402 = vld [vmem:[%s2 + $0xa90] sm:$0xff]
    %v403 = vld [vmem:[%s2 + $0xa98] sm:$0xff]
    %v404 = vld [vmem:[%s2 + $0xaa0] sm:$0xff]
    %v405 = vld [vmem:[%s2 + $0xaa8] sm:$0xff]
    %v406 = vld [vmem:[%s2 + $0xab0] sm:$0xff]
    %v407 = vld [vmem:[%s2 + $0xab8] sm:$0xff]
    %v408 = vld [vmem:[%s2 + $0xac0] sm:$0xff]
    %v409 = vld [vmem:[%s2 + $0xac8] sm:$0xff]
    %v410 = vld [vmem:[%s2 + $0xad0] sm:$0xff]
    %v411 = vld [vmem:[%s2 + $0xad8] sm:$0xff]
    %v412 = vld [vmem:[%s2 + $0xae0] sm:$0xff]
    %v413 = vld [vmem:[%s2 + $0xae8] sm:$0xff]
    %v414 = vld [vmem:[%s2 + $0xaf0] sm:$0xff]
    %v415 = vld [vmem:[%s2 + $0xaf8] sm:$0xff]
    %v416 = vld [vmem:[%s2 + $0xb00] sm:$0xff]
    %v417 = vld [vmem:[%s2 + $0xb08] sm:$0xff]
    %v418 = vld [vmem:[%s2 + $0xb10] sm:$0xff]
    %v419 = vld [vmem:[%s2 + $0xb18] sm:$0xff]
    %v420 = vld [vmem:[%s2 + $0xb20] sm:$0xff]
    %v421 = vld [vmem:[%s2 + $0xb28] sm:$0xff]
    %v422 = vld [vmem:[%s2 + $0xb30] sm:$0xff]
    %v423 = vld [vmem:[%s2 + $0xb38] sm:$0xff]
    %v424 = vld [vmem:[%s2 + $0xb40] sm:$0xff]
    %v425 = vld [vmem:[%s2 + $0xb48] sm:$0xff]
    %v426 = vld [vmem:[%s2 + $0xb50] sm:$0xff]
    %v427 = vld [vmem:[%s2 + $0xb58] sm:$0xff]
    %v428 = vld [vmem:[%s2 + $0xb60] sm:$0xff]
    %v429 = vld [vmem:[%s2 + $0xb68] sm:$0xff]
    %v430 = vld [vmem:[%s2 + $0xb70] sm:$0xff]
    %v431 = vld [vmem:[%s2 + $0xb78] sm:$0xff]
    %v432 = vld [vmem:[%s2 + $0xb80] sm:$0xff]
    %v433 = vld [vmem:[%s2 + $0xb88] sm:$0xff]
    %v434 = vld [vmem:[%s2 + $0xb90] sm:$0xff]
    %v435 = vld [vmem:[%s2 + $0xb98] sm:$0xff]
    %v436 = vld [vmem:[%s2 + $0xba0] sm:$0xff]
    %v437 = vld [vmem:[%s2 + $0xba8] sm:$0xff]
    %v438 = vld [vmem:[%s2 + $0xbb0] sm:$0xff]
    %v439 = vld [vmem:[%s2 + $0xbb8] sm:$0xff]
    %v440 = vld [vmem:[%s2 + $0xbc0] sm:$0xff]
    %v441 = vld [vmem:[%s2 + $0xbc8] sm:$0xff]
    %v442 = vld [vmem:[%s2 + $0xbd0] sm:$0xff]
    %v443 = vld [vmem:[%s2 + $0xbd8] sm:$0xff]
    %v444 = vld [vmem:[%s2 + $0xbe0] sm:$0xff]
    %v445 = vld [vmem:[%s2 + $0xbe8] sm:$0xff]
    %v446 = vld [vmem:[%s2 + $0xbf0] sm:$0xff]
    %v447 = vld [vmem:[%s2 + $0xbf8] sm:$0xff]
    %v448 = vld [vmem:[%s2 + $0xc00] sm:$0xff]
    %v449 = vld [vmem:[%s2 + $0xc08] sm:$0xff]
    %v450 = vld [vmem:[%s2 + $0xc10] sm:$0xff]
    %v451 = vld [vmem:[%s2 + $0xc18] sm:$0xff]
    %v452 = vld [vmem:[%s2 + $0xc20] sm:$0xff]
    %v453 = vld [vmem:[%s2 + $0xc28] sm:$0xff]
    %v454 = vld [vmem:[%s2 + $0xc30] sm:$0xff]
    %v455 = vld [vmem:[%s2 + $0xc38] sm:$0xff]
    %v456 = vld [vmem:[%s2 + $0xc40] sm:$0xff]
    %v457 = vld [vmem:[%s2 + $0xc48] sm:$0xff]
    %v458 = vld [vmem:[%s2 + $0xc50] sm:$0xff]
    %v459 = vld [vmem:[%s2 + $0xc58] sm:$0xff]
    %v460 = vld [vmem:[%s2 + $0xc60] sm:$0xff]
    %v461 = vld [vmem:[%s2 + $0xc68] sm:$0xff]
    %v462 = vld [vmem:[%s2 + $0xc70] sm:$0xff]
    %v463 = vld [vmem:[%s2 + $0xc78] sm:$0xff]
    %v464 = vld [vmem:[%s2 + $0xc80] sm:$0xff]
    %v465 = vld [vmem:[%s2 + $0xc88] sm:$0xff]
    %v466 = vld [vmem:[%s2 + $0xc90] sm:$0xff]
    %v467 = vld [vmem:[%s2 + $0xc98] sm:$0xff]
    %v468 = vld [vmem:[%s2 + $0xca0] sm:$0xff]
    %v469 = vld [vmem:[%s2 + $0xca8] sm:$0xff]
    %v470 = vld [vmem:[%s2 + $0xcb0] sm:$0xff]
    %v471 = vld [vmem:[%s2 + $0xcb8] sm:$0xff]
    %v472 = vld [vmem:[%s2 + $0xcc0] sm:$0xff]
    %v473 = vld [vmem:[%s2 + $0xcc8] sm:$0xff]
    %v474 = vld [vmem:[%s2 + $0xcd0] sm:$0xff]
    %v475 = vld [vmem:[%s2 + $0xcd8] sm:$0xff]
    %v476 = vld [vmem:[%s2 + $0xce0] sm:$0xff]
    %v477 = vld [vmem:[%s2 + $0xce8] sm:$0xff]
    %v478 = vld [vmem:[%s2 + $0xcf0] sm:$0xff]
    %v479 = vld [vmem:[%s2 + $0xcf8] sm:$0xff]
    %v480 = vld [vmem:[%s2 + $0xd00] sm:$0xff]
    %v481 = vld [vmem:[%s2 + $0xd08] sm:$0xff]
    %v482 = vld [vmem:[%s2 + $0xd10] sm:$0xff]
    %v483 = vld [vmem:[%s2 + $0xd18] sm:$0xff]
    %v484 = vld [vmem:[%s2 + $0xd20] sm:$0xff]
    %v485 = vld [vmem:[%s2 + $0xd28] sm:$0xff]
    %v486 = vld [vmem:[%s2 + $0xd30] sm:$0xff]
    %v487 = vld [vmem:[%s2 + $0xd38] sm:$0xff]
    %v488 = vld [vmem:[%s2 + $0xd40] sm:$0xff]
    %v489 = vld [vmem:[%s2 + $0xd48] sm:$0xff]
    %v490 = vld [vmem:[%s2 + $0xd50] sm:$0xff]
    %v491 = vld [vmem:[%s2 + $0xd58] sm:$0xff]
    %v492 = vld [vmem:[%s2 + $0xd60] sm:$0xff]
    %v493 = vld [vmem:[%s2 + $0xd68] sm:$0xff]
    %v494 = vld [vmem:[%s2 + $0xd70] sm:$0xff]
    %v495 = vld [vmem:[%s2 + $0xd78] sm:$0xff]
    %v496 = vld [vmem:[%s2 + $0xd80] sm:$0xff]
    %v497 = vld [vmem:[%s2 + $0xd88] sm:$0xff]
    %v498 = vld [vmem:[%s2 + $0xd90] sm:$0xff]
    %v499 = vld [vmem:[%s2 + $0xd98] sm:$0xff]
    %v500 = vld [vmem:[%s2 + $0xda0] sm:$0xff]
    %v501 = vld [vmem:[%s2 + $0xda8] sm:$0xff]
    %v502 = vld [vmem:[%s2 + $0xdb0] sm:$0xff]
    %v503 = vld [vmem:[%s2 + $0xdb8] sm:$0xff]
    %v504 = vld [vmem:[%s2 + $0xdc0] sm:$0xff]
    %v505 = vld [vmem:[%s2 + $0xdc8] sm:$0xff]
    %v506 = vld [vmem:[%s2 + $0xdd0] sm:$0xff]
    %v507 = vld [vmem:[%s2 + $0xdd8] sm:$0xff]
    %v508 = vld [vmem:[%s2 + $0xde0] sm:$0xff]
    %v509 = vld [vmem:[%s2 + $0xde8] sm:$0xff]
    %v510 = vld [vmem:[%s2 + $0xdf0] sm:$0xff]
    %v511 = vld [vmem:[%s2 + $0xdf8] sm:$0xff]
    %v512 = vld [vmem:[%s2 + $0xe00] sm:$0xff]
    %v513 = vld [vmem:[%s2 + $0xe08] sm:$0xff]
    %v514 = vld [vmem:[%s2 + $0xe10] sm:$0xff]
    %v515 = vld [vmem:[%s2 + $0xe18] sm:$0xff]
    %v516 = vld [vmem:[%s2 + $0xe20] sm:$0xff]
    %v517 = vld [vmem:[%s2 + $0xe28] sm:$0xff]
    %v518 = vld [vmem:[%s2 + $0xe30] sm:$0xff]
    %v519 = vld [vmem:[%s2 + $0xe38] sm:$0xff]
    %v520 = vld [vmem:[%s2 + $0xe40] sm:$0xff]
    %v521 = vld [vmem:[%s2 + $0xe48] sm:$0xff]
    %v522 = vld [vmem:[%s2 + $0xe50] sm:$0xff]
    %v523 = vld [vmem:[%s2 + $0xe58] sm:$0xff]
    %v524 = vld [vmem:[%s2 + $0xe60] sm:$0xff]
    %v525 = vld [vmem:[%s2 + $0xe68] sm:$0xff]
    %v526 = vld [vmem:[%s2 + $0xe70] sm:$0xff]
    %v527 = vld [vmem:[%s2 + $0xe78] sm:$0xff]
    %v528 = vld [vmem:[%s2 + $0xe80] sm:$0xff]
    %v529 = vld [vmem:[%s2 + $0xe88] sm:$0xff]
    %v530 = vld [vmem:[%s2 + $0xe90] sm:$0xff]
    %v531 = vld [vmem:[%s2 + $0xe98] sm:$0xff]
    %v532 = vld [vmem:[%s2 + $0xea0] sm:$0xff]
    %v533 = vld [vmem:[%s2 + $0xea8] sm:$0xff]
    %v534 = vld [vmem:[%s2 + $0xeb0] sm:$0xff]
    %v535 = vld [vmem:[%s2 + $0xeb8] sm:$0xff]
    %v536 = vld [vmem:[%s2 + $0xec0] sm:$0xff]
    %v537 = vld [vmem:[%s2 + $0xec8] sm:$0xff]
    %v538 = vld [vmem:[%s2 + $0xed0] sm:$0xff]
    %v539 = vld [vmem:[%s2 + $0xed8] sm:$0xff]
    %v540 = vld [vmem:[%s2 + $0xee0] sm:$0xff]
    %v541 = vld [vmem:[%s2 + $0xee8] sm:$0xff]
    %v542 = vld [vmem:[%s2 + $0xef0] sm:$0xff]
    %v543 = vld [vmem:[%s2 + $0xef8] sm:$0xff]
    %v544 = vld [vmem:[%s2 + $0xf00] sm:$0xff]
    %v545 = vld [vmem:[%s2 + $0xf08] sm:$0xff]
    %v546 = vld [vmem:[%s2 + $0xf10] sm:$0xff]
    %v547 = vld [vmem:[%s2 + $0xf18] sm:$0xff]
    %v548 = vld [vmem:[%s2 + $0xf20] sm:$0xff]
    %v549 = vld [vmem:[%s2 + $0xf28] sm:$0xff]
    %v550 = vld [vmem:[%s2 + $0xf30] sm:$0xff]
    %v551 = vld [vmem:[%s2 + $0xf38] sm:$0xff]
    %v552 = vld [vmem:[%s2 + $0xf40] sm:$0xff]
    %v553 = vld [vmem:[%s2 + $0xf48] sm:$0xff]
    %v554 = vld [vmem:[%s2 + $0xf50] sm:$0xff]
    %v555 = vld [vmem:[%s2 + $0xf58] sm:$0xff]
    %v556 = vld [vmem:[%s2 + $0xf60] sm:$0xff]
    %v557 = vld [vmem:[%s2 + $0xf68] sm:$0xff]
    %v558 = vld [vmem:[%s2 + $0xf70] sm:$0xff]
    %v559 = vld [vmem:[%s2 + $0xf78] sm:$0xff]
    %v560 = vld [vmem:[%s2 + $0xf80] sm:$0xff]
    %v561 = vld [vmem:[%s2 + $0xf88] sm:$0xff]
    %v562 = vld [vmem:[%s2 + $0xf90] sm:$0xff]
    %v563 = vld [vmem:[%s2 + $0xf98] sm:$0xff]
    %v564 = vld [vmem:[%s2 + $0xfa0] sm:$0xff]
    %v565 = vld [vmem:[%s2 + $0xfa8] sm:$0xff]
    %v566 = vld [vmem:[%s2 + $0xfb0] sm:$0xff]
    %v567 = vld [vmem:[%s2 + $0xfb8] sm:$0xff]
    %v568 = vld [vmem:[%s2 + $0xfc0] sm:$0xff]
    %v569 = vld [vmem:[%s2 + $0xfc8] sm:$0xff]
    %v570 = vld [vmem:[%s2 + $0xfd0] sm:$0xff]
    %v571 = vld [vmem:[%s2 + $0xfd8] sm:$0xff]
    %v572 = vld [vmem:[%s2 + $0xfe0] sm:$0xff]
    %v573 = vld [vmem:[%s2 + $0xfe8] sm:$0xff]
    %v574 = vld [vmem:[%s2 + $0xff0] sm:$0xff]
    %v575 = vld [vmem:[%s2 + $0xff8] sm:$0xff]
    %v576 = vld [vmem:[%s3] sm:$0xf]
    %v578 = vperm.slane %v576, 0
    %v579 = vperm.slane %v576, 1
    %v580 = vperm.slane %v576, 2
    %v581 = vperm.slane %v576, 3
    %588 = vst [vmem:[#allocation1] ss:$4 sm:$0xff] %v62
    %s589 = scalar_lea.vmem [#allocation1], 32
    %590 = vst [vmem:[%s589] ss:$4 sm:$0xff] %v63
    %v591 = vld.sshfl [vmem:[#allocation1] sm:$0xff pattern:$0x73625140]
    %v592 = vld.sshfl [vmem:[#allocation1 + $0x8] sm:$0xff pattern:$0x73625140]
    %v593 = vld.sshfl [vmem:[#allocation1 + $0x10] sm:$0xff pattern:$0x73625140]
    %v594 = vld.sshfl [vmem:[#allocation1 + $0x18] sm:$0xff pattern:$0x73625140]
    %v595 = vld.sshfl [vmem:[#allocation1 + $0x20] sm:$0xff pattern:$0x73625140]
    %v596 = vld.sshfl [vmem:[#allocation1 + $0x28] sm:$0xff pattern:$0x73625140]
    %v597 = vld.sshfl [vmem:[#allocation1 + $0x30] sm:$0xff pattern:$0x73625140]
    %v598 = vld.sshfl [vmem:[#allocation1 + $0x38] sm:$0xff pattern:$0x73625140]
    %607 = vmatpush.msra.mxu0 %v124
    %608 = vmatpush.msra.mxu0 %v120
    %609 = vmatpush.msra.mxu0 %v116
    %610 = vmatpush.msra.mxu0 %v112
    %611 = vmatpush.msra.mxu0 %v108
    %612 = vmatpush.msra.mxu0 %v104
    %613 = vmatpush.msra.mxu0 %v100
    %614 = vmatpush.msra.mxu0 %v96
    %615 = vmatpush.msra.mxu0 %v92
    %616 = vmatpush.msra.mxu0 %v88
    %617 = vmatpush.msra.mxu0 %v84
    %618 = vmatpush.msra.mxu0 %v80
    %619 = vmatpush.msra.mxu0 %v76
    %620 = vmatpush.msra.mxu0 %v72
    %621 = vmatpush.msra.mxu0 %v68
    %622 = vmatpush.msra.mxu0 %v64
    %623 = vmatmul.f32.gmra.mxu0 %v591
    %v624 = vpop.f32.mrf.mxu0
    %v625 = vadd.f32 %v578, %v624
    %626 = vdwg.mxu0
    %627 = vmatpush.msra.mxu0 %v188
    %628 = vmatpush.msra.mxu0 %v184
    %629 = vmatpush.msra.mxu0 %v180
    %630 = vmatpush.msra.mxu0 %v176
    %631 = vmatpush.msra.mxu0 %v172
    %632 = vmatpush.msra.mxu0 %v168
    %633 = vmatpush.msra.mxu0 %v164
    %634 = vmatpush.msra.mxu0 %v160
    %635 = vmatpush.msra.mxu0 %v156
    %636 = vmatpush.msra.mxu0 %v152
    %637 = vmatpush.msra.mxu0 %v148
    %638 = vmatpush.msra.mxu0 %v144
    %639 = vmatpush.msra.mxu0 %v140
    %640 = vmatpush.msra.mxu0 %v136
    %641 = vmatpush.msra.mxu0 %v132
    %642 = vmatpush.msra.mxu0 %v128
    %643 = vmatmul.f32.gmra.mxu0 %v592
    %v644 = vpop.f32.mrf.mxu0
    %v645 = vadd.f32 %v625, %v644
    %646 = vdwg.mxu0
    %647 = vmatpush.msra.mxu0 %v252
    %648 = vmatpush.msra.mxu0 %v248
    %649 = vmatpush.msra.mxu0 %v244
    %650 = vmatpush.msra.mxu0 %v240
    %651 = vmatpush.msra.mxu0 %v236
    %652 = vmatpush.msra.mxu0 %v232
    %653 = vmatpush.msra.mxu0 %v228
    %654 = vmatpush.msra.mxu0 %v224
    %655 = vmatpush.msra.mxu0 %v220
    %656 = vmatpush.msra.mxu0 %v216
    %657 = vmatpush.msra.mxu0 %v212
    %658 = vmatpush.msra.mxu0 %v208
    %659 = vmatpush.msra.mxu0 %v204
    %660 = vmatpush.msra.mxu0 %v200
    %661 = vmatpush.msra.mxu0 %v196
    %662 = vmatpush.msra.mxu0 %v192
    %663 = vmatmul.f32.gmra.mxu0 %v593
    %v664 = vpop.f32.mrf.mxu0
    %v665 = vadd.f32 %v645, %v664
    %666 = vdwg.mxu0
    %667 = vmatpush.msra.mxu0 %v316
    %668 = vmatpush.msra.mxu0 %v312
    %669 = vmatpush.msra.mxu0 %v308
    %670 = vmatpush.msra.mxu0 %v304
    %671 = vmatpush.msra.mxu0 %v300
    %672 = vmatpush.msra.mxu0 %v296
    %673 = vmatpush.msra.mxu0 %v292
    %674 = vmatpush.msra.mxu0 %v288
    %675 = vmatpush.msra.mxu0 %v284
    %676 = vmatpush.msra.mxu0 %v280
    %677 = vmatpush.msra.mxu0 %v276
    %678 = vmatpush.msra.mxu0 %v272
    %679 = vmatpush.msra.mxu0 %v268
    %680 = vmatpush.msra.mxu0 %v264
    %681 = vmatpush.msra.mxu0 %v260
    %682 = vmatpush.msra.mxu0 %v256
    %683 = vmatmul.f32.gmra.mxu0 %v594
    %v684 = vpop.f32.mrf.mxu0
    %v685 = vadd.f32 %v665, %v684
    %686 = vdwg.mxu0
    %687 = vmatpush.msra.mxu0 %v380
    %688 = vmatpush.msra.mxu0 %v376
    %689 = vmatpush.msra.mxu0 %v372
    %690 = vmatpush.msra.mxu0 %v368
    %691 = vmatpush.msra.mxu0 %v364
    %692 = vmatpush.msra.mxu0 %v360
    %693 = vmatpush.msra.mxu0 %v356
    %694 = vmatpush.msra.mxu0 %v352
    %695 = vmatpush.msra.mxu0 %v348
    %696 = vmatpush.msra.mxu0 %v344
    %697 = vmatpush.msra.mxu0 %v340
    %698 = vmatpush.msra.mxu0 %v336
    %699 = vmatpush.msra.mxu0 %v332
    %700 = vmatpush.msra.mxu0 %v328
    %701 = vmatpush.msra.mxu0 %v324
    %702 = vmatpush.msra.mxu0 %v320
    %703 = vmatmul.f32.gmra.mxu0 %v595
    %v704 = vpop.f32.mrf.mxu0
    %v705 = vadd.f32 %v685, %v704
    %706 = vdwg.mxu0
    %707 = vmatpush.msra.mxu0 %v444
    %708 = vmatpush.msra.mxu0 %v440
    %709 = vmatpush.msra.mxu0 %v436
    %710 = vmatpush.msra.mxu0 %v432
    %711 = vmatpush.msra.mxu0 %v428
    %712 = vmatpush.msra.mxu0 %v424
    %713 = vmatpush.msra.mxu0 %v420
    %714 = vmatpush.msra.mxu0 %v416
    %715 = vmatpush.msra.mxu0 %v412
    %716 = vmatpush.msra.mxu0 %v408
    %717 = vmatpush.msra.mxu0 %v404
    %718 = vmatpush.msra.mxu0 %v400
    %719 = vmatpush.msra.mxu0 %v396
    %720 = vmatpush.msra.mxu0 %v392
    %721 = vmatpush.msra.mxu0 %v388
    %722 = vmatpush.msra.mxu0 %v384
    %723 = vmatmul.f32.gmra.mxu0 %v596
    %v724 = vpop.f32.mrf.mxu0
    %v725 = vadd.f32 %v705, %v724
    %726 = vdwg.mxu0
    %727 = vmatpush.msra.mxu0 %v508
    %728 = vmatpush.msra.mxu0 %v504
    %729 = vmatpush.msra.mxu0 %v500
    %730 = vmatpush.msra.mxu0 %v496
    %731 = vmatpush.msra.mxu0 %v492
    %732 = vmatpush.msra.mxu0 %v488
    %733 = vmatpush.msra.mxu0 %v484
    %734 = vmatpush.msra.mxu0 %v480
    %735 = vmatpush.msra.mxu0 %v476
    %736 = vmatpush.msra.mxu0 %v472
    %737 = vmatpush.msra.mxu0 %v468
    %738 = vmatpush.msra.mxu0 %v464
    %739 = vmatpush.msra.mxu0 %v460
    %740 = vmatpush.msra.mxu0 %v456
    %741 = vmatpush.msra.mxu0 %v452
    %742 = vmatpush.msra.mxu0 %v448
    %743 = vmatmul.f32.gmra.mxu0 %v597
    %v744 = vpop.f32.mrf.mxu0
    %v745 = vadd.f32 %v725, %v744
    %746 = vdwg.mxu0
    %747 = vmatpush.msra.mxu0 %v572
    %748 = vmatpush.msra.mxu0 %v568
    %749 = vmatpush.msra.mxu0 %v564
    %750 = vmatpush.msra.mxu0 %v560
    %751 = vmatpush.msra.mxu0 %v556
    %752 = vmatpush.msra.mxu0 %v552
    %753 = vmatpush.msra.mxu0 %v548
    %754 = vmatpush.msra.mxu0 %v544
    %755 = vmatpush.msra.mxu0 %v540
    %756 = vmatpush.msra.mxu0 %v536
    %757 = vmatpush.msra.mxu0 %v532
    %758 = vmatpush.msra.mxu0 %v528
    %759 = vmatpush.msra.mxu0 %v524
    %760 = vmatpush.msra.mxu0 %v520
    %761 = vmatpush.msra.mxu0 %v516
    %762 = vmatpush.msra.mxu0 %v512
    %763 = vmatmul.f32.gmra.mxu0 %v598
    %v764 = vpop.f32.mrf.mxu0
    %v765 = vadd.f32 %v745, %v764
    %766 = vdwg.mxu0
    %767 = vmatpush.msra.mxu0 %v125
    %768 = vmatpush.msra.mxu0 %v121
    %769 = vmatpush.msra.mxu0 %v117
    %770 = vmatpush.msra.mxu0 %v113
    %771 = vmatpush.msra.mxu0 %v109
    %772 = vmatpush.msra.mxu0 %v105
    %773 = vmatpush.msra.mxu0 %v101
    %774 = vmatpush.msra.mxu0 %v97
    %775 = vmatpush.msra.mxu0 %v93
    %776 = vmatpush.msra.mxu0 %v89
    %777 = vmatpush.msra.mxu0 %v85
    %778 = vmatpush.msra.mxu0 %v81
    %779 = vmatpush.msra.mxu0 %v77
    %780 = vmatpush.msra.mxu0 %v73
    %781 = vmatpush.msra.mxu0 %v69
    %782 = vmatpush.msra.mxu0 %v65
    %783 = vmatmul.f32.gmra.mxu0 %v591
    %v784 = vpop.f32.mrf.mxu0
    %v785 = vadd.f32 %v579, %v784
    %786 = vdwg.mxu0
    %787 = vmatpush.msra.mxu0 %v189
    %788 = vmatpush.msra.mxu0 %v185
    %789 = vmatpush.msra.mxu0 %v181
    %790 = vmatpush.msra.mxu0 %v177
    %791 = vmatpush.msra.mxu0 %v173
    %792 = vmatpush.msra.mxu0 %v169
    %793 = vmatpush.msra.mxu0 %v165
    %794 = vmatpush.msra.mxu0 %v161
    %795 = vmatpush.msra.mxu0 %v157
    %796 = vmatpush.msra.mxu0 %v153
    %797 = vmatpush.msra.mxu0 %v149
    %798 = vmatpush.msra.mxu0 %v145
    %799 = vmatpush.msra.mxu0 %v141
    %800 = vmatpush.msra.mxu0 %v137
    %801 = vmatpush.msra.mxu0 %v133
    %802 = vmatpush.msra.mxu0 %v129
    %803 = vmatmul.f32.gmra.mxu0 %v592
    %v804 = vpop.f32.mrf.mxu0
    %v805 = vadd.f32 %v785, %v804
    %806 = vdwg.mxu0
    %807 = vmatpush.msra.mxu0 %v253
    %808 = vmatpush.msra.mxu0 %v249
    %809 = vmatpush.msra.mxu0 %v245
    %810 = vmatpush.msra.mxu0 %v241
    %811 = vmatpush.msra.mxu0 %v237
    %812 = vmatpush.msra.mxu0 %v233
    %813 = vmatpush.msra.mxu0 %v229
    %814 = vmatpush.msra.mxu0 %v225
    %815 = vmatpush.msra.mxu0 %v221
    %816 = vmatpush.msra.mxu0 %v217
    %817 = vmatpush.msra.mxu0 %v213
    %818 = vmatpush.msra.mxu0 %v209
    %819 = vmatpush.msra.mxu0 %v205
    %820 = vmatpush.msra.mxu0 %v201
    %821 = vmatpush.msra.mxu0 %v197
    %822 = vmatpush.msra.mxu0 %v193
    %823 = vmatmul.f32.gmra.mxu0 %v593
    %v824 = vpop.f32.mrf.mxu0
    %v825 = vadd.f32 %v805, %v824
    %826 = vdwg.mxu0
    %827 = vmatpush.msra.mxu0 %v317
    %828 = vmatpush.msra.mxu0 %v313
    %829 = vmatpush.msra.mxu0 %v309
    %830 = vmatpush.msra.mxu0 %v305
    %831 = vmatpush.msra.mxu0 %v301
    %832 = vmatpush.msra.mxu0 %v297
    %833 = vmatpush.msra.mxu0 %v293
    %834 = vmatpush.msra.mxu0 %v289
    %835 = vmatpush.msra.mxu0 %v285
    %836 = vmatpush.msra.mxu0 %v281
    %837 = vmatpush.msra.mxu0 %v277
    %838 = vmatpush.msra.mxu0 %v273
    %839 = vmatpush.msra.mxu0 %v269
    %840 = vmatpush.msra.mxu0 %v265
    %841 = vmatpush.msra.mxu0 %v261
    %842 = vmatpush.msra.mxu0 %v257
    %843 = vmatmul.f32.gmra.mxu0 %v594
    %v844 = vpop.f32.mrf.mxu0
    %v845 = vadd.f32 %v825, %v844
    %846 = vdwg.mxu0
    %847 = vmatpush.msra.mxu0 %v381
    %848 = vmatpush.msra.mxu0 %v377
    %849 = vmatpush.msra.mxu0 %v373
    %850 = vmatpush.msra.mxu0 %v369
    %851 = vmatpush.msra.mxu0 %v365
    %852 = vmatpush.msra.mxu0 %v361
    %853 = vmatpush.msra.mxu0 %v357
    %854 = vmatpush.msra.mxu0 %v353
    %855 = vmatpush.msra.mxu0 %v349
    %856 = vmatpush.msra.mxu0 %v345
    %857 = vmatpush.msra.mxu0 %v341
    %858 = vmatpush.msra.mxu0 %v337
    %859 = vmatpush.msra.mxu0 %v333
    %860 = vmatpush.msra.mxu0 %v329
    %861 = vmatpush.msra.mxu0 %v325
    %862 = vmatpush.msra.mxu0 %v321
    %863 = vmatmul.f32.gmra.mxu0 %v595
    %v864 = vpop.f32.mrf.mxu0
    %v865 = vadd.f32 %v845, %v864
    %866 = vdwg.mxu0
    %867 = vmatpush.msra.mxu0 %v445
    %868 = vmatpush.msra.mxu0 %v441
    %869 = vmatpush.msra.mxu0 %v437
    %870 = vmatpush.msra.mxu0 %v433
    %871 = vmatpush.msra.mxu0 %v429
    %872 = vmatpush.msra.mxu0 %v425
    %873 = vmatpush.msra.mxu0 %v421
    %874 = vmatpush.msra.mxu0 %v417
    %875 = vmatpush.msra.mxu0 %v413
    %876 = vmatpush.msra.mxu0 %v409
    %877 = vmatpush.msra.mxu0 %v405
    %878 = vmatpush.msra.mxu0 %v401
    %879 = vmatpush.msra.mxu0 %v397
    %880 = vmatpush.msra.mxu0 %v393
    %881 = vmatpush.msra.mxu0 %v389
    %882 = vmatpush.msra.mxu0 %v385
    %883 = vmatmul.f32.gmra.mxu0 %v596
    %v884 = vpop.f32.mrf.mxu0
    %v885 = vadd.f32 %v865, %v884
    %886 = vdwg.mxu0
    %887 = vmatpush.msra.mxu0 %v509
    %888 = vmatpush.msra.mxu0 %v505
    %889 = vmatpush.msra.mxu0 %v501
    %890 = vmatpush.msra.mxu0 %v497
    %891 = vmatpush.msra.mxu0 %v493
    %892 = vmatpush.msra.mxu0 %v489
    %893 = vmatpush.msra.mxu0 %v485
    %894 = vmatpush.msra.mxu0 %v481
    %895 = vmatpush.msra.mxu0 %v477
    %896 = vmatpush.msra.mxu0 %v473
    %897 = vmatpush.msra.mxu0 %v469
    %898 = vmatpush.msra.mxu0 %v465
    %899 = vmatpush.msra.mxu0 %v461
    %900 = vmatpush.msra.mxu0 %v457
    %901 = vmatpush.msra.mxu0 %v453
    %902 = vmatpush.msra.mxu0 %v449
    %903 = vmatmul.f32.gmra.mxu0 %v597
    %v904 = vpop.f32.mrf.mxu0
    %v905 = vadd.f32 %v885, %v904
    %906 = vdwg.mxu0
    %907 = vmatpush.msra.mxu0 %v573
    %908 = vmatpush.msra.mxu0 %v569
    %909 = vmatpush.msra.mxu0 %v565
    %910 = vmatpush.msra.mxu0 %v561
    %911 = vmatpush.msra.mxu0 %v557
    %912 = vmatpush.msra.mxu0 %v553
    %913 = vmatpush.msra.mxu0 %v549
    %914 = vmatpush.msra.mxu0 %v545
    %915 = vmatpush.msra.mxu0 %v541
    %916 = vmatpush.msra.mxu0 %v537
    %917 = vmatpush.msra.mxu0 %v533
    %918 = vmatpush.msra.mxu0 %v529
    %919 = vmatpush.msra.mxu0 %v525
    %920 = vmatpush.msra.mxu0 %v521
    %921 = vmatpush.msra.mxu0 %v517
    %922 = vmatpush.msra.mxu0 %v513
    %923 = vmatmul.f32.gmra.mxu0 %v598
    %v924 = vpop.f32.mrf.mxu0
    %v925 = vadd.f32 %v905, %v924
    %926 = vdwg.mxu0
    %927 = vmatpush.msra.mxu0 %v126
    %928 = vmatpush.msra.mxu0 %v122
    %929 = vmatpush.msra.mxu0 %v118
    %930 = vmatpush.msra.mxu0 %v114
    %931 = vmatpush.msra.mxu0 %v110
    %932 = vmatpush.msra.mxu0 %v106
    %933 = vmatpush.msra.mxu0 %v102
    %934 = vmatpush.msra.mxu0 %v98
    %935 = vmatpush.msra.mxu0 %v94
    %936 = vmatpush.msra.mxu0 %v90
    %937 = vmatpush.msra.mxu0 %v86
    %938 = vmatpush.msra.mxu0 %v82
    %939 = vmatpush.msra.mxu0 %v78
    %940 = vmatpush.msra.mxu0 %v74
    %941 = vmatpush.msra.mxu0 %v70
    %942 = vmatpush.msra.mxu0 %v66
    %943 = vmatmul.f32.gmra.mxu0 %v591
    %v944 = vpop.f32.mrf.mxu0
    %v945 = vadd.f32 %v580, %v944
    %946 = vdwg.mxu0
    %947 = vmatpush.msra.mxu0 %v190
    %948 = vmatpush.msra.mxu0 %v186
    %949 = vmatpush.msra.mxu0 %v182
    %950 = vmatpush.msra.mxu0 %v178
    %951 = vmatpush.msra.mxu0 %v174
    %952 = vmatpush.msra.mxu0 %v170
    %953 = vmatpush.msra.mxu0 %v166
    %954 = vmatpush.msra.mxu0 %v162
    %955 = vmatpush.msra.mxu0 %v158
    %956 = vmatpush.msra.mxu0 %v154
    %957 = vmatpush.msra.mxu0 %v150
    %958 = vmatpush.msra.mxu0 %v146
    %959 = vmatpush.msra.mxu0 %v142
    %960 = vmatpush.msra.mxu0 %v138
    %961 = vmatpush.msra.mxu0 %v134
    %962 = vmatpush.msra.mxu0 %v130
    %963 = vmatmul.f32.gmra.mxu0 %v592
    %v964 = vpop.f32.mrf.mxu0
    %v965 = vadd.f32 %v945, %v964
    %966 = vdwg.mxu0
    %967 = vmatpush.msra.mxu0 %v254
    %968 = vmatpush.msra.mxu0 %v250
    %969 = vmatpush.msra.mxu0 %v246
    %970 = vmatpush.msra.mxu0 %v242
    %971 = vmatpush.msra.mxu0 %v238
    %972 = vmatpush.msra.mxu0 %v234
    %973 = vmatpush.msra.mxu0 %v230
    %974 = vmatpush.msra.mxu0 %v226
    %975 = vmatpush.msra.mxu0 %v222
    %976 = vmatpush.msra.mxu0 %v218
    %977 = vmatpush.msra.mxu0 %v214
    %978 = vmatpush.msra.mxu0 %v210
    %979 = vmatpush.msra.mxu0 %v206
    %980 = vmatpush.msra.mxu0 %v202
    %981 = vmatpush.msra.mxu0 %v198
    %982 = vmatpush.msra.mxu0 %v194
    %983 = vmatmul.f32.gmra.mxu0 %v593
    %v984 = vpop.f32.mrf.mxu0
    %v985 = vadd.f32 %v965, %v984
    %986 = vdwg.mxu0
    %987 = vmatpush.msra.mxu0 %v318
    %988 = vmatpush.msra.mxu0 %v314
    %989 = vmatpush.msra.mxu0 %v310
    %990 = vmatpush.msra.mxu0 %v306
    %991 = vmatpush.msra.mxu0 %v302
    %992 = vmatpush.msra.mxu0 %v298
    %993 = vmatpush.msra.mxu0 %v294
    %994 = vmatpush.msra.mxu0 %v290
    %995 = vmatpush.msra.mxu0 %v286
    %996 = vmatpush.msra.mxu0 %v282
    %997 = vmatpush.msra.mxu0 %v278
    %998 = vmatpush.msra.mxu0 %v274
    %999 = vmatpush.msra.mxu0 %v270
    %1000 = vmatpush.msra.mxu0 %v266
    %1001 = vmatpush.msra.mxu0 %v262
    %1002 = vmatpush.msra.mxu0 %v258
    %1003 = vmatmul.f32.gmra.mxu0 %v594
    %v1004 = vpop.f32.mrf.mxu0
    %v1005 = vadd.f32 %v985, %v1004
    %1006 = vdwg.mxu0
    %1007 = vmatpush.msra.mxu0 %v382
    %1008 = vmatpush.msra.mxu0 %v378
    %1009 = vmatpush.msra.mxu0 %v374
    %1010 = vmatpush.msra.mxu0 %v370
    %1011 = vmatpush.msra.mxu0 %v366
    %1012 = vmatpush.msra.mxu0 %v362
    %1013 = vmatpush.msra.mxu0 %v358
    %1014 = vmatpush.msra.mxu0 %v354
    %1015 = vmatpush.msra.mxu0 %v350
    %1016 = vmatpush.msra.mxu0 %v346
    %1017 = vmatpush.msra.mxu0 %v342
    %1018 = vmatpush.msra.mxu0 %v338
    %1019 = vmatpush.msra.mxu0 %v334
    %1020 = vmatpush.msra.mxu0 %v330
    %1021 = vmatpush.msra.mxu0 %v326
    %1022 = vmatpush.msra.mxu0 %v322
    %1023 = vmatmul.f32.gmra.mxu0 %v595
    %v1024 = vpop.f32.mrf.mxu0
    %v1025 = vadd.f32 %v1005, %v1024
    %1026 = vdwg.mxu0
    %1027 = vmatpush.msra.mxu0 %v446
    %1028 = vmatpush.msra.mxu0 %v442
    %1029 = vmatpush.msra.mxu0 %v438
    %1030 = vmatpush.msra.mxu0 %v434
    %1031 = vmatpush.msra.mxu0 %v430
    %1032 = vmatpush.msra.mxu0 %v426
    %1033 = vmatpush.msra.mxu0 %v422
    %1034 = vmatpush.msra.mxu0 %v418
    %1035 = vmatpush.msra.mxu0 %v414
    %1036 = vmatpush.msra.mxu0 %v410
    %1037 = vmatpush.msra.mxu0 %v406
    %1038 = vmatpush.msra.mxu0 %v402
    %1039 = vmatpush.msra.mxu0 %v398
    %1040 = vmatpush.msra.mxu0 %v394
    %1041 = vmatpush.msra.mxu0 %v390
    %1042 = vmatpush.msra.mxu0 %v386
    %1043 = vmatmul.f32.gmra.mxu0 %v596
    %v1044 = vpop.f32.mrf.mxu0
    %v1045 = vadd.f32 %v1025, %v1044
    %1046 = vdwg.mxu0
    %1047 = vmatpush.msra.mxu0 %v510
    %1048 = vmatpush.msra.mxu0 %v506
    %1049 = vmatpush.msra.mxu0 %v502
    %1050 = vmatpush.msra.mxu0 %v498
    %1051 = vmatpush.msra.mxu0 %v494
    %1052 = vmatpush.msra.mxu0 %v490
    %1053 = vmatpush.msra.mxu0 %v486
    %1054 = vmatpush.msra.mxu0 %v482
    %1055 = vmatpush.msra.mxu0 %v478
    %1056 = vmatpush.msra.mxu0 %v474
    %1057 = vmatpush.msra.mxu0 %v470
    %1058 = vmatpush.msra.mxu0 %v466
    %1059 = vmatpush.msra.mxu0 %v462
    %1060 = vmatpush.msra.mxu0 %v458
    %1061 = vmatpush.msra.mxu0 %v454
    %1062 = vmatpush.msra.mxu0 %v450
    %1063 = vmatmul.f32.gmra.mxu0 %v597
    %v1064 = vpop.f32.mrf.mxu0
    %v1065 = vadd.f32 %v1045, %v1064
    %1066 = vdwg.mxu0
    %1067 = vmatpush.msra.mxu0 %v574
    %1068 = vmatpush.msra.mxu0 %v570
    %1069 = vmatpush.msra.mxu0 %v566
    %1070 = vmatpush.msra.mxu0 %v562
    %1071 = vmatpush.msra.mxu0 %v558
    %1072 = vmatpush.msra.mxu0 %v554
    %1073 = vmatpush.msra.mxu0 %v550
    %1074 = vmatpush.msra.mxu0 %v546
    %1075 = vmatpush.msra.mxu0 %v542
    %1076 = vmatpush.msra.mxu0 %v538
    %1077 = vmatpush.msra.mxu0 %v534
    %1078 = vmatpush.msra.mxu0 %v530
    %1079 = vmatpush.msra.mxu0 %v526
    %1080 = vmatpush.msra.mxu0 %v522
    %1081 = vmatpush.msra.mxu0 %v518
    %1082 = vmatpush.msra.mxu0 %v514
    %1083 = vmatmul.f32.gmra.mxu0 %v598
    %v1084 = vpop.f32.mrf.mxu0
    %v1085 = vadd.f32 %v1065, %v1084
    %1086 = vdwg.mxu0
    %1087 = vmatpush.msra.mxu0 %v127
    %1088 = vmatpush.msra.mxu0 %v123
    %1089 = vmatpush.msra.mxu0 %v119
    %1090 = vmatpush.msra.mxu0 %v115
    %1091 = vmatpush.msra.mxu0 %v111
    %1092 = vmatpush.msra.mxu0 %v107
    %1093 = vmatpush.msra.mxu0 %v103
    %1094 = vmatpush.msra.mxu0 %v99
    %1095 = vmatpush.msra.mxu0 %v95
    %1096 = vmatpush.msra.mxu0 %v91
    %1097 = vmatpush.msra.mxu0 %v87
    %1098 = vmatpush.msra.mxu0 %v83
    %1099 = vmatpush.msra.mxu0 %v79
    %1100 = vmatpush.msra.mxu0 %v75
    %1101 = vmatpush.msra.mxu0 %v71
    %1102 = vmatpush.msra.mxu0 %v67
    %1103 = vmatmul.f32.gmra.mxu0 %v591
    %v1104 = vpop.f32.mrf.mxu0
    %v1105 = vadd.f32 %v581, %v1104
    %1106 = vdwg.mxu0
    %1107 = vmatpush.msra.mxu0 %v191
    %1108 = vmatpush.msra.mxu0 %v187
    %1109 = vmatpush.msra.mxu0 %v183
    %1110 = vmatpush.msra.mxu0 %v179
    %1111 = vmatpush.msra.mxu0 %v175
    %1112 = vmatpush.msra.mxu0 %v171
    %1113 = vmatpush.msra.mxu0 %v167
    %1114 = vmatpush.msra.mxu0 %v163
    %1115 = vmatpush.msra.mxu0 %v159
    %1116 = vmatpush.msra.mxu0 %v155
    %1117 = vmatpush.msra.mxu0 %v151
    %1118 = vmatpush.msra.mxu0 %v147
    %1119 = vmatpush.msra.mxu0 %v143
    %1120 = vmatpush.msra.mxu0 %v139
    %1121 = vmatpush.msra.mxu0 %v135
    %1122 = vmatpush.msra.mxu0 %v131
    %1123 = vmatmul.f32.gmra.mxu0 %v592
    %v1124 = vpop.f32.mrf.mxu0
    %v1125 = vadd.f32 %v1105, %v1124
    %1126 = vdwg.mxu0
    %1127 = vmatpush.msra.mxu0 %v255
    %1128 = vmatpush.msra.mxu0 %v251
    %1129 = vmatpush.msra.mxu0 %v247
    %1130 = vmatpush.msra.mxu0 %v243
    %1131 = vmatpush.msra.mxu0 %v239
    %1132 = vmatpush.msra.mxu0 %v235
    %1133 = vmatpush.msra.mxu0 %v231
    %1134 = vmatpush.msra.mxu0 %v227
    %1135 = vmatpush.msra.mxu0 %v223
    %1136 = vmatpush.msra.mxu0 %v219
    %1137 = vmatpush.msra.mxu0 %v215
    %1138 = vmatpush.msra.mxu0 %v211
    %1139 = vmatpush.msra.mxu0 %v207
    %1140 = vmatpush.msra.mxu0 %v203
    %1141 = vmatpush.msra.mxu0 %v199
    %1142 = vmatpush.msra.mxu0 %v195
    %1143 = vmatmul.f32.gmra.mxu0 %v593
    %v1144 = vpop.f32.mrf.mxu0
    %v1145 = vadd.f32 %v1125, %v1144
    %1146 = vdwg.mxu0
    %1147 = vmatpush.msra.mxu0 %v319
    %1148 = vmatpush.msra.mxu0 %v315
    %1149 = vmatpush.msra.mxu0 %v311
    %1150 = vmatpush.msra.mxu0 %v307
    %1151 = vmatpush.msra.mxu0 %v303
    %1152 = vmatpush.msra.mxu0 %v299
    %1153 = vmatpush.msra.mxu0 %v295
    %1154 = vmatpush.msra.mxu0 %v291
    %1155 = vmatpush.msra.mxu0 %v287
    %1156 = vmatpush.msra.mxu0 %v283
    %1157 = vmatpush.msra.mxu0 %v279
    %1158 = vmatpush.msra.mxu0 %v275
    %1159 = vmatpush.msra.mxu0 %v271
    %1160 = vmatpush.msra.mxu0 %v267
    %1161 = vmatpush.msra.mxu0 %v263
    %1162 = vmatpush.msra.mxu0 %v259
    %1163 = vmatmul.f32.gmra.mxu0 %v594
    %v1164 = vpop.f32.mrf.mxu0
    %v1165 = vadd.f32 %v1145, %v1164
    %1166 = vdwg.mxu0
    %1167 = vmatpush.msra.mxu0 %v383
    %1168 = vmatpush.msra.mxu0 %v379
    %1169 = vmatpush.msra.mxu0 %v375
    %1170 = vmatpush.msra.mxu0 %v371
    %1171 = vmatpush.msra.mxu0 %v367
    %1172 = vmatpush.msra.mxu0 %v363
    %1173 = vmatpush.msra.mxu0 %v359
    %1174 = vmatpush.msra.mxu0 %v355
    %1175 = vmatpush.msra.mxu0 %v351
    %1176 = vmatpush.msra.mxu0 %v347
    %1177 = vmatpush.msra.mxu0 %v343
    %1178 = vmatpush.msra.mxu0 %v339
    %1179 = vmatpush.msra.mxu0 %v335
    %1180 = vmatpush.msra.mxu0 %v331
    %1181 = vmatpush.msra.mxu0 %v327
    %1182 = vmatpush.msra.mxu0 %v323
    %1183 = vmatmul.f32.gmra.mxu0 %v595
    %v1184 = vpop.f32.mrf.mxu0
    %v1185 = vadd.f32 %v1165, %v1184
    %1186 = vdwg.mxu0
    %1187 = vmatpush.msra.mxu0 %v447
    %1188 = vmatpush.msra.mxu0 %v443
    %1189 = vmatpush.msra.mxu0 %v439
    %1190 = vmatpush.msra.mxu0 %v435
    %1191 = vmatpush.msra.mxu0 %v431
    %1192 = vmatpush.msra.mxu0 %v427
    %1193 = vmatpush.msra.mxu0 %v423
    %1194 = vmatpush.msra.mxu0 %v419
    %1195 = vmatpush.msra.mxu0 %v415
    %1196 = vmatpush.msra.mxu0 %v411
    %1197 = vmatpush.msra.mxu0 %v407
    %1198 = vmatpush.msra.mxu0 %v403
    %1199 = vmatpush.msra.mxu0 %v399
    %1200 = vmatpush.msra.mxu0 %v395
    %1201 = vmatpush.msra.mxu0 %v391
    %1202 = vmatpush.msra.mxu0 %v387
    %1203 = vmatmul.f32.gmra.mxu0 %v596
    %v1204 = vpop.f32.mrf.mxu0
    %v1205 = vadd.f32 %v1185, %v1204
    %1206 = vdwg.mxu0
    %1207 = vmatpush.msra.mxu0 %v511
    %1208 = vmatpush.msra.mxu0 %v507
    %1209 = vmatpush.msra.mxu0 %v503
    %1210 = vmatpush.msra.mxu0 %v499
    %1211 = vmatpush.msra.mxu0 %v495
    %1212 = vmatpush.msra.mxu0 %v491
    %1213 = vmatpush.msra.mxu0 %v487
    %1214 = vmatpush.msra.mxu0 %v483
    %1215 = vmatpush.msra.mxu0 %v479
    %1216 = vmatpush.msra.mxu0 %v475
    %1217 = vmatpush.msra.mxu0 %v471
    %1218 = vmatpush.msra.mxu0 %v467
    %1219 = vmatpush.msra.mxu0 %v463
    %1220 = vmatpush.msra.mxu0 %v459
    %1221 = vmatpush.msra.mxu0 %v455
    %1222 = vmatpush.msra.mxu0 %v451
    %1223 = vmatmul.f32.gmra.mxu0 %v597
    %v1224 = vpop.f32.mrf.mxu0
    %v1225 = vadd.f32 %v1205, %v1224
    %1226 = vdwg.mxu0
    %1227 = vmatpush.msra.mxu0 %v575
    %1228 = vmatpush.msra.mxu0 %v571
    %1229 = vmatpush.msra.mxu0 %v567
    %1230 = vmatpush.msra.mxu0 %v563
    %1231 = vmatpush.msra.mxu0 %v559
    %1232 = vmatpush.msra.mxu0 %v555
    %1233 = vmatpush.msra.mxu0 %v551
    %1234 = vmatpush.msra.mxu0 %v547
    %1235 = vmatpush.msra.mxu0 %v543
    %1236 = vmatpush.msra.mxu0 %v539
    %1237 = vmatpush.msra.mxu0 %v535
    %1238 = vmatpush.msra.mxu0 %v531
    %1239 = vmatpush.msra.mxu0 %v527
    %1240 = vmatpush.msra.mxu0 %v523
    %1241 = vmatpush.msra.mxu0 %v519
    %1242 = vmatpush.msra.mxu0 %v515
    %1243 = vmatmul.f32.gmra.mxu0 %v598
    %v1244 = vpop.f32.mrf.mxu0
    %v1245 = vadd.f32 %v1225, %v1244
    %1246 = vdwg.mxu0
    %v1247 = vsel %vm51, %v765, 0.0
    %v1248 = vrot.slane %v1247, 4
    %v1249 = vadd.f32 %v1247, %v1248
    %v1250 = vrot.slane %v1249, 2
    %v1251 = vadd.f32 %v1249, %v1250
    %v1252 = vrot.slane %v1251, 1
    %v1253 = vadd.f32 %v1251, %v1252
    %v1254 = vsel %vm51, %v925, 0.0
    %v1255 = vrot.slane %v1254, 4
    %v1256 = vadd.f32 %v1254, %v1255
    %v1257 = vrot.slane %v1256, 2
    %v1258 = vadd.f32 %v1256, %v1257
    %v1259 = vrot.slane %v1258, 1
    %v1260 = vadd.f32 %v1258, %v1259
    %v1261 = vsel %vm51, %v1085, 0.0
    %v1262 = vrot.slane %v1261, 4
    %v1263 = vadd.f32 %v1261, %v1262
    %v1264 = vrot.slane %v1263, 2
    %v1265 = vadd.f32 %v1263, %v1264
    %v1266 = vrot.slane %v1265, 1
    %v1267 = vadd.f32 %v1265, %v1266
    %v1268 = vsel %vm51, %v1245, 0.0
    %v1269 = vrot.slane %v1268, 4
    %v1270 = vadd.f32 %v1268, %v1269
    %v1271 = vrot.slane %v1270, 2
    %v1272 = vadd.f32 %v1270, %v1271
    %v1273 = vrot.slane %v1272, 1
    %v1274 = vadd.f32 %v1272, %v1273
    %v1275 = vrcp.pop 2.0
    %v1276 = vmul.f32 2.0, %v1275
    %v1277 = vsub.f32 1.0, %v1276
    %v1278 = vmul.f32 %v1275, %v1277
    %v1279 = vadd.f32 %v1275, %v1278
    %vm1280 = vweird.f32 %v1275
    %v1281 = vsel %vm1280, %v1275, %v1279
    %v1282 = vmul.f32 %v1253, %v1281
    %v1283 = vmul.f32 %v1260, %v1281
    %v1284 = vmul.f32 %v1267, %v1281
    %v1285 = vmul.f32 %v1274, %v1281
    %v1286 = vsub.f32 %v765, %v1282
    %v1287 = vsub.f32 %v925, %v1283
    %v1288 = vsub.f32 %v1085, %v1284
    %v1289 = vsub.f32 %v1245, %v1285
    %v1290 = vmul.f32 %v1286, %v1286
    %v1291 = vmul.f32 %v1287, %v1287
    %v1292 = vmul.f32 %v1288, %v1288
    %v1293 = vmul.f32 %v1289, %v1289
    %v1294 = vsel %vm51, %v1290, 0.0
    %v1295 = vrot.slane %v1294, 4
    %v1296 = vadd.f32 %v1294, %v1295
    %v1297 = vrot.slane %v1296, 2
    %v1298 = vadd.f32 %v1296, %v1297
    %v1299 = vrot.slane %v1298, 1
    %v1300 = vadd.f32 %v1298, %v1299
    %v1301 = vsel %vm51, %v1291, 0.0
    %v1302 = vrot.slane %v1301, 4
    %v1303 = vadd.f32 %v1301, %v1302
    %v1304 = vrot.slane %v1303, 2
    %v1305 = vadd.f32 %v1303, %v1304
    %v1306 = vrot.slane %v1305, 1
    %v1307 = vadd.f32 %v1305, %v1306
    %v1308 = vsel %vm51, %v1292, 0.0
    %v1309 = vrot.slane %v1308, 4
    %v1310 = vadd.f32 %v1308, %v1309
    %v1311 = vrot.slane %v1310, 2
    %v1312 = vadd.f32 %v1310, %v1311
    %v1313 = vrot.slane %v1312, 1
    %v1314 = vadd.f32 %v1312, %v1313
    %v1315 = vsel %vm51, %v1293, 0.0
    %v1316 = vrot.slane %v1315, 4
    %v1317 = vadd.f32 %v1315, %v1316
    %v1318 = vrot.slane %v1317, 2
    %v1319 = vadd.f32 %v1317, %v1318
    %v1320 = vrot.slane %v1319, 1
    %v1321 = vadd.f32 %v1319, %v1320
    %v1322 = vmul.f32 %v1300, %v1281
    %v1323 = vmul.f32 %v1307, %v1281
    %v1324 = vmul.f32 %v1314, %v1281
    %v1325 = vmul.f32 %v1321, %v1281
    %v1326 = vadd.f32 %v1322, 1e-05
    %v1327 = vadd.f32 %v1323, 1e-05
    %v1328 = vadd.f32 %v1324, 1e-05
    %v1329 = vadd.f32 %v1325, 1e-05
    %v1330 = vrsqrt.pop %v1326
    %v1331 = vmul.f32 %v1330, %v1326
    %v1332 = vmul.f32 %v1331, %v1330
    %v1333 = vmul.f32 0.5, %v1332
    %v1334 = vsub.f32 1.5, %v1333
    %v1335 = vmul.f32 %v1330, %v1334
    %vm1336 = vweird.f32 %v1326
    %vm1337 = vweird.f32 %v1330
    %vm1338 = vmor %vm1336, %vm1337
    %v1339 = vsel %vm1338, %v1330, %v1335
    %v1340 = vrsqrt.pop %v1327
    %v1341 = vmul.f32 %v1340, %v1327
    %v1342 = vmul.f32 %v1341, %v1340
    %v1343 = vmul.f32 0.5, %v1342
    %v1344 = vsub.f32 1.5, %v1343
    %v1345 = vmul.f32 %v1340, %v1344
    %vm1346 = vweird.f32 %v1327
    %vm1347 = vweird.f32 %v1340
    %vm1348 = vmor %vm1346, %vm1347
    %v1349 = vsel %vm1348, %v1340, %v1345
    %v1350 = vrsqrt.pop %v1328
    %v1351 = vmul.f32 %v1350, %v1328
    %v1352 = vmul.f32 %v1351, %v1350
    %v1353 = vmul.f32 0.5, %v1352
    %v1354 = vsub.f32 1.5, %v1353
    %v1355 = vmul.f32 %v1350, %v1354
    %vm1356 = vweird.f32 %v1328
    %vm1357 = vweird.f32 %v1350
    %vm1358 = vmor %vm1356, %vm1357
    %v1359 = vsel %vm1358, %v1350, %v1355
    %v1360 = vrsqrt.pop %v1329
    %v1361 = vmul.f32 %v1360, %v1329
    %v1362 = vmul.f32 %v1361, %v1360
    %v1363 = vmul.f32 0.5, %v1362
    %v1364 = vsub.f32 1.5, %v1363
    %v1365 = vmul.f32 %v1360, %v1364
    %vm1366 = vweird.f32 %v1329
    %vm1367 = vweird.f32 %v1360
    %vm1368 = vmor %vm1366, %vm1367
    %v1369 = vsel %vm1368, %v1360, %v1365
    %v1370 = vld [vmem:[%s4] sm:$0xf]
    %v1372 = vperm.slane %v1370, 0
    %v1373 = vperm.slane %v1370, 1
    %v1374 = vperm.slane %v1370, 2
    %v1375 = vperm.slane %v1370, 3
    %v1380 = vmul.f32 %v1339, %v1372
    %v1381 = vmul.f32 %v1349, %v1373
    %v1382 = vmul.f32 %v1359, %v1374
    %v1383 = vmul.f32 %v1369, %v1375
    %v1384 = vperm.slane %v1380, 0
    %v1385 = vperm.slane %v1381, 0
    %v1386 = vperm.slane %v1382, 0
    %v1387 = vperm.slane %v1383, 0
    %v1388 = vmul.f32 %v1286, %v1384
    %v1389 = vmul.f32 %v1287, %v1385
    %v1390 = vmul.f32 %v1288, %v1386
    %v1391 = vmul.f32 %v1289, %v1387
    %v1392 = vld [vmem:[%s5] sm:$0xf]
    %v1394 = vperm.slane %v1392, 0
    %v1395 = vperm.slane %v1392, 1
    %v1396 = vperm.slane %v1392, 2
    %v1397 = vperm.slane %v1392, 3
    %v1402 = vadd.f32 %v1388, %v1394
    %v1403 = vadd.f32 %v1389, %v1395
    %v1404 = vadd.f32 %v1390, %v1396
    %v1405 = vadd.f32 %v1391, %v1397
    %v1406 = vmax.f32 %v1402, 0.0
    %v1407 = vmax.f32 %v1403, 0.0
    %v1408 = vmax.f32 %v1404, 0.0
    %v1409 = vmax.f32 %v1405, 0.0
    %v1410 = vld [vmem:[%s6] sm:$0xf]
    %v1412 = vperm.slane %v1410, 0
    %v1413 = vperm.slane %v1410, 1
    %v1414 = vperm.slane %v1410, 2
    %v1415 = vperm.slane %v1410, 3
    %v1420 = vmul.f32 %v1406, %v1412
    %v1421 = vmul.f32 %v1407, %v1413
    %v1422 = vmul.f32 %v1408, %v1414
    %v1423 = vmul.f32 %v1409, %v1415
    %v1424 = vld [vmem:[%s7] sm:$0xff]
    %v1425 = vld [vmem:[%s7 + $0x8] sm:$0xff]
    %v1426 = vld [vmem:[%s7 + $0x10] sm:$0xff]
    %v1427 = vld [vmem:[%s7 + $0x18] sm:$0xff]
    %v1428 = vld [vmem:[%s7 + $0x20] sm:$0xff]
    %v1429 = vld [vmem:[%s7 + $0x28] sm:$0xff]
    %v1430 = vld [vmem:[%s7 + $0x30] sm:$0xff]
    %v1431 = vld [vmem:[%s7 + $0x38] sm:$0xff]
    %v1432 = vld [vmem:[%s7 + $0x40] sm:$0xff]
    %v1433 = vld [vmem:[%s7 + $0x48] sm:$0xff]
    %v1434 = vld [vmem:[%s7 + $0x50] sm:$0xff]
    %v1435 = vld [vmem:[%s7 + $0x58] sm:$0xff]
    %v1436 = vld [vmem:[%s7 + $0x60] sm:$0xff]
    %v1437 = vld [vmem:[%s7 + $0x68] sm:$0xff]
    %v1438 = vld [vmem:[%s7 + $0x70] sm:$0xff]
    %v1439 = vld [vmem:[%s7 + $0x78] sm:$0xff]
    %v1440 = vld [vmem:[%s7 + $0x80] sm:$0xff]
    %v1441 = vld [vmem:[%s7 + $0x88] sm:$0xff]
    %v1442 = vld [vmem:[%s7 + $0x90] sm:$0xff]
    %v1443 = vld [vmem:[%s7 + $0x98] sm:$0xff]
    %v1444 = vld [vmem:[%s7 + $0xa0] sm:$0xff]
    %v1445 = vld [vmem:[%s7 + $0xa8] sm:$0xff]
    %v1446 = vld [vmem:[%s7 + $0xb0] sm:$0xff]
    %v1447 = vld [vmem:[%s7 + $0xb8] sm:$0xff]
    %v1448 = vld [vmem:[%s7 + $0xc0] sm:$0xff]
    %v1449 = vld [vmem:[%s7 + $0xc8] sm:$0xff]
    %v1450 = vld [vmem:[%s7 + $0xd0] sm:$0xff]
    %v1451 = vld [vmem:[%s7 + $0xd8] sm:$0xff]
    %v1452 = vld [vmem:[%s7 + $0xe0] sm:$0xff]
    %v1453 = vld [vmem:[%s7 + $0xe8] sm:$0xff]
    %v1454 = vld [vmem:[%s7 + $0xf0] sm:$0xff]
    %v1455 = vld [vmem:[%s7 + $0xf8] sm:$0xff]
    %v1456 = vld [vmem:[%s7 + $0x100] sm:$0xff]
    %v1457 = vld [vmem:[%s7 + $0x108] sm:$0xff]
    %v1458 = vld [vmem:[%s7 + $0x110] sm:$0xff]
    %v1459 = vld [vmem:[%s7 + $0x118] sm:$0xff]
    %v1460 = vld [vmem:[%s7 + $0x120] sm:$0xff]
    %v1461 = vld [vmem:[%s7 + $0x128] sm:$0xff]
    %v1462 = vld [vmem:[%s7 + $0x130] sm:$0xff]
    %v1463 = vld [vmem:[%s7 + $0x138] sm:$0xff]
    %v1464 = vld [vmem:[%s7 + $0x140] sm:$0xff]
    %v1465 = vld [vmem:[%s7 + $0x148] sm:$0xff]
    %v1466 = vld [vmem:[%s7 + $0x150] sm:$0xff]
    %v1467 = vld [vmem:[%s7 + $0x158] sm:$0xff]
    %v1468 = vld [vmem:[%s7 + $0x160] sm:$0xff]
    %v1469 = vld [vmem:[%s7 + $0x168] sm:$0xff]
    %v1470 = vld [vmem:[%s7 + $0x170] sm:$0xff]
    %v1471 = vld [vmem:[%s7 + $0x178] sm:$0xff]
    %v1472 = vld [vmem:[%s7 + $0x180] sm:$0xff]
    %v1473 = vld [vmem:[%s7 + $0x188] sm:$0xff]
    %v1474 = vld [vmem:[%s7 + $0x190] sm:$0xff]
    %v1475 = vld [vmem:[%s7 + $0x198] sm:$0xff]
    %v1476 = vld [vmem:[%s7 + $0x1a0] sm:$0xff]
    %v1477 = vld [vmem:[%s7 + $0x1a8] sm:$0xff]
    %v1478 = vld [vmem:[%s7 + $0x1b0] sm:$0xff]
    %v1479 = vld [vmem:[%s7 + $0x1b8] sm:$0xff]
    %v1480 = vld [vmem:[%s7 + $0x1c0] sm:$0xff]
    %v1481 = vld [vmem:[%s7 + $0x1c8] sm:$0xff]
    %v1482 = vld [vmem:[%s7 + $0x1d0] sm:$0xff]
    %v1483 = vld [vmem:[%s7 + $0x1d8] sm:$0xff]
    %v1484 = vld [vmem:[%s7 + $0x1e0] sm:$0xff]
    %v1485 = vld [vmem:[%s7 + $0x1e8] sm:$0xff]
    %v1486 = vld [vmem:[%s7 + $0x1f0] sm:$0xff]
    %v1487 = vld [vmem:[%s7 + $0x1f8] sm:$0xff]
    %v1488 = vld [vmem:[%s8] sm:$0x1]
    %v1490 = vperm.slane %v1488, 0
    %1492 = vmatpush.msra.mxu0 %v1439
    %1493 = vmatpush.msra.mxu0 %v1438
    %1494 = vmatpush.msra.mxu0 %v1437
    %1495 = vmatpush.msra.mxu0 %v1436
    %1496 = vmatpush.msra.mxu0 %v1435
    %1497 = vmatpush.msra.mxu0 %v1434
    %1498 = vmatpush.msra.mxu0 %v1433
    %1499 = vmatpush.msra.mxu0 %v1432
    %1500 = vmatpush.msra.mxu0 %v1431
    %1501 = vmatpush.msra.mxu0 %v1430
    %1502 = vmatpush.msra.mxu0 %v1429
    %1503 = vmatpush.msra.mxu0 %v1428
    %1504 = vmatpush.msra.mxu0 %v1427
    %1505 = vmatpush.msra.mxu0 %v1426
    %1506 = vmatpush.msra.mxu0 %v1425
    %1507 = vmatpush.msra.mxu0 %v1424
    %1508 = vmatmul.f32.gmra.mxu0 %v1420
    %v1509 = vpop.f32.mrf.mxu0
    %v1510 = vadd.f32 %v1490, %v1509
    %1511 = vdwg.mxu0
    %1512 = vmatpush.msra.mxu0 %v1455
    %1513 = vmatpush.msra.mxu0 %v1454
    %1514 = vmatpush.msra.mxu0 %v1453
    %1515 = vmatpush.msra.mxu0 %v1452
    %1516 = vmatpush.msra.mxu0 %v1451
    %1517 = vmatpush.msra.mxu0 %v1450
    %1518 = vmatpush.msra.mxu0 %v1449
    %1519 = vmatpush.msra.mxu0 %v1448
    %1520 = vmatpush.msra.mxu0 %v1447
    %1521 = vmatpush.msra.mxu0 %v1446
    %1522 = vmatpush.msra.mxu0 %v1445
    %1523 = vmatpush.msra.mxu0 %v1444
    %1524 = vmatpush.msra.mxu0 %v1443
    %1525 = vmatpush.msra.mxu0 %v1442
    %1526 = vmatpush.msra.mxu0 %v1441
    %1527 = vmatpush.msra.mxu0 %v1440
    %1528 = vmatmul.f32.gmra.mxu0 %v1421
    %v1529 = vpop.f32.mrf.mxu0
    %v1530 = vadd.f32 %v1510, %v1529
    %1531 = vdwg.mxu0
    %1532 = vmatpush.msra.mxu0 %v1471
    %1533 = vmatpush.msra.mxu0 %v1470
    %1534 = vmatpush.msra.mxu0 %v1469
    %1535 = vmatpush.msra.mxu0 %v1468
    %1536 = vmatpush.msra.mxu0 %v1467
    %1537 = vmatpush.msra.mxu0 %v1466
    %1538 = vmatpush.msra.mxu0 %v1465
    %1539 = vmatpush.msra.mxu0 %v1464
    %1540 = vmatpush.msra.mxu0 %v1463
    %1541 = vmatpush.msra.mxu0 %v1462
    %1542 = vmatpush.msra.mxu0 %v1461
    %1543 = vmatpush.msra.mxu0 %v1460
    %1544 = vmatpush.msra.mxu0 %v1459
    %1545 = vmatpush.msra.mxu0 %v1458
    %1546 = vmatpush.msra.mxu0 %v1457
    %1547 = vmatpush.msra.mxu0 %v1456
    %1548 = vmatmul.f32.gmra.mxu0 %v1422
    %v1549 = vpop.f32.mrf.mxu0
    %v1550 = vadd.f32 %v1530, %v1549
    %1551 = vdwg.mxu0
    %1552 = vmatpush.msra.mxu0 %v1487
    %1553 = vmatpush.msra.mxu0 %v1486
    %1554 = vmatpush.msra.mxu0 %v1485
    %1555 = vmatpush.msra.mxu0 %v1484
    %1556 = vmatpush.msra.mxu0 %v1483
    %1557 = vmatpush.msra.mxu0 %v1482
    %1558 = vmatpush.msra.mxu0 %v1481
    %1559 = vmatpush.msra.mxu0 %v1480
    %1560 = vmatpush.msra.mxu0 %v1479
    %1561 = vmatpush.msra.mxu0 %v1478
    %1562 = vmatpush.msra.mxu0 %v1477
    %1563 = vmatpush.msra.mxu0 %v1476
    %1564 = vmatpush.msra.mxu0 %v1475
    %1565 = vmatpush.msra.mxu0 %v1474
    %1566 = vmatpush.msra.mxu0 %v1473
    %1567 = vmatpush.msra.mxu0 %v1472
    %1568 = vmatmul.f32.gmra.mxu0 %v1423
    %v1569 = vpop.f32.mrf.mxu0
    %v1570 = vadd.f32 %v1550, %v1569
    %1571 = vdwg.mxu0
    %vm1572 = vcmask 74752
    %1573 = vst.msk [vmem:[#allocation2] sm:$0x3] %vm1572, %v1570
    // Predicated region
    $region38: #{simple_cnn_with_te_apply.9} parent=1 // pred_check
      _
    $region39: #{simple_cnn_with_te_apply.9} parent=1 // pred_check_branch
      %1575 = sbr.rel (0) target = $region41
    $region40: #{simple_cnn_with_te_apply.9} parent=1 // pred_region
      %1577 = vsyncadd [#allocation3], 0
      %s1579 = sshll.u32 [#allocation2], 4
      %s1580 = int_to_ptr.vmem [resolvable:$true] %s1579
      %s1581 = sshll.u32 %s9, 4
      %s1582 = int_to_ptr.hbm [resolvable:$true] %s1581
      %1584 = dma.vmem_to_hbm [thread:$0]  %s1580, 32, %s1582, [#allocation3]
    $region41: #{simple_cnn_with_te_apply.9} parent=1 // pred_fallthru
      _
    // Predicated region
    $region42: #{simple_cnn_with_te_apply.9} parent=1 // pred_check
      _
    $region43: #{simple_cnn_with_te_apply.9} parent=1 // pred_check_branch
      %1586 = sbr.rel (0) target = $region45
    $region44: #{simple_cnn_with_te_apply.9} parent=1 // pred_region
      %1588 = dma.done [#allocation3], 32
    $region45: #{simple_cnn_with_te_apply.9} parent=1 // pred_fallthru
      _
    %1589 = vsyncpa [#allocation3], 1

</llo_original>
